<compile_context>
chip_gen: v5e
topology: v5e:2x2
jax: 0.10.0
libtpu: 0.0.40
codegen_flags: <defaults>
</compile_context>

<pallas_src>
from itertools import pairwise

import numpy as np
import jax
import jax.numpy as jnp
from jax.experimental import pallas as pl
from jax.experimental.pallas import tpu as pltpu


_VMEM_LIMIT = 32 * 1024 * 1024  # safe on v5e/v6e/v7x; kernels here are far below


# ----------------------------------------------------------------------------
# helpers
# ----------------------------------------------------------------------------
def _round_up(x, m):
    return ((x + m - 1) // m) * m


def _padcast2(a, rows, cols, dtype=jnp.bfloat16):
    return jnp.pad(a, ((0, rows - a.shape[0]), (0, cols - a.shape[1]))).astype(dtype)


def _padcast3(a, d1, d2, dtype=jnp.bfloat16):
    return jnp.pad(a, ((0, 0), (0, d1 - a.shape[1]), (0, d2 - a.shape[2]))).astype(dtype)


def _choose_tm(Mp, max_tm=256):
    """M-tile selection.  For small M (serial grid loop dominates) use a single
    full-size tile; for large M pick the largest tile <= max_tm dividing Mp
    with >=2 steps so the 'parallel' axis can be sharded across v7x's 2 TCs."""
    if Mp < 256:
        return Mp
    tm = max_tm
    while tm >= 16:
        if Mp % tm == 0 and Mp // tm >= 2:
            return tm
        tm //= 2
    return Mp


# ----------------------------------------------------------------------------
# Pallas kernels
# ----------------------------------------------------------------------------
def _linear_swiglu_kernel(x_ref, w_ref, b_ref, wg_ref, bg_ref, wu_ref, bu_ref, o_ref):
    """o = silu(h @ Wg + bg) * (h @ Wu + bu) where h = x @ W + b (fused pair)."""
    x = x_ref[...]
    h = jnp.dot(x, w_ref[...], preferred_element_type=jnp.float32) + b_ref[...]
    hb = h.astype(jnp.bfloat16)
    g = jnp.dot(hb, wg_ref[...], preferred_element_type=jnp.float32) + bg_ref[...]
    u = jnp.dot(hb, wu_ref[...], preferred_element_type=jnp.float32) + bu_ref[...]
    o_ref[...] = ((g * jax.nn.sigmoid(g)) * u).astype(o_ref.dtype)


def pallas_linear_swiglu(x, w, b, wg, bg, wu, bu):
    """x:(Mp,Kp) bf16, w:(Kp,Np) bf16, wg/wu:(Np,Np) bf16, b/bg/bu:(1,Np) f32."""
    Mp, Kp = x.shape
    Np = w.shape[1]
    TM = _choose_tm(Mp)
    # TODO(synk): for dim >= ~1024 the full (Kp,Np)/(Np,Np) weight blocks should
    # be tiled along K/N with an f32 accumulator to fit v7x's 64 MiB VMEM.
    return pl.pallas_call(
        _linear_swiglu_kernel,
        out_shape=jax.ShapeDtypeStruct((Mp, Np), jnp.bfloat16),
        grid=(Mp // TM,),
        in_specs=[
            pl.BlockSpec((TM, Kp), lambda i: (i, 0)),
            pl.BlockSpec((Kp, Np), lambda i: (0, 0)),
            pl.BlockSpec((1, Np), lambda i: (0, 0)),
            pl.BlockSpec((Np, Np), lambda i: (0, 0)),
            pl.BlockSpec((1, Np), lambda i: (0, 0)),
            pl.BlockSpec((Np, Np), lambda i: (0, 0)),
            pl.BlockSpec((1, Np), lambda i: (0, 0)),
        ],
        out_specs=pl.BlockSpec((TM, Np), lambda i: (i, 0)),
        compiler_params=pltpu.CompilerParams(
            dimension_semantics=("parallel",),
            vmem_limit_bytes=_VMEM_LIMIT),
    )(x, w, b, wg, bg, wu, bu)


def _moe_kernel(x_ref, w1_ref, w3_ref, w2_ref, wt_ref,
                sw1_ref, sw3_ref, sw2_ref, o_ref, acc_ref):
    """Fused MoE: shared SwiGLU-MLP expert (computed once at e==0, initializes
    the f32 VMEM accumulator) + dense-equivalent routed experts accumulated
    across the 'arbitrary' expert axis; bf16 output written once at e==E-1."""
    e = pl.program_id(1)
    x = x_ref[...]

    @pl.when(e == 0)
    def _():
        g = jnp.dot(x, sw1_ref[...], preferred_element_type=jnp.float32)
        u = jnp.dot(x, sw3_ref[...], preferred_element_type=jnp.float32)
        h = ((g * jax.nn.sigmoid(g)) * u).astype(jnp.bfloat16)
        acc_ref[...] = jnp.dot(h, sw2_ref[...], preferred_element_type=jnp.float32)

    g = jnp.dot(x, w1_ref[0], preferred_element_type=jnp.float32)
    u = jnp.dot(x, w3_ref[0], preferred_element_type=jnp.float32)
    # fold per-token routing weight into h: (wt * h) @ w2 == wt * (h @ w2)
    h = ((g * jax.nn.sigmoid(g)) * u * wt_ref[0]).astype(jnp.bfloat16)
    acc_ref[...] += jnp.dot(h, w2_ref[0], preferred_element_type=jnp.float32)

    @pl.when(e == pl.num_programs(1) - 1)
    def _():
        o_ref[...] = acc_ref[...].astype(o_ref.dtype)


def pallas_moe(x, w1, w3, w2, wt, sw1, sw3, sw2):
    """x:(Mp,Dp) bf16, w1/w3:(E,Dp,Hp) bf16, w2:(E,Hp,Dp) bf16, wt:(E,Mp,1) f32,
    sw1/sw3:(Dp,SHp) bf16, sw2:(SHp,Dp) bf16  ->  (Mp,Dp) bf16."""
    Mp, Dp = x.shape
    E, _, Hp = w1.shape
    SHp = sw1.shape[1]
    # Larger TM amortizes per-expert weight re-streaming (expert weights are
    # re-read once per M tile); still prefers >=2 parallel steps for large M.
    TM = _choose_tm(Mp, max_tm=512)
    # TODO(synk): dense-equivalent routed path (every expert computed for every
    # token, masked by routing weight).  For large num_experts, switch to
    # sparse dispatch via PrefetchScalarGridSpec (tokens grouped by expert).
    return pl.pallas_call(
        _moe_kernel,
        out_shape=jax.ShapeDtypeStruct((Mp, Dp), jnp.bfloat16),
        grid=(Mp // TM, E),
        in_specs=[
            pl.BlockSpec((TM, Dp), lambda i, e: (i, 0)),
            pl.BlockSpec((1, Dp, Hp), lambda i, e: (e, 0, 0)),
            pl.BlockSpec((1, Dp, Hp), lambda i, e: (e, 0, 0)),
            pl.BlockSpec((1, Hp, Dp), lambda i, e: (e, 0, 0)),
            pl.BlockSpec((1, TM, 1), lambda i, e: (e, i, 0)),
            pl.BlockSpec((Dp, SHp), lambda i, e: (0, 0)),
            pl.BlockSpec((Dp, SHp), lambda i, e: (0, 0)),
            pl.BlockSpec((SHp, Dp), lambda i, e: (0, 0)),
        ],
        out_specs=pl.BlockSpec((TM, Dp), lambda i, e: (i, 0)),
        scratch_shapes=[pltpu.VMEM((TM, Dp), jnp.float32)],
        compiler_params=pltpu.CompilerParams(
            dimension_semantics=("parallel", "arbitrary"),
            vmem_limit_bytes=_VMEM_LIMIT),
    )(x, w1, w3, w2, wt, sw1, sw3, sw2)


# ----------------------------------------------------------------------------
# parameter initialization (deterministic, synthetic; pre-padded + bf16)
# ----------------------------------------------------------------------------
def _init_linear_swiglu(key, din, dout):
    Kp, Np = _round_up(din, 128), _round_up(dout, 128)
    k1, k2, k3 = jax.random.split(key, 3)
    s_in, s_out = 1.0 / np.sqrt(din), 1.0 / np.sqrt(dout)
    return {
        "w":  _padcast2(jax.random.normal(k1, (din, dout), jnp.float32) * s_in, Kp, Np),
        "b":  jnp.zeros((1, Np), jnp.float32),
        "wg": _padcast2(jax.random.normal(k2, (dout, dout), jnp.float32) * s_out, Np, Np),
        "bg": jnp.zeros((1, Np), jnp.float32),
        "wu": _padcast2(jax.random.normal(k3, (dout, dout), jnp.float32) * s_out, Np, Np),
        "bu": jnp.zeros((1, Np), jnp.float32),
    }


def _init_moe(key, dim, n_routed_experts, n_group, topk_group,
              num_experts_per_tok, n_shared_experts, routed_scaling_factor):
    hidden = dim                               # hidden_dim=None -> dim
    sh_hidden = dim * n_shared_experts
    Dp = _round_up(dim, 128)
    Hp = _round_up(hidden, 128)
    SHp = _round_up(sh_hidden, 128)
    ks = jax.random.split(key, 7)
    s_d = 1.0 / np.sqrt(dim)
    s_h = 1.0 / np.sqrt(hidden)
    s_sh = 1.0 / np.sqrt(sh_hidden)
    E = n_routed_experts
    return {
        # gate stays f32/unfused: dim x E is tiny, handled by XLA
        "gate_w": jnp.pad(
            jax.random.normal(ks[0], (dim, E), jnp.float32) * s_d,
            ((0, Dp - dim), (0, 0))),
        "w1": _padcast3(jax.random.normal(ks[1], (E, dim, hidden), jnp.float32) * s_d, Dp, Hp),
        "w3": _padcast3(jax.random.normal(ks[2], (E, dim, hidden), jnp.float32) * s_d, Dp, Hp),
        "w2": _padcast3(jax.random.normal(ks[3], (E, hidden, dim), jnp.float32) * s_h, Hp, Dp),
        "sh_w1": _padcast2(jax.random.normal(ks[4], (dim, sh_hidden), jnp.float32) * s_d, Dp, SHp),
        "sh_w3": _padcast2(jax.random.normal(ks[5], (dim, sh_hidden), jnp.float32) * s_d, Dp, SHp),
        "sh_w2": _padcast2(jax.random.normal(ks[6], (sh_hidden, dim), jnp.float32) * s_sh, SHp, Dp),
        "cfg": {
            "E": E, "n_group": n_group, "topk_group": topk_group,
            "k": num_experts_per_tok, "scale": routed_scaling_factor,
        },
    }


def _init_moeff(key, din, dout, num_ff, num_experts):
    n_extra = max(num_ff - 1, 0)
    keys = jax.random.split(key, 2 + n_extra)
    layers = [("ls", _init_linear_swiglu(keys[0], din, dout)),
              ("moe", _init_moe(keys[1], dout,
                                n_routed_experts=num_experts,
                                n_group=4, topk_group=2,
                                num_experts_per_tok=4, n_shared_experts=2,
                                routed_scaling_factor=1.0))]
    for j in range(n_extra):
        layers.append(("ls", _init_linear_swiglu(keys[2 + j], dout, dout)))
    return layers


def init_unet_tff(key, num_features, num_funnel, num_ff, num_experts, bottleneck_dim):
    nf = num_funnel + 1
    enc_dims = np.linspace(num_features, bottleneck_dim, nf, dtype=int)
    dec_dims = np.linspace(bottleneck_dim, num_features, nf, dtype=int)
    n_enc = len(list(pairwise(enc_dims)))
    keys = jax.random.split(key, 2 * n_enc + 3)
    it = iter(keys)
    encoder = [_init_moeff(next(it), int(a), int(b), num_ff, num_experts)
               for a, b in pairwise(enc_dims)]
    bottleneck = _init_moeff(next(it), bottleneck_dim, bottleneck_dim, num_ff, num_experts)
    decoder = [_init_moeff(next(it), int(a), int(b), num_ff, num_experts)
               for a, b in pairwise(dec_dims)]
    # bos/eos parameters exist in the reference module but are unused in forward.
    bos = jax.random.normal(next(it), (1, num_features), jnp.float32)
    eos = jax.random.normal(next(it), (1, num_features), jnp.float32)
    return {"encoder": encoder, "bottleneck": bottleneck, "decoder": decoder,
            "bos": bos, "eos": eos, "num_features": num_features}


# ----------------------------------------------------------------------------
# forward
# ----------------------------------------------------------------------------
def moe_forward(p, x2d):
    """x2d: (Mp, Dp) bf16, feature-padded -> (Mp, Dp) bf16."""
    cfg = p["cfg"]
    E, g, tg, k = cfg["E"], cfg["n_group"], cfg["topk_group"], cfg["k"]
    # router: tiny (Dp x E) matmul + softmax + group-limited greedy top-k in XLA
    logits = jnp.dot(x2d.astype(jnp.float32), p["gate_w"])            # (Mp, E)
    scores = jax.nn.softmax(logits, axis=-1)
    epg = E // g
    group_scores = scores.reshape(-1, g, epg).max(axis=-1)
    _, gidx = jax.lax.top_k(group_scores, tg)
    gmask = jax.nn.one_hot(gidx, g, dtype=scores.dtype).sum(axis=1)    # (Mp, g)
    emask = jnp.repeat(gmask, epg, axis=1)                             # (Mp, E)
    masked = scores * emask
    topv, topi = jax.lax.top_k(masked, k)
    weights = (jax.nn.one_hot(topi, E, dtype=scores.dtype) * topv[..., None]).sum(axis=1)
    weights = weights * cfg["scale"]                                   # (Mp, E)
    wt = weights.T[:, :, None]                                         # (E, Mp, 1) f32
    # routed experts + shared expert fused in one Pallas kernel
    return pallas_moe(x2d, p["w1"], p["w3"], p["w2"], wt,
                      p["sh_w1"], p["sh_w3"], p["sh_w2"])


def moeff_forward(layers, x2d):
    for kind, p in layers:
        if kind == "ls":
            x2d = pallas_linear_swiglu(x2d, p["w"], p["b"],
                                       p["wg"], p["bg"], p["wu"], p["bu"])
        else:  # moe
            x2d = moe_forward(p, x2d)
    return x2d


def unet_tff_forward(params, x):
    """x: [B, T, F] f32  ->  [B, (len(decoder)+1)*T, F] f32."""
    B, T0, F = x.shape
    Fp = _round_up(F, 128)
    # pad features once; carry bf16, feature-padded activations end-to-end
    x = jnp.pad(x, ((0, 0), (0, 0), (0, Fp - F))).astype(jnp.bfloat16)

    def apply(block, x3d):
        b, t, fp = x3d.shape
        m = b * t
        mp = _round_up(m, 16)          # bf16 sublane-friendly row padding
        x2d = x3d.reshape(m, fp)
        x2d = jnp.pad(x2d, ((0, mp - m), (0, 0)))
        y = moeff_forward(block, x2d)
        return y[:m].reshape(b, t, y.shape[-1])

    skips = []
    for enc in params["encoder"]:
        x = apply(enc, x)
        skips.append(x)
    x = apply(params["bottleneck"], x)
    for dec, skip in zip(params["decoder"], skips[::-1]):
        x = jnp.concatenate([x, skip], axis=1)   # torch.cat(..., dim=1) == token axis
        x = apply(dec, x)
    return x[..., :params["num_features"]].astype(jnp.float32)


# ----------------------------------------------------------------------------
# main
# ----------------------------------------------------------------------------
if __name__ == "__main__":
    key = jax.random.PRNGKey(0)
    pkey, xkey = jax.random.split(key)

    # small config consistent with the module's constructor
    num_features, num_funnel, num_ff, num_experts, bottleneck_dim = 32, 3, 2, 8, 8
    params = init_unet_tff(pkey, num_features, num_funnel, num_ff,
                           num_experts, bottleneck_dim)

    B, T = 2, 4
    x = jax.random.normal(xkey, (B, T, num_features), jnp.float32)

    fwd = jax.jit(lambda inp: unet_tff_forward(params, inp))
    y = jax.block_until_ready(fwd(x))

    # decoder has num_funnel layers; tokens grow by T at each decoder step
    assert y.shape == (B, (num_funnel + 1) * T, num_features), y.shape
    assert bool(jnp.all(jnp.isfinite(y)))
    print("KERNEL_OK")
</pallas_src>

<mosaic_0001>
module attributes {stable_mosaic.version = 11 : i64} {
  func.func @_linear_swiglu_kernel(%arg0: i32, %arg1: memref<16x128xbf16, #tpu.memory_space<vmem>>, %arg2: memref<128x128xbf16, #tpu.memory_space<vmem>>, %arg3: memref<1x128xf32, #tpu.memory_space<vmem>>, %arg4: memref<128x128xbf16, #tpu.memory_space<vmem>>, %arg5: memref<1x128xf32, #tpu.memory_space<vmem>>, %arg6: memref<128x128xbf16, #tpu.memory_space<vmem>>, %arg7: memref<1x128xf32, #tpu.memory_space<vmem>>, %arg8: memref<16x128xbf16, #tpu.memory_space<vmem>>) attributes {dimension_semantics = [#tpu.dimension_semantics<parallel>], iteration_bounds = array<i64: 1>, scalar_prefetch = 0 : i64, scratch_operands = 0 : i64, tpu.core_type = #tpu.core_type<tc>, window_params = [{transform_indices = @transform_0, window_bounds = array<i64: 16, 128>}, {pipeline_mode = #tpu.pipeline_mode<synchronous>, transform_indices = @transform_1, window_bounds = array<i64: 128, 128>}, {pipeline_mode = #tpu.pipeline_mode<synchronous>, transform_indices = @transform_2, window_bounds = array<i64: 1, 128>}, {pipeline_mode = #tpu.pipeline_mode<synchronous>, transform_indices = @transform_3, window_bounds = array<i64: 128, 128>}, {pipeline_mode = #tpu.pipeline_mode<synchronous>, transform_indices = @transform_4, window_bounds = array<i64: 1, 128>}, {pipeline_mode = #tpu.pipeline_mode<synchronous>, transform_indices = @transform_5, window_bounds = array<i64: 128, 128>}, {pipeline_mode = #tpu.pipeline_mode<synchronous>, transform_indices = @transform_6, window_bounds = array<i64: 1, 128>}, {transform_indices = @transform_7, window_bounds = array<i64: 16, 128>}]} {
    %c0 = arith.constant 0 : index
    %c0_0 = arith.constant 0 : index
    %0 = vector.load %arg1[%c0, %c0_0] : memref<16x128xbf16, #tpu.memory_space<vmem>>, vector<16x128xbf16>
    %c0_1 = arith.constant 0 : index
    %c0_2 = arith.constant 0 : index
    %1 = vector.load %arg2[%c0_1, %c0_2] : memref<128x128xbf16, #tpu.memory_space<vmem>>, vector<128x128xbf16>
    %cst = arith.constant dense<0.000000e+00> : vector<16x128xf32>
    %2 = tpu.matmul %0, %1, %cst {dimension_numbers = #tpu.dot_dimension_numbers<[1], [0], [0], [1], [0, 0, 1, 1], [], []>} : vector<16x128xbf16>, vector<128x128xbf16>, vector<16x128xf32> -> vector<16x128xf32>
    %c0_3 = arith.constant 0 : index
    %c0_4 = arith.constant 0 : index
    %3 = vector.load %arg3[%c0_3, %c0_4] : memref<1x128xf32, #tpu.memory_space<vmem>>, vector<1x128xf32>
    %4 = vector.broadcast %3 : vector<1x128xf32> to vector<16x128xf32>
    %5 = arith.addf %2, %4 : vector<16x128xf32>
    %6 = arith.truncf %5 : vector<16x128xf32> to vector<16x128xbf16>
    %c0_5 = arith.constant 0 : index
    %c0_6 = arith.constant 0 : index
    %7 = vector.load %arg4[%c0_5, %c0_6] : memref<128x128xbf16, #tpu.memory_space<vmem>>, vector<128x128xbf16>
    %cst_7 = arith.constant dense<0.000000e+00> : vector<16x128xf32>
    %8 = tpu.matmul %6, %7, %cst_7 {dimension_numbers = #tpu.dot_dimension_numbers<[1], [0], [0], [1], [0, 0, 1, 1], [], []>} : vector<16x128xbf16>, vector<128x128xbf16>, vector<16x128xf32> -> vector<16x128xf32>
    %c0_8 = arith.constant 0 : index
    %c0_9 = arith.constant 0 : index
    %9 = vector.load %arg5[%c0_8, %c0_9] : memref<1x128xf32, #tpu.memory_space<vmem>>, vector<1x128xf32>
    %10 = vector.broadcast %9 : vector<1x128xf32> to vector<16x128xf32>
    %11 = arith.addf %8, %10 : vector<16x128xf32>
    %c0_10 = arith.constant 0 : index
    %c0_11 = arith.constant 0 : index
    %12 = vector.load %arg6[%c0_10, %c0_11] : memref<128x128xbf16, #tpu.memory_space<vmem>>, vector<128x128xbf16>
    %cst_12 = arith.constant dense<0.000000e+00> : vector<16x128xf32>
    %13 = tpu.matmul %6, %12, %cst_12 {dimension_numbers = #tpu.dot_dimension_numbers<[1], [0], [0], [1], [0, 0, 1, 1], [], []>} : vector<16x128xbf16>, vector<128x128xbf16>, vector<16x128xf32> -> vector<16x128xf32>
    %c0_13 = arith.constant 0 : index
    %c0_14 = arith.constant 0 : index
    %14 = vector.load %arg7[%c0_13, %c0_14] : memref<1x128xf32, #tpu.memory_space<vmem>>, vector<1x128xf32>
    %15 = vector.broadcast %14 : vector<1x128xf32> to vector<16x128xf32>
    %16 = arith.addf %13, %15 : vector<16x128xf32>
    %17 = arith.negf %11 : vector<16x128xf32>
    %18 = math.exp %17 : vector<16x128xf32>
    %cst_15 = arith.constant 1.000000e+00 : f32
    %19 = vector.broadcast %cst_15 : f32 to vector<16x128xf32>
    %20 = arith.addf %19, %18 : vector<16x128xf32>
    %21 = arith.divf %19, %20 : vector<16x128xf32>
    %22 = arith.mulf %11, %21 : vector<16x128xf32>
    %23 = arith.mulf %22, %16 : vector<16x128xf32>
    %24 = arith.truncf %23 : vector<16x128xf32> to vector<16x128xbf16>
    %c0_16 = arith.constant 0 : index
    %c0_17 = arith.constant 0 : index
    %25 = vector.load %arg8[%c0_16, %c0_17] : memref<16x128xbf16, #tpu.memory_space<vmem>>, vector<16x128xbf16>
    tpu.vector_store %arg8[%c0_16, %c0_17], %24 {strides = array<i32>} : memref<16x128xbf16, #tpu.memory_space<vmem>>, vector<16x128xbf16>,
    return
  }
  func.func @transform_0(%arg0: i32) -> (i32, i32) {
    %c0_i32 = arith.constant 0 : i32
    %c0_i32_0 = arith.constant 0 : i32
    return %arg0, %c0_i32 : i32, i32
  }
  func.func @transform_1(%arg0: i32) -> (i32, i32) {
    %c0_i32 = arith.constant 0 : i32
    %c0_i32_0 = arith.constant 0 : i32
    %c0_i32_1 = arith.constant 0 : i32
    return %c0_i32, %c0_i32_0 : i32, i32
  }
  func.func @transform_2(%arg0: i32) -> (i32, i32) {
    %c0_i32 = arith.constant 0 : i32
    %c0_i32_0 = arith.constant 0 : i32
    %c0_i32_1 = arith.constant 0 : i32
    return %c0_i32, %c0_i32_0 : i32, i32
  }
  func.func @transform_3(%arg0: i32) -> (i32, i32) {
    %c0_i32 = arith.constant 0 : i32
    %c0_i32_0 = arith.constant 0 : i32
    %c0_i32_1 = arith.constant 0 : i32
    return %c0_i32, %c0_i32_0 : i32, i32
  }
  func.func @transform_4(%arg0: i32) -> (i32, i32) {
    %c0_i32 = arith.constant 0 : i32
    %c0_i32_0 = arith.constant 0 : i32
    %c0_i32_1 = arith.constant 0 : i32
    return %c0_i32, %c0_i32_0 : i32, i32
  }
  func.func @transform_5(%arg0: i32) -> (i32, i32) {
    %c0_i32 = arith.constant 0 : i32
    %c0_i32_0 = arith.constant 0 : i32
    %c0_i32_1 = arith.constant 0 : i32
    return %c0_i32, %c0_i32_0 : i32, i32
  }
  func.func @transform_6(%arg0: i32) -> (i32, i32) {
    %c0_i32 = arith.constant 0 : i32
    %c0_i32_0 = arith.constant 0 : i32
    %c0_i32_1 = arith.constant 0 : i32
    return %c0_i32, %c0_i32_0 : i32, i32
  }
  func.func @transform_7(%arg0: i32) -> (i32, i32) {
    %c0_i32 = arith.constant 0 : i32
    %c0_i32_0 = arith.constant 0 : i32
    return %arg0, %c0_i32 : i32, i32
  }
}

module attributes {stable_mosaic.version = 11 : i64} {
  func.func @_moe_kernel(%arg0: i32, %arg1: i32, %arg2: memref<16x128xbf16, #tpu.memory_space<vmem>>, %arg3: memref<1x128x128xbf16, #tpu.memory_space<vmem>>, %arg4: memref<1x128x128xbf16, #tpu.memory_space<vmem>>, %arg5: memref<1x128x128xbf16, #tpu.memory_space<vmem>>, %arg6: memref<1x16x1xf32, #tpu.memory_space<vmem>>, %arg7: memref<128x128xbf16, #tpu.memory_space<vmem>>, %arg8: memref<128x128xbf16, #tpu.memory_space<vmem>>, %arg9: memref<128x128xbf16, #tpu.memory_space<vmem>>, %arg10: memref<16x128xbf16, #tpu.memory_space<vmem>>, %arg11: memref<16x128xf32, #tpu.memory_space<vmem>>) attributes {dimension_semantics = [#tpu.dimension_semantics<parallel>, #tpu.dimension_semantics<arbitrary>], iteration_bounds = array<i64: 1, 8>, scalar_prefetch = 0 : i64, scratch_operands = 1 : i64, tpu.core_type = #tpu.core_type<tc>, window_params = [{transform_indices = @transform_0, window_bounds = array<i64: 16, 128>}, {transform_indices = @transform_1, window_bounds = array<i64: 1, 128, 128>}, {transform_indices = @transform_2, window_bounds = array<i64: 1, 128, 128>}, {transform_indices = @transform_3, window_bounds = array<i64: 1, 128, 128>}, {transform_indices = @transform_4, window_bounds = array<i64: 1, 16, 1>}, {pipeline_mode = #tpu.pipeline_mode<synchronous>, transform_indices = @transform_5, window_bounds = array<i64: 128, 128>}, {pipeline_mode = #tpu.pipeline_mode<synchronous>, transform_indices = @transform_6, window_bounds = array<i64: 128, 128>}, {pipeline_mode = #tpu.pipeline_mode<synchronous>, transform_indices = @transform_7, window_bounds = array<i64: 128, 128>}, {transform_indices = @transform_8, window_bounds = array<i64: 16, 128>}]} {
    %c0 = arith.constant 0 : index
    %c0_0 = arith.constant 0 : index
    %0 = vector.load %arg2[%c0, %c0_0] : memref<16x128xbf16, #tpu.memory_space<vmem>>, vector<16x128xbf16>
    %c0_i32 = arith.constant 0 : i32
    %1 = arith.cmpi eq, %arg1, %c0_i32 : i32
    %2 = arith.extui %1 : i1 to i32
    %c0_i32_1 = arith.constant 0 : i32
    %3 = arith.cmpi ne, %2, %c0_i32_1 : i32
    scf.if %3 {
      %c0_22 = arith.constant 0 : index
      %c0_23 = arith.constant 0 : index
      %31 = vector.load %arg7[%c0_22, %c0_23] : memref<128x128xbf16, #tpu.memory_space<vmem>>, vector<128x128xbf16>
      %cst_24 = arith.constant dense<0.000000e+00> : vector<16x128xf32>
      %32 = tpu.matmul %0, %31, %cst_24 {dimension_numbers = #tpu.dot_dimension_numbers<[1], [0], [0], [1], [0, 0, 1, 1], [], []>} : vector<16x128xbf16>, vector<128x128xbf16>, vector<16x128xf32> -> vector<16x128xf32>
      %c0_25 = arith.constant 0 : index
      %c0_26 = arith.constant 0 : index
      %33 = vector.load %arg8[%c0_25, %c0_26] : memref<128x128xbf16, #tpu.memory_space<vmem>>, vector<128x128xbf16>
      %cst_27 = arith.constant dense<0.000000e+00> : vector<16x128xf32>
      %34 = tpu.matmul %0, %33, %cst_27 {dimension_numbers = #tpu.dot_dimension_numbers<[1], [0], [0], [1], [0, 0, 1, 1], [], []>} : vector<16x128xbf16>, vector<128x128xbf16>, vector<16x128xf32> -> vector<16x128xf32>
      %35 = arith.negf %32 : vector<16x128xf32>
      %36 = math.exp %35 : vector<16x128xf32>
      %cst_28 = arith.constant 1.000000e+00 : f32
      %37 = vector.broadcast %cst_28 : f32 to vector<16x128xf32>
      %38 = arith.addf %37, %36 : vector<16x128xf32>
      %39 = arith.divf %37, %38 : vector<16x128xf32>
      %40 = arith.mulf %32, %39 : vector<16x128xf32>
      %41 = arith.mulf %40, %34 : vector<16x128xf32>
      %42 = arith.truncf %41 : vector<16x128xf32> to vector<16x128xbf16>
      %c0_29 = arith.constant 0 : index
      %c0_30 = arith.constant 0 : index
      %43 = vector.load %arg9[%c0_29, %c0_30] : memref<128x128xbf16, #tpu.memory_space<vmem>>, vector<128x128xbf16>
      %cst_31 = arith.constant dense<0.000000e+00> : vector<16x128xf32>
      %44 = tpu.matmul %42, %43, %cst_31 {dimension_numbers = #tpu.dot_dimension_numbers<[1], [0], [0], [1], [0, 0, 1, 1], [], []>} : vector<16x128xbf16>, vector<128x128xbf16>, vector<16x128xf32> -> vector<16x128xf32>
      %c0_32 = arith.constant 0 : index
      %c0_33 = arith.constant 0 : index
      %45 = vector.load %arg11[%c0_32, %c0_33] : memref<16x128xf32, #tpu.memory_space<vmem>>, vector<16x128xf32>
      tpu.vector_store %arg11[%c0_32, %c0_33], %44 {strides = array<i32>} : memref<16x128xf32, #tpu.memory_space<vmem>>, vector<16x128xf32>,
    } else {
    }
    %c0_2 = arith.constant 0 : index
    %c0_3 = arith.constant 0 : index
    %c0_4 = arith.constant 0 : index
    %4 = vector.load %arg3[%c0_2, %c0_3, %c0_4] : memref<1x128x128xbf16, #tpu.memory_space<vmem>>, vector<1x128x128xbf16>
    %5 = vector.shape_cast %4 : vector<1x128x128xbf16> to vector<128x128xbf16>
    %cst = arith.constant dense<0.000000e+00> : vector<16x128xf32>
    %6 = tpu.matmul %0, %5, %cst {dimension_numbers = #tpu.dot_dimension_numbers<[1], [0], [0], [1], [0, 0, 1, 1], [], []>} : vector<16x128xbf16>, vector<128x128xbf16>, vector<16x128xf32> -> vector<16x128xf32>
    %c0_5 = arith.constant 0 : index
    %c0_6 = arith.constant 0 : index
    %c0_7 = arith.constant 0 : index
    %7 = vector.load %arg4[%c0_5, %c0_6, %c0_7] : memref<1x128x128xbf16, #tpu.memory_space<vmem>>, vector<1x128x128xbf16>
    %8 = vector.shape_cast %7 : vector<1x128x128xbf16> to vector<128x128xbf16>
    %cst_8 = arith.constant dense<0.000000e+00> : vector<16x128xf32>
    %9 = tpu.matmul %0, %8, %cst_8 {dimension_numbers = #tpu.dot_dimension_numbers<[1], [0], [0], [1], [0, 0, 1, 1], [], []>} : vector<16x128xbf16>, vector<128x128xbf16>, vector<16x128xf32> -> vector<16x128xf32>
    %10 = arith.negf %6 : vector<16x128xf32>
    %11 = math.exp %10 : vector<16x128xf32>
    %cst_9 = arith.constant 1.000000e+00 : f32
    %12 = vector.broadcast %cst_9 : f32 to vector<16x128xf32>
    %13 = arith.addf %12, %11 : vector<16x128xf32>
    %14 = arith.divf %12, %13 : vector<16x128xf32>
    %15 = arith.mulf %6, %14 : vector<16x128xf32>
    %16 = arith.mulf %15, %9 : vector<16x128xf32>
    %c0_10 = arith.constant 0 : index
    %c0_11 = arith.constant 0 : index
    %c0_12 = arith.constant 0 : index
    %17 = vector.load %arg6[%c0_10, %c0_11, %c0_12] : memref<1x16x1xf32, #tpu.memory_space<vmem>>, vector<1x16x1xf32>
    %18 = vector.shape_cast %17 : vector<1x16x1xf32> to vector<16x1xf32>
    %19 = vector.broadcast %18 : vector<16x1xf32> to vector<16x128xf32>
    %20 = arith.mulf %16, %19 : vector<16x128xf32>
    %21 = arith.truncf %20 : vector<16x128xf32> to vector<16x128xbf16>
    %c0_13 = arith.constant 0 : index
    %c0_14 = arith.constant 0 : index
    %22 = vector.load %arg11[%c0_13, %c0_14] : memref<16x128xf32, #tpu.memory_space<vmem>>, vector<16x128xf32>
    %c0_15 = arith.constant 0 : index
    %c0_16 = arith.constant 0 : index
    %c0_17 = arith.constant 0 : index
    %23 = vector.load %arg5[%c0_15, %c0_16, %c0_17] : memref<1x128x128xbf16, #tpu.memory_space<vmem>>, vector<1x128x128xbf16>
    %24 = vector.shape_cast %23 : vector<1x128x128xbf16> to vector<128x128xbf16>
    %cst_18 = arith.constant dense<0.000000e+00> : vector<16x128xf32>
    %25 = tpu.matmul %21, %24, %cst_18 {dimension_numbers = #tpu.dot_dimension_numbers<[1], [0], [0], [1], [0, 0, 1, 1], [], []>} : vector<16x128xbf16>, vector<128x128xbf16>, vector<16x128xf32> -> vector<16x128xf32>
    %26 = arith.addf %22, %25 : vector<16x128xf32>
    %c0_19 = arith.constant 0 : index
    %c0_20 = arith.constant 0 : index
    %27 = vector.load %arg11[%c0_19, %c0_20] : memref<16x128xf32, #tpu.memory_space<vmem>>, vector<16x128xf32>
    tpu.vector_store %arg11[%c0_19, %c0_20], %26 {strides = array<i32>} : memref<16x128xf32, #tpu.memory_space<vmem>>, vector<16x128xf32>,
    %c7_i32 = arith.constant 7 : i32
    %28 = arith.cmpi eq, %arg1, %c7_i32 : i32
    %29 = arith.extui %28 : i1 to i32
    %c0_i32_21 = arith.constant 0 : i32
    %30 = arith.cmpi ne, %29, %c0_i32_21 : i32
    scf.if %30 {
      %c0_22 = arith.constant 0 : index
      %c0_23 = arith.constant 0 : index
      %31 = vector.load %arg11[%c0_22, %c0_23] : memref<16x128xf32, #tpu.memory_space<vmem>>, vector<16x128xf32>
      %32 = arith.truncf %31 : vector<16x128xf32> to vector<16x128xbf16>
      %c0_24 = arith.constant 0 : index
      %c0_25 = arith.constant 0 : index
      %33 = vector.load %arg10[%c0_24, %c0_25] : memref<16x128xbf16, #tpu.memory_space<vmem>>, vector<16x128xbf16>
      tpu.vector_store %arg10[%c0_24, %c0_25], %32 {strides = array<i32>} : memref<16x128xbf16, #tpu.memory_space<vmem>>, vector<16x128xbf16>,
    } else {
    }
    return
  }
  func.func @transform_0(%arg0: i32, %arg1: i32) -> (i32, i32) {
    %c0_i32 = arith.constant 0 : i32
    %c0_i32_0 = arith.constant 0 : i32
    return %arg0, %c0_i32 : i32, i32
  }
  func.func @transform_1(%arg0: i32, %arg1: i32) -> (i32, i32, i32) {
    %c0_i32 = arith.constant 0 : i32
    %c0_i32_0 = arith.constant 0 : i32
    %c0_i32_1 = arith.constant 0 : i32
    return %arg1, %c0_i32, %c0_i32_0 : i32, i32, i32
  }
  func.func @transform_2(%arg0: i32, %arg1: i32) -> (i32, i32, i32) {
    %c0_i32 = arith.constant 0 : i32
    %c0_i32_0 = arith.constant 0 : i32
    %c0_i32_1 = arith.constant 0 : i32
    return %arg1, %c0_i32, %c0_i32_0 : i32, i32, i32
  }
  func.func @transform_3(%arg0: i32, %arg1: i32) -> (i32, i32, i32) {
    %c0_i32 = arith.constant 0 : i32
    %c0_i32_0 = arith.constant 0 : i32
    %c0_i32_1 = arith.constant 0 : i32
    return %arg1, %c0_i32, %c0_i32_0 : i32, i32, i32
  }
  func.func @transform_4(%arg0: i32, %arg1: i32) -> (i32, i32, i32) {
    %c0_i32 = arith.constant 0 : i32
    %c0_i32_0 = arith.constant 0 : i32
    return %arg1, %arg0, %c0_i32 : i32, i32, i32
  }
  func.func @transform_5(%arg0: i32, %arg1: i32) -> (i32, i32) {
    %c0_i32 = arith.constant 0 : i32
    %c0_i32_0 = arith.constant 0 : i32
    %c0_i32_1 = arith.constant 0 : i32
    return %c0_i32, %c0_i32_0 : i32, i32
  }
  func.func @transform_6(%arg0: i32, %arg1: i32) -> (i32, i32) {
    %c0_i32 = arith.constant 0 : i32
    %c0_i32_0 = arith.constant 0 : i32
    %c0_i32_1 = arith.constant 0 : i32
    return %c0_i32, %c0_i32_0 : i32, i32
  }
  func.func @transform_7(%arg0: i32, %arg1: i32) -> (i32, i32) {
    %c0_i32 = arith.constant 0 : i32
    %c0_i32_0 = arith.constant 0 : i32
    %c0_i32_1 = arith.constant 0 : i32
    return %c0_i32, %c0_i32_0 : i32, i32
  }
  func.func @transform_8(%arg0: i32, %arg1: i32) -> (i32, i32) {
    %c0_i32 = arith.constant 0 : i32
    %c0_i32_0 = arith.constant 0 : i32
    return %arg0, %c0_i32 : i32, i32
  }
}

module attributes {stable_mosaic.version = 11 : i64} {
  func.func @_linear_swiglu_kernel(%arg0: i32, %arg1: memref<16x128xbf16, #tpu.memory_space<vmem>>, %arg2: memref<128x128xbf16, #tpu.memory_space<vmem>>, %arg3: memref<1x128xf32, #tpu.memory_space<vmem>>, %arg4: memref<128x128xbf16, #tpu.memory_space<vmem>>, %arg5: memref<1x128xf32, #tpu.memory_space<vmem>>, %arg6: memref<128x128xbf16, #tpu.memory_space<vmem>>, %arg7: memref<1x128xf32, #tpu.memory_space<vmem>>, %arg8: memref<16x128xbf16, #tpu.memory_space<vmem>>) attributes {dimension_semantics = [#tpu.dimension_semantics<parallel>], iteration_bounds = array<i64: 1>, scalar_prefetch = 0 : i64, scratch_operands = 0 : i64, tpu.core_type = #tpu.core_type<tc>, window_params = [{transform_indices = @transform_0, window_bounds = array<i64: 16, 128>}, {pipeline_mode = #tpu.pipeline_mode<synchronous>, transform_indices = @transform_1, window_bounds = array<i64: 128, 128>}, {pipeline_mode = #tpu.pipeline_mode<synchronous>, transform_indices = @transform_2, window_bounds = array<i64: 1, 128>}, {pipeline_mode = #tpu.pipeline_mode<synchronous>, transform_indices = @transform_3, window_bounds = array<i64: 128, 128>}, {pipeline_mode = #tpu.pipeline_mode<synchronous>, transform_indices = @transform_4, window_bounds = array<i64: 1, 128>}, {pipeline_mode = #tpu.pipeline_mode<synchronous>, transform_indices = @transform_5, window_bounds = array<i64: 128, 128>}, {pipeline_mode = #tpu.pipeline_mode<synchronous>, transform_indices = @transform_6, window_bounds = array<i64: 1, 128>}, {transform_indices = @transform_7, window_bounds = array<i64: 16, 128>}]} {
    %c0 = arith.constant 0 : index
    %c0_0 = arith.constant 0 : index
    %0 = vector.load %arg1[%c0, %c0_0] : memref<16x128xbf16, #tpu.memory_space<vmem>>, vector<16x128xbf16>
    %c0_1 = arith.constant 0 : index
    %c0_2 = arith.constant 0 : index
    %1 = vector.load %arg2[%c0_1, %c0_2] : memref<128x128xbf16, #tpu.memory_space<vmem>>, vector<128x128xbf16>
    %cst = arith.constant dense<0.000000e+00> : vector<16x128xf32>
    %2 = tpu.matmul %0, %1, %cst {dimension_numbers = #tpu.dot_dimension_numbers<[1], [0], [0], [1], [0, 0, 1, 1], [], []>} : vector<16x128xbf16>, vector<128x128xbf16>, vector<16x128xf32> -> vector<16x128xf32>
    %c0_3 = arith.constant 0 : index
    %c0_4 = arith.constant 0 : index
    %3 = vector.load %arg3[%c0_3, %c0_4] : memref<1x128xf32, #tpu.memory_space<vmem>>, vector<1x128xf32>
    %4 = vector.broadcast %3 : vector<1x128xf32> to vector<16x128xf32>
    %5 = arith.addf %2, %4 : vector<16x128xf32>
    %6 = arith.truncf %5 : vector<16x128xf32> to vector<16x128xbf16>
    %c0_5 = arith.constant 0 : index
    %c0_6 = arith.constant 0 : index
    %7 = vector.load %arg4[%c0_5, %c0_6] : memref<128x128xbf16, #tpu.memory_space<vmem>>, vector<128x128xbf16>
    %cst_7 = arith.constant dense<0.000000e+00> : vector<16x128xf32>
    %8 = tpu.matmul %6, %7, %cst_7 {dimension_numbers = #tpu.dot_dimension_numbers<[1], [0], [0], [1], [0, 0, 1, 1], [], []>} : vector<16x128xbf16>, vector<128x128xbf16>, vector<16x128xf32> -> vector<16x128xf32>
    %c0_8 = arith.constant 0 : index
    %c0_9 = arith.constant 0 : index
    %9 = vector.load %arg5[%c0_8, %c0_9] : memref<1x128xf32, #tpu.memory_space<vmem>>, vector<1x128xf32>
    %10 = vector.broadcast %9 : vector<1x128xf32> to vector<16x128xf32>
    %11 = arith.addf %8, %10 : vector<16x128xf32>
    %c0_10 = arith.constant 0 : index
    %c0_11 = arith.constant 0 : index
    %12 = vector.load %arg6[%c0_10, %c0_11] : memref<128x128xbf16, #tpu.memory_space<vmem>>, vector<128x128xbf16>
    %cst_12 = arith.constant dense<0.000000e+00> : vector<16x128xf32>
    %13 = tpu.matmul %6, %12, %cst_12 {dimension_numbers = #tpu.dot_dimension_numbers<[1], [0], [0], [1], [0, 0, 1, 1], [], []>} : vector<16x128xbf16>, vector<128x128xbf16>, vector<16x128xf32> -> vector<16x128xf32>
    %c0_13 = arith.constant 0 : index
    %c0_14 = arith.constant 0 : index
    %14 = vector.load %arg7[%c0_13, %c0_14] : memref<1x128xf32, #tpu.memory_space<vmem>>, vector<1x128xf32>
    %15 = vector.broadcast %14 : vector<1x128xf32> to vector<16x128xf32>
    %16 = arith.addf %13, %15 : vector<16x128xf32>
    %17 = arith.negf %11 : vector<16x128xf32>
    %18 = math.exp %17 : vector<16x128xf32>
    %cst_15 = arith.constant 1.000000e+00 : f32
    %19 = vector.broadcast %cst_15 : f32 to vector<16x128xf32>
    %20 = arith.addf %19, %18 : vector<16x128xf32>
    %21 = arith.divf %19, %20 : vector<16x128xf32>
    %22 = arith.mulf %11, %21 : vector<16x128xf32>
    %23 = arith.mulf %22, %16 : vector<16x128xf32>
    %24 = arith.truncf %23 : vector<16x128xf32> to vector<16x128xbf16>
    %c0_16 = arith.constant 0 : index
    %c0_17 = arith.constant 0 : index
    %25 = vector.load %arg8[%c0_16, %c0_17] : memref<16x128xbf16, #tpu.memory_space<vmem>>, vector<16x128xbf16>
    tpu.vector_store %arg8[%c0_16, %c0_17], %24 {strides = array<i32>} : memref<16x128xbf16, #tpu.memory_space<vmem>>, vector<16x128xbf16>,
    return
  }
  func.func @transform_0(%arg0: i32) -> (i32, i32) {
    %c0_i32 = arith.constant 0 : i32
    %c0_i32_0 = arith.constant 0 : i32
    return %arg0, %c0_i32 : i32, i32
  }
  func.func @transform_1(%arg0: i32) -> (i32, i32) {
    %c0_i32 = arith.constant 0 : i32
    %c0_i32_0 = arith.constant 0 : i32
    %c0_i32_1 = arith.constant 0 : i32
    return %c0_i32, %c0_i32_0 : i32, i32
  }
  func.func @transform_2(%arg0: i32) -> (i32, i32) {
    %c0_i32 = arith.constant 0 : i32
    %c0_i32_0 = arith.constant 0 : i32
    %c0_i32_1 = arith.constant 0 : i32
    return %c0_i32, %c0_i32_0 : i32, i32
  }
  func.func @transform_3(%arg0: i32) -> (i32, i32) {
    %c0_i32 = arith.constant 0 : i32
    %c0_i32_0 = arith.constant 0 : i32
    %c0_i32_1 = arith.constant 0 : i32
    return %c0_i32, %c0_i32_0 : i32, i32
  }
  func.func @transform_4(%arg0: i32) -> (i32, i32) {
    %c0_i32 = arith.constant 0 : i32
    %c0_i32_0 = arith.constant 0 : i32
    %c0_i32_1 = arith.constant 0 : i32
    return %c0_i32, %c0_i32_0 : i32, i32
  }
  func.func @transform_5(%arg0: i32) -> (i32, i32) {
    %c0_i32 = arith.constant 0 : i32
    %c0_i32_0 = arith.constant 0 : i32
    %c0_i32_1 = arith.constant 0 : i32
    return %c0_i32, %c0_i32_0 : i32, i32
  }
  func.func @transform_6(%arg0: i32) -> (i32, i32) {
    %c0_i32 = arith.constant 0 : i32
    %c0_i32_0 = arith.constant 0 : i32
    %c0_i32_1 = arith.constant 0 : i32
    return %c0_i32, %c0_i32_0 : i32, i32
  }
  func.func @transform_7(%arg0: i32) -> (i32, i32) {
    %c0_i32 = arith.constant 0 : i32
    %c0_i32_0 = arith.constant 0 : i32
    return %arg0, %c0_i32 : i32, i32
  }
}

module attributes {stable_mosaic.version = 11 : i64} {
  func.func @_moe_kernel(%arg0: i32, %arg1: i32, %arg2: memref<16x128xbf16, #tpu.memory_space<vmem>>, %arg3: memref<1x128x128xbf16, #tpu.memory_space<vmem>>, %arg4: memref<1x128x128xbf16, #tpu.memory_space<vmem>>, %arg5: memref<1x128x128xbf16, #tpu.memory_space<vmem>>, %arg6: memref<1x16x1xf32, #tpu.memory_space<vmem>>, %arg7: memref<128x128xbf16, #tpu.memory_space<vmem>>, %arg8: memref<128x128xbf16, #tpu.memory_space<vmem>>, %arg9: memref<128x128xbf16, #tpu.memory_space<vmem>>, %arg10: memref<16x128xbf16, #tpu.memory_space<vmem>>, %arg11: memref<16x128xf32, #tpu.memory_space<vmem>>) attributes {dimension_semantics = [#tpu.dimension_semantics<parallel>, #tpu.dimension_semantics<arbitrary>], iteration_bounds = array<i64: 1, 8>, scalar_prefetch = 0 : i64, scratch_operands = 1 : i64, tpu.core_type = #tpu.core_type<tc>, window_params = [{transform_indices = @transform_0, window_bounds = array<i64: 16, 128>}, {transform_indices = @transform_1, window_bounds = array<i64: 1, 128, 128>}, {transform_indices = @transform_2, window_bounds = array<i64: 1, 128, 128>}, {transform_indices = @transform_3, window_bounds = array<i64: 1, 128, 128>}, {transform_indices = @transform_4, window_bounds = array<i64: 1, 16, 1>}, {pipeline_mode = #tpu.pipeline_mode<synchronous>, transform_indices = @transform_5, window_bounds = array<i64: 128, 128>}, {pipeline_mode = #tpu.pipeline_mode<synchronous>, transform_indices = @transform_6, window_bounds = array<i64: 128, 128>}, {pipeline_mode = #tpu.pipeline_mode<synchronous>, transform_indices = @transform_7, window_bounds = array<i64: 128, 128>}, {transform_indices = @transform_8, window_bounds = array<i64: 16, 128>}]} {
    %c0 = arith.constant 0 : index
    %c0_0 = arith.constant 0 : index
    %0 = vector.load %arg2[%c0, %c0_0] : memref<16x128xbf16, #tpu.memory_space<vmem>>, vector<16x128xbf16>
    %c0_i32 = arith.constant 0 : i32
    %1 = arith.cmpi eq, %arg1, %c0_i32 : i32
    %2 = arith.extui %1 : i1 to i32
    %c0_i32_1 = arith.constant 0 : i32
    %3 = arith.cmpi ne, %2, %c0_i32_1 : i32
    scf.if %3 {
      %c0_22 = arith.constant 0 : index
      %c0_23 = arith.constant 0 : index
      %31 = vector.load %arg7[%c0_22, %c0_23] : memref<128x128xbf16, #tpu.memory_space<vmem>>, vector<128x128xbf16>
      %cst_24 = arith.constant dense<0.000000e+00> : vector<16x128xf32>
      %32 = tpu.matmul %0, %31, %cst_24 {dimension_numbers = #tpu.dot_dimension_numbers<[1], [0], [0], [1], [0, 0, 1, 1], [], []>} : vector<16x128xbf16>, vector<128x128xbf16>, vector<16x128xf32> -> vector<16x128xf32>
      %c0_25 = arith.constant 0 : index
      %c0_26 = arith.constant 0 : index
      %33 = vector.load %arg8[%c0_25, %c0_26] : memref<128x128xbf16, #tpu.memory_space<vmem>>, vector<128x128xbf16>
      %cst_27 = arith.constant dense<0.000000e+00> : vector<16x128xf32>
      %34 = tpu.matmul %0, %33, %cst_27 {dimension_numbers = #tpu.dot_dimension_numbers<[1], [0], [0], [1], [0, 0, 1, 1], [], []>} : vector<16x128xbf16>, vector<128x128xbf16>, vector<16x128xf32> -> vector<16x128xf32>
      %35 = arith.negf %32 : vector<16x128xf32>
      %36 = math.exp %35 : vector<16x128xf32>
      %cst_28 = arith.constant 1.000000e+00 : f32
      %37 = vector.broadcast %cst_28 : f32 to vector<16x128xf32>
      %38 = arith.addf %37, %36 : vector<16x128xf32>
      %39 = arith.divf %37, %38 : vector<16x128xf32>
      %40 = arith.mulf %32, %39 : vector<16x128xf32>
      %41 = arith.mulf %40, %34 : vector<16x128xf32>
      %42 = arith.truncf %41 : vector<16x128xf32> to vector<16x128xbf16>
      %c0_29 = arith.constant 0 : index
      %c0_30 = arith.constant 0 : index
      %43 = vector.load %arg9[%c0_29, %c0_30] : memref<128x128xbf16, #tpu.memory_space<vmem>>, vector<128x128xbf16>
      %cst_31 = arith.constant dense<0.000000e+00> : vector<16x128xf32>
      %44 = tpu.matmul %42, %43, %cst_31 {dimension_numbers = #tpu.dot_dimension_numbers<[1], [0], [0], [1], [0, 0, 1, 1], [], []>} : vector<16x128xbf16>, vector<128x128xbf16>, vector<16x128xf32> -> vector<16x128xf32>
      %c0_32 = arith.constant 0 : index
      %c0_33 = arith.constant 0 : index
      %45 = vector.load %arg11[%c0_32, %c0_33] : memref<16x128xf32, #tpu.memory_space<vmem>>, vector<16x128xf32>
      tpu.vector_store %arg11[%c0_32, %c0_33], %44 {strides = array<i32>} : memref<16x128xf32, #tpu.memory_space<vmem>>, vector<16x128xf32>,
    } else {
    }
    %c0_2 = arith.constant 0 : index
    %c0_3 = arith.constant 0 : index
    %c0_4 = arith.constant 0 : index
    %4 = vector.load %arg3[%c0_2, %c0_3, %c0_4] : memref<1x128x128xbf16, #tpu.memory_space<vmem>>, vector<1x128x128xbf16>
    %5 = vector.shape_cast %4 : vector<1x128x128xbf16> to vector<128x128xbf16>
    %cst = arith.constant dense<0.000000e+00> : vector<16x128xf32>
    %6 = tpu.matmul %0, %5, %cst {dimension_numbers = #tpu.dot_dimension_numbers<[1], [0], [0], [1], [0, 0, 1, 1], [], []>} : vector<16x128xbf16>, vector<128x128xbf16>, vector<16x128xf32> -> vector<16x128xf32>
    %c0_5 = arith.constant 0 : index
    %c0_6 = arith.constant 0 : index
    %c0_7 = arith.constant 0 : index
    %7 = vector.load %arg4[%c0_5, %c0_6, %c0_7] : memref<1x128x128xbf16, #tpu.memory_space<vmem>>, vector<1x128x128xbf16>
    %8 = vector.shape_cast %7 : vector<1x128x128xbf16> to vector<128x128xbf16>
    %cst_8 = arith.constant dense<0.000000e+00> : vector<16x128xf32>
    %9 = tpu.matmul %0, %8, %cst_8 {dimension_numbers = #tpu.dot_dimension_numbers<[1], [0], [0], [1], [0, 0, 1, 1], [], []>} : vector<16x128xbf16>, vector<128x128xbf16>, vector<16x128xf32> -> vector<16x128xf32>
    %10 = arith.negf %6 : vector<16x128xf32>
    %11 = math.exp %10 : vector<16x128xf32>
    %cst_9 = arith.constant 1.000000e+00 : f32
    %12 = vector.broadcast %cst_9 : f32 to vector<16x128xf32>
    %13 = arith.addf %12, %11 : vector<16x128xf32>
    %14 = arith.divf %12, %13 : vector<16x128xf32>
    %15 = arith.mulf %6, %14 : vector<16x128xf32>
    %16 = arith.mulf %15, %9 : vector<16x128xf32>
    %c0_10 = arith.constant 0 : index
    %c0_11 = arith.constant 0 : index
    %c0_12 = arith.constant 0 : index
    %17 = vector.load %arg6[%c0_10, %c0_11, %c0_12] : memref<1x16x1xf32, #tpu.memory_space<vmem>>, vector<1x16x1xf32>
    %18 = vector.shape_cast %17 : vector<1x16x1xf32> to vector<16x1xf32>
    %19 = vector.broadcast %18 : vector<16x1xf32> to vector<16x128xf32>
    %20 = arith.mulf %16, %19 : vector<16x128xf32>
    %21 = arith.truncf %20 : vector<16x128xf32> to vector<16x128xbf16>
    %c0_13 = arith.constant 0 : index
    %c0_14 = arith.constant 0 : index
    %22 = vector.load %arg11[%c0_13, %c0_14] : memref<16x128xf32, #tpu.memory_space<vmem>>, vector<16x128xf32>
    %c0_15 = arith.constant 0 : index
    %c0_16 = arith.constant 0 : index
    %c0_17 = arith.constant 0 : index
    %23 = vector.load %arg5[%c0_15, %c0_16, %c0_17] : memref<1x128x128xbf16, #tpu.memory_space<vmem>>, vector<1x128x128xbf16>
    %24 = vector.shape_cast %23 : vector<1x128x128xbf16> to vector<128x128xbf16>
    %cst_18 = arith.constant dense<0.000000e+00> : vector<16x128xf32>
    %25 = tpu.matmul %21, %24, %cst_18 {dimension_numbers = #tpu.dot_dimension_numbers<[1], [0], [0], [1], [0, 0, 1, 1], [], []>} : vector<16x128xbf16>, vector<128x128xbf16>, vector<16x128xf32> -> vector<16x128xf32>
    %26 = arith.addf %22, %25 : vector<16x128xf32>
    %c0_19 = arith.constant 0 : index
    %c0_20 = arith.constant 0 : index
    %27 = vector.load %arg11[%c0_19, %c0_20] : memref<16x128xf32, #tpu.memory_space<vmem>>, vector<16x128xf32>
    tpu.vector_store %arg11[%c0_19, %c0_20], %26 {strides = array<i32>} : memref<16x128xf32, #tpu.memory_space<vmem>>, vector<16x128xf32>,
    %c7_i32 = arith.constant 7 : i32
    %28 = arith.cmpi eq, %arg1, %c7_i32 : i32
    %29 = arith.extui %28 : i1 to i32
    %c0_i32_21 = arith.constant 0 : i32
    %30 = arith.cmpi ne, %29, %c0_i32_21 : i32
    scf.if %30 {
      %c0_22 = arith.constant 0 : index
      %c0_23 = arith.constant 0 : index
      %31 = vector.load %arg11[%c0_22, %c0_23] : memref<16x128xf32, #tpu.memory_space<vmem>>, vector<16x128xf32>
      %32 = arith.truncf %31 : vector<16x128xf32> to vector<16x128xbf16>
      %c0_24 = arith.constant 0 : index
      %c0_25 = arith.constant 0 : index
      %33 = vector.load %arg10[%c0_24, %c0_25] : memref<16x128xbf16, #tpu.memory_space<vmem>>, vector<16x128xbf16>
      tpu.vector_store %arg10[%c0_24, %c0_25], %32 {strides = array<i32>} : memref<16x128xbf16, #tpu.memory_space<vmem>>, vector<16x128xbf16>,
    } else {
    }
    return
  }
  func.func @transform_0(%arg0: i32, %arg1: i32) -> (i32, i32) {
    %c0_i32 = arith.constant 0 : i32
    %c0_i32_0 = arith.constant 0 : i32
    return %arg0, %c0_i32 : i32, i32
  }
  func.func @transform_1(%arg0: i32, %arg1: i32) -> (i32, i32, i32) {
    %c0_i32 = arith.constant 0 : i32
    %c0_i32_0 = arith.constant 0 : i32
    %c0_i32_1 = arith.constant 0 : i32
    return %arg1, %c0_i32, %c0_i32_0 : i32, i32, i32
  }
  func.func @transform_2(%arg0: i32, %arg1: i32) -> (i32, i32, i32) {
    %c0_i32 = arith.constant 0 : i32
    %c0_i32_0 = arith.constant 0 : i32
    %c0_i32_1 = arith.constant 0 : i32
    return %arg1, %c0_i32, %c0_i32_0 : i32, i32, i32
  }
  func.func @transform_3(%arg0: i32, %arg1: i32) -> (i32, i32, i32) {
    %c0_i32 = arith.constant 0 : i32
    %c0_i32_0 = arith.constant 0 : i32
    %c0_i32_1 = arith.constant 0 : i32
    return %arg1, %c0_i32, %c0_i32_0 : i32, i32, i32
  }
  func.func @transform_4(%arg0: i32, %arg1: i32) -> (i32, i32, i32) {
    %c0_i32 = arith.constant 0 : i32
    %c0_i32_0 = arith.constant 0 : i32
    return %arg1, %arg0, %c0_i32 : i32, i32, i32
  }
  func.func @transform_5(%arg0: i32, %arg1: i32) -> (i32, i32) {
    %c0_i32 = arith.constant 0 : i32
    %c0_i32_0 = arith.constant 0 : i32
    %c0_i32_1 = arith.constant 0 : i32
    return %c0_i32, %c0_i32_0 : i32, i32
  }
  func.func @transform_6(%arg0: i32, %arg1: i32) -> (i32, i32) {
    %c0_i32 = arith.constant 0 : i32
    %c0_i32_0 = arith.constant 0 : i32
    %c0_i32_1 = arith.constant 0 : i32
    return %c0_i32, %c0_i32_0 : i32, i32
  }
  func.func @transform_7(%arg0: i32, %arg1: i32) -> (i32, i32) {
    %c0_i32 = arith.constant 0 : i32
    %c0_i32_0 = arith.constant 0 : i32
    %c0_i32_1 = arith.constant 0 : i32
    return %c0_i32, %c0_i32_0 : i32, i32
  }
  func.func @transform_8(%arg0: i32, %arg1: i32) -> (i32, i32) {
    %c0_i32 = arith.constant 0 : i32
    %c0_i32_0 = arith.constant 0 : i32
    return %arg0, %c0_i32 : i32, i32
  }
}

module attributes {stable_mosaic.version = 11 : i64} {
  func.func @_linear_swiglu_kernel(%arg0: i32, %arg1: memref<32x128xbf16, #tpu.memory_space<vmem>>, %arg2: memref<128x128xbf16, #tpu.memory_space<vmem>>, %arg3: memref<1x128xf32, #tpu.memory_space<vmem>>, %arg4: memref<128x128xbf16, #tpu.memory_space<vmem>>, %arg5: memref<1x128xf32, #tpu.memory_space<vmem>>, %arg6: memref<128x128xbf16, #tpu.memory_space<vmem>>, %arg7: memref<1x128xf32, #tpu.memory_space<vmem>>, %arg8: memref<32x128xbf16, #tpu.memory_space<vmem>>) attributes {dimension_semantics = [#tpu.dimension_semantics<parallel>], iteration_bounds = array<i64: 1>, scalar_prefetch = 0 : i64, scratch_operands = 0 : i64, tpu.core_type = #tpu.core_type<tc>, window_params = [{transform_indices = @transform_0, window_bounds = array<i64: 32, 128>}, {pipeline_mode = #tpu.pipeline_mode<synchronous>, transform_indices = @transform_1, window_bounds = array<i64: 128, 128>}, {pipeline_mode = #tpu.pipeline_mode<synchronous>, transform_indices = @transform_2, window_bounds = array<i64: 1, 128>}, {pipeline_mode = #tpu.pipeline_mode<synchronous>, transform_indices = @transform_3, window_bounds = array<i64: 128, 128>}, {pipeline_mode = #tpu.pipeline_mode<synchronous>, transform_indices = @transform_4, window_bounds = array<i64: 1, 128>}, {pipeline_mode = #tpu.pipeline_mode<synchronous>, transform_indices = @transform_5, window_bounds = array<i64: 128, 128>}, {pipeline_mode = #tpu.pipeline_mode<synchronous>, transform_indices = @transform_6, window_bounds = array<i64: 1, 128>}, {transform_indices = @transform_7, window_bounds = array<i64: 32, 128>}]} {
    %c0 = arith.constant 0 : index
    %c0_0 = arith.constant 0 : index
    %0 = vector.load %arg1[%c0, %c0_0] : memref<32x128xbf16, #tpu.memory_space<vmem>>, vector<32x128xbf16>
    %c0_1 = arith.constant 0 : index
    %c0_2 = arith.constant 0 : index
    %1 = vector.load %arg2[%c0_1, %c0_2] : memref<128x128xbf16, #tpu.memory_space<vmem>>, vector<128x128xbf16>
    %cst = arith.constant dense<0.000000e+00> : vector<32x128xf32>
    %2 = tpu.matmul %0, %1, %cst {dimension_numbers = #tpu.dot_dimension_numbers<[1], [0], [0], [1], [0, 0, 1, 1], [], []>} : vector<32x128xbf16>, vector<128x128xbf16>, vector<32x128xf32> -> vector<32x128xf32>
    %c0_3 = arith.constant 0 : index
    %c0_4 = arith.constant 0 : index
    %3 = vector.load %arg3[%c0_3, %c0_4] : memref<1x128xf32, #tpu.memory_space<vmem>>, vector<1x128xf32>
    %4 = vector.broadcast %3 : vector<1x128xf32> to vector<32x128xf32>
    %5 = arith.addf %2, %4 : vector<32x128xf32>
    %6 = arith.truncf %5 : vector<32x128xf32> to vector<32x128xbf16>
    %c0_5 = arith.constant 0 : index
    %c0_6 = arith.constant 0 : index
    %7 = vector.load %arg4[%c0_5, %c0_6] : memref<128x128xbf16, #tpu.memory_space<vmem>>, vector<128x128xbf16>
    %cst_7 = arith.constant dense<0.000000e+00> : vector<32x128xf32>
    %8 = tpu.matmul %6, %7, %cst_7 {dimension_numbers = #tpu.dot_dimension_numbers<[1], [0], [0], [1], [0, 0, 1, 1], [], []>} : vector<32x128xbf16>, vector<128x128xbf16>, vector<32x128xf32> -> vector<32x128xf32>
    %c0_8 = arith.constant 0 : index
    %c0_9 = arith.constant 0 : index
    %9 = vector.load %arg5[%c0_8, %c0_9] : memref<1x128xf32, #tpu.memory_space<vmem>>, vector<1x128xf32>
    %10 = vector.broadcast %9 : vector<1x128xf32> to vector<32x128xf32>
    %11 = arith.addf %8, %10 : vector<32x128xf32>
    %c0_10 = arith.constant 0 : index
    %c0_11 = arith.constant 0 : index
    %12 = vector.load %arg6[%c0_10, %c0_11] : memref<128x128xbf16, #tpu.memory_space<vmem>>, vector<128x128xbf16>
    %cst_12 = arith.constant dense<0.000000e+00> : vector<32x128xf32>
    %13 = tpu.matmul %6, %12, %cst_12 {dimension_numbers = #tpu.dot_dimension_numbers<[1], [0], [0], [1], [0, 0, 1, 1], [], []>} : vector<32x128xbf16>, vector<128x128xbf16>, vector<32x128xf32> -> vector<32x128xf32>
    %c0_13 = arith.constant 0 : index
    %c0_14 = arith.constant 0 : index
    %14 = vector.load %arg7[%c0_13, %c0_14] : memref<1x128xf32, #tpu.memory_space<vmem>>, vector<1x128xf32>
    %15 = vector.broadcast %14 : vector<1x128xf32> to vector<32x128xf32>
    %16 = arith.addf %13, %15 : vector<32x128xf32>
    %17 = arith.negf %11 : vector<32x128xf32>
    %18 = math.exp %17 : vector<32x128xf32>
    %cst_15 = arith.constant 1.000000e+00 : f32
    %19 = vector.broadcast %cst_15 : f32 to vector<32x128xf32>
    %20 = arith.addf %19, %18 : vector<32x128xf32>
    %21 = arith.divf %19, %20 : vector<32x128xf32>
    %22 = arith.mulf %11, %21 : vector<32x128xf32>
    %23 = arith.mulf %22, %16 : vector<32x128xf32>
    %24 = arith.truncf %23 : vector<32x128xf32> to vector<32x128xbf16>
    %c0_16 = arith.constant 0 : index
    %c0_17 = arith.constant 0 : index
    %25 = vector.load %arg8[%c0_16, %c0_17] : memref<32x128xbf16, #tpu.memory_space<vmem>>, vector<32x128xbf16>
    tpu.vector_store %arg8[%c0_16, %c0_17], %24 {strides = array<i32>} : memref<32x128xbf16, #tpu.memory_space<vmem>>, vector<32x128xbf16>,
    return
  }
  func.func @transform_0(%arg0: i32) -> (i32, i32) {
    %c0_i32 = arith.constant 0 : i32
    %c0_i32_0 = arith.constant 0 : i32
    return %arg0, %c0_i32 : i32, i32
  }
  func.func @transform_1(%arg0: i32) -> (i32, i32) {
    %c0_i32 = arith.constant 0 : i32
    %c0_i32_0 = arith.constant 0 : i32
    %c0_i32_1 = arith.constant 0 : i32
    return %c0_i32, %c0_i32_0 : i32, i32
  }
  func.func @transform_2(%arg0: i32) -> (i32, i32) {
    %c0_i32 = arith.constant 0 : i32
    %c0_i32_0 = arith.constant 0 : i32
    %c0_i32_1 = arith.constant 0 : i32
    return %c0_i32, %c0_i32_0 : i32, i32
  }
  func.func @transform_3(%arg0: i32) -> (i32, i32) {
    %c0_i32 = arith.constant 0 : i32
    %c0_i32_0 = arith.constant 0 : i32
    %c0_i32_1 = arith.constant 0 : i32
    return %c0_i32, %c0_i32_0 : i32, i32
  }
  func.func @transform_4(%arg0: i32) -> (i32, i32) {
    %c0_i32 = arith.constant 0 : i32
    %c0_i32_0 = arith.constant 0 : i32
    %c0_i32_1 = arith.constant 0 : i32
    return %c0_i32, %c0_i32_0 : i32, i32
  }
  func.func @transform_5(%arg0: i32) -> (i32, i32) {
    %c0_i32 = arith.constant 0 : i32
    %c0_i32_0 = arith.constant 0 : i32
    %c0_i32_1 = arith.constant 0 : i32
    return %c0_i32, %c0_i32_0 : i32, i32
  }
  func.func @transform_6(%arg0: i32) -> (i32, i32) {
    %c0_i32 = arith.constant 0 : i32
    %c0_i32_0 = arith.constant 0 : i32
    %c0_i32_1 = arith.constant 0 : i32
    return %c0_i32, %c0_i32_0 : i32, i32
  }
  func.func @transform_7(%arg0: i32) -> (i32, i32) {
    %c0_i32 = arith.constant 0 : i32
    %c0_i32_0 = arith.constant 0 : i32
    return %arg0, %c0_i32 : i32, i32
  }
}

module attributes {stable_mosaic.version = 11 : i64} {
  func.func @_moe_kernel(%arg0: i32, %arg1: i32, %arg2: memref<32x128xbf16, #tpu.memory_space<vmem>>, %arg3: memref<1x128x128xbf16, #tpu.memory_space<vmem>>, %arg4: memref<1x128x128xbf16, #tpu.memory_space<vmem>>, %arg5: memref<1x128x128xbf16, #tpu.memory_space<vmem>>, %arg6: memref<1x32x1xf32, #tpu.memory_space<vmem>>, %arg7: memref<128x128xbf16, #tpu.memory_space<vmem>>, %arg8: memref<128x128xbf16, #tpu.memory_space<vmem>>, %arg9: memref<128x128xbf16, #tpu.memory_space<vmem>>, %arg10: memref<32x128xbf16, #tpu.memory_space<vmem>>, %arg11: memref<32x128xf32, #tpu.memory_space<vmem>>) attributes {dimension_semantics = [#tpu.dimension_semantics<parallel>, #tpu.dimension_semantics<arbitrary>], iteration_bounds = array<i64: 1, 8>, scalar_prefetch = 0 : i64, scratch_operands = 1 : i64, tpu.core_type = #tpu.core_type<tc>, window_params = [{transform_indices = @transform_0, window_bounds = array<i64: 32, 128>}, {transform_indices = @transform_1, window_bounds = array<i64: 1, 128, 128>}, {transform_indices = @transform_2, window_bounds = array<i64: 1, 128, 128>}, {transform_indices = @transform_3, window_bounds = array<i64: 1, 128, 128>}, {transform_indices = @transform_4, window_bounds = array<i64: 1, 32, 1>}, {pipeline_mode = #tpu.pipeline_mode<synchronous>, transform_indices = @transform_5, window_bounds = array<i64: 128, 128>}, {pipeline_mode = #tpu.pipeline_mode<synchronous>, transform_indices = @transform_6, window_bounds = array<i64: 128, 128>}, {pipeline_mode = #tpu.pipeline_mode<synchronous>, transform_indices = @transform_7, window_bounds = array<i64: 128, 128>}, {transform_indices = @transform_8, window_bounds = array<i64: 32, 128>}]} {
    %c0 = arith.constant 0 : index
    %c0_0 = arith.constant 0 : index
    %0 = vector.load %arg2[%c0, %c0_0] : memref<32x128xbf16, #tpu.memory_space<vmem>>, vector<32x128xbf16>
    %c0_i32 = arith.constant 0 : i32
    %1 = arith.cmpi eq, %arg1, %c0_i32 : i32
    %2 = arith.extui %1 : i1 to i32
    %c0_i32_1 = arith.constant 0 : i32
    %3 = arith.cmpi ne, %2, %c0_i32_1 : i32
    scf.if %3 {
      %c0_22 = arith.constant 0 : index
      %c0_23 = arith.constant 0 : index
      %31 = vector.load %arg7[%c0_22, %c0_23] : memref<128x128xbf16, #tpu.memory_space<vmem>>, vector<128x128xbf16>
      %cst_24 = arith.constant dense<0.000000e+00> : vector<32x128xf32>
      %32 = tpu.matmul %0, %31, %cst_24 {dimension_numbers = #tpu.dot_dimension_numbers<[1], [0], [0], [1], [0, 0, 1, 1], [], []>} : vector<32x128xbf16>, vector<128x128xbf16>, vector<32x128xf32> -> vector<32x128xf32>
      %c0_25 = arith.constant 0 : index
      %c0_26 = arith.constant 0 : index
      %33 = vector.load %arg8[%c0_25, %c0_26] : memref<128x128xbf16, #tpu.memory_space<vmem>>, vector<128x128xbf16>
      %cst_27 = arith.constant dense<0.000000e+00> : vector<32x128xf32>
      %34 = tpu.matmul %0, %33, %cst_27 {dimension_numbers = #tpu.dot_dimension_numbers<[1], [0], [0], [1], [0, 0, 1, 1], [], []>} : vector<32x128xbf16>, vector<128x128xbf16>, vector<32x128xf32> -> vector<32x128xf32>
      %35 = arith.negf %32 : vector<32x128xf32>
      %36 = math.exp %35 : vector<32x128xf32>
      %cst_28 = arith.constant 1.000000e+00 : f32
      %37 = vector.broadcast %cst_28 : f32 to vector<32x128xf32>
      %38 = arith.addf %37, %36 : vector<32x128xf32>
      %39 = arith.divf %37, %38 : vector<32x128xf32>
      %40 = arith.mulf %32, %39 : vector<32x128xf32>
      %41 = arith.mulf %40, %34 : vector<32x128xf32>
      %42 = arith.truncf %41 : vector<32x128xf32> to vector<32x128xbf16>
      %c0_29 = arith.constant 0 : index
      %c0_30 = arith.constant 0 : index
      %43 = vector.load %arg9[%c0_29, %c0_30] : memref<128x128xbf16, #tpu.memory_space<vmem>>, vector<128x128xbf16>
      %cst_31 = arith.constant dense<0.000000e+00> : vector<32x128xf32>
      %44 = tpu.matmul %42, %43, %cst_31 {dimension_numbers = #tpu.dot_dimension_numbers<[1], [0], [0], [1], [0, 0, 1, 1], [], []>} : vector<32x128xbf16>, vector<128x128xbf16>, vector<32x128xf32> -> vector<32x128xf32>
      %c0_32 = arith.constant 0 : index
      %c0_33 = arith.constant 0 : index
      %45 = vector.load %arg11[%c0_32, %c0_33] : memref<32x128xf32, #tpu.memory_space<vmem>>, vector<32x128xf32>
      tpu.vector_store %arg11[%c0_32, %c0_33], %44 {strides = array<i32>} : memref<32x128xf32, #tpu.memory_space<vmem>>, vector<32x128xf32>,
    } else {
    }
    %c0_2 = arith.constant 0 : index
    %c0_3 = arith.constant 0 : index
    %c0_4 = arith.constant 0 : index
    %4 = vector.load %arg3[%c0_2, %c0_3, %c0_4] : memref<1x128x128xbf16, #tpu.memory_space<vmem>>, vector<1x128x128xbf16>
    %5 = vector.shape_cast %4 : vector<1x128x128xbf16> to vector<128x128xbf16>
    %cst = arith.constant dense<0.000000e+00> : vector<32x128xf32>
    %6 = tpu.matmul %0, %5, %cst {dimension_numbers = #tpu.dot_dimension_numbers<[1], [0], [0], [1], [0, 0, 1, 1], [], []>} : vector<32x128xbf16>, vector<128x128xbf16>, vector<32x128xf32> -> vector<32x128xf32>
    %c0_5 = arith.constant 0 : index
    %c0_6 = arith.constant 0 : index
    %c0_7 = arith.constant 0 : index
    %7 = vector.load %arg4[%c0_5, %c0_6, %c0_7] : memref<1x128x128xbf16, #tpu.memory_space<vmem>>, vector<1x128x128xbf16>
    %8 = vector.shape_cast %7 : vector<1x128x128xbf16> to vector<128x128xbf16>
    %cst_8 = arith.constant dense<0.000000e+00> : vector<32x128xf32>
    %9 = tpu.matmul %0, %8, %cst_8 {dimension_numbers = #tpu.dot_dimension_numbers<[1], [0], [0], [1], [0, 0, 1, 1], [], []>} : vector<32x128xbf16>, vector<128x128xbf16>, vector<32x128xf32> -> vector<32x128xf32>
    %10 = arith.negf %6 : vector<32x128xf32>
    %11 = math.exp %10 : vector<32x128xf32>
    %cst_9 = arith.constant 1.000000e+00 : f32
    %12 = vector.broadcast %cst_9 : f32 to vector<32x128xf32>
    %13 = arith.addf %12, %11 : vector<32x128xf32>
    %14 = arith.divf %12, %13 : vector<32x128xf32>
    %15 = arith.mulf %6, %14 : vector<32x128xf32>
    %16 = arith.mulf %15, %9 : vector<32x128xf32>
    %c0_10 = arith.constant 0 : index
    %c0_11 = arith.constant 0 : index
    %c0_12 = arith.constant 0 : index
    %17 = vector.load %arg6[%c0_10, %c0_11, %c0_12] : memref<1x32x1xf32, #tpu.memory_space<vmem>>, vector<1x32x1xf32>
    %18 = vector.shape_cast %17 : vector<1x32x1xf32> to vector<32x1xf32>
    %19 = vector.broadcast %18 : vector<32x1xf32> to vector<32x128xf32>
    %20 = arith.mulf %16, %19 : vector<32x128xf32>
    %21 = arith.truncf %20 : vector<32x128xf32> to vector<32x128xbf16>
    %c0_13 = arith.constant 0 : index
    %c0_14 = arith.constant 0 : index
    %22 = vector.load %arg11[%c0_13, %c0_14] : memref<32x128xf32, #tpu.memory_space<vmem>>, vector<32x128xf32>
    %c0_15 = arith.constant 0 : index
    %c0_16 = arith.constant 0 : index
    %c0_17 = arith.constant 0 : index
    %23 = vector.load %arg5[%c0_15, %c0_16, %c0_17] : memref<1x128x128xbf16, #tpu.memory_space<vmem>>, vector<1x128x128xbf16>
    %24 = vector.shape_cast %23 : vector<1x128x128xbf16> to vector<128x128xbf16>
    %cst_18 = arith.constant dense<0.000000e+00> : vector<32x128xf32>
    %25 = tpu.matmul %21, %24, %cst_18 {dimension_numbers = #tpu.dot_dimension_numbers<[1], [0], [0], [1], [0, 0, 1, 1], [], []>} : vector<32x128xbf16>, vector<128x128xbf16>, vector<32x128xf32> -> vector<32x128xf32>
    %26 = arith.addf %22, %25 : vector<32x128xf32>
    %c0_19 = arith.constant 0 : index
    %c0_20 = arith.constant 0 : index
    %27 = vector.load %arg11[%c0_19, %c0_20] : memref<32x128xf32, #tpu.memory_space<vmem>>, vector<32x128xf32>
    tpu.vector_store %arg11[%c0_19, %c0_20], %26 {strides = array<i32>} : memref<32x128xf32, #tpu.memory_space<vmem>>, vector<32x128xf32>,
    %c7_i32 = arith.constant 7 : i32
    %28 = arith.cmpi eq, %arg1, %c7_i32 : i32
    %29 = arith.extui %28 : i1 to i32
    %c0_i32_21 = arith.constant 0 : i32
    %30 = arith.cmpi ne, %29, %c0_i32_21 : i32
    scf.if %30 {
      %c0_22 = arith.constant 0 : index
      %c0_23 = arith.constant 0 : index
      %31 = vector.load %arg11[%c0_22, %c0_23] : memref<32x128xf32, #tpu.memory_space<vmem>>, vector<32x128xf32>
      %32 = arith.truncf %31 : vector<32x128xf32> to vector<32x128xbf16>
      %c0_24 = arith.constant 0 : index
      %c0_25 = arith.constant 0 : index
      %33 = vector.load %arg10[%c0_24, %c0_25] : memref<32x128xbf16, #tpu.memory_space<vmem>>, vector<32x128xbf16>
      tpu.vector_store %arg10[%c0_24, %c0_25], %32 {strides = array<i32>} : memref<32x128xbf16, #tpu.memory_space<vmem>>, vector<32x128xbf16>,
    } else {
    }
    return
  }
  func.func @transform_0(%arg0: i32, %arg1: i32) -> (i32, i32) {
    %c0_i32 = arith.constant 0 : i32
    %c0_i32_0 = arith.constant 0 : i32
    return %arg0, %c0_i32 : i32, i32
  }
  func.func @transform_1(%arg0: i32, %arg1: i32) -> (i32, i32, i32) {
    %c0_i32 = arith.constant 0 : i32
    %c0_i32_0 = arith.constant 0 : i32
    %c0_i32_1 = arith.constant 0 : i32
    return %arg1, %c0_i32, %c0_i32_0 : i32, i32, i32
  }
  func.func @transform_2(%arg0: i32, %arg1: i32) -> (i32, i32, i32) {
    %c0_i32 = arith.constant 0 : i32
    %c0_i32_0 = arith.constant 0 : i32
    %c0_i32_1 = arith.constant 0 : i32
    return %arg1, %c0_i32, %c0_i32_0 : i32, i32, i32
  }
  func.func @transform_3(%arg0: i32, %arg1: i32) -> (i32, i32, i32) {
    %c0_i32 = arith.constant 0 : i32
    %c0_i32_0 = arith.constant 0 : i32
    %c0_i32_1 = arith.constant 0 : i32
    return %arg1, %c0_i32, %c0_i32_0 : i32, i32, i32
  }
  func.func @transform_4(%arg0: i32, %arg1: i32) -> (i32, i32, i32) {
    %c0_i32 = arith.constant 0 : i32
    %c0_i32_0 = arith.constant 0 : i32
    return %arg1, %arg0, %c0_i32 : i32, i32, i32
  }
  func.func @transform_5(%arg0: i32, %arg1: i32) -> (i32, i32) {
    %c0_i32 = arith.constant 0 : i32
    %c0_i32_0 = arith.constant 0 : i32
    %c0_i32_1 = arith.constant 0 : i32
    return %c0_i32, %c0_i32_0 : i32, i32
  }
  func.func @transform_6(%arg0: i32, %arg1: i32) -> (i32, i32) {
    %c0_i32 = arith.constant 0 : i32
    %c0_i32_0 = arith.constant 0 : i32
    %c0_i32_1 = arith.constant 0 : i32
    return %c0_i32, %c0_i32_0 : i32, i32
  }
  func.func @transform_7(%arg0: i32, %arg1: i32) -> (i32, i32) {
    %c0_i32 = arith.constant 0 : i32
    %c0_i32_0 = arith.constant 0 : i32
    %c0_i32_1 = arith.constant 0 : i32
    return %c0_i32, %c0_i32_0 : i32, i32
  }
  func.func @transform_8(%arg0: i32, %arg1: i32) -> (i32, i32) {
    %c0_i32 = arith.constant 0 : i32
    %c0_i32_0 = arith.constant 0 : i32
    return %arg0, %c0_i32 : i32, i32
  }
}

module attributes {stable_mosaic.version = 11 : i64} {
  func.func @_moe_kernel(%arg0: i32, %arg1: i32, %arg2: memref<32x128xbf16, #tpu.memory_space<vmem>>, %arg3: memref<1x128x128xbf16, #tpu.memory_space<vmem>>, %arg4: memref<1x128x128xbf16, #tpu.memory_space<vmem>>, %arg5: memref<1x128x128xbf16, #tpu.memory_space<vmem>>, %arg6: memref<1x32x1xf32, #tpu.memory_space<vmem>>, %arg7: memref<128x128xbf16, #tpu.memory_space<vmem>>, %arg8: memref<128x128xbf16, #tpu.memory_space<vmem>>, %arg9: memref<128x128xbf16, #tpu.memory_space<vmem>>, %arg10: memref<32x128xbf16, #tpu.memory_space<vmem>>, %arg11: memref<32x128xf32, #tpu.memory_space<vmem>>) attributes {dimension_semantics = [#tpu.dimension_semantics<parallel>, #tpu.dimension_semantics<arbitrary>], iteration_bounds = array<i64: 1, 8>, scalar_prefetch = 0 : i64, scratch_operands = 1 : i64, tpu.core_type = #tpu.core_type<tc>, window_params = [{transform_indices = @transform_0, window_bounds = array<i64: 32, 128>}, {transform_indices = @transform_1, window_bounds = array<i64: 1, 128, 128>}, {transform_indices = @transform_2, window_bounds = array<i64: 1, 128, 128>}, {transform_indices = @transform_3, window_bounds = array<i64: 1, 128, 128>}, {transform_indices = @transform_4, window_bounds = array<i64: 1, 32, 1>}, {pipeline_mode = #tpu.pipeline_mode<synchronous>, transform_indices = @transform_5, window_bounds = array<i64: 128, 128>}, {pipeline_mode = #tpu.pipeline_mode<synchronous>, transform_indices = @transform_6, window_bounds = array<i64: 128, 128>}, {pipeline_mode = #tpu.pipeline_mode<synchronous>, transform_indices = @transform_7, window_bounds = array<i64: 128, 128>}, {transform_indices = @transform_8, window_bounds = array<i64: 32, 128>}]} {
    %c0 = arith.constant 0 : index
    %c0_0 = arith.constant 0 : index
    %0 = vector.load %arg2[%c0, %c0_0] : memref<32x128xbf16, #tpu.memory_space<vmem>>, vector<32x128xbf16>
    %c0_i32 = arith.constant 0 : i32
    %1 = arith.cmpi eq, %arg1, %c0_i32 : i32
    %2 = arith.extui %1 : i1 to i32
    %c0_i32_1 = arith.constant 0 : i32
    %3 = arith.cmpi ne, %2, %c0_i32_1 : i32
    scf.if %3 {
      %c0_22 = arith.constant 0 : index
      %c0_23 = arith.constant 0 : index
      %31 = vector.load %arg7[%c0_22, %c0_23] : memref<128x128xbf16, #tpu.memory_space<vmem>>, vector<128x128xbf16>
      %cst_24 = arith.constant dense<0.000000e+00> : vector<32x128xf32>
      %32 = tpu.matmul %0, %31, %cst_24 {dimension_numbers = #tpu.dot_dimension_numbers<[1], [0], [0], [1], [0, 0, 1, 1], [], []>} : vector<32x128xbf16>, vector<128x128xbf16>, vector<32x128xf32> -> vector<32x128xf32>
      %c0_25 = arith.constant 0 : index
      %c0_26 = arith.constant 0 : index
      %33 = vector.load %arg8[%c0_25, %c0_26] : memref<128x128xbf16, #tpu.memory_space<vmem>>, vector<128x128xbf16>
      %cst_27 = arith.constant dense<0.000000e+00> : vector<32x128xf32>
      %34 = tpu.matmul %0, %33, %cst_27 {dimension_numbers = #tpu.dot_dimension_numbers<[1], [0], [0], [1], [0, 0, 1, 1], [], []>} : vector<32x128xbf16>, vector<128x128xbf16>, vector<32x128xf32> -> vector<32x128xf32>
      %35 = arith.negf %32 : vector<32x128xf32>
      %36 = math.exp %35 : vector<32x128xf32>
      %cst_28 = arith.constant 1.000000e+00 : f32
      %37 = vector.broadcast %cst_28 : f32 to vector<32x128xf32>
      %38 = arith.addf %37, %36 : vector<32x128xf32>
      %39 = arith.divf %37, %38 : vector<32x128xf32>
      %40 = arith.mulf %32, %39 : vector<32x128xf32>
      %41 = arith.mulf %40, %34 : vector<32x128xf32>
      %42 = arith.truncf %41 : vector<32x128xf32> to vector<32x128xbf16>
      %c0_29 = arith.constant 0 : index
      %c0_30 = arith.constant 0 : index
      %43 = vector.load %arg9[%c0_29, %c0_30] : memref<128x128xbf16, #tpu.memory_space<vmem>>, vector<128x128xbf16>
      %cst_31 = arith.constant dense<0.000000e+00> : vector<32x128xf32>
      %44 = tpu.matmul %42, %43, %cst_31 {dimension_numbers = #tpu.dot_dimension_numbers<[1], [0], [0], [1], [0, 0, 1, 1], [], []>} : vector<32x128xbf16>, vector<128x128xbf16>, vector<32x128xf32> -> vector<32x128xf32>
      %c0_32 = arith.constant 0 : index
      %c0_33 = arith.constant 0 : index
      %45 = vector.load %arg11[%c0_32, %c0_33] : memref<32x128xf32, #tpu.memory_space<vmem>>, vector<32x128xf32>
      tpu.vector_store %arg11[%c0_32, %c0_33], %44 {strides = array<i32>} : memref<32x128xf32, #tpu.memory_space<vmem>>, vector<32x128xf32>,
    } else {
    }
    %c0_2 = arith.constant 0 : index
    %c0_3 = arith.constant 0 : index
    %c0_4 = arith.constant 0 : index
    %4 = vector.load %arg3[%c0_2, %c0_3, %c0_4] : memref<1x128x128xbf16, #tpu.memory_space<vmem>>, vector<1x128x128xbf16>
    %5 = vector.shape_cast %4 : vector<1x128x128xbf16> to vector<128x128xbf16>
    %cst = arith.constant dense<0.000000e+00> : vector<32x128xf32>
    %6 = tpu.matmul %0, %5, %cst {dimension_numbers = #tpu.dot_dimension_numbers<[1], [0], [0], [1], [0, 0, 1, 1], [], []>} : vector<32x128xbf16>, vector<128x128xbf16>, vector<32x128xf32> -> vector<32x128xf32>
    %c0_5 = arith.constant 0 : index
    %c0_6 = arith.constant 0 : index
    %c0_7 = arith.constant 0 : index
    %7 = vector.load %arg4[%c0_5, %c0_6, %c0_7] : memref<1x128x128xbf16, #tpu.memory_space<vmem>>, vector<1x128x128xbf16>
    %8 = vector.shape_cast %7 : vector<1x128x128xbf16> to vector<128x128xbf16>
    %cst_8 = arith.constant dense<0.000000e+00> : vector<32x128xf32>
    %9 = tpu.matmul %0, %8, %cst_8 {dimension_numbers = #tpu.dot_dimension_numbers<[1], [0], [0], [1], [0, 0, 1, 1], [], []>} : vector<32x128xbf16>, vector<128x128xbf16>, vector<32x128xf32> -> vector<32x128xf32>
    %10 = arith.negf %6 : vector<32x128xf32>
    %11 = math.exp %10 : vector<32x128xf32>
    %cst_9 = arith.constant 1.000000e+00 : f32
    %12 = vector.broadcast %cst_9 : f32 to vector<32x128xf32>
    %13 = arith.addf %12, %11 : vector<32x128xf32>
    %14 = arith.divf %12, %13 : vector<32x128xf32>
    %15 = arith.mulf %6, %14 : vector<32x128xf32>
    %16 = arith.mulf %15, %9 : vector<32x128xf32>
    %c0_10 = arith.constant 0 : index
    %c0_11 = arith.constant 0 : index
    %c0_12 = arith.constant 0 : index
    %17 = vector.load %arg6[%c0_10, %c0_11, %c0_12] : memref<1x32x1xf32, #tpu.memory_space<vmem>>, vector<1x32x1xf32>
    %18 = vector.shape_cast %17 : vector<1x32x1xf32> to vector<32x1xf32>
    %19 = vector.broadcast %18 : vector<32x1xf32> to vector<32x128xf32>
    %20 = arith.mulf %16, %19 : vector<32x128xf32>
    %21 = arith.truncf %20 : vector<32x128xf32> to vector<32x128xbf16>
    %c0_13 = arith.constant 0 : index
    %c0_14 = arith.constant 0 : index
    %22 = vector.load %arg11[%c0_13, %c0_14] : memref<32x128xf32, #tpu.memory_space<vmem>>, vector<32x128xf32>
    %c0_15 = arith.constant 0 : index
    %c0_16 = arith.constant 0 : index
    %c0_17 = arith.constant 0 : index
    %23 = vector.load %arg5[%c0_15, %c0_16, %c0_17] : memref<1x128x128xbf16, #tpu.memory_space<vmem>>, vector<1x128x128xbf16>
    %24 = vector.shape_cast %23 : vector<1x128x128xbf16> to vector<128x128xbf16>
    %cst_18 = arith.constant dense<0.000000e+00> : vector<32x128xf32>
    %25 = tpu.matmul %21, %24, %cst_18 {dimension_numbers = #tpu.dot_dimension_numbers<[1], [0], [0], [1], [0, 0, 1, 1], [], []>} : vector<32x128xbf16>, vector<128x128xbf16>, vector<32x128xf32> -> vector<32x128xf32>
    %26 = arith.addf %22, %25 : vector<32x128xf32>
    %c0_19 = arith.constant 0 : index
    %c0_20 = arith.constant 0 : index
    %27 = vector.load %arg11[%c0_19, %c0_20] : memref<32x128xf32, #tpu.memory_space<vmem>>, vector<32x128xf32>
    tpu.vector_store %arg11[%c0_19, %c0_20], %26 {strides = array<i32>} : memref<32x128xf32, #tpu.memory_space<vmem>>, vector<32x128xf32>,
    %c7_i32 = arith.constant 7 : i32
    %28 = arith.cmpi eq, %arg1, %c7_i32 : i32
    %29 = arith.extui %28 : i1 to i32
    %c0_i32_21 = arith.constant 0 : i32
    %30 = arith.cmpi ne, %29, %c0_i32_21 : i32
    scf.if %30 {
      %c0_22 = arith.constant 0 : index
      %c0_23 = arith.constant 0 : index
      %31 = vector.load %arg11[%c0_22, %c0_23] : memref<32x128xf32, #tpu.memory_space<vmem>>, vector<32x128xf32>
      %32 = arith.truncf %31 : vector<32x128xf32> to vector<32x128xbf16>
      %c0_24 = arith.constant 0 : index
      %c0_25 = arith.constant 0 : index
      %33 = vector.load %arg10[%c0_24, %c0_25] : memref<32x128xbf16, #tpu.memory_space<vmem>>, vector<32x128xbf16>
      tpu.vector_store %arg10[%c0_24, %c0_25], %32 {strides = array<i32>} : memref<32x128xbf16, #tpu.memory_space<vmem>>, vector<32x128xbf16>,
    } else {
    }
    return
  }
  func.func @transform_0(%arg0: i32, %arg1: i32) -> (i32, i32) {
    %c0_i32 = arith.constant 0 : i32
    %c0_i32_0 = arith.constant 0 : i32
    return %arg0, %c0_i32 : i32, i32
  }
  func.func @transform_1(%arg0: i32, %arg1: i32) -> (i32, i32, i32) {
    %c0_i32 = arith.constant 0 : i32
    %c0_i32_0 = arith.constant 0 : i32
    %c0_i32_1 = arith.constant 0 : i32
    return %arg1, %c0_i32, %c0_i32_0 : i32, i32, i32
  }
  func.func @transform_2(%arg0: i32, %arg1: i32) -> (i32, i32, i32) {
    %c0_i32 = arith.constant 0 : i32
    %c0_i32_0 = arith.constant 0 : i32
    %c0_i32_1 = arith.constant 0 : i32
    return %arg1, %c0_i32, %c0_i32_0 : i32, i32, i32
  }
  func.func @transform_3(%arg0: i32, %arg1: i32) -> (i32, i32, i32) {
    %c0_i32 = arith.constant 0 : i32
    %c0_i32_0 = arith.constant 0 : i32
    %c0_i32_1 = arith.constant 0 : i32
    return %arg1, %c0_i32, %c0_i32_0 : i32, i32, i32
  }
  func.func @transform_4(%arg0: i32, %arg1: i32) -> (i32, i32, i32) {
    %c0_i32 = arith.constant 0 : i32
    %c0_i32_0 = arith.constant 0 : i32
    return %arg1, %arg0, %c0_i32 : i32, i32, i32
  }
  func.func @transform_5(%arg0: i32, %arg1: i32) -> (i32, i32) {
    %c0_i32 = arith.constant 0 : i32
    %c0_i32_0 = arith.constant 0 : i32
    %c0_i32_1 = arith.constant 0 : i32
    return %c0_i32, %c0_i32_0 : i32, i32
  }
  func.func @transform_6(%arg0: i32, %arg1: i32) -> (i32, i32) {
    %c0_i32 = arith.constant 0 : i32
    %c0_i32_0 = arith.constant 0 : i32
    %c0_i32_1 = arith.constant 0 : i32
    return %c0_i32, %c0_i32_0 : i32, i32
  }
  func.func @transform_7(%arg0: i32, %arg1: i32) -> (i32, i32) {
    %c0_i32 = arith.constant 0 : i32
    %c0_i32_0 = arith.constant 0 : i32
    %c0_i32_1 = arith.constant 0 : i32
    return %c0_i32, %c0_i32_0 : i32, i32
  }
  func.func @transform_8(%arg0: i32, %arg1: i32) -> (i32, i32) {
    %c0_i32 = arith.constant 0 : i32
    %c0_i32_0 = arith.constant 0 : i32
    return %arg0, %c0_i32 : i32, i32
  }
}

</mosaic_0001>

<llo_original>
// kernel: _lambda_.21
$region0: #{_lambda_.21}
  #allocation0 [shape = 'u32[]', space=smem, size = 0x4, offset = 0x4, fixed_abs, tag = 'smem constant byte address 0x4 - core index']
  #allocation1 [shape = 'u32[72,128]{1,0:T(1,128)}', space=vmem, size = 0x9000, scoped, tag = 'internal scratch']
  %s0 = inlined_call_operand.vmem [shape: bf16[16,128], index: 0, kind: input, shape index: {}]
  %s1 = inlined_call_operand.hbm [shape: bf16[128,128], index: 1, kind: input, shape index: {}]
  %s2 = inlined_call_operand.vmem [shape: f32[1,128], index: 2, kind: input, shape index: {}, may-alias: {2,4,6}]
  %s3 = inlined_call_operand.hbm [shape: bf16[128,128], index: 3, kind: input, shape index: {}]
  %s4 = inlined_call_operand.vmem [shape: f32[1,128], index: 4, kind: input, shape index: {}, may-alias: {2,4,6}]
  %s5 = inlined_call_operand.hbm [shape: bf16[128,128], index: 5, kind: input, shape index: {}]
  %s6 = inlined_call_operand.vmem [shape: f32[1,128], index: 6, kind: input, shape index: {}, may-alias: {2,4,6}]
  %s7 = inlined_call_operand.vmem [shape: bf16[16,128], index: 7, kind: output, shape index: {}]
  %s8 = sld [smem:[#allocation0]]
  $region50: #{_lambda_.21} parent=0
    _
  %s10 = ssub.s32 1, %s8
  %s11 = scalar_select 0, %s10, %s8
  $region1: #{_lambda_.21} parent=0
    #allocation2 [shape = 'u8[32768]{0}', space=vmem, size = 0x8000, scoped, tag = 'input window, operand 1, single buffered']
    #allocation3 [shape = 's32[1]{0}', space=sflag, size = 0x4, scoped, tag = 'scoped memory for _lambda_.21']
    #allocation4 [shape = 'u8[32768]{0}', space=vmem, size = 0x8000, scoped, tag = 'input window, operand 3, single buffered']
    #allocation5 [shape = 's32[1]{0}', space=sflag, size = 0x4, scoped, tag = 'scoped memory for _lambda_.21']
    #allocation6 [shape = 'u8[32768]{0}', space=vmem, size = 0x8000, scoped, tag = 'input window, operand 5, single buffered']
    %12 = vsyncpa [#allocation3], 0
    %13 = vsyncpa [#allocation5], 0
    // Predicated region
    $region2: #{_lambda_.21} parent=1 // pred_check
      _
    $region3: #{_lambda_.21} parent=1 // pred_check_branch
      %15 = sbr.rel (0) target = $region5
    $region4: #{_lambda_.21} parent=1 // pred_region
      _
    $region5: #{_lambda_.21} parent=1 // pred_fallthru
      _
    // Predicated region
    $region6: #{_lambda_.21} parent=1 // pred_check
      _
    $region7: #{_lambda_.21} parent=1 // pred_check_branch
      %17 = sbr.rel (0) target = $region9
    $region8: #{_lambda_.21} parent=1 // pred_region
      %19 = vsyncadd [#allocation3], 0
      %s20 = sshll.u32 %s1, 4
      %s21 = int_to_ptr.hbm [resolvable:$true] %s20
      %s22 = sshll.u32 [#allocation2], 4
      %s23 = int_to_ptr.vmem [resolvable:$true] %s22
      %28 = dma.hbm_to_vmem [thread:$0]  %s21, 1024, %s23, [#allocation3], 64, 64, 4
    $region9: #{_lambda_.21} parent=1 // pred_fallthru
      _
    // Predicated region
    $region10: #{_lambda_.21} parent=1 // pred_check
      _
    $region11: #{_lambda_.21} parent=1 // pred_check_branch
      %30 = sbr.rel (0) target = $region13
    $region12: #{_lambda_.21} parent=1 // pred_region
      _
    $region13: #{_lambda_.21} parent=1 // pred_fallthru
      _
    // Predicated region
    $region14: #{_lambda_.21} parent=1 // pred_check
      _
    $region15: #{_lambda_.21} parent=1 // pred_check_branch
      %32 = sbr.rel (0) target = $region17
    $region16: #{_lambda_.21} parent=1 // pred_region
      %34 = vsyncadd [#allocation5], 0
      %s35 = sshll.u32 %s3, 4
      %s36 = int_to_ptr.hbm [resolvable:$true] %s35
      %s37 = sshll.u32 [#allocation4], 4
      %s38 = int_to_ptr.vmem [resolvable:$true] %s37
      %43 = dma.hbm_to_vmem [thread:$0]  %s36, 1024, %s38, [#allocation5], 64, 64, 4
    $region17: #{_lambda_.21} parent=1 // pred_fallthru
      _
    // Predicated region
    $region18: #{_lambda_.21} parent=1 // pred_check
      _
    $region19: #{_lambda_.21} parent=1 // pred_check_branch
      %45 = sbr.rel (0) target = $region21
    $region20: #{_lambda_.21} parent=1 // pred_region
      _
    $region21: #{_lambda_.21} parent=1 // pred_fallthru
      _
    // Predicated region
    $region22: #{_lambda_.21} parent=1 // pred_check
      _
    $region23: #{_lambda_.21} parent=1 // pred_check_branch
      %47 = sbr.rel (0) target = $region25
    $region24: #{_lambda_.21} parent=1 // pred_region
      %49 = vsyncadd [#allocation5], 0
      %s50 = sshll.u32 %s5, 4
      %s51 = int_to_ptr.hbm [resolvable:$true] %s50
      %s52 = sshll.u32 [#allocation6], 4
      %s53 = int_to_ptr.vmem [resolvable:$true] %s52
      %58 = dma.hbm_to_vmem [thread:$0]  %s51, 1024, %s53, [#allocation5], 64, 64, 4
    $region25: #{_lambda_.21} parent=1 // pred_fallthru
      _
    // Predicated region
    $region26: #{_lambda_.21} parent=1 // pred_check
      _
    $region27: #{_lambda_.21} parent=1 // pred_check_branch
      %60 = sbr.rel (0) target = $region29
    $region28: #{_lambda_.21} parent=1 // pred_region
      _
    $region29: #{_lambda_.21} parent=1 // pred_fallthru
      _
    // Predicated region
    $region30: #{_lambda_.21} parent=1 // pred_check
      _
    $region31: #{_lambda_.21} parent=1 // pred_check_branch
      %62 = sbr.rel (0) target = $region33
    $region32: #{_lambda_.21} parent=1 // pred_region
      %64 = dma.done [#allocation3], 1024
    $region33: #{_lambda_.21} parent=1 // pred_fallthru
      _
    // Predicated region
    $region34: #{_lambda_.21} parent=1 // pred_check
      _
    $region35: #{_lambda_.21} parent=1 // pred_check_branch
      %66 = sbr.rel (0) target = $region37
    $region36: #{_lambda_.21} parent=1 // pred_region
      %68 = dma.done [#allocation5], 1024
    $region37: #{_lambda_.21} parent=1 // pred_fallthru
      _
    // Predicated region
    $region38: #{_lambda_.21} parent=1 // pred_check
      _
    $region39: #{_lambda_.21} parent=1 // pred_check_branch
      %70 = sbr.rel (0) target = $region41
    $region40: #{_lambda_.21} parent=1 // pred_region
      %72 = dma.done [#allocation5], 1024
    $region41: #{_lambda_.21} parent=1 // pred_fallthru
      _
    %v73 = vld [vmem:[%s0] sm:$0xf]
    %v74 = vld [vmem:[%s0 + $0x4] sm:$0xf]
    %v75 = vld [vmem:[#allocation2] sm:$0xf]
    %v76 = vld [vmem:[#allocation2 + $0x4] sm:$0xf]
    %v77 = vld [vmem:[#allocation2 + $0x8] sm:$0xf]
    %v78 = vld [vmem:[#allocation2 + $0xc] sm:$0xf]
    %v79 = vld [vmem:[#allocation2 + $0x10] sm:$0xf]
    %v80 = vld [vmem:[#allocation2 + $0x14] sm:$0xf]
    %v81 = vld [vmem:[#allocation2 + $0x18] sm:$0xf]
    %v82 = vld [vmem:[#allocation2 + $0x1c] sm:$0xf]
    %v83 = vld [vmem:[#allocation2 + $0x20] sm:$0xf]
    %v84 = vld [vmem:[#allocation2 + $0x24] sm:$0xf]
    %v85 = vld [vmem:[#allocation2 + $0x28] sm:$0xf]
    %v86 = vld [vmem:[#allocation2 + $0x2c] sm:$0xf]
    %v87 = vld [vmem:[#allocation2 + $0x30] sm:$0xf]
    %v88 = vld [vmem:[#allocation2 + $0x34] sm:$0xf]
    %v89 = vld [vmem:[#allocation2 + $0x38] sm:$0xf]
    %v90 = vld [vmem:[#allocation2 + $0x3c] sm:$0xf]
    %v91 = vld [vmem:[%s2] sm:$0x1]
    %v93 = vperm.slane %v91, 0
    %v97 = vunpack.c.l.b16 %v73
    %v98 = vunpack.c.l.b16 %v74
    %v99 = vpack.c.b16 %v98, %v97
    %v117 = vunpack.c.l.b16 %v75
    %v118 = vunpack.c.l.b16 %v76
    %v119 = vunpack.c.l.b16 %v77
    %v120 = vunpack.c.l.b16 %v78
    %v121 = vunpack.c.l.b16 %v79
    %v122 = vunpack.c.l.b16 %v80
    %v123 = vunpack.c.l.b16 %v81
    %v124 = vunpack.c.l.b16 %v82
    %v125 = vunpack.c.l.b16 %v83
    %v126 = vunpack.c.l.b16 %v84
    %v127 = vunpack.c.l.b16 %v85
    %v128 = vunpack.c.l.b16 %v86
    %v129 = vunpack.c.l.b16 %v87
    %v130 = vunpack.c.l.b16 %v88
    %v131 = vunpack.c.l.b16 %v89
    %v132 = vunpack.c.l.b16 %v90
    %v133 = vpack.c.b16 %v118, %v117
    %v134 = vpack.c.b16 %v120, %v119
    %v135 = vpack.c.b16 %v122, %v121
    %v136 = vpack.c.b16 %v124, %v123
    %v137 = vpack.c.b16 %v126, %v125
    %v138 = vpack.c.b16 %v128, %v127
    %v139 = vpack.c.b16 %v130, %v129
    %v140 = vpack.c.b16 %v132, %v131
    %149 = vmatpush.bf16.msra.mxu0 %v140
    %150 = vmatpush.bf16.msra.mxu0 %v139
    %151 = vmatpush.bf16.msra.mxu0 %v138
    %152 = vmatpush.bf16.msra.mxu0 %v137
    %153 = vmatpush.bf16.msra.mxu0 %v136
    %154 = vmatpush.bf16.msra.mxu0 %v135
    %155 = vmatpush.bf16.msra.mxu0 %v134
    %156 = vmatpush.bf16.msra.mxu0 %v133
    %157 = vmatmul.bf16.gmra.mxu0 %v99
    %v158 = vpop.f32.mrf.mxu0
    %v159 = vadd.f32 %v93, %v158
    %v160 = vpop.f32.mrf.mxu0
    %v161 = vadd.f32 %v93, %v160
    %162 = vdwg.mxu0
    %v163 = vpack.c.bf16 %v161, %v159
    %v164 = vld [vmem:[#allocation4] sm:$0xf]
    %v165 = vld [vmem:[#allocation4 + $0x4] sm:$0xf]
    %v166 = vld [vmem:[#allocation4 + $0x8] sm:$0xf]
    %v167 = vld [vmem:[#allocation4 + $0xc] sm:$0xf]
    %v168 = vld [vmem:[#allocation4 + $0x10] sm:$0xf]
    %v169 = vld [vmem:[#allocation4 + $0x14] sm:$0xf]
    %v170 = vld [vmem:[#allocation4 + $0x18] sm:$0xf]
    %v171 = vld [vmem:[#allocation4 + $0x1c] sm:$0xf]
    %v172 = vld [vmem:[#allocation4 + $0x20] sm:$0xf]
    %v173 = vld [vmem:[#allocation4 + $0x24] sm:$0xf]
    %v174 = vld [vmem:[#allocation4 + $0x28] sm:$0xf]
    %v175 = vld [vmem:[#allocation4 + $0x2c] sm:$0xf]
    %v176 = vld [vmem:[#allocation4 + $0x30] sm:$0xf]
    %v177 = vld [vmem:[#allocation4 + $0x34] sm:$0xf]
    %v178 = vld [vmem:[#allocation4 + $0x38] sm:$0xf]
    %v179 = vld [vmem:[#allocation4 + $0x3c] sm:$0xf]
    %v180 = vld [vmem:[%s4] sm:$0x1]
    %v182 = vperm.slane %v180, 0
    %v200 = vunpack.c.l.b16 %v164
    %v201 = vunpack.c.l.b16 %v165
    %v202 = vunpack.c.l.b16 %v166
    %v203 = vunpack.c.l.b16 %v167
    %v204 = vunpack.c.l.b16 %v168
    %v205 = vunpack.c.l.b16 %v169
    %v206 = vunpack.c.l.b16 %v170
    %v207 = vunpack.c.l.b16 %v171
    %v208 = vunpack.c.l.b16 %v172
    %v209 = vunpack.c.l.b16 %v173
    %v210 = vunpack.c.l.b16 %v174
    %v211 = vunpack.c.l.b16 %v175
    %v212 = vunpack.c.l.b16 %v176
    %v213 = vunpack.c.l.b16 %v177
    %v214 = vunpack.c.l.b16 %v178
    %v215 = vunpack.c.l.b16 %v179
    %v216 = vpack.c.b16 %v201, %v200
    %v217 = vpack.c.b16 %v203, %v202
    %v218 = vpack.c.b16 %v205, %v204
    %v219 = vpack.c.b16 %v207, %v206
    %v220 = vpack.c.b16 %v209, %v208
    %v221 = vpack.c.b16 %v211, %v210
    %v222 = vpack.c.b16 %v213, %v212
    %v223 = vpack.c.b16 %v215, %v214
    %232 = vmatpush.bf16.msra.mxu0 %v223
    %233 = vmatpush.bf16.msra.mxu0 %v222
    %234 = vmatpush.bf16.msra.mxu0 %v221
    %235 = vmatpush.bf16.msra.mxu0 %v220
    %236 = vmatpush.bf16.msra.mxu0 %v219
    %237 = vmatpush.bf16.msra.mxu0 %v218
    %238 = vmatpush.bf16.msra.mxu0 %v217
    %239 = vmatpush.bf16.msra.mxu0 %v216
    %240 = vmatmul.bf16.gmra.mxu0 %v163
    %v241 = vpop.f32.mrf.mxu0
    %v242 = vadd.f32 %v182, %v241
    %v243 = vpop.f32.mrf.mxu0
    %v244 = vadd.f32 %v182, %v243
    %245 = vdwg.mxu0
    %v246 = vld [vmem:[#allocation6] sm:$0xf]
    %v247 = vld [vmem:[#allocation6 + $0x4] sm:$0xf]
    %v248 = vld [vmem:[#allocation6 + $0x8] sm:$0xf]
    %v249 = vld [vmem:[#allocation6 + $0xc] sm:$0xf]
    %v250 = vld [vmem:[#allocation6 + $0x10] sm:$0xf]
    %v251 = vld [vmem:[#allocation6 + $0x14] sm:$0xf]
    %v252 = vld [vmem:[#allocation6 + $0x18] sm:$0xf]
    %v253 = vld [vmem:[#allocation6 + $0x1c] sm:$0xf]
    %v254 = vld [vmem:[#allocation6 + $0x20] sm:$0xf]
    %v255 = vld [vmem:[#allocation6 + $0x24] sm:$0xf]
    %v256 = vld [vmem:[#allocation6 + $0x28] sm:$0xf]
    %v257 = vld [vmem:[#allocation6 + $0x2c] sm:$0xf]
    %v258 = vld [vmem:[#allocation6 + $0x30] sm:$0xf]
    %v259 = vld [vmem:[#allocation6 + $0x34] sm:$0xf]
    %v260 = vld [vmem:[#allocation6 + $0x38] sm:$0xf]
    %v261 = vld [vmem:[#allocation6 + $0x3c] sm:$0xf]
    %v262 = vld [vmem:[%s6] sm:$0x1]
    %v264 = vperm.slane %v262, 0
    %v282 = vunpack.c.l.b16 %v246
    %v283 = vunpack.c.l.b16 %v247
    %v284 = vunpack.c.l.b16 %v248
    %v285 = vunpack.c.l.b16 %v249
    %v286 = vunpack.c.l.b16 %v250
    %v287 = vunpack.c.l.b16 %v251
    %v288 = vunpack.c.l.b16 %v252
    %v289 = vunpack.c.l.b16 %v253
    %v290 = vunpack.c.l.b16 %v254
    %v291 = vunpack.c.l.b16 %v255
    %v292 = vunpack.c.l.b16 %v256
    %v293 = vunpack.c.l.b16 %v257
    %v294 = vunpack.c.l.b16 %v258
    %v295 = vunpack.c.l.b16 %v259
    %v296 = vunpack.c.l.b16 %v260
    %v297 = vunpack.c.l.b16 %v261
    %v298 = vpack.c.b16 %v283, %v282
    %v299 = vpack.c.b16 %v285, %v284
    %v300 = vpack.c.b16 %v287, %v286
    %v301 = vpack.c.b16 %v289, %v288
    %v302 = vpack.c.b16 %v291, %v290
    %v303 = vpack.c.b16 %v293, %v292
    %v304 = vpack.c.b16 %v295, %v294
    %v305 = vpack.c.b16 %v297, %v296
    %314 = vmatpush.bf16.msra.mxu0 %v305
    %315 = vmatpush.bf16.msra.mxu0 %v304
    %316 = vmatpush.bf16.msra.mxu0 %v303
    %317 = vmatpush.bf16.msra.mxu0 %v302
    %318 = vmatpush.bf16.msra.mxu0 %v301
    %319 = vmatpush.bf16.msra.mxu0 %v300
    %320 = vmatpush.bf16.msra.mxu0 %v299
    %321 = vmatpush.bf16.msra.mxu0 %v298
    %322 = vmatmul.bf16.gmra.mxu0 %v163
    %v323 = vpop.f32.mrf.mxu0
    %v324 = vadd.f32 %v264, %v323
    %v325 = vpop.f32.mrf.mxu0
    %v326 = vadd.f32 %v264, %v325
    %327 = vdwg.mxu0
    %v328 = vxor.u32 %v242, 2147483648
    %v329 = vxor.u32 %v244, 2147483648
    %v330 = vmul.f32 %v328, 1.442695
    %v331 = vpow.pop %v330
    %v332 = vmul.f32 %v329, 1.442695
    %v333 = vpow.pop %v332
    %v334 = vadd.f32 %v331, 1.0
    %v335 = vadd.f32 %v333, 1.0
    %v336 = vrcp.pop %v334
    %v337 = vmul.f32 %v334, %v336
    %v338 = vsub.f32 1.0, %v337
    %v339 = vmul.f32 %v336, %v338
    %v340 = vadd.f32 %v336, %v339
    %vm341 = vweird.f32 %v334
    %vm342 = vweird.f32 %v336
    %vm343 = vmor %vm341, %vm342
    %v344 = vsel %vm343, %v336, %v340
    %v345 = vand.u32 2147483647, %v334
    %vm346 = vcmp.eq.f32.partialorder %v345, 8.507059e+37
    %v347 = vand.u32 %v334, 2147483648
    %v348 = vor.u32 1.1754944e-38, %v347
    %v349 = vsel %vm346, %v348, %v344
    %v350 = vmul.f32 1.0, %v349
    %v351 = vrcp.pop %v335
    %v352 = vmul.f32 %v335, %v351
    %v353 = vsub.f32 1.0, %v352
    %v354 = vmul.f32 %v351, %v353
    %v355 = vadd.f32 %v351, %v354
    %vm356 = vweird.f32 %v335
    %vm357 = vweird.f32 %v351
    %vm358 = vmor %vm356, %vm357
    %v359 = vsel %vm358, %v351, %v355
    %v360 = vand.u32 2147483647, %v335
    %vm361 = vcmp.eq.f32.partialorder %v360, 8.507059e+37
    %v362 = vand.u32 %v335, 2147483648
    %v363 = vor.u32 1.1754944e-38, %v362
    %v364 = vsel %vm361, %v363, %v359
    %v365 = vmul.f32 1.0, %v364
    %v366 = vmul.f32 %v242, %v350
    %v367 = vmul.f32 %v244, %v365
    %v368 = vmul.f32 %v366, %v324
    %v369 = vmul.f32 %v367, %v326
    %v370 = vpack.c.bf16 %v368, %v368
    %v371 = vpack.c.bf16 %v369, %v369
    %372 = vst [vmem:[%s7] sm:$0xf] %v370
    %373 = vst [vmem:[%s7 + $0x4] sm:$0xf] %v371
    // Predicated region
    $region42: #{_lambda_.21} parent=1 // pred_check
      _
    $region43: #{_lambda_.21} parent=1 // pred_check_branch
      %375 = sbr.rel (0) target = $region45
    $region44: #{_lambda_.21} parent=1 // pred_region
      _
    $region45: #{_lambda_.21} parent=1 // pred_fallthru
      _
    // Predicated region
    $region46: #{_lambda_.21} parent=1 // pred_check
      _
    $region47: #{_lambda_.21} parent=1 // pred_check_branch
      %377 = sbr.rel (0) target = $region49
    $region48: #{_lambda_.21} parent=1 // pred_region
      _
    $region49: #{_lambda_.21} parent=1 // pred_fallthru
      _
    %378 = vsyncpa [#allocation3], 1
    %379 = vsyncpa [#allocation5], 1

// kernel: _lambda_.22
$region0: #{_lambda_.22}
  #allocation0 [shape = 'u32[]', space=smem, size = 0x4, offset = 0x4, fixed_abs, tag = 'smem constant byte address 0x4 - core index']
  #allocation1 [shape = 'u32[72,128]{1,0:T(1,128)}', space=vmem, size = 0x9000, scoped, tag = 'internal scratch']
  #allocation2 [shape = 'f32[16,128]{1,0:T(8,128)}', space=vmem, size = 0x2000, scoped, tag = 'scratch operand']
  %s0 = inlined_call_operand.vmem [shape: bf16[16,128], index: 0, kind: input, shape index: {}]
  %s1 = inlined_call_operand.hbm [shape: bf16[8,128,128], index: 1, kind: input, shape index: {}]
  %s2 = inlined_call_operand.hbm [shape: bf16[8,128,128], index: 2, kind: input, shape index: {}]
  %s3 = inlined_call_operand.hbm [shape: bf16[8,128,128], index: 3, kind: input, shape index: {}]
  %s4 = inlined_call_operand.vmem [shape: f32[8,16,1], index: 4, kind: input, shape index: {}]
  %s5 = inlined_call_operand.hbm [shape: bf16[128,128], index: 5, kind: input, shape index: {}]
  %s6 = inlined_call_operand.hbm [shape: bf16[128,128], index: 6, kind: input, shape index: {}]
  %s7 = inlined_call_operand.hbm [shape: bf16[128,128], index: 7, kind: input, shape index: {}]
  %s8 = inlined_call_operand.vmem [shape: bf16[16,128], index: 8, kind: output, shape index: {}]
  %s9 = sld [smem:[#allocation0]]
  $region97: #{_lambda_.22} parent=0
    _
  %s11 = ssub.s32 1, %s9
  %s12 = scalar_select 0, %s11, %s9
  $region1: #{_lambda_.22} parent=0
    #allocation3 [shape = 'u8[65536]{0}', space=vmem, size = 0x10000, scoped, tag = 'input window, operand 1']
    #allocation4 [shape = 's32[2]{0}', space=sflag, size = 0x8, scoped, tag = 'scoped memory for _lambda_.22']
    #allocation5 [shape = 'u8[65536]{0}', space=vmem, size = 0x10000, scoped, tag = 'input window, operand 2']
    #allocation6 [shape = 's32[2]{0}', space=sflag, size = 0x8, scoped, tag = 'scoped memory for _lambda_.22']
    #allocation7 [shape = 'u8[65536]{0}', space=vmem, size = 0x10000, scoped, tag = 'input window, operand 3']
    #allocation8 [shape = 'u8[32768]{0}', space=vmem, size = 0x8000, scoped, tag = 'input window, operand 5, single buffered']
    #allocation9 [shape = 's32[1]{0}', space=sflag, size = 0x4, scoped, tag = 'scoped memory for _lambda_.22']
    #allocation10 [shape = 'u8[32768]{0}', space=vmem, size = 0x8000, scoped, tag = 'input window, operand 6, single buffered']
    #allocation11 [shape = 'u8[32768]{0}', space=vmem, size = 0x8000, scoped, tag = 'input window, operand 7, single buffered']
    #allocation12 [shape = 's32[1]{0}', space=sflag, size = 0x4, scoped, tag = 'scoped memory for _lambda_.22']
    %13 = vsyncpa [#allocation4], 0
    %s14 = scalar_lea.sflag [#allocation4], 1
    %15 = vsyncpa %s14, 0
    %16 = vsyncpa [#allocation6], 0
    %s17 = scalar_lea.sflag [#allocation6], 1
    %18 = vsyncpa %s17, 0
    %19 = vsyncpa [#allocation9], 0
    %20 = vsyncpa [#allocation12], 0
    loop: start=0, step=1, limit=10
    $region2: #{_lambda_.22} parent=1 // loop_pre_header
      _
    $region3: #{_lambda_.22} parent=1 // loop_header
      %s22 = sphi 0, %s26
      %p23 = scmp.ge.s32.totalorder %s22, 10
      %s29 = sphi 0, %s41
      %s30 = sphi 0, %s37
      %s31 = sphi 0, %s29
      %s32 = sphi 0, %s30
      %s33 = sphi 0, %s31
      %s34 = sphi 0, %s32
      %s44 = sphi 0, %s46
      %s47 = sphi 0, %s44
      %s48 = sphi 0, %s47
      %s64 = sphi 0, %s48
      %s70 = sphi 0, %s72
      %s73 = sphi 0, %s70
      %s74 = sphi 0, %s73
      %s90 = sphi 0, %s74
      %s96 = sphi 0, %s98
      %s99 = sphi 0, %s96
      %s100 = sphi 0, %s99
      %s116 = sphi 0, %s100
      %s122 = sphi 0, %s124
      %s125 = sphi 0, %s122
      %s126 = sphi 0, %s125
      %s142 = sphi 0, %s126
      %s150 = sphi 0, %s152
      %s153 = sphi 0, %s150
      %s154 = sphi 0, %s153
      %s170 = sphi 0, %s154
      %s174 = sphi 0, %s174
      %s176 = sphi 0, %s174
      %s177 = sphi 0, %s176
      %s191 = sphi 0, %s177
      %s195 = sphi 0, %s195
      %s197 = sphi 0, %s195
      %s198 = sphi 0, %s197
      %s212 = sphi 0, %s198
      %s216 = sphi 0, %s216
      %s218 = sphi 0, %s216
      %s219 = sphi 0, %s218
      %s233 = sphi 0, %s219
      %s239 = sphi 0, %s241
      %s242 = sphi 0, %s239
      %s243 = sphi 0, %s242
      %s259 = sphi 0, %s243
    $region4: #{_lambda_.22} parent=1 // loop_header_branch
      %25 = sbr.rel (%p23) target = $region8
    $region5: #{_lambda_.22} parent=1 // loop_body
      %s27 = ssub.s32 %s22, 1
      %s28 = ssub.s32 %s22, 2
      %s35 = sadd.s32 1, %s30
      %p36 = scmp.ge.s32.totalorder %s35, 8
      %s37 = scalar_select %p36, 0, %s35
      %s38 = sadd.s32 1, %s29
      %s39 = scalar_select %p36, %s38, %s29
      %p40 = scmp.ge.s32.totalorder %s39, 1
      %s41 = scalar_select %p40, 0, %s39
      %s42 = ssub.s32 %s29, %s41
      %p43 = scmp.eq.s32.totalorder %s42, 0
      %s45 = sadd.s32 %s44, 1
      %s46 = scalar_select %p43, %s44, %s45
      %p49 = pneg %p43
      %p50 = scmp.eq.s32.totalorder %s22, 7
      %p51 = por %p49, %p50
      %p52 = scmp.ne.s32.totalorder %s44, %s47
      %p53 = scmp.eq.s32.totalorder %s22, 0
      %p54 = por %p52, %p53
      %p55 = scmp.ne.s32.totalorder %s44, %s47
      %p56 = scmp.eq.s32.totalorder %s27, 7
      %p57 = por %p55, %p56
      %p58 = scmp.ne.s32.totalorder %s47, %s48
      %p59 = scmp.eq.s32.totalorder %s27, 0
      %p60 = por %p58, %p59
      %p61 = scmp.ne.s32.totalorder %s47, %s48
      %p62 = scmp.eq.s32.totalorder %s28, 7
      %p63 = por %p61, %p62
      %p65 = scmp.ne.s32.totalorder %s48, %s64
      %p66 = scmp.eq.s32.totalorder %s28, 0
      %p67 = por %p65, %p66
      %s68 = ssub.s32 %s30, %s37
      %p69 = scmp.eq.s32.totalorder %s68, 0
      %s71 = sadd.s32 %s70, 1
      %s72 = scalar_select %p69, %s70, %s71
      %p75 = pneg %p69
      %p76 = scmp.eq.s32.totalorder %s22, 7
      %p77 = por %p75, %p76
      %p78 = scmp.ne.s32.totalorder %s70, %s73
      %p79 = scmp.eq.s32.totalorder %s22, 0
      %p80 = por %p78, %p79
      %p81 = scmp.ne.s32.totalorder %s70, %s73
      %p82 = scmp.eq.s32.totalorder %s27, 7
      %p83 = por %p81, %p82
      %p84 = scmp.ne.s32.totalorder %s73, %s74
      %p85 = scmp.eq.s32.totalorder %s27, 0
      %p86 = por %p84, %p85
      %p87 = scmp.ne.s32.totalorder %s73, %s74
      %p88 = scmp.eq.s32.totalorder %s28, 7
      %p89 = por %p87, %p88
      %p91 = scmp.ne.s32.totalorder %s74, %s90
      %p92 = scmp.eq.s32.totalorder %s28, 0
      %p93 = por %p91, %p92
      %s94 = ssub.s32 %s30, %s37
      %p95 = scmp.eq.s32.totalorder %s94, 0
      %s97 = sadd.s32 %s96, 1
      %s98 = scalar_select %p95, %s96, %s97
      %p101 = pneg %p95
      %p102 = scmp.eq.s32.totalorder %s22, 7
      %p103 = por %p101, %p102
      %p104 = scmp.ne.s32.totalorder %s96, %s99
      %p105 = scmp.eq.s32.totalorder %s22, 0
      %p106 = por %p104, %p105
      %p107 = scmp.ne.s32.totalorder %s96, %s99
      %p108 = scmp.eq.s32.totalorder %s27, 7
      %p109 = por %p107, %p108
      %p110 = scmp.ne.s32.totalorder %s99, %s100
      %p111 = scmp.eq.s32.totalorder %s27, 0
      %p112 = por %p110, %p111
      %p113 = scmp.ne.s32.totalorder %s99, %s100
      %p114 = scmp.eq.s32.totalorder %s28, 7
      %p115 = por %p113, %p114
      %p117 = scmp.ne.s32.totalorder %s100, %s116
      %p118 = scmp.eq.s32.totalorder %s28, 0
      %p119 = por %p117, %p118
      %s120 = ssub.s32 %s30, %s37
      %p121 = scmp.eq.s32.totalorder %s120, 0
      %s123 = sadd.s32 %s122, 1
      %s124 = scalar_select %p121, %s122, %s123
      %p127 = pneg %p121
      %p128 = scmp.eq.s32.totalorder %s22, 7
      %p129 = por %p127, %p128
      %p130 = scmp.ne.s32.totalorder %s122, %s125
      %p131 = scmp.eq.s32.totalorder %s22, 0
      %p132 = por %p130, %p131
      %p133 = scmp.ne.s32.totalorder %s122, %s125
      %p134 = scmp.eq.s32.totalorder %s27, 7
      %p135 = por %p133, %p134
      %p136 = scmp.ne.s32.totalorder %s125, %s126
      %p137 = scmp.eq.s32.totalorder %s27, 0
      %p138 = por %p136, %p137
      %p139 = scmp.ne.s32.totalorder %s125, %s126
      %p140 = scmp.eq.s32.totalorder %s28, 7
      %p141 = por %p139, %p140
      %p143 = scmp.ne.s32.totalorder %s126, %s142
      %p144 = scmp.eq.s32.totalorder %s28, 0
      %p145 = por %p143, %p144
      %s146 = ssub.s32 %s30, %s37
      %s147 = ssub.s32 %s29, %s41
      %s148 = sor.u32 %s146, %s147
      %p149 = scmp.eq.s32.totalorder %s148, 0
      %s151 = sadd.s32 %s150, 1
      %s152 = scalar_select %p149, %s150, %s151
      %p155 = pneg %p149
      %p156 = scmp.eq.s32.totalorder %s22, 7
      %p157 = por %p155, %p156
      %p158 = scmp.ne.s32.totalorder %s150, %s153
      %p159 = scmp.eq.s32.totalorder %s22, 0
      %p160 = por %p158, %p159
      %p161 = scmp.ne.s32.totalorder %s150, %s153
      %p162 = scmp.eq.s32.totalorder %s27, 7
      %p163 = por %p161, %p162
      %p164 = scmp.ne.s32.totalorder %s153, %s154
      %p165 = scmp.eq.s32.totalorder %s27, 0
      %p166 = por %p164, %p165
      %p167 = scmp.ne.s32.totalorder %s153, %s154
      %p168 = scmp.eq.s32.totalorder %s28, 7
      %p169 = por %p167, %p168
      %p171 = scmp.ne.s32.totalorder %s154, %s170
      %p172 = scmp.eq.s32.totalorder %s28, 0
      %p173 = por %p171, %p172
      %s175 = sadd.s32 %s174, 1
      %p178 = scmp.eq.s32.totalorder %s22, 7
      %p179 = scmp.ne.s32.totalorder %s174, %s176
      %p180 = scmp.eq.s32.totalorder %s22, 0
      %p181 = por %p179, %p180
      %p182 = scmp.ne.s32.totalorder %s174, %s176
      %p183 = scmp.eq.s32.totalorder %s27, 7
      %p184 = por %p182, %p183
      %p185 = scmp.ne.s32.totalorder %s176, %s177
      %p186 = scmp.eq.s32.totalorder %s27, 0
      %p187 = por %p185, %p186
      %p188 = scmp.ne.s32.totalorder %s176, %s177
      %p189 = scmp.eq.s32.totalorder %s28, 7
      %p190 = por %p188, %p189
      %p192 = scmp.ne.s32.totalorder %s177, %s191
      %p193 = scmp.eq.s32.totalorder %s28, 0
      %p194 = por %p192, %p193
      %s196 = sadd.s32 %s195, 1
      %p199 = scmp.eq.s32.totalorder %s22, 7
      %p200 = scmp.ne.s32.totalorder %s195, %s197
      %p201 = scmp.eq.s32.totalorder %s22, 0
      %p202 = por %p200, %p201
      %p203 = scmp.ne.s32.totalorder %s195, %s197
      %p204 = scmp.eq.s32.totalorder %s27, 7
      %p205 = por %p203, %p204
      %p206 = scmp.ne.s32.totalorder %s197, %s198
      %p207 = scmp.eq.s32.totalorder %s27, 0
      %p208 = por %p206, %p207
      %p209 = scmp.ne.s32.totalorder %s197, %s198
      %p210 = scmp.eq.s32.totalorder %s28, 7
      %p211 = por %p209, %p210
      %p213 = scmp.ne.s32.totalorder %s198, %s212
      %p214 = scmp.eq.s32.totalorder %s28, 0
      %p215 = por %p213, %p214
      %s217 = sadd.s32 %s216, 1
      %p220 = scmp.eq.s32.totalorder %s22, 7
      %p221 = scmp.ne.s32.totalorder %s216, %s218
      %p222 = scmp.eq.s32.totalorder %s22, 0
      %p223 = por %p221, %p222
      %p224 = scmp.ne.s32.totalorder %s216, %s218
      %p225 = scmp.eq.s32.totalorder %s27, 7
      %p226 = por %p224, %p225
      %p227 = scmp.ne.s32.totalorder %s218, %s219
      %p228 = scmp.eq.s32.totalorder %s27, 0
      %p229 = por %p227, %p228
      %p230 = scmp.ne.s32.totalorder %s218, %s219
      %p231 = scmp.eq.s32.totalorder %s28, 7
      %p232 = por %p230, %p231
      %p234 = scmp.ne.s32.totalorder %s219, %s233
      %p235 = scmp.eq.s32.totalorder %s28, 0
      %p236 = por %p234, %p235
      %s237 = ssub.s32 %s29, %s41
      %p238 = scmp.eq.s32.totalorder %s237, 0
      %s240 = sadd.s32 %s239, 1
      %s241 = scalar_select %p238, %s239, %s240
      %p244 = pneg %p238
      %p245 = scmp.eq.s32.totalorder %s22, 7
      %p246 = por %p244, %p245
      %p247 = scmp.ne.s32.totalorder %s239, %s242
      %p248 = scmp.eq.s32.totalorder %s22, 0
      %p249 = por %p247, %p248
      %p250 = scmp.ne.s32.totalorder %s239, %s242
      %p251 = scmp.eq.s32.totalorder %s27, 7
      %p252 = por %p250, %p251
      %p253 = scmp.ne.s32.totalorder %s242, %s243
      %p254 = scmp.eq.s32.totalorder %s27, 0
      %p255 = por %p253, %p254
      %p256 = scmp.ne.s32.totalorder %s242, %s243
      %p257 = scmp.eq.s32.totalorder %s28, 7
      %p258 = por %p256, %p257
      %p260 = scmp.ne.s32.totalorder %s243, %s259
      %p261 = scmp.eq.s32.totalorder %s28, 0
      %p262 = por %p260, %p261
      %p263 = scmp.le.s32.totalorder 1, %s22
      %p264 = scmp.lt.s32.totalorder %s22, 9
      %p265 = pnand %p263, %p264
      %p266 = pneg %p265
      // Predicated region
      $region9: #{_lambda_.22} parent=5 // pred_check
        _
      $region10: #{_lambda_.22} parent=5 // pred_check_branch
        %268 = sbr.rel (%p265) target = $region12
      $region11: #{_lambda_.22} parent=5 // pred_region
        %s269 = ssub.s32 %s22, 1
        // Predicated region
        $region13: #{_lambda_.22} parent=11 // pred_check
          %p270 = pneg %p60
        $region14: #{_lambda_.22} parent=11 // pred_check_branch
          %272 = sbr.rel (%p270) target = $region16
        $region15: #{_lambda_.22} parent=11 // pred_region
          %s273 = smul.u32 2, %s31
          %p274 = scmp.lt.s32.totalorder %s273, 1
          %s275 = scalar_select %p274, %s273, 1
          %s276 = smul.addr %s275, 4
          %s277 = scalar_lea.vmem %s0, %s276
          %s278 = smul.u32 2, %s31
        $region16: #{_lambda_.22} parent=11 // pred_fallthru
          _
        // Predicated region
        $region17: #{_lambda_.22} parent=11 // pred_check
          %p279 = pneg %p187
        $region18: #{_lambda_.22} parent=11 // pred_check_branch
          %281 = sbr.rel (%p279) target = $region20
        $region19: #{_lambda_.22} parent=11 // pred_region
          %283 = vsyncadd [#allocation9], 0
          %s284 = sshll.u32 %s5, 4
          %s285 = int_to_ptr.hbm [resolvable:$true] %s284
          %s286 = sshll.u32 [#allocation8], 4
          %s287 = int_to_ptr.vmem [resolvable:$true] %s286
          %292 = dma.hbm_to_vmem [thread:$0]  %s285, 1024, %s287, [#allocation9], 64, 64, 4
        $region20: #{_lambda_.22} parent=11 // pred_fallthru
          _
        // Predicated region
        $region21: #{_lambda_.22} parent=11 // pred_check
          %p293 = pneg %p208
        $region22: #{_lambda_.22} parent=11 // pred_check_branch
          %295 = sbr.rel (%p293) target = $region24
        $region23: #{_lambda_.22} parent=11 // pred_region
          %297 = vsyncadd [#allocation9], 0
          %s298 = sshll.u32 %s6, 4
          %s299 = int_to_ptr.hbm [resolvable:$true] %s298
          %s300 = sshll.u32 [#allocation10], 4
          %s301 = int_to_ptr.vmem [resolvable:$true] %s300
          %306 = dma.hbm_to_vmem [thread:$0]  %s299, 1024, %s301, [#allocation9], 64, 64, 4
        $region24: #{_lambda_.22} parent=11 // pred_fallthru
          _
        // Predicated region
        $region25: #{_lambda_.22} parent=11 // pred_check
          %p307 = pneg %p229
        $region26: #{_lambda_.22} parent=11 // pred_check_branch
          %309 = sbr.rel (%p307) target = $region28
        $region27: #{_lambda_.22} parent=11 // pred_region
          %311 = vsyncadd [#allocation12], 0
          %s312 = sshll.u32 %s7, 4
          %s313 = int_to_ptr.hbm [resolvable:$true] %s312
          %s314 = sshll.u32 [#allocation11], 4
          %s315 = int_to_ptr.vmem [resolvable:$true] %s314
          %320 = dma.hbm_to_vmem [thread:$0]  %s313, 1024, %s315, [#allocation12], 64, 64, 4
        $region28: #{_lambda_.22} parent=11 // pred_fallthru
          _
      $region12: #{_lambda_.22} parent=5 // pred_fallthru
        _
      %p321 = scmp.lt.s32.totalorder %s22, 8
      // Predicated region
      $region29: #{_lambda_.22} parent=5 // pred_check
        %p322 = pneg %p321
      $region30: #{_lambda_.22} parent=5 // pred_check_branch
        %324 = sbr.rel (%p322) target = $region32
      $region31: #{_lambda_.22} parent=5 // pred_region
        // Predicated region
        $region33: #{_lambda_.22} parent=31 // pred_check
          %p325 = pneg %p80
        $region34: #{_lambda_.22} parent=31 // pred_check_branch
          %327 = sbr.rel (%p325) target = $region36
        $region35: #{_lambda_.22} parent=31 // pred_region
          %s328 = sand.u32 %s70, 1
          %s329 = scalar_lea.sflag [#allocation4], %s328
          %s330 = sand.u32 %s70, 1
          %s331 = smul.addr %s330, 64
          %s332 = scalar_lea.vmem [#allocation3], %s331
          %334 = vsyncadd %s329, 0
          %s335 = smul.addr %s30, 16
          %s336 = smul.addr %s335, 4
          %s337 = scalar_lea.hbm %s1, %s336
          %s338 = sshll.u32 %s337, 4
          %s339 = int_to_ptr.hbm [resolvable:$true] %s338
          %s340 = sshll.u32 %s332, 4
          %s341 = int_to_ptr.vmem [resolvable:$true] %s340
          %346 = dma.hbm_to_vmem [thread:$0]  %s339, 1024, %s341, %s329, 64, 64, 4
        $region36: #{_lambda_.22} parent=31 // pred_fallthru
          _
        // Predicated region
        $region37: #{_lambda_.22} parent=31 // pred_check
          %p347 = pneg %p106
        $region38: #{_lambda_.22} parent=31 // pred_check_branch
          %349 = sbr.rel (%p347) target = $region40
        $region39: #{_lambda_.22} parent=31 // pred_region
          %s350 = sand.u32 %s22, 1
          %s351 = scalar_lea.sflag [#allocation6], %s350
          %s352 = sand.u32 %s96, 1
          %s353 = smul.addr %s352, 64
          %s354 = scalar_lea.vmem [#allocation5], %s353
          %356 = vsyncadd %s351, 0
          %s357 = smul.addr %s30, 16
          %s358 = smul.addr %s357, 4
          %s359 = scalar_lea.hbm %s2, %s358
          %s360 = sshll.u32 %s359, 4
          %s361 = int_to_ptr.hbm [resolvable:$true] %s360
          %s362 = sshll.u32 %s354, 4
          %s363 = int_to_ptr.vmem [resolvable:$true] %s362
          %368 = dma.hbm_to_vmem [thread:$0]  %s361, 1024, %s363, %s351, 64, 64, 4
        $region40: #{_lambda_.22} parent=31 // pred_fallthru
          _
        // Predicated region
        $region41: #{_lambda_.22} parent=31 // pred_check
          %p369 = pneg %p132
        $region42: #{_lambda_.22} parent=31 // pred_check_branch
          %371 = sbr.rel (%p369) target = $region44
        $region43: #{_lambda_.22} parent=31 // pred_region
          %s372 = sand.u32 %s22, 1
          %s373 = scalar_lea.sflag [#allocation6], %s372
          %s374 = sand.u32 %s122, 1
          %s375 = smul.addr %s374, 64
          %s376 = scalar_lea.vmem [#allocation7], %s375
          %378 = vsyncadd %s373, 0
          %s379 = smul.addr %s30, 16
          %s380 = smul.addr %s379, 4
          %s381 = scalar_lea.hbm %s3, %s380
          %s382 = sshll.u32 %s381, 4
          %s383 = int_to_ptr.hbm [resolvable:$true] %s382
          %s384 = sshll.u32 %s376, 4
          %s385 = int_to_ptr.vmem [resolvable:$true] %s384
          %390 = dma.hbm_to_vmem [thread:$0]  %s383, 1024, %s385, %s373, 64, 64, 4
        $region44: #{_lambda_.22} parent=31 // pred_fallthru
          _
        // Predicated region
        $region45: #{_lambda_.22} parent=31 // pred_check
          %p391 = pneg %p160
        $region46: #{_lambda_.22} parent=31 // pred_check_branch
          %393 = sbr.rel (%p391) target = $region48
        $region47: #{_lambda_.22} parent=31 // pred_region
          %s394 = smul.u32 2, %s29
          %p395 = scmp.lt.s32.totalorder %s30, 7
          %s396 = scalar_select %p395, %s30, 7
          %p397 = scmp.lt.s32.totalorder %s394, 1
          %s398 = scalar_select %p397, %s394, 1
          %s399 = smul.addr %s396, 2
          %s400 = sadd.s32 %s398, %s399
          %s401 = smul.addr %s400, 8
          %s402 = scalar_lea.vmem %s4, %s401
          %s403 = smul.u32 2, %s29
        $region48: #{_lambda_.22} parent=31 // pred_fallthru
          _
      $region32: #{_lambda_.22} parent=5 // pred_fallthru
        _
      %p404 = scmp.le.s32.totalorder 1, %s22
      %p405 = scmp.lt.s32.totalorder %s22, 9
      %p406 = pnand %p404, %p405
      %p407 = pneg %p406
      // Predicated region
      $region49: #{_lambda_.22} parent=5 // pred_check
        _
      $region50: #{_lambda_.22} parent=5 // pred_check_branch
        %409 = sbr.rel (%p406) target = $region52
      $region51: #{_lambda_.22} parent=5 // pred_region
        %s410 = ssub.s32 %s22, 1
        %s411 = sand.u32 %s73, 1
        %s412 = scalar_lea.sflag [#allocation4], %s411
        %s413 = sand.u32 %s73, 1
        %s414 = smul.addr %s413, 64
        %s415 = scalar_lea.vmem [#allocation3], %s414
        // Predicated region
        $region53: #{_lambda_.22} parent=51 // pred_check
          %p416 = pneg %p86
        $region54: #{_lambda_.22} parent=51 // pred_check_branch
          %418 = sbr.rel (%p416) target = $region56
        $region55: #{_lambda_.22} parent=51 // pred_region
          %420 = dma.done %s412, 1024
        $region56: #{_lambda_.22} parent=51 // pred_fallthru
          _
        %s421 = sand.u32 %s27, 1
        %s422 = scalar_lea.sflag [#allocation6], %s421
        %s423 = sand.u32 %s99, 1
        %s424 = smul.addr %s423, 64
        %s425 = scalar_lea.vmem [#allocation5], %s424
        // Predicated region
        $region57: #{_lambda_.22} parent=51 // pred_check
          %p426 = pneg %p112
        $region58: #{_lambda_.22} parent=51 // pred_check_branch
          %428 = sbr.rel (%p426) target = $region60
        $region59: #{_lambda_.22} parent=51 // pred_region
          %430 = dma.done %s422, 1024
        $region60: #{_lambda_.22} parent=51 // pred_fallthru
          _
        %s431 = sand.u32 %s27, 1
        %s432 = scalar_lea.sflag [#allocation6], %s431
        %s433 = sand.u32 %s125, 1
        %s434 = smul.addr %s433, 64
        %s435 = scalar_lea.vmem [#allocation7], %s434
        // Predicated region
        $region61: #{_lambda_.22} parent=51 // pred_check
          %p436 = pneg %p138
        $region62: #{_lambda_.22} parent=51 // pred_check_branch
          %438 = sbr.rel (%p436) target = $region64
        $region63: #{_lambda_.22} parent=51 // pred_region
          %440 = dma.done %s432, 1024
        $region64: #{_lambda_.22} parent=51 // pred_fallthru
          _
        // Predicated region
        $region65: #{_lambda_.22} parent=51 // pred_check
          %p441 = pneg %p187
        $region66: #{_lambda_.22} parent=51 // pred_check_branch
          %443 = sbr.rel (%p441) target = $region68
        $region67: #{_lambda_.22} parent=51 // pred_region
          %445 = dma.done [#allocation9], 1024
        $region68: #{_lambda_.22} parent=51 // pred_fallthru
          _
        // Predicated region
        $region69: #{_lambda_.22} parent=51 // pred_check
          %p446 = pneg %p208
        $region70: #{_lambda_.22} parent=51 // pred_check_branch
          %448 = sbr.rel (%p446) target = $region72
        $region71: #{_lambda_.22} parent=51 // pred_region
          %450 = dma.done [#allocation9], 1024
        $region72: #{_lambda_.22} parent=51 // pred_fallthru
          _
        // Predicated region
        $region73: #{_lambda_.22} parent=51 // pred_check
          %p451 = pneg %p229
        $region74: #{_lambda_.22} parent=51 // pred_check_branch
          %453 = sbr.rel (%p451) target = $region76
        $region75: #{_lambda_.22} parent=51 // pred_region
          %455 = dma.done [#allocation12], 1024
        $region76: #{_lambda_.22} parent=51 // pred_fallthru
          _
        %s456 = smul.u32 2, %s31
        %p457 = scmp.lt.s32.totalorder %s456, 1
        %s458 = scalar_select %p457, %s456, 1
        %s459 = smul.addr %s458, 4
        %s460 = scalar_lea.vmem %s0, %s459
        %p461 = pneg %p60
        %p462 = pneg %p57
        %s463 = sand.u32 %s73, 1
        %s464 = scalar_lea.sflag [#allocation4], %s463
        %s465 = sand.u32 %s73, 1
        %s466 = smul.addr %s465, 64
        %s467 = scalar_lea.vmem [#allocation3], %s466
        %p468 = pneg %p86
        %p469 = pneg %p83
        %s470 = sand.u32 %s27, 1
        %s471 = scalar_lea.sflag [#allocation6], %s470
        %s472 = sand.u32 %s99, 1
        %s473 = smul.addr %s472, 64
        %s474 = scalar_lea.vmem [#allocation5], %s473
        %p475 = pneg %p112
        %p476 = pneg %p109
        %s477 = sand.u32 %s27, 1
        %s478 = scalar_lea.sflag [#allocation6], %s477
        %s479 = sand.u32 %s125, 1
        %s480 = smul.addr %s479, 64
        %s481 = scalar_lea.vmem [#allocation7], %s480
        %p482 = pneg %p138
        %p483 = pneg %p135
        %s484 = smul.u32 2, %s31
        %p485 = scmp.lt.s32.totalorder %s32, 7
        %s486 = scalar_select %p485, %s32, 7
        %p487 = scmp.lt.s32.totalorder %s484, 1
        %s488 = scalar_select %p487, %s484, 1
        %s489 = smul.addr %s486, 2
        %s490 = sadd.s32 %s488, %s489
        %s491 = smul.addr %s490, 8
        %s492 = scalar_lea.vmem %s4, %s491
        %p493 = pneg %p166
        %p494 = pneg %p163
        %p495 = pneg %p187
        %p496 = pneg %p184
        %p497 = pneg %p208
        %p498 = pneg %p205
        %p499 = pneg %p229
        %p500 = pneg %p226
        %p501 = pneg %p255
        %p502 = pneg %p252
        %s503 = smul.u32 2, %s31
        %p504 = scmp.lt.s32.totalorder %s503, 1
        %s505 = scalar_select %p504, %s503, 1
        %s506 = smul.addr %s505, 4
        %s507 = scalar_lea.vmem %s8, %s506
        %s508 = smul.u32 2, %s31
        %p509 = scmp.lt.s32.totalorder %s508, 1
        %s510 = scalar_select %p509, %s508, 1
        %s511 = smul.addr %s510, 4
        %s512 = scalar_lea.vmem %s0, %s511
        %s513 = smul.u32 2, %s31
        %s514 = smul.u32 2, %s31
        %p515 = scmp.lt.s32.totalorder %s32, 7
        %s516 = scalar_select %p515, %s32, 7
        %p517 = scmp.lt.s32.totalorder %s514, 1
        %s518 = scalar_select %p517, %s514, 1
        %s519 = smul.addr %s516, 2
        %s520 = sadd.s32 %s518, %s519
        %s521 = smul.addr %s520, 8
        %s522 = scalar_lea.vmem %s4, %s521
        %s523 = smul.u32 2, %s31
        %s524 = smul.u32 2, %s31
        %p525 = scmp.lt.s32.totalorder %s524, 1
        %s526 = scalar_select %p525, %s524, 1
        %s527 = smul.addr %s526, 4
        %s528 = scalar_lea.vmem %s8, %s527
        %s529 = smul.u32 2, %s31
        %v530 = vld [vmem:[%s512] sm:$0xf]
        %v531 = vld [vmem:[%s512 + $0x4] sm:$0xf]
        %p532 = scmp.eq.s32.totalorder %s32, 0
        // Predicated region
        $region77: #{_lambda_.22} parent=51 // pred_check
          %p533 = pneg %p532
        $region78: #{_lambda_.22} parent=51 // pred_check_branch
          %535 = sbr.rel (%p533) target = $region80
        $region79: #{_lambda_.22} parent=51 // pred_region
          %v536 = vld [vmem:[#allocation8] sm:$0xf]
          %v537 = vld [vmem:[#allocation8 + $0x4] sm:$0xf]
          %v538 = vld [vmem:[#allocation8 + $0x8] sm:$0xf]
          %v539 = vld [vmem:[#allocation8 + $0xc] sm:$0xf]
          %v540 = vld [vmem:[#allocation8 + $0x10] sm:$0xf]
          %v541 = vld [vmem:[#allocation8 + $0x14] sm:$0xf]
          %v542 = vld [vmem:[#allocation8 + $0x18] sm:$0xf]
          %v543 = vld [vmem:[#allocation8 + $0x1c] sm:$0xf]
          %v544 = vld [vmem:[#allocation8 + $0x20] sm:$0xf]
          %v545 = vld [vmem:[#allocation8 + $0x24] sm:$0xf]
          %v546 = vld [vmem:[#allocation8 + $0x28] sm:$0xf]
          %v547 = vld [vmem:[#allocation8 + $0x2c] sm:$0xf]
          %v548 = vld [vmem:[#allocation8 + $0x30] sm:$0xf]
          %v549 = vld [vmem:[#allocation8 + $0x34] sm:$0xf]
          %v550 = vld [vmem:[#allocation8 + $0x38] sm:$0xf]
          %v551 = vld [vmem:[#allocation8 + $0x3c] sm:$0xf]
          %v554 = vunpack.c.l.b16 %v530
          %v555 = vunpack.c.l.b16 %v531
          %v556 = vpack.c.b16 %v555, %v554
          %v574 = vunpack.c.l.b16 %v536
          %v575 = vunpack.c.l.b16 %v537
          %v576 = vunpack.c.l.b16 %v538
          %v577 = vunpack.c.l.b16 %v539
          %v578 = vunpack.c.l.b16 %v540
          %v579 = vunpack.c.l.b16 %v541
          %v580 = vunpack.c.l.b16 %v542
          %v581 = vunpack.c.l.b16 %v543
          %v582 = vunpack.c.l.b16 %v544
          %v583 = vunpack.c.l.b16 %v545
          %v584 = vunpack.c.l.b16 %v546
          %v585 = vunpack.c.l.b16 %v547
          %v586 = vunpack.c.l.b16 %v548
          %v587 = vunpack.c.l.b16 %v549
          %v588 = vunpack.c.l.b16 %v550
          %v589 = vunpack.c.l.b16 %v551
          %v590 = vpack.c.b16 %v575, %v574
          %v591 = vpack.c.b16 %v577, %v576
          %v592 = vpack.c.b16 %v579, %v578
          %v593 = vpack.c.b16 %v581, %v580
          %v594 = vpack.c.b16 %v583, %v582
          %v595 = vpack.c.b16 %v585, %v584
          %v596 = vpack.c.b16 %v587, %v586
          %v597 = vpack.c.b16 %v589, %v588
          %606 = vmatpush.bf16.msra.mxu0 %v597
          %607 = vmatpush.bf16.msra.mxu0 %v596
          %608 = vmatpush.bf16.msra.mxu0 %v595
          %609 = vmatpush.bf16.msra.mxu0 %v594
          %610 = vmatpush.bf16.msra.mxu0 %v593
          %611 = vmatpush.bf16.msra.mxu0 %v592
          %612 = vmatpush.bf16.msra.mxu0 %v591
          %613 = vmatpush.bf16.msra.mxu0 %v590
          %614 = vmatmul.bf16.gmra.mxu0 %v556
          %v615 = vpop.f32.mrf.mxu0
          %v616 = vadd.f32 0.0, %v615
          %v617 = vpop.f32.mrf.mxu0
          %v618 = vadd.f32 0.0, %v617
          %619 = vdwg.mxu0
          %v620 = vld [vmem:[#allocation10] sm:$0xf]
          %v621 = vld [vmem:[#allocation10 + $0x4] sm:$0xf]
          %v622 = vld [vmem:[#allocation10 + $0x8] sm:$0xf]
          %v623 = vld [vmem:[#allocation10 + $0xc] sm:$0xf]
          %v624 = vld [vmem:[#allocation10 + $0x10] sm:$0xf]
          %v625 = vld [vmem:[#allocation10 + $0x14] sm:$0xf]
          %v626 = vld [vmem:[#allocation10 + $0x18] sm:$0xf]
          %v627 = vld [vmem:[#allocation10 + $0x1c] sm:$0xf]
          %v628 = vld [vmem:[#allocation10 + $0x20] sm:$0xf]
          %v629 = vld [vmem:[#allocation10 + $0x24] sm:$0xf]
          %v630 = vld [vmem:[#allocation10 + $0x28] sm:$0xf]
          %v631 = vld [vmem:[#allocation10 + $0x2c] sm:$0xf]
          %v632 = vld [vmem:[#allocation10 + $0x30] sm:$0xf]
          %v633 = vld [vmem:[#allocation10 + $0x34] sm:$0xf]
          %v634 = vld [vmem:[#allocation10 + $0x38] sm:$0xf]
          %v635 = vld [vmem:[#allocation10 + $0x3c] sm:$0xf]
          %v652 = vunpack.c.l.b16 %v620
          %v653 = vunpack.c.l.b16 %v621
          %v654 = vunpack.c.l.b16 %v622
          %v655 = vunpack.c.l.b16 %v623
          %v656 = vunpack.c.l.b16 %v624
          %v657 = vunpack.c.l.b16 %v625
          %v658 = vunpack.c.l.b16 %v626
          %v659 = vunpack.c.l.b16 %v627
          %v660 = vunpack.c.l.b16 %v628
          %v661 = vunpack.c.l.b16 %v629
          %v662 = vunpack.c.l.b16 %v630
          %v663 = vunpack.c.l.b16 %v631
          %v664 = vunpack.c.l.b16 %v632
          %v665 = vunpack.c.l.b16 %v633
          %v666 = vunpack.c.l.b16 %v634
          %v667 = vunpack.c.l.b16 %v635
          %v668 = vpack.c.b16 %v653, %v652
          %v669 = vpack.c.b16 %v655, %v654
          %v670 = vpack.c.b16 %v657, %v656
          %v671 = vpack.c.b16 %v659, %v658
          %v672 = vpack.c.b16 %v661, %v660
          %v673 = vpack.c.b16 %v663, %v662
          %v674 = vpack.c.b16 %v665, %v664
          %v675 = vpack.c.b16 %v667, %v666
          %684 = vmatpush.bf16.msra.mxu0 %v675
          %685 = vmatpush.bf16.msra.mxu0 %v674
          %686 = vmatpush.bf16.msra.mxu0 %v673
          %687 = vmatpush.bf16.msra.mxu0 %v672
          %688 = vmatpush.bf16.msra.mxu0 %v671
          %689 = vmatpush.bf16.msra.mxu0 %v670
          %690 = vmatpush.bf16.msra.mxu0 %v669
          %691 = vmatpush.bf16.msra.mxu0 %v668
          %692 = vmatmul.bf16.gmra.mxu0 %v556
          %v693 = vpop.f32.mrf.mxu0
          %v694 = vadd.f32 0.0, %v693
          %v695 = vpop.f32.mrf.mxu0
          %v696 = vadd.f32 0.0, %v695
          %697 = vdwg.mxu0
          %v698 = vxor.u32 %v616, 2147483648
          %v699 = vxor.u32 %v618, 2147483648
          %v700 = vmul.f32 %v698, 1.442695
          %v701 = vpow.pop %v700
          %v702 = vmul.f32 %v699, 1.442695
          %v703 = vpow.pop %v702
          %v704 = vadd.f32 %v701, 1.0
          %v705 = vadd.f32 %v703, 1.0
          %v706 = vrcp.pop %v704
          %v707 = vmul.f32 %v704, %v706
          %v708 = vsub.f32 1.0, %v707
          %v709 = vmul.f32 %v706, %v708
          %v710 = vadd.f32 %v706, %v709
          %vm711 = vweird.f32 %v704
          %vm712 = vweird.f32 %v706
          %vm713 = vmor %vm711, %vm712
          %v714 = vsel %vm713, %v706, %v710
          %v715 = vand.u32 2147483647, %v704
          %vm716 = vcmp.eq.f32.partialorder %v715, 8.507059e+37
          %v717 = vand.u32 %v704, 2147483648
          %v718 = vor.u32 1.1754944e-38, %v717
          %v719 = vsel %vm716, %v718, %v714
          %v720 = vmul.f32 1.0, %v719
          %v721 = vrcp.pop %v705
          %v722 = vmul.f32 %v705, %v721
          %v723 = vsub.f32 1.0, %v722
          %v724 = vmul.f32 %v721, %v723
          %v725 = vadd.f32 %v721, %v724
          %vm726 = vweird.f32 %v705
          %vm727 = vweird.f32 %v721
          %vm728 = vmor %vm726, %vm727
          %v729 = vsel %vm728, %v721, %v725
          %v730 = vand.u32 2147483647, %v705
          %vm731 = vcmp.eq.f32.partialorder %v730, 8.507059e+37
          %v732 = vand.u32 %v705, 2147483648
          %v733 = vor.u32 1.1754944e-38, %v732
          %v734 = vsel %vm731, %v733, %v729
          %v735 = vmul.f32 1.0, %v734
          %v736 = vmul.f32 %v616, %v720
          %v737 = vmul.f32 %v618, %v735
          %v738 = vmul.f32 %v736, %v694
          %v739 = vmul.f32 %v737, %v696
          %v740 = vpack.c.bf16 %v739, %v738
          %v741 = vld [vmem:[#allocation11] sm:$0xf]
          %v742 = vld [vmem:[#allocation11 + $0x4] sm:$0xf]
          %v743 = vld [vmem:[#allocation11 + $0x8] sm:$0xf]
          %v744 = vld [vmem:[#allocation11 + $0xc] sm:$0xf]
          %v745 = vld [vmem:[#allocation11 + $0x10] sm:$0xf]
          %v746 = vld [vmem:[#allocation11 + $0x14] sm:$0xf]
          %v747 = vld [vmem:[#allocation11 + $0x18] sm:$0xf]
          %v748 = vld [vmem:[#allocation11 + $0x1c] sm:$0xf]
          %v749 = vld [vmem:[#allocation11 + $0x20] sm:$0xf]
          %v750 = vld [vmem:[#allocation11 + $0x24] sm:$0xf]
          %v751 = vld [vmem:[#allocation11 + $0x28] sm:$0xf]
          %v752 = vld [vmem:[#allocation11 + $0x2c] sm:$0xf]
          %v753 = vld [vmem:[#allocation11 + $0x30] sm:$0xf]
          %v754 = vld [vmem:[#allocation11 + $0x34] sm:$0xf]
          %v755 = vld [vmem:[#allocation11 + $0x38] sm:$0xf]
          %v756 = vld [vmem:[#allocation11 + $0x3c] sm:$0xf]
          %v773 = vunpack.c.l.b16 %v741
          %v774 = vunpack.c.l.b16 %v742
          %v775 = vunpack.c.l.b16 %v743
          %v776 = vunpack.c.l.b16 %v744
          %v777 = vunpack.c.l.b16 %v745
          %v778 = vunpack.c.l.b16 %v746
          %v779 = vunpack.c.l.b16 %v747
          %v780 = vunpack.c.l.b16 %v748
          %v781 = vunpack.c.l.b16 %v749
          %v782 = vunpack.c.l.b16 %v750
          %v783 = vunpack.c.l.b16 %v751
          %v784 = vunpack.c.l.b16 %v752
          %v785 = vunpack.c.l.b16 %v753
          %v786 = vunpack.c.l.b16 %v754
          %v787 = vunpack.c.l.b16 %v755
          %v788 = vunpack.c.l.b16 %v756
          %v789 = vpack.c.b16 %v774, %v773
          %v790 = vpack.c.b16 %v776, %v775
          %v791 = vpack.c.b16 %v778, %v777
          %v792 = vpack.c.b16 %v780, %v779
          %v793 = vpack.c.b16 %v782, %v781
          %v794 = vpack.c.b16 %v784, %v783
          %v795 = vpack.c.b16 %v786, %v785
          %v796 = vpack.c.b16 %v788, %v787
          %805 = vmatpush.bf16.msra.mxu0 %v796
          %806 = vmatpush.bf16.msra.mxu0 %v795
          %807 = vmatpush.bf16.msra.mxu0 %v794
          %808 = vmatpush.bf16.msra.mxu0 %v793
          %809 = vmatpush.bf16.msra.mxu0 %v792
          %810 = vmatpush.bf16.msra.mxu0 %v791
          %811 = vmatpush.bf16.msra.mxu0 %v790
          %812 = vmatpush.bf16.msra.mxu0 %v789
          %813 = vmatmul.bf16.gmra.mxu0 %v740
          %v814 = vpop.f32.mrf.mxu0
          %v815 = vadd.f32 0.0, %v814
          %v816 = vpop.f32.mrf.mxu0
          %v817 = vadd.f32 0.0, %v816
          %818 = vdwg.mxu0
          %819 = vst [vmem:[#allocation2] sm:$0xff] %v815
          %820 = vst [vmem:[#allocation2 + $0x8] sm:$0xff] %v817
        $region80: #{_lambda_.22} parent=51 // pred_fallthru
          _
        %v821 = vld [vmem:[%s415] sm:$0xf]
        %v822 = vld [vmem:[%s415 + $0x4] sm:$0xf]
        %v823 = vld [vmem:[%s415 + $0x8] sm:$0xf]
        %v824 = vld [vmem:[%s415 + $0xc] sm:$0xf]
        %v825 = vld [vmem:[%s415 + $0x10] sm:$0xf]
        %v826 = vld [vmem:[%s415 + $0x14] sm:$0xf]
        %v827 = vld [vmem:[%s415 + $0x18] sm:$0xf]
        %v828 = vld [vmem:[%s415 + $0x1c] sm:$0xf]
        %v829 = vld [vmem:[%s415 + $0x20] sm:$0xf]
        %v830 = vld [vmem:[%s415 + $0x24] sm:$0xf]
        %v831 = vld [vmem:[%s415 + $0x28] sm:$0xf]
        %v832 = vld [vmem:[%s415 + $0x2c] sm:$0xf]
        %v833 = vld [vmem:[%s415 + $0x30] sm:$0xf]
        %v834 = vld [vmem:[%s415 + $0x34] sm:$0xf]
        %v835 = vld [vmem:[%s415 + $0x38] sm:$0xf]
        %v836 = vld [vmem:[%s415 + $0x3c] sm:$0xf]
        %v839 = vunpack.c.l.b16 %v530
        %v840 = vunpack.c.l.b16 %v531
        %v841 = vpack.c.b16 %v840, %v839
        %v859 = vunpack.c.l.b16 %v821
        %v860 = vunpack.c.l.b16 %v822
        %v861 = vunpack.c.l.b16 %v823
        %v862 = vunpack.c.l.b16 %v824
        %v863 = vunpack.c.l.b16 %v825
        %v864 = vunpack.c.l.b16 %v826
        %v865 = vunpack.c.l.b16 %v827
        %v866 = vunpack.c.l.b16 %v828
        %v867 = vunpack.c.l.b16 %v829
        %v868 = vunpack.c.l.b16 %v830
        %v869 = vunpack.c.l.b16 %v831
        %v870 = vunpack.c.l.b16 %v832
        %v871 = vunpack.c.l.b16 %v833
        %v872 = vunpack.c.l.b16 %v834
        %v873 = vunpack.c.l.b16 %v835
        %v874 = vunpack.c.l.b16 %v836
        %v875 = vpack.c.b16 %v860, %v859
        %v876 = vpack.c.b16 %v862, %v861
        %v877 = vpack.c.b16 %v864, %v863
        %v878 = vpack.c.b16 %v866, %v865
        %v879 = vpack.c.b16 %v868, %v867
        %v880 = vpack.c.b16 %v870, %v869
        %v881 = vpack.c.b16 %v872, %v871
        %v882 = vpack.c.b16 %v874, %v873
        %891 = vmatpush.bf16.msra.mxu0 %v882
        %892 = vmatpush.bf16.msra.mxu0 %v881
        %893 = vmatpush.bf16.msra.mxu0 %v880
        %894 = vmatpush.bf16.msra.mxu0 %v879
        %895 = vmatpush.bf16.msra.mxu0 %v878
        %896 = vmatpush.bf16.msra.mxu0 %v877
        %897 = vmatpush.bf16.msra.mxu0 %v876
        %898 = vmatpush.bf16.msra.mxu0 %v875
        %899 = vmatmul.bf16.gmra.mxu0 %v841
        %v900 = vpop.f32.mrf.mxu0
        %v901 = vadd.f32 0.0, %v900
        %v902 = vpop.f32.mrf.mxu0
        %v903 = vadd.f32 0.0, %v902
        %904 = vdwg.mxu0
        %v905 = vld [vmem:[%s425] sm:$0xf]
        %v906 = vld [vmem:[%s425 + $0x4] sm:$0xf]
        %v907 = vld [vmem:[%s425 + $0x8] sm:$0xf]
        %v908 = vld [vmem:[%s425 + $0xc] sm:$0xf]
        %v909 = vld [vmem:[%s425 + $0x10] sm:$0xf]
        %v910 = vld [vmem:[%s425 + $0x14] sm:$0xf]
        %v911 = vld [vmem:[%s425 + $0x18] sm:$0xf]
        %v912 = vld [vmem:[%s425 + $0x1c] sm:$0xf]
        %v913 = vld [vmem:[%s425 + $0x20] sm:$0xf]
        %v914 = vld [vmem:[%s425 + $0x24] sm:$0xf]
        %v915 = vld [vmem:[%s425 + $0x28] sm:$0xf]
        %v916 = vld [vmem:[%s425 + $0x2c] sm:$0xf]
        %v917 = vld [vmem:[%s425 + $0x30] sm:$0xf]
        %v918 = vld [vmem:[%s425 + $0x34] sm:$0xf]
        %v919 = vld [vmem:[%s425 + $0x38] sm:$0xf]
        %v920 = vld [vmem:[%s425 + $0x3c] sm:$0xf]
        %v937 = vunpack.c.l.b16 %v905
        %v938 = vunpack.c.l.b16 %v906
        %v939 = vunpack.c.l.b16 %v907
        %v940 = vunpack.c.l.b16 %v908
        %v941 = vunpack.c.l.b16 %v909
        %v942 = vunpack.c.l.b16 %v910
        %v943 = vunpack.c.l.b16 %v911
        %v944 = vunpack.c.l.b16 %v912
        %v945 = vunpack.c.l.b16 %v913
        %v946 = vunpack.c.l.b16 %v914
        %v947 = vunpack.c.l.b16 %v915
        %v948 = vunpack.c.l.b16 %v916
        %v949 = vunpack.c.l.b16 %v917
        %v950 = vunpack.c.l.b16 %v918
        %v951 = vunpack.c.l.b16 %v919
        %v952 = vunpack.c.l.b16 %v920
        %v953 = vpack.c.b16 %v938, %v937
        %v954 = vpack.c.b16 %v940, %v939
        %v955 = vpack.c.b16 %v942, %v941
        %v956 = vpack.c.b16 %v944, %v943
        %v957 = vpack.c.b16 %v946, %v945
        %v958 = vpack.c.b16 %v948, %v947
        %v959 = vpack.c.b16 %v950, %v949
        %v960 = vpack.c.b16 %v952, %v951
        %969 = vmatpush.bf16.msra.mxu0 %v960
        %970 = vmatpush.bf16.msra.mxu0 %v959
        %971 = vmatpush.bf16.msra.mxu0 %v958
        %972 = vmatpush.bf16.msra.mxu0 %v957
        %973 = vmatpush.bf16.msra.mxu0 %v956
        %974 = vmatpush.bf16.msra.mxu0 %v955
        %975 = vmatpush.bf16.msra.mxu0 %v954
        %976 = vmatpush.bf16.msra.mxu0 %v953
        %977 = vmatmul.bf16.gmra.mxu0 %v841
        %v978 = vpop.f32.mrf.mxu0
        %v979 = vadd.f32 0.0, %v978
        %v980 = vpop.f32.mrf.mxu0
        %v981 = vadd.f32 0.0, %v980
        %982 = vdwg.mxu0
        %v983 = vxor.u32 %v901, 2147483648
        %v984 = vxor.u32 %v903, 2147483648
        %v985 = vmul.f32 %v983, 1.442695
        %v986 = vpow.pop %v985
        %v987 = vmul.f32 %v984, 1.442695
        %v988 = vpow.pop %v987
        %v989 = vadd.f32 %v986, 1.0
        %v990 = vadd.f32 %v988, 1.0
        %v991 = vrcp.pop %v989
        %v992 = vmul.f32 %v989, %v991
        %v993 = vsub.f32 1.0, %v992
        %v994 = vmul.f32 %v991, %v993
        %v995 = vadd.f32 %v991, %v994
        %vm996 = vweird.f32 %v989
        %vm997 = vweird.f32 %v991
        %vm998 = vmor %vm996, %vm997
        %v999 = vsel %vm998, %v991, %v995
        %v1000 = vand.u32 2147483647, %v989
        %vm1001 = vcmp.eq.f32.partialorder %v1000, 8.507059e+37
        %v1002 = vand.u32 %v989, 2147483648
        %v1003 = vor.u32 1.1754944e-38, %v1002
        %v1004 = vsel %vm1001, %v1003, %v999
        %v1005 = vmul.f32 1.0, %v1004
        %v1006 = vrcp.pop %v990
        %v1007 = vmul.f32 %v990, %v1006
        %v1008 = vsub.f32 1.0, %v1007
        %v1009 = vmul.f32 %v1006, %v1008
        %v1010 = vadd.f32 %v1006, %v1009
        %vm1011 = vweird.f32 %v990
        %vm1012 = vweird.f32 %v1006
        %vm1013 = vmor %vm1011, %vm1012
        %v1014 = vsel %vm1013, %v1006, %v1010
        %v1015 = vand.u32 2147483647, %v990
        %vm1016 = vcmp.eq.f32.partialorder %v1015, 8.507059e+37
        %v1017 = vand.u32 %v990, 2147483648
        %v1018 = vor.u32 1.1754944e-38, %v1017
        %v1019 = vsel %vm1016, %v1018, %v1014
        %v1020 = vmul.f32 1.0, %v1019
        %v1021 = vmul.f32 %v901, %v1005
        %v1022 = vmul.f32 %v903, %v1020
        %v1023 = vmul.f32 %v1021, %v979
        %v1024 = vmul.f32 %v1022, %v981
        %v1025 = vld [vmem:[%s522] sm:$0xff]
        %v1026 = vld [vmem:[%s522 + $0x8] sm:$0xff]
        %1028 = vset.pattern.permute.xlu0 0
        %1029 = vperm.xlu0 %1028, %v1025
        %v1030 = vpop.permute.xlu0 %1029
        %1033 = vset.pattern.permute.xlu0 0
        %1034 = vperm.xlu0 %1033, %v1026
        %v1035 = vpop.permute.xlu0 %1034
        %v1037 = vmul.f32 %v1023, %v1030
        %v1038 = vmul.f32 %v1024, %v1035
        %v1039 = vpack.c.bf16 %v1038, %v1037
        %v1040 = vld [vmem:[#allocation2] sm:$0xff]
        %v1041 = vld [vmem:[#allocation2 + $0x8] sm:$0xff]
        %v1042 = vld [vmem:[%s435] sm:$0xf]
        %v1043 = vld [vmem:[%s435 + $0x4] sm:$0xf]
        %v1044 = vld [vmem:[%s435 + $0x8] sm:$0xf]
        %v1045 = vld [vmem:[%s435 + $0xc] sm:$0xf]
        %v1046 = vld [vmem:[%s435 + $0x10] sm:$0xf]
        %v1047 = vld [vmem:[%s435 + $0x14] sm:$0xf]
        %v1048 = vld [vmem:[%s435 + $0x18] sm:$0xf]
        %v1049 = vld [vmem:[%s435 + $0x1c] sm:$0xf]
        %v1050 = vld [vmem:[%s435 + $0x20] sm:$0xf]
        %v1051 = vld [vmem:[%s435 + $0x24] sm:$0xf]
        %v1052 = vld [vmem:[%s435 + $0x28] sm:$0xf]
        %v1053 = vld [vmem:[%s435 + $0x2c] sm:$0xf]
        %v1054 = vld [vmem:[%s435 + $0x30] sm:$0xf]
        %v1055 = vld [vmem:[%s435 + $0x34] sm:$0xf]
        %v1056 = vld [vmem:[%s435 + $0x38] sm:$0xf]
        %v1057 = vld [vmem:[%s435 + $0x3c] sm:$0xf]
        %v1074 = vunpack.c.l.b16 %v1042
        %v1075 = vunpack.c.l.b16 %v1043
        %v1076 = vunpack.c.l.b16 %v1044
        %v1077 = vunpack.c.l.b16 %v1045
        %v1078 = vunpack.c.l.b16 %v1046
        %v1079 = vunpack.c.l.b16 %v1047
        %v1080 = vunpack.c.l.b16 %v1048
        %v1081 = vunpack.c.l.b16 %v1049
        %v1082 = vunpack.c.l.b16 %v1050
        %v1083 = vunpack.c.l.b16 %v1051
        %v1084 = vunpack.c.l.b16 %v1052
        %v1085 = vunpack.c.l.b16 %v1053
        %v1086 = vunpack.c.l.b16 %v1054
        %v1087 = vunpack.c.l.b16 %v1055
        %v1088 = vunpack.c.l.b16 %v1056
        %v1089 = vunpack.c.l.b16 %v1057
        %v1090 = vpack.c.b16 %v1075, %v1074
        %v1091 = vpack.c.b16 %v1077, %v1076
        %v1092 = vpack.c.b16 %v1079, %v1078
        %v1093 = vpack.c.b16 %v1081, %v1080
        %v1094 = vpack.c.b16 %v1083, %v1082
        %v1095 = vpack.c.b16 %v1085, %v1084
        %v1096 = vpack.c.b16 %v1087, %v1086
        %v1097 = vpack.c.b16 %v1089, %v1088
        %1106 = vmatpush.bf16.msra.mxu0 %v1097
        %1107 = vmatpush.bf16.msra.mxu0 %v1096
        %1108 = vmatpush.bf16.msra.mxu0 %v1095
        %1109 = vmatpush.bf16.msra.mxu0 %v1094
        %1110 = vmatpush.bf16.msra.mxu0 %v1093
        %1111 = vmatpush.bf16.msra.mxu0 %v1092
        %1112 = vmatpush.bf16.msra.mxu0 %v1091
        %1113 = vmatpush.bf16.msra.mxu0 %v1090
        %1114 = vmatmul.bf16.gmra.mxu0 %v1039
        %v1115 = vpop.f32.mrf.mxu0
        %v1116 = vadd.f32 0.0, %v1115
        %v1117 = vpop.f32.mrf.mxu0
        %v1118 = vadd.f32 0.0, %v1117
        %1119 = vdwg.mxu0
        %v1120 = vadd.f32 %v1040, %v1116
        %v1121 = vadd.f32 %v1041, %v1118
        %1122 = vst [vmem:[#allocation2] sm:$0xff] %v1120
        %1123 = vst [vmem:[#allocation2 + $0x8] sm:$0xff] %v1121
        %p1124 = scmp.eq.s32.totalorder %s32, 7
        // Predicated region
        $region81: #{_lambda_.22} parent=51 // pred_check
          %p1125 = pneg %p1124
        $region82: #{_lambda_.22} parent=51 // pred_check_branch
          %1127 = sbr.rel (%p1125) target = $region84
        $region83: #{_lambda_.22} parent=51 // pred_region
          %v1128 = vld [vmem:[#allocation2] sm:$0xff]
          %v1129 = vld [vmem:[#allocation2 + $0x8] sm:$0xff]
          %v1130 = vpack.c.bf16 %v1128, %v1128
          %v1131 = vpack.c.bf16 %v1129, %v1129
          %1132 = vst [vmem:[%s528] sm:$0xf] %v1130
          %1133 = vst [vmem:[%s528 + $0x4] sm:$0xf] %v1131
        $region84: #{_lambda_.22} parent=51 // pred_fallthru
          _
        %s1134 = smul.u32 2, %s31
        %p1135 = scmp.lt.s32.totalorder %s1134, 1
        %s1136 = scalar_select %p1135, %s1134, 1
        %s1137 = smul.addr %s1136, 4
        %s1138 = scalar_lea.vmem %s8, %s1137
        // Predicated region
        $region85: #{_lambda_.22} parent=51 // pred_check
          %p1139 = pneg %p252
        $region86: #{_lambda_.22} parent=51 // pred_check_branch
          %1141 = sbr.rel (%p1139) target = $region88
        $region87: #{_lambda_.22} parent=51 // pred_region
          %s1142 = smul.u32 2, %s31
        $region88: #{_lambda_.22} parent=51 // pred_fallthru
          _
        // Predicated region
        $region89: #{_lambda_.22} parent=51 // pred_check
          %p1143 = pneg %p252
        $region90: #{_lambda_.22} parent=51 // pred_check_branch
          %1145 = sbr.rel (%p1143) target = $region92
        $region91: #{_lambda_.22} parent=51 // pred_region
          %s1146 = smul.u32 2, %s31
          %p1147 = scmp.lt.s32.totalorder %s1146, 1
          %s1148 = scalar_select %p1147, %s1146, 1
          %s1149 = smul.addr %s1148, 4
          %s1150 = scalar_lea.vmem %s8, %s1149
        $region92: #{_lambda_.22} parent=51 // pred_fallthru
          _
      $region52: #{_lambda_.22} parent=5 // pred_fallthru
        _
      %p1151 = scmp.le.s32.totalorder 2, %s22
      // Predicated region
      $region93: #{_lambda_.22} parent=5 // pred_check
        %p1152 = pneg %p1151
      $region94: #{_lambda_.22} parent=5 // pred_check_branch
        %1154 = sbr.rel (%p1152) target = $region96
      $region95: #{_lambda_.22} parent=5 // pred_region
        %s1155 = ssub.s32 %s22, 2
      $region96: #{_lambda_.22} parent=5 // pred_fallthru
        _
    $region6: #{_lambda_.22} parent=1 // loop_footer
      %s26 = sadd.s32 1, %s22
    $region7: #{_lambda_.22} parent=1 // loop_footer_branch
      %21 = sbr.rel target = $region3
    $region8: #{_lambda_.22} parent=1 // loop_exit
      _
    %1156 = vsyncpa [#allocation4], 1
    %s1157 = scalar_lea.sflag [#allocation4], 1
    %1158 = vsyncpa %s1157, 1
    %1159 = vsyncpa [#allocation6], 1
    %s1160 = scalar_lea.sflag [#allocation6], 1
    %1161 = vsyncpa %s1160, 1
    %1162 = vsyncpa [#allocation9], 1
    %1163 = vsyncpa [#allocation12], 1

// kernel: _lambda_.32
$region0: #{_lambda_.32}
  #allocation0 [shape = 'u32[]', space=smem, size = 0x4, offset = 0x4, fixed_abs, tag = 'smem constant byte address 0x4 - core index']
  #allocation1 [shape = 'u32[72,128]{1,0:T(1,128)}', space=vmem, size = 0x9000, scoped, tag = 'internal scratch']
  %s0 = inlined_call_operand.vmem [shape: bf16[16,128], index: 0, kind: input, shape index: {}]
  %s1 = inlined_call_operand.vmem [shape: bf16[128,128], index: 1, kind: input, shape index: {}]
  %s2 = inlined_call_operand.vmem [shape: f32[1,128], index: 2, kind: input, shape index: {}, may-alias: {2,4,6}]
  %s3 = inlined_call_operand.vmem [shape: bf16[128,128], index: 3, kind: input, shape index: {}]
  %s4 = inlined_call_operand.vmem [shape: f32[1,128], index: 4, kind: input, shape index: {}, may-alias: {2,4,6}]
  %s5 = inlined_call_operand.vmem [shape: bf16[128,128], index: 5, kind: input, shape index: {}]
  %s6 = inlined_call_operand.vmem [shape: f32[1,128], index: 6, kind: input, shape index: {}, may-alias: {2,4,6}]
  %s7 = inlined_call_operand.vmem [shape: bf16[16,128], index: 7, kind: output, shape index: {}]
  %s8 = sld [smem:[#allocation0]]
  $region38: #{_lambda_.32} parent=0
    _
  %s10 = ssub.s32 1, %s8
  %s11 = scalar_select 0, %s10, %s8
  // Predicated region
  $region2: #{_lambda_.32} parent=0 // pred_check
    _
  $region3: #{_lambda_.32} parent=0 // pred_check_branch
    %13 = sbr.rel (0) target = $region5
  $region4: #{_lambda_.32} parent=0 // pred_region
    _
  $region5: #{_lambda_.32} parent=0 // pred_fallthru
    _
  // Predicated region
  $region6: #{_lambda_.32} parent=0 // pred_check
    _
  $region7: #{_lambda_.32} parent=0 // pred_check_branch
    %15 = sbr.rel (0) target = $region9
  $region8: #{_lambda_.32} parent=0 // pred_region
    _
  $region9: #{_lambda_.32} parent=0 // pred_fallthru
    _
  // Predicated region
  $region10: #{_lambda_.32} parent=0 // pred_check
    _
  $region11: #{_lambda_.32} parent=0 // pred_check_branch
    %17 = sbr.rel (0) target = $region13
  $region12: #{_lambda_.32} parent=0 // pred_region
    _
  $region13: #{_lambda_.32} parent=0 // pred_fallthru
    _
  // Predicated region
  $region14: #{_lambda_.32} parent=0 // pred_check
    _
  $region15: #{_lambda_.32} parent=0 // pred_check_branch
    %19 = sbr.rel (0) target = $region17
  $region16: #{_lambda_.32} parent=0 // pred_region
    _
  $region17: #{_lambda_.32} parent=0 // pred_fallthru
    _
  // Predicated region
  $region18: #{_lambda_.32} parent=0 // pred_check
    _
  $region19: #{_lambda_.32} parent=0 // pred_check_branch
    %21 = sbr.rel (0) target = $region21
  $region20: #{_lambda_.32} parent=0 // pred_region
    _
  $region21: #{_lambda_.32} parent=0 // pred_fallthru
    _
  // Predicated region
  $region22: #{_lambda_.32} parent=0 // pred_check
    _
  $region23: #{_lambda_.32} parent=0 // pred_check_branch
    %23 = sbr.rel (0) target = $region25
  $region24: #{_lambda_.32} parent=0 // pred_region
    _
  $region25: #{_lambda_.32} parent=0 // pred_fallthru
    _
  // Predicated region
  $region26: #{_lambda_.32} parent=0 // pred_check
    _
  $region27: #{_lambda_.32} parent=0 // pred_check_branch
    %25 = sbr.rel (0) target = $region29
  $region28: #{_lambda_.32} parent=0 // pred_region
    _
  $region29: #{_lambda_.32} parent=0 // pred_fallthru
    _
  %v26 = vld [vmem:[%s0] sm:$0xf]
  %v27 = vld [vmem:[%s0 + $0x4] sm:$0xf]
  %v28 = vld [vmem:[%s1] sm:$0xf]
  %v29 = vld [vmem:[%s1 + $0x4] sm:$0xf]
  %v30 = vld [vmem:[%s1 + $0x8] sm:$0xf]
  %v31 = vld [vmem:[%s1 + $0xc] sm:$0xf]
  %v32 = vld [vmem:[%s1 + $0x10] sm:$0xf]
  %v33 = vld [vmem:[%s1 + $0x14] sm:$0xf]
  %v34 = vld [vmem:[%s1 + $0x18] sm:$0xf]
  %v35 = vld [vmem:[%s1 + $0x1c] sm:$0xf]
  %v36 = vld [vmem:[%s1 + $0x20] sm:$0xf]
  %v37 = vld [vmem:[%s1 + $0x24] sm:$0xf]
  %v38 = vld [vmem:[%s1 + $0x28] sm:$0xf]
  %v39 = vld [vmem:[%s1 + $0x2c] sm:$0xf]
  %v40 = vld [vmem:[%s1 + $0x30] sm:$0xf]
  %v41 = vld [vmem:[%s1 + $0x34] sm:$0xf]
  %v42 = vld [vmem:[%s1 + $0x38] sm:$0xf]
  %v43 = vld [vmem:[%s1 + $0x3c] sm:$0xf]
  %v44 = vld [vmem:[%s2] sm:$0x1]
  %v46 = vperm.slane %v44, 0
  %v50 = vunpack.c.l.b16 %v26
  %v51 = vunpack.c.l.b16 %v27
  %v52 = vpack.c.b16 %v51, %v50
  %v70 = vunpack.c.l.b16 %v28
  %v71 = vunpack.c.l.b16 %v29
  %v72 = vunpack.c.l.b16 %v30
  %v73 = vunpack.c.l.b16 %v31
  %v74 = vunpack.c.l.b16 %v32
  %v75 = vunpack.c.l.b16 %v33
  %v76 = vunpack.c.l.b16 %v34
  %v77 = vunpack.c.l.b16 %v35
  %v78 = vunpack.c.l.b16 %v36
  %v79 = vunpack.c.l.b16 %v37
  %v80 = vunpack.c.l.b16 %v38
  %v81 = vunpack.c.l.b16 %v39
  %v82 = vunpack.c.l.b16 %v40
  %v83 = vunpack.c.l.b16 %v41
  %v84 = vunpack.c.l.b16 %v42
  %v85 = vunpack.c.l.b16 %v43
  %v86 = vpack.c.b16 %v71, %v70
  %v87 = vpack.c.b16 %v73, %v72
  %v88 = vpack.c.b16 %v75, %v74
  %v89 = vpack.c.b16 %v77, %v76
  %v90 = vpack.c.b16 %v79, %v78
  %v91 = vpack.c.b16 %v81, %v80
  %v92 = vpack.c.b16 %v83, %v82
  %v93 = vpack.c.b16 %v85, %v84
  %102 = vmatpush.bf16.msra.mxu0 %v93
  %103 = vmatpush.bf16.msra.mxu0 %v92
  %104 = vmatpush.bf16.msra.mxu0 %v91
  %105 = vmatpush.bf16.msra.mxu0 %v90
  %106 = vmatpush.bf16.msra.mxu0 %v89
  %107 = vmatpush.bf16.msra.mxu0 %v88
  %108 = vmatpush.bf16.msra.mxu0 %v87
  %109 = vmatpush.bf16.msra.mxu0 %v86
  %110 = vmatmul.bf16.gmra.mxu0 %v52
  %v111 = vpop.f32.mrf.mxu0
  %v112 = vadd.f32 %v46, %v111
  %v113 = vpop.f32.mrf.mxu0
  %v114 = vadd.f32 %v46, %v113
  %115 = vdwg.mxu0
  %v116 = vpack.c.bf16 %v114, %v112
  %v117 = vld [vmem:[%s3] sm:$0xf]
  %v118 = vld [vmem:[%s3 + $0x4] sm:$0xf]
  %v119 = vld [vmem:[%s3 + $0x8] sm:$0xf]
  %v120 = vld [vmem:[%s3 + $0xc] sm:$0xf]
  %v121 = vld [vmem:[%s3 + $0x10] sm:$0xf]
  %v122 = vld [vmem:[%s3 + $0x14] sm:$0xf]
  %v123 = vld [vmem:[%s3 + $0x18] sm:$0xf]
  %v124 = vld [vmem:[%s3 + $0x1c] sm:$0xf]
  %v125 = vld [vmem:[%s3 + $0x20] sm:$0xf]
  %v126 = vld [vmem:[%s3 + $0x24] sm:$0xf]
  %v127 = vld [vmem:[%s3 + $0x28] sm:$0xf]
  %v128 = vld [vmem:[%s3 + $0x2c] sm:$0xf]
  %v129 = vld [vmem:[%s3 + $0x30] sm:$0xf]
  %v130 = vld [vmem:[%s3 + $0x34] sm:$0xf]
  %v131 = vld [vmem:[%s3 + $0x38] sm:$0xf]
  %v132 = vld [vmem:[%s3 + $0x3c] sm:$0xf]
  %v133 = vld [vmem:[%s4] sm:$0x1]
  %v135 = vperm.slane %v133, 0
  %v153 = vunpack.c.l.b16 %v117
  %v154 = vunpack.c.l.b16 %v118
  %v155 = vunpack.c.l.b16 %v119
  %v156 = vunpack.c.l.b16 %v120
  %v157 = vunpack.c.l.b16 %v121
  %v158 = vunpack.c.l.b16 %v122
  %v159 = vunpack.c.l.b16 %v123
  %v160 = vunpack.c.l.b16 %v124
  %v161 = vunpack.c.l.b16 %v125
  %v162 = vunpack.c.l.b16 %v126
  %v163 = vunpack.c.l.b16 %v127
  %v164 = vunpack.c.l.b16 %v128
  %v165 = vunpack.c.l.b16 %v129
  %v166 = vunpack.c.l.b16 %v130
  %v167 = vunpack.c.l.b16 %v131
  %v168 = vunpack.c.l.b16 %v132
  %v169 = vpack.c.b16 %v154, %v153
  %v170 = vpack.c.b16 %v156, %v155
  %v171 = vpack.c.b16 %v158, %v157
  %v172 = vpack.c.b16 %v160, %v159
  %v173 = vpack.c.b16 %v162, %v161
  %v174 = vpack.c.b16 %v164, %v163
  %v175 = vpack.c.b16 %v166, %v165
  %v176 = vpack.c.b16 %v168, %v167
  %185 = vmatpush.bf16.msra.mxu0 %v176
  %186 = vmatpush.bf16.msra.mxu0 %v175
  %187 = vmatpush.bf16.msra.mxu0 %v174
  %188 = vmatpush.bf16.msra.mxu0 %v173
  %189 = vmatpush.bf16.msra.mxu0 %v172
  %190 = vmatpush.bf16.msra.mxu0 %v171
  %191 = vmatpush.bf16.msra.mxu0 %v170
  %192 = vmatpush.bf16.msra.mxu0 %v169
  %193 = vmatmul.bf16.gmra.mxu0 %v116
  %v194 = vpop.f32.mrf.mxu0
  %v195 = vadd.f32 %v135, %v194
  %v196 = vpop.f32.mrf.mxu0
  %v197 = vadd.f32 %v135, %v196
  %198 = vdwg.mxu0
  %v199 = vld [vmem:[%s5] sm:$0xf]
  %v200 = vld [vmem:[%s5 + $0x4] sm:$0xf]
  %v201 = vld [vmem:[%s5 + $0x8] sm:$0xf]
  %v202 = vld [vmem:[%s5 + $0xc] sm:$0xf]
  %v203 = vld [vmem:[%s5 + $0x10] sm:$0xf]
  %v204 = vld [vmem:[%s5 + $0x14] sm:$0xf]
  %v205 = vld [vmem:[%s5 + $0x18] sm:$0xf]
  %v206 = vld [vmem:[%s5 + $0x1c] sm:$0xf]
  %v207 = vld [vmem:[%s5 + $0x20] sm:$0xf]
  %v208 = vld [vmem:[%s5 + $0x24] sm:$0xf]
  %v209 = vld [vmem:[%s5 + $0x28] sm:$0xf]
  %v210 = vld [vmem:[%s5 + $0x2c] sm:$0xf]
  %v211 = vld [vmem:[%s5 + $0x30] sm:$0xf]
  %v212 = vld [vmem:[%s5 + $0x34] sm:$0xf]
  %v213 = vld [vmem:[%s5 + $0x38] sm:$0xf]
  %v214 = vld [vmem:[%s5 + $0x3c] sm:$0xf]
  %v215 = vld [vmem:[%s6] sm:$0x1]
  %v217 = vperm.slane %v215, 0
  %v235 = vunpack.c.l.b16 %v199
  %v236 = vunpack.c.l.b16 %v200
  %v237 = vunpack.c.l.b16 %v201
  %v238 = vunpack.c.l.b16 %v202
  %v239 = vunpack.c.l.b16 %v203
  %v240 = vunpack.c.l.b16 %v204
  %v241 = vunpack.c.l.b16 %v205
  %v242 = vunpack.c.l.b16 %v206
  %v243 = vunpack.c.l.b16 %v207
  %v244 = vunpack.c.l.b16 %v208
  %v245 = vunpack.c.l.b16 %v209
  %v246 = vunpack.c.l.b16 %v210
  %v247 = vunpack.c.l.b16 %v211
  %v248 = vunpack.c.l.b16 %v212
  %v249 = vunpack.c.l.b16 %v213
  %v250 = vunpack.c.l.b16 %v214
  %v251 = vpack.c.b16 %v236, %v235
  %v252 = vpack.c.b16 %v238, %v237
  %v253 = vpack.c.b16 %v240, %v239
  %v254 = vpack.c.b16 %v242, %v241
  %v255 = vpack.c.b16 %v244, %v243
  %v256 = vpack.c.b16 %v246, %v245
  %v257 = vpack.c.b16 %v248, %v247
  %v258 = vpack.c.b16 %v250, %v249
  %267 = vmatpush.bf16.msra.mxu0 %v258
  %268 = vmatpush.bf16.msra.mxu0 %v257
  %269 = vmatpush.bf16.msra.mxu0 %v256
  %270 = vmatpush.bf16.msra.mxu0 %v255
  %271 = vmatpush.bf16.msra.mxu0 %v254
  %272 = vmatpush.bf16.msra.mxu0 %v253
  %273 = vmatpush.bf16.msra.mxu0 %v252
  %274 = vmatpush.bf16.msra.mxu0 %v251
  %275 = vmatmul.bf16.gmra.mxu0 %v116
  %v276 = vpop.f32.mrf.mxu0
  %v277 = vadd.f32 %v217, %v276
  %v278 = vpop.f32.mrf.mxu0
  %v279 = vadd.f32 %v217, %v278
  %280 = vdwg.mxu0
  %v281 = vxor.u32 %v195, 2147483648
  %v282 = vxor.u32 %v197, 2147483648
  %v283 = vmul.f32 %v281, 1.442695
  %v284 = vpow.pop %v283
  %v285 = vmul.f32 %v282, 1.442695
  %v286 = vpow.pop %v285
  %v287 = vadd.f32 %v284, 1.0
  %v288 = vadd.f32 %v286, 1.0
  %v289 = vrcp.pop %v287
  %v290 = vmul.f32 %v287, %v289
  %v291 = vsub.f32 1.0, %v290
  %v292 = vmul.f32 %v289, %v291
  %v293 = vadd.f32 %v289, %v292
  %vm294 = vweird.f32 %v287
  %vm295 = vweird.f32 %v289
  %vm296 = vmor %vm294, %vm295
  %v297 = vsel %vm296, %v289, %v293
  %v298 = vand.u32 2147483647, %v287
  %vm299 = vcmp.eq.f32.partialorder %v298, 8.507059e+37
  %v300 = vand.u32 %v287, 2147483648
  %v301 = vor.u32 1.1754944e-38, %v300
  %v302 = vsel %vm299, %v301, %v297
  %v303 = vmul.f32 1.0, %v302
  %v304 = vrcp.pop %v288
  %v305 = vmul.f32 %v288, %v304
  %v306 = vsub.f32 1.0, %v305
  %v307 = vmul.f32 %v304, %v306
  %v308 = vadd.f32 %v304, %v307
  %vm309 = vweird.f32 %v288
  %vm310 = vweird.f32 %v304
  %vm311 = vmor %vm309, %vm310
  %v312 = vsel %vm311, %v304, %v308
  %v313 = vand.u32 2147483647, %v288
  %vm314 = vcmp.eq.f32.partialorder %v313, 8.507059e+37
  %v315 = vand.u32 %v288, 2147483648
  %v316 = vor.u32 1.1754944e-38, %v315
  %v317 = vsel %vm314, %v316, %v312
  %v318 = vmul.f32 1.0, %v317
  %v319 = vmul.f32 %v195, %v303
  %v320 = vmul.f32 %v197, %v318
  %v321 = vmul.f32 %v319, %v277
  %v322 = vmul.f32 %v320, %v279
  %v323 = vpack.c.bf16 %v321, %v321
  %v324 = vpack.c.bf16 %v322, %v322
  %325 = vst [vmem:[%s7] sm:$0xf] %v323
  %326 = vst [vmem:[%s7 + $0x4] sm:$0xf] %v324
  // Predicated region
  $region30: #{_lambda_.32} parent=0 // pred_check
    _
  $region31: #{_lambda_.32} parent=0 // pred_check_branch
    %328 = sbr.rel (0) target = $region33
  $region32: #{_lambda_.32} parent=0 // pred_region
    _
  $region33: #{_lambda_.32} parent=0 // pred_fallthru
    _
  // Predicated region
  $region34: #{_lambda_.32} parent=0 // pred_check
    _
  $region35: #{_lambda_.32} parent=0 // pred_check_branch
    %330 = sbr.rel (0) target = $region37
  $region36: #{_lambda_.32} parent=0 // pred_region
    _
  $region37: #{_lambda_.32} parent=0 // pred_fallthru
    _

// kernel: _lambda_.34
$region0: #{_lambda_.34}
  #allocation0 [shape = 'u32[]', space=smem, size = 0x4, offset = 0x4, fixed_abs, tag = 'smem constant byte address 0x4 - core index']
  #allocation1 [shape = 'u32[72,128]{1,0:T(1,128)}', space=vmem, size = 0x9000, scoped, tag = 'internal scratch']
  #allocation2 [shape = 'f32[16,128]{1,0:T(8,128)}', space=vmem, size = 0x2000, scoped, tag = 'scratch operand']
  %s0 = inlined_call_operand.vmem [shape: bf16[16,128], index: 0, kind: input, shape index: {}]
  %s1 = inlined_call_operand.hbm [shape: bf16[8,128,128], index: 1, kind: input, shape index: {}]
  %s2 = inlined_call_operand.hbm [shape: bf16[8,128,128], index: 2, kind: input, shape index: {}]
  %s3 = inlined_call_operand.hbm [shape: bf16[8,128,128], index: 3, kind: input, shape index: {}]
  %s4 = inlined_call_operand.vmem [shape: f32[8,16,1], index: 4, kind: input, shape index: {}]
  %s5 = inlined_call_operand.vmem [shape: bf16[128,128], index: 5, kind: input, shape index: {}]
  %s6 = inlined_call_operand.vmem [shape: bf16[128,128], index: 6, kind: input, shape index: {}]
  %s7 = inlined_call_operand.vmem [shape: bf16[128,128], index: 7, kind: input, shape index: {}]
  %s8 = inlined_call_operand.vmem [shape: bf16[16,128], index: 8, kind: output, shape index: {}]
  %s9 = sld [smem:[#allocation0]]
  $region85: #{_lambda_.34} parent=0
    _
  %s11 = ssub.s32 1, %s9
  %s12 = scalar_select 0, %s11, %s9
  $region1: #{_lambda_.34} parent=0
    #allocation3 [shape = 'u8[65536]{0}', space=vmem, size = 0x10000, scoped, tag = 'input window, operand 1']
    #allocation4 [shape = 's32[2]{0}', space=sflag, size = 0x8, scoped, tag = 'scoped memory for _lambda_.34']
    #allocation5 [shape = 'u8[65536]{0}', space=vmem, size = 0x10000, scoped, tag = 'input window, operand 2']
    #allocation6 [shape = 's32[2]{0}', space=sflag, size = 0x8, scoped, tag = 'scoped memory for _lambda_.34']
    #allocation7 [shape = 'u8[65536]{0}', space=vmem, size = 0x10000, scoped, tag = 'input window, operand 3']
    %13 = vsyncpa [#allocation4], 0
    %s14 = scalar_lea.sflag [#allocation4], 1
    %15 = vsyncpa %s14, 0
    %16 = vsyncpa [#allocation6], 0
    %s17 = scalar_lea.sflag [#allocation6], 1
    %18 = vsyncpa %s17, 0
    loop: start=0, step=1, limit=10
    $region2: #{_lambda_.34} parent=1 // loop_pre_header
      _
    $region3: #{_lambda_.34} parent=1 // loop_header
      %s20 = sphi 0, %s24
      %p21 = scmp.ge.s32.totalorder %s20, 10
      %s27 = sphi 0, %s39
      %s28 = sphi 0, %s35
      %s29 = sphi 0, %s27
      %s30 = sphi 0, %s28
      %s31 = sphi 0, %s29
      %s32 = sphi 0, %s30
      %s42 = sphi 0, %s44
      %s45 = sphi 0, %s42
      %s46 = sphi 0, %s45
      %s62 = sphi 0, %s46
      %s68 = sphi 0, %s70
      %s71 = sphi 0, %s68
      %s72 = sphi 0, %s71
      %s88 = sphi 0, %s72
      %s94 = sphi 0, %s96
      %s97 = sphi 0, %s94
      %s98 = sphi 0, %s97
      %s114 = sphi 0, %s98
      %s120 = sphi 0, %s122
      %s123 = sphi 0, %s120
      %s124 = sphi 0, %s123
      %s140 = sphi 0, %s124
      %s148 = sphi 0, %s150
      %s151 = sphi 0, %s148
      %s152 = sphi 0, %s151
      %s168 = sphi 0, %s152
      %s172 = sphi 0, %s172
      %s174 = sphi 0, %s172
      %s175 = sphi 0, %s174
      %s189 = sphi 0, %s175
      %s193 = sphi 0, %s193
      %s195 = sphi 0, %s193
      %s196 = sphi 0, %s195
      %s210 = sphi 0, %s196
      %s214 = sphi 0, %s214
      %s216 = sphi 0, %s214
      %s217 = sphi 0, %s216
      %s231 = sphi 0, %s217
      %s237 = sphi 0, %s239
      %s240 = sphi 0, %s237
      %s241 = sphi 0, %s240
      %s257 = sphi 0, %s241
    $region4: #{_lambda_.34} parent=1 // loop_header_branch
      %23 = sbr.rel (%p21) target = $region8
    $region5: #{_lambda_.34} parent=1 // loop_body
      %s25 = ssub.s32 %s20, 1
      %s26 = ssub.s32 %s20, 2
      %s33 = sadd.s32 1, %s28
      %p34 = scmp.ge.s32.totalorder %s33, 8
      %s35 = scalar_select %p34, 0, %s33
      %s36 = sadd.s32 1, %s27
      %s37 = scalar_select %p34, %s36, %s27
      %p38 = scmp.ge.s32.totalorder %s37, 1
      %s39 = scalar_select %p38, 0, %s37
      %s40 = ssub.s32 %s27, %s39
      %p41 = scmp.eq.s32.totalorder %s40, 0
      %s43 = sadd.s32 %s42, 1
      %s44 = scalar_select %p41, %s42, %s43
      %p47 = pneg %p41
      %p48 = scmp.eq.s32.totalorder %s20, 7
      %p49 = por %p47, %p48
      %p50 = scmp.ne.s32.totalorder %s42, %s45
      %p51 = scmp.eq.s32.totalorder %s20, 0
      %p52 = por %p50, %p51
      %p53 = scmp.ne.s32.totalorder %s42, %s45
      %p54 = scmp.eq.s32.totalorder %s25, 7
      %p55 = por %p53, %p54
      %p56 = scmp.ne.s32.totalorder %s45, %s46
      %p57 = scmp.eq.s32.totalorder %s25, 0
      %p58 = por %p56, %p57
      %p59 = scmp.ne.s32.totalorder %s45, %s46
      %p60 = scmp.eq.s32.totalorder %s26, 7
      %p61 = por %p59, %p60
      %p63 = scmp.ne.s32.totalorder %s46, %s62
      %p64 = scmp.eq.s32.totalorder %s26, 0
      %p65 = por %p63, %p64
      %s66 = ssub.s32 %s28, %s35
      %p67 = scmp.eq.s32.totalorder %s66, 0
      %s69 = sadd.s32 %s68, 1
      %s70 = scalar_select %p67, %s68, %s69
      %p73 = pneg %p67
      %p74 = scmp.eq.s32.totalorder %s20, 7
      %p75 = por %p73, %p74
      %p76 = scmp.ne.s32.totalorder %s68, %s71
      %p77 = scmp.eq.s32.totalorder %s20, 0
      %p78 = por %p76, %p77
      %p79 = scmp.ne.s32.totalorder %s68, %s71
      %p80 = scmp.eq.s32.totalorder %s25, 7
      %p81 = por %p79, %p80
      %p82 = scmp.ne.s32.totalorder %s71, %s72
      %p83 = scmp.eq.s32.totalorder %s25, 0
      %p84 = por %p82, %p83
      %p85 = scmp.ne.s32.totalorder %s71, %s72
      %p86 = scmp.eq.s32.totalorder %s26, 7
      %p87 = por %p85, %p86
      %p89 = scmp.ne.s32.totalorder %s72, %s88
      %p90 = scmp.eq.s32.totalorder %s26, 0
      %p91 = por %p89, %p90
      %s92 = ssub.s32 %s28, %s35
      %p93 = scmp.eq.s32.totalorder %s92, 0
      %s95 = sadd.s32 %s94, 1
      %s96 = scalar_select %p93, %s94, %s95
      %p99 = pneg %p93
      %p100 = scmp.eq.s32.totalorder %s20, 7
      %p101 = por %p99, %p100
      %p102 = scmp.ne.s32.totalorder %s94, %s97
      %p103 = scmp.eq.s32.totalorder %s20, 0
      %p104 = por %p102, %p103
      %p105 = scmp.ne.s32.totalorder %s94, %s97
      %p106 = scmp.eq.s32.totalorder %s25, 7
      %p107 = por %p105, %p106
      %p108 = scmp.ne.s32.totalorder %s97, %s98
      %p109 = scmp.eq.s32.totalorder %s25, 0
      %p110 = por %p108, %p109
      %p111 = scmp.ne.s32.totalorder %s97, %s98
      %p112 = scmp.eq.s32.totalorder %s26, 7
      %p113 = por %p111, %p112
      %p115 = scmp.ne.s32.totalorder %s98, %s114
      %p116 = scmp.eq.s32.totalorder %s26, 0
      %p117 = por %p115, %p116
      %s118 = ssub.s32 %s28, %s35
      %p119 = scmp.eq.s32.totalorder %s118, 0
      %s121 = sadd.s32 %s120, 1
      %s122 = scalar_select %p119, %s120, %s121
      %p125 = pneg %p119
      %p126 = scmp.eq.s32.totalorder %s20, 7
      %p127 = por %p125, %p126
      %p128 = scmp.ne.s32.totalorder %s120, %s123
      %p129 = scmp.eq.s32.totalorder %s20, 0
      %p130 = por %p128, %p129
      %p131 = scmp.ne.s32.totalorder %s120, %s123
      %p132 = scmp.eq.s32.totalorder %s25, 7
      %p133 = por %p131, %p132
      %p134 = scmp.ne.s32.totalorder %s123, %s124
      %p135 = scmp.eq.s32.totalorder %s25, 0
      %p136 = por %p134, %p135
      %p137 = scmp.ne.s32.totalorder %s123, %s124
      %p138 = scmp.eq.s32.totalorder %s26, 7
      %p139 = por %p137, %p138
      %p141 = scmp.ne.s32.totalorder %s124, %s140
      %p142 = scmp.eq.s32.totalorder %s26, 0
      %p143 = por %p141, %p142
      %s144 = ssub.s32 %s28, %s35
      %s145 = ssub.s32 %s27, %s39
      %s146 = sor.u32 %s144, %s145
      %p147 = scmp.eq.s32.totalorder %s146, 0
      %s149 = sadd.s32 %s148, 1
      %s150 = scalar_select %p147, %s148, %s149
      %p153 = pneg %p147
      %p154 = scmp.eq.s32.totalorder %s20, 7
      %p155 = por %p153, %p154
      %p156 = scmp.ne.s32.totalorder %s148, %s151
      %p157 = scmp.eq.s32.totalorder %s20, 0
      %p158 = por %p156, %p157
      %p159 = scmp.ne.s32.totalorder %s148, %s151
      %p160 = scmp.eq.s32.totalorder %s25, 7
      %p161 = por %p159, %p160
      %p162 = scmp.ne.s32.totalorder %s151, %s152
      %p163 = scmp.eq.s32.totalorder %s25, 0
      %p164 = por %p162, %p163
      %p165 = scmp.ne.s32.totalorder %s151, %s152
      %p166 = scmp.eq.s32.totalorder %s26, 7
      %p167 = por %p165, %p166
      %p169 = scmp.ne.s32.totalorder %s152, %s168
      %p170 = scmp.eq.s32.totalorder %s26, 0
      %p171 = por %p169, %p170
      %s173 = sadd.s32 %s172, 1
      %p176 = scmp.eq.s32.totalorder %s20, 7
      %p177 = scmp.ne.s32.totalorder %s172, %s174
      %p178 = scmp.eq.s32.totalorder %s20, 0
      %p179 = por %p177, %p178
      %p180 = scmp.ne.s32.totalorder %s172, %s174
      %p181 = scmp.eq.s32.totalorder %s25, 7
      %p182 = por %p180, %p181
      %p183 = scmp.ne.s32.totalorder %s174, %s175
      %p184 = scmp.eq.s32.totalorder %s25, 0
      %p185 = por %p183, %p184
      %p186 = scmp.ne.s32.totalorder %s174, %s175
      %p187 = scmp.eq.s32.totalorder %s26, 7
      %p188 = por %p186, %p187
      %p190 = scmp.ne.s32.totalorder %s175, %s189
      %p191 = scmp.eq.s32.totalorder %s26, 0
      %p192 = por %p190, %p191
      %s194 = sadd.s32 %s193, 1
      %p197 = scmp.eq.s32.totalorder %s20, 7
      %p198 = scmp.ne.s32.totalorder %s193, %s195
      %p199 = scmp.eq.s32.totalorder %s20, 0
      %p200 = por %p198, %p199
      %p201 = scmp.ne.s32.totalorder %s193, %s195
      %p202 = scmp.eq.s32.totalorder %s25, 7
      %p203 = por %p201, %p202
      %p204 = scmp.ne.s32.totalorder %s195, %s196
      %p205 = scmp.eq.s32.totalorder %s25, 0
      %p206 = por %p204, %p205
      %p207 = scmp.ne.s32.totalorder %s195, %s196
      %p208 = scmp.eq.s32.totalorder %s26, 7
      %p209 = por %p207, %p208
      %p211 = scmp.ne.s32.totalorder %s196, %s210
      %p212 = scmp.eq.s32.totalorder %s26, 0
      %p213 = por %p211, %p212
      %s215 = sadd.s32 %s214, 1
      %p218 = scmp.eq.s32.totalorder %s20, 7
      %p219 = scmp.ne.s32.totalorder %s214, %s216
      %p220 = scmp.eq.s32.totalorder %s20, 0
      %p221 = por %p219, %p220
      %p222 = scmp.ne.s32.totalorder %s214, %s216
      %p223 = scmp.eq.s32.totalorder %s25, 7
      %p224 = por %p222, %p223
      %p225 = scmp.ne.s32.totalorder %s216, %s217
      %p226 = scmp.eq.s32.totalorder %s25, 0
      %p227 = por %p225, %p226
      %p228 = scmp.ne.s32.totalorder %s216, %s217
      %p229 = scmp.eq.s32.totalorder %s26, 7
      %p230 = por %p228, %p229
      %p232 = scmp.ne.s32.totalorder %s217, %s231
      %p233 = scmp.eq.s32.totalorder %s26, 0
      %p234 = por %p232, %p233
      %s235 = ssub.s32 %s27, %s39
      %p236 = scmp.eq.s32.totalorder %s235, 0
      %s238 = sadd.s32 %s237, 1
      %s239 = scalar_select %p236, %s237, %s238
      %p242 = pneg %p236
      %p243 = scmp.eq.s32.totalorder %s20, 7
      %p244 = por %p242, %p243
      %p245 = scmp.ne.s32.totalorder %s237, %s240
      %p246 = scmp.eq.s32.totalorder %s20, 0
      %p247 = por %p245, %p246
      %p248 = scmp.ne.s32.totalorder %s237, %s240
      %p249 = scmp.eq.s32.totalorder %s25, 7
      %p250 = por %p248, %p249
      %p251 = scmp.ne.s32.totalorder %s240, %s241
      %p252 = scmp.eq.s32.totalorder %s25, 0
      %p253 = por %p251, %p252
      %p254 = scmp.ne.s32.totalorder %s240, %s241
      %p255 = scmp.eq.s32.totalorder %s26, 7
      %p256 = por %p254, %p255
      %p258 = scmp.ne.s32.totalorder %s241, %s257
      %p259 = scmp.eq.s32.totalorder %s26, 0
      %p260 = por %p258, %p259
      %p261 = scmp.le.s32.totalorder 1, %s20
      %p262 = scmp.lt.s32.totalorder %s20, 9
      %p263 = pnand %p261, %p262
      %p264 = pneg %p263
      // Predicated region
      $region9: #{_lambda_.34} parent=5 // pred_check
        _
      $region10: #{_lambda_.34} parent=5 // pred_check_branch
        %266 = sbr.rel (%p263) target = $region12
      $region11: #{_lambda_.34} parent=5 // pred_region
        %s267 = ssub.s32 %s20, 1
        // Predicated region
        $region13: #{_lambda_.34} parent=11 // pred_check
          %p268 = pneg %p58
        $region14: #{_lambda_.34} parent=11 // pred_check_branch
          %270 = sbr.rel (%p268) target = $region16
        $region15: #{_lambda_.34} parent=11 // pred_region
          %s271 = smul.u32 2, %s29
          %p272 = scmp.lt.s32.totalorder %s271, 1
          %s273 = scalar_select %p272, %s271, 1
          %s274 = smul.addr %s273, 4
          %s275 = scalar_lea.vmem %s0, %s274
          %s276 = smul.u32 2, %s29
        $region16: #{_lambda_.34} parent=11 // pred_fallthru
          _
        // Predicated region
        $region17: #{_lambda_.34} parent=11 // pred_check
          %p277 = pneg %p185
        $region18: #{_lambda_.34} parent=11 // pred_check_branch
          %279 = sbr.rel (%p277) target = $region20
        $region19: #{_lambda_.34} parent=11 // pred_region
          _
        $region20: #{_lambda_.34} parent=11 // pred_fallthru
          _
        // Predicated region
        $region21: #{_lambda_.34} parent=11 // pred_check
          %p280 = pneg %p206
        $region22: #{_lambda_.34} parent=11 // pred_check_branch
          %282 = sbr.rel (%p280) target = $region24
        $region23: #{_lambda_.34} parent=11 // pred_region
          _
        $region24: #{_lambda_.34} parent=11 // pred_fallthru
          _
        // Predicated region
        $region25: #{_lambda_.34} parent=11 // pred_check
          %p283 = pneg %p227
        $region26: #{_lambda_.34} parent=11 // pred_check_branch
          %285 = sbr.rel (%p283) target = $region28
        $region27: #{_lambda_.34} parent=11 // pred_region
          _
        $region28: #{_lambda_.34} parent=11 // pred_fallthru
          _
      $region12: #{_lambda_.34} parent=5 // pred_fallthru
        _
      %p286 = scmp.lt.s32.totalorder %s20, 8
      // Predicated region
      $region29: #{_lambda_.34} parent=5 // pred_check
        %p287 = pneg %p286
      $region30: #{_lambda_.34} parent=5 // pred_check_branch
        %289 = sbr.rel (%p287) target = $region32
      $region31: #{_lambda_.34} parent=5 // pred_region
        // Predicated region
        $region33: #{_lambda_.34} parent=31 // pred_check
          %p290 = pneg %p78
        $region34: #{_lambda_.34} parent=31 // pred_check_branch
          %292 = sbr.rel (%p290) target = $region36
        $region35: #{_lambda_.34} parent=31 // pred_region
          %s293 = sand.u32 %s68, 1
          %s294 = scalar_lea.sflag [#allocation4], %s293
          %s295 = sand.u32 %s68, 1
          %s296 = smul.addr %s295, 64
          %s297 = scalar_lea.vmem [#allocation3], %s296
          %299 = vsyncadd %s294, 0
          %s300 = smul.addr %s28, 16
          %s301 = smul.addr %s300, 4
          %s302 = scalar_lea.hbm %s1, %s301
          %s303 = sshll.u32 %s302, 4
          %s304 = int_to_ptr.hbm [resolvable:$true] %s303
          %s305 = sshll.u32 %s297, 4
          %s306 = int_to_ptr.vmem [resolvable:$true] %s305
          %311 = dma.hbm_to_vmem [thread:$0]  %s304, 1024, %s306, %s294, 64, 64, 4
        $region36: #{_lambda_.34} parent=31 // pred_fallthru
          _
        // Predicated region
        $region37: #{_lambda_.34} parent=31 // pred_check
          %p312 = pneg %p104
        $region38: #{_lambda_.34} parent=31 // pred_check_branch
          %314 = sbr.rel (%p312) target = $region40
        $region39: #{_lambda_.34} parent=31 // pred_region
          %s315 = sand.u32 %s20, 1
          %s316 = scalar_lea.sflag [#allocation6], %s315
          %s317 = sand.u32 %s94, 1
          %s318 = smul.addr %s317, 64
          %s319 = scalar_lea.vmem [#allocation5], %s318
          %321 = vsyncadd %s316, 0
          %s322 = smul.addr %s28, 16
          %s323 = smul.addr %s322, 4
          %s324 = scalar_lea.hbm %s2, %s323
          %s325 = sshll.u32 %s324, 4
          %s326 = int_to_ptr.hbm [resolvable:$true] %s325
          %s327 = sshll.u32 %s319, 4
          %s328 = int_to_ptr.vmem [resolvable:$true] %s327
          %333 = dma.hbm_to_vmem [thread:$0]  %s326, 1024, %s328, %s316, 64, 64, 4
        $region40: #{_lambda_.34} parent=31 // pred_fallthru
          _
        // Predicated region
        $region41: #{_lambda_.34} parent=31 // pred_check
          %p334 = pneg %p130
        $region42: #{_lambda_.34} parent=31 // pred_check_branch
          %336 = sbr.rel (%p334) target = $region44
        $region43: #{_lambda_.34} parent=31 // pred_region
          %s337 = sand.u32 %s20, 1
          %s338 = scalar_lea.sflag [#allocation6], %s337
          %s339 = sand.u32 %s120, 1
          %s340 = smul.addr %s339, 64
          %s341 = scalar_lea.vmem [#allocation7], %s340
          %343 = vsyncadd %s338, 0
          %s344 = smul.addr %s28, 16
          %s345 = smul.addr %s344, 4
          %s346 = scalar_lea.hbm %s3, %s345
          %s347 = sshll.u32 %s346, 4
          %s348 = int_to_ptr.hbm [resolvable:$true] %s347
          %s349 = sshll.u32 %s341, 4
          %s350 = int_to_ptr.vmem [resolvable:$true] %s349
          %355 = dma.hbm_to_vmem [thread:$0]  %s348, 1024, %s350, %s338, 64, 64, 4
        $region44: #{_lambda_.34} parent=31 // pred_fallthru
          _
        // Predicated region
        $region45: #{_lambda_.34} parent=31 // pred_check
          %p356 = pneg %p158
        $region46: #{_lambda_.34} parent=31 // pred_check_branch
          %358 = sbr.rel (%p356) target = $region48
        $region47: #{_lambda_.34} parent=31 // pred_region
          %s359 = smul.u32 2, %s27
          %p360 = scmp.lt.s32.totalorder %s28, 7
          %s361 = scalar_select %p360, %s28, 7
          %p362 = scmp.lt.s32.totalorder %s359, 1
          %s363 = scalar_select %p362, %s359, 1
          %s364 = smul.addr %s361, 2
          %s365 = sadd.s32 %s363, %s364
          %s366 = smul.addr %s365, 8
          %s367 = scalar_lea.vmem %s4, %s366
          %s368 = smul.u32 2, %s27
        $region48: #{_lambda_.34} parent=31 // pred_fallthru
          _
      $region32: #{_lambda_.34} parent=5 // pred_fallthru
        _
      %p369 = scmp.le.s32.totalorder 1, %s20
      %p370 = scmp.lt.s32.totalorder %s20, 9
      %p371 = pnand %p369, %p370
      %p372 = pneg %p371
      // Predicated region
      $region49: #{_lambda_.34} parent=5 // pred_check
        _
      $region50: #{_lambda_.34} parent=5 // pred_check_branch
        %374 = sbr.rel (%p371) target = $region52
      $region51: #{_lambda_.34} parent=5 // pred_region
        %s375 = ssub.s32 %s20, 1
        %s376 = sand.u32 %s71, 1
        %s377 = scalar_lea.sflag [#allocation4], %s376
        %s378 = sand.u32 %s71, 1
        %s379 = smul.addr %s378, 64
        %s380 = scalar_lea.vmem [#allocation3], %s379
        // Predicated region
        $region53: #{_lambda_.34} parent=51 // pred_check
          %p381 = pneg %p84
        $region54: #{_lambda_.34} parent=51 // pred_check_branch
          %383 = sbr.rel (%p381) target = $region56
        $region55: #{_lambda_.34} parent=51 // pred_region
          %385 = dma.done %s377, 1024
        $region56: #{_lambda_.34} parent=51 // pred_fallthru
          _
        %s386 = sand.u32 %s25, 1
        %s387 = scalar_lea.sflag [#allocation6], %s386
        %s388 = sand.u32 %s97, 1
        %s389 = smul.addr %s388, 64
        %s390 = scalar_lea.vmem [#allocation5], %s389
        // Predicated region
        $region57: #{_lambda_.34} parent=51 // pred_check
          %p391 = pneg %p110
        $region58: #{_lambda_.34} parent=51 // pred_check_branch
          %393 = sbr.rel (%p391) target = $region60
        $region59: #{_lambda_.34} parent=51 // pred_region
          %395 = dma.done %s387, 1024
        $region60: #{_lambda_.34} parent=51 // pred_fallthru
          _
        %s396 = sand.u32 %s25, 1
        %s397 = scalar_lea.sflag [#allocation6], %s396
        %s398 = sand.u32 %s123, 1
        %s399 = smul.addr %s398, 64
        %s400 = scalar_lea.vmem [#allocation7], %s399
        // Predicated region
        $region61: #{_lambda_.34} parent=51 // pred_check
          %p401 = pneg %p136
        $region62: #{_lambda_.34} parent=51 // pred_check_branch
          %403 = sbr.rel (%p401) target = $region64
        $region63: #{_lambda_.34} parent=51 // pred_region
          %405 = dma.done %s397, 1024
        $region64: #{_lambda_.34} parent=51 // pred_fallthru
          _
        %s406 = smul.u32 2, %s29
        %p407 = scmp.lt.s32.totalorder %s406, 1
        %s408 = scalar_select %p407, %s406, 1
        %s409 = smul.addr %s408, 4
        %s410 = scalar_lea.vmem %s0, %s409
        %p411 = pneg %p58
        %p412 = pneg %p55
        %s413 = sand.u32 %s71, 1
        %s414 = scalar_lea.sflag [#allocation4], %s413
        %s415 = sand.u32 %s71, 1
        %s416 = smul.addr %s415, 64
        %s417 = scalar_lea.vmem [#allocation3], %s416
        %p418 = pneg %p84
        %p419 = pneg %p81
        %s420 = sand.u32 %s25, 1
        %s421 = scalar_lea.sflag [#allocation6], %s420
        %s422 = sand.u32 %s97, 1
        %s423 = smul.addr %s422, 64
        %s424 = scalar_lea.vmem [#allocation5], %s423
        %p425 = pneg %p110
        %p426 = pneg %p107
        %s427 = sand.u32 %s25, 1
        %s428 = scalar_lea.sflag [#allocation6], %s427
        %s429 = sand.u32 %s123, 1
        %s430 = smul.addr %s429, 64
        %s431 = scalar_lea.vmem [#allocation7], %s430
        %p432 = pneg %p136
        %p433 = pneg %p133
        %s434 = smul.u32 2, %s29
        %p435 = scmp.lt.s32.totalorder %s30, 7
        %s436 = scalar_select %p435, %s30, 7
        %p437 = scmp.lt.s32.totalorder %s434, 1
        %s438 = scalar_select %p437, %s434, 1
        %s439 = smul.addr %s436, 2
        %s440 = sadd.s32 %s438, %s439
        %s441 = smul.addr %s440, 8
        %s442 = scalar_lea.vmem %s4, %s441
        %p443 = pneg %p164
        %p444 = pneg %p161
        %p445 = pneg %p185
        %p446 = pneg %p182
        %p447 = pneg %p206
        %p448 = pneg %p203
        %p449 = pneg %p227
        %p450 = pneg %p224
        %p451 = pneg %p253
        %p452 = pneg %p250
        %s453 = smul.u32 2, %s29
        %p454 = scmp.lt.s32.totalorder %s453, 1
        %s455 = scalar_select %p454, %s453, 1
        %s456 = smul.addr %s455, 4
        %s457 = scalar_lea.vmem %s8, %s456
        %s458 = smul.u32 2, %s29
        %p459 = scmp.lt.s32.totalorder %s458, 1
        %s460 = scalar_select %p459, %s458, 1
        %s461 = smul.addr %s460, 4
        %s462 = scalar_lea.vmem %s0, %s461
        %s463 = smul.u32 2, %s29
        %s464 = smul.u32 2, %s29
        %p465 = scmp.lt.s32.totalorder %s30, 7
        %s466 = scalar_select %p465, %s30, 7
        %p467 = scmp.lt.s32.totalorder %s464, 1
        %s468 = scalar_select %p467, %s464, 1
        %s469 = smul.addr %s466, 2
        %s470 = sadd.s32 %s468, %s469
        %s471 = smul.addr %s470, 8
        %s472 = scalar_lea.vmem %s4, %s471
        %s473 = smul.u32 2, %s29
        %s474 = smul.u32 2, %s29
        %p475 = scmp.lt.s32.totalorder %s474, 1
        %s476 = scalar_select %p475, %s474, 1
        %s477 = smul.addr %s476, 4
        %s478 = scalar_lea.vmem %s8, %s477
        %s479 = smul.u32 2, %s29
        %v480 = vld [vmem:[%s462] sm:$0xf]
        %v481 = vld [vmem:[%s462 + $0x4] sm:$0xf]
        %p482 = scmp.eq.s32.totalorder %s30, 0
        // Predicated region
        $region65: #{_lambda_.34} parent=51 // pred_check
          %p483 = pneg %p482
        $region66: #{_lambda_.34} parent=51 // pred_check_branch
          %485 = sbr.rel (%p483) target = $region68
        $region67: #{_lambda_.34} parent=51 // pred_region
          %v486 = vld [vmem:[%s5] sm:$0xf]
          %v487 = vld [vmem:[%s5 + $0x4] sm:$0xf]
          %v488 = vld [vmem:[%s5 + $0x8] sm:$0xf]
          %v489 = vld [vmem:[%s5 + $0xc] sm:$0xf]
          %v490 = vld [vmem:[%s5 + $0x10] sm:$0xf]
          %v491 = vld [vmem:[%s5 + $0x14] sm:$0xf]
          %v492 = vld [vmem:[%s5 + $0x18] sm:$0xf]
          %v493 = vld [vmem:[%s5 + $0x1c] sm:$0xf]
          %v494 = vld [vmem:[%s5 + $0x20] sm:$0xf]
          %v495 = vld [vmem:[%s5 + $0x24] sm:$0xf]
          %v496 = vld [vmem:[%s5 + $0x28] sm:$0xf]
          %v497 = vld [vmem:[%s5 + $0x2c] sm:$0xf]
          %v498 = vld [vmem:[%s5 + $0x30] sm:$0xf]
          %v499 = vld [vmem:[%s5 + $0x34] sm:$0xf]
          %v500 = vld [vmem:[%s5 + $0x38] sm:$0xf]
          %v501 = vld [vmem:[%s5 + $0x3c] sm:$0xf]
          %v504 = vunpack.c.l.b16 %v480
          %v505 = vunpack.c.l.b16 %v481
          %v506 = vpack.c.b16 %v505, %v504
          %v524 = vunpack.c.l.b16 %v486
          %v525 = vunpack.c.l.b16 %v487
          %v526 = vunpack.c.l.b16 %v488
          %v527 = vunpack.c.l.b16 %v489
          %v528 = vunpack.c.l.b16 %v490
          %v529 = vunpack.c.l.b16 %v491
          %v530 = vunpack.c.l.b16 %v492
          %v531 = vunpack.c.l.b16 %v493
          %v532 = vunpack.c.l.b16 %v494
          %v533 = vunpack.c.l.b16 %v495
          %v534 = vunpack.c.l.b16 %v496
          %v535 = vunpack.c.l.b16 %v497
          %v536 = vunpack.c.l.b16 %v498
          %v537 = vunpack.c.l.b16 %v499
          %v538 = vunpack.c.l.b16 %v500
          %v539 = vunpack.c.l.b16 %v501
          %v540 = vpack.c.b16 %v525, %v524
          %v541 = vpack.c.b16 %v527, %v526
          %v542 = vpack.c.b16 %v529, %v528
          %v543 = vpack.c.b16 %v531, %v530
          %v544 = vpack.c.b16 %v533, %v532
          %v545 = vpack.c.b16 %v535, %v534
          %v546 = vpack.c.b16 %v537, %v536
          %v547 = vpack.c.b16 %v539, %v538
          %556 = vmatpush.bf16.msra.mxu0 %v547
          %557 = vmatpush.bf16.msra.mxu0 %v546
          %558 = vmatpush.bf16.msra.mxu0 %v545
          %559 = vmatpush.bf16.msra.mxu0 %v544
          %560 = vmatpush.bf16.msra.mxu0 %v543
          %561 = vmatpush.bf16.msra.mxu0 %v542
          %562 = vmatpush.bf16.msra.mxu0 %v541
          %563 = vmatpush.bf16.msra.mxu0 %v540
          %564 = vmatmul.bf16.gmra.mxu0 %v506
          %v565 = vpop.f32.mrf.mxu0
          %v566 = vadd.f32 0.0, %v565
          %v567 = vpop.f32.mrf.mxu0
          %v568 = vadd.f32 0.0, %v567
          %569 = vdwg.mxu0
          %v570 = vld [vmem:[%s6] sm:$0xf]
          %v571 = vld [vmem:[%s6 + $0x4] sm:$0xf]
          %v572 = vld [vmem:[%s6 + $0x8] sm:$0xf]
          %v573 = vld [vmem:[%s6 + $0xc] sm:$0xf]
          %v574 = vld [vmem:[%s6 + $0x10] sm:$0xf]
          %v575 = vld [vmem:[%s6 + $0x14] sm:$0xf]
          %v576 = vld [vmem:[%s6 + $0x18] sm:$0xf]
          %v577 = vld [vmem:[%s6 + $0x1c] sm:$0xf]
          %v578 = vld [vmem:[%s6 + $0x20] sm:$0xf]
          %v579 = vld [vmem:[%s6 + $0x24] sm:$0xf]
          %v580 = vld [vmem:[%s6 + $0x28] sm:$0xf]
          %v581 = vld [vmem:[%s6 + $0x2c] sm:$0xf]
          %v582 = vld [vmem:[%s6 + $0x30] sm:$0xf]
          %v583 = vld [vmem:[%s6 + $0x34] sm:$0xf]
          %v584 = vld [vmem:[%s6 + $0x38] sm:$0xf]
          %v585 = vld [vmem:[%s6 + $0x3c] sm:$0xf]
          %v602 = vunpack.c.l.b16 %v570
          %v603 = vunpack.c.l.b16 %v571
          %v604 = vunpack.c.l.b16 %v572
          %v605 = vunpack.c.l.b16 %v573
          %v606 = vunpack.c.l.b16 %v574
          %v607 = vunpack.c.l.b16 %v575
          %v608 = vunpack.c.l.b16 %v576
          %v609 = vunpack.c.l.b16 %v577
          %v610 = vunpack.c.l.b16 %v578
          %v611 = vunpack.c.l.b16 %v579
          %v612 = vunpack.c.l.b16 %v580
          %v613 = vunpack.c.l.b16 %v581
          %v614 = vunpack.c.l.b16 %v582
          %v615 = vunpack.c.l.b16 %v583
          %v616 = vunpack.c.l.b16 %v584
          %v617 = vunpack.c.l.b16 %v585
          %v618 = vpack.c.b16 %v603, %v602
          %v619 = vpack.c.b16 %v605, %v604
          %v620 = vpack.c.b16 %v607, %v606
          %v621 = vpack.c.b16 %v609, %v608
          %v622 = vpack.c.b16 %v611, %v610
          %v623 = vpack.c.b16 %v613, %v612
          %v624 = vpack.c.b16 %v615, %v614
          %v625 = vpack.c.b16 %v617, %v616
          %634 = vmatpush.bf16.msra.mxu0 %v625
          %635 = vmatpush.bf16.msra.mxu0 %v624
          %636 = vmatpush.bf16.msra.mxu0 %v623
          %637 = vmatpush.bf16.msra.mxu0 %v622
          %638 = vmatpush.bf16.msra.mxu0 %v621
          %639 = vmatpush.bf16.msra.mxu0 %v620
          %640 = vmatpush.bf16.msra.mxu0 %v619
          %641 = vmatpush.bf16.msra.mxu0 %v618
          %642 = vmatmul.bf16.gmra.mxu0 %v506
          %v643 = vpop.f32.mrf.mxu0
          %v644 = vadd.f32 0.0, %v643
          %v645 = vpop.f32.mrf.mxu0
          %v646 = vadd.f32 0.0, %v645
          %647 = vdwg.mxu0
          %v648 = vxor.u32 %v566, 2147483648
          %v649 = vxor.u32 %v568, 2147483648
          %v650 = vmul.f32 %v648, 1.442695
          %v651 = vpow.pop %v650
          %v652 = vmul.f32 %v649, 1.442695
          %v653 = vpow.pop %v652
          %v654 = vadd.f32 %v651, 1.0
          %v655 = vadd.f32 %v653, 1.0
          %v656 = vrcp.pop %v654
          %v657 = vmul.f32 %v654, %v656
          %v658 = vsub.f32 1.0, %v657
          %v659 = vmul.f32 %v656, %v658
          %v660 = vadd.f32 %v656, %v659
          %vm661 = vweird.f32 %v654
          %vm662 = vweird.f32 %v656
          %vm663 = vmor %vm661, %vm662
          %v664 = vsel %vm663, %v656, %v660
          %v665 = vand.u32 2147483647, %v654
          %vm666 = vcmp.eq.f32.partialorder %v665, 8.507059e+37
          %v667 = vand.u32 %v654, 2147483648
          %v668 = vor.u32 1.1754944e-38, %v667
          %v669 = vsel %vm666, %v668, %v664
          %v670 = vmul.f32 1.0, %v669
          %v671 = vrcp.pop %v655
          %v672 = vmul.f32 %v655, %v671
          %v673 = vsub.f32 1.0, %v672
          %v674 = vmul.f32 %v671, %v673
          %v675 = vadd.f32 %v671, %v674
          %vm676 = vweird.f32 %v655
          %vm677 = vweird.f32 %v671
          %vm678 = vmor %vm676, %vm677
          %v679 = vsel %vm678, %v671, %v675
          %v680 = vand.u32 2147483647, %v655
          %vm681 = vcmp.eq.f32.partialorder %v680, 8.507059e+37
          %v682 = vand.u32 %v655, 2147483648
          %v683 = vor.u32 1.1754944e-38, %v682
          %v684 = vsel %vm681, %v683, %v679
          %v685 = vmul.f32 1.0, %v684
          %v686 = vmul.f32 %v566, %v670
          %v687 = vmul.f32 %v568, %v685
          %v688 = vmul.f32 %v686, %v644
          %v689 = vmul.f32 %v687, %v646
          %v690 = vpack.c.bf16 %v689, %v688
          %v691 = vld [vmem:[%s7] sm:$0xf]
          %v692 = vld [vmem:[%s7 + $0x4] sm:$0xf]
          %v693 = vld [vmem:[%s7 + $0x8] sm:$0xf]
          %v694 = vld [vmem:[%s7 + $0xc] sm:$0xf]
          %v695 = vld [vmem:[%s7 + $0x10] sm:$0xf]
          %v696 = vld [vmem:[%s7 + $0x14] sm:$0xf]
          %v697 = vld [vmem:[%s7 + $0x18] sm:$0xf]
          %v698 = vld [vmem:[%s7 + $0x1c] sm:$0xf]
          %v699 = vld [vmem:[%s7 + $0x20] sm:$0xf]
          %v700 = vld [vmem:[%s7 + $0x24] sm:$0xf]
          %v701 = vld [vmem:[%s7 + $0x28] sm:$0xf]
          %v702 = vld [vmem:[%s7 + $0x2c] sm:$0xf]
          %v703 = vld [vmem:[%s7 + $0x30] sm:$0xf]
          %v704 = vld [vmem:[%s7 + $0x34] sm:$0xf]
          %v705 = vld [vmem:[%s7 + $0x38] sm:$0xf]
          %v706 = vld [vmem:[%s7 + $0x3c] sm:$0xf]
          %v723 = vunpack.c.l.b16 %v691
          %v724 = vunpack.c.l.b16 %v692
          %v725 = vunpack.c.l.b16 %v693
          %v726 = vunpack.c.l.b16 %v694
          %v727 = vunpack.c.l.b16 %v695
          %v728 = vunpack.c.l.b16 %v696
          %v729 = vunpack.c.l.b16 %v697
          %v730 = vunpack.c.l.b16 %v698
          %v731 = vunpack.c.l.b16 %v699
          %v732 = vunpack.c.l.b16 %v700
          %v733 = vunpack.c.l.b16 %v701
          %v734 = vunpack.c.l.b16 %v702
          %v735 = vunpack.c.l.b16 %v703
          %v736 = vunpack.c.l.b16 %v704
          %v737 = vunpack.c.l.b16 %v705
          %v738 = vunpack.c.l.b16 %v706
          %v739 = vpack.c.b16 %v724, %v723
          %v740 = vpack.c.b16 %v726, %v725
          %v741 = vpack.c.b16 %v728, %v727
          %v742 = vpack.c.b16 %v730, %v729
          %v743 = vpack.c.b16 %v732, %v731
          %v744 = vpack.c.b16 %v734, %v733
          %v745 = vpack.c.b16 %v736, %v735
          %v746 = vpack.c.b16 %v738, %v737
          %755 = vmatpush.bf16.msra.mxu0 %v746
          %756 = vmatpush.bf16.msra.mxu0 %v745
          %757 = vmatpush.bf16.msra.mxu0 %v744
          %758 = vmatpush.bf16.msra.mxu0 %v743
          %759 = vmatpush.bf16.msra.mxu0 %v742
          %760 = vmatpush.bf16.msra.mxu0 %v741
          %761 = vmatpush.bf16.msra.mxu0 %v740
          %762 = vmatpush.bf16.msra.mxu0 %v739
          %763 = vmatmul.bf16.gmra.mxu0 %v690
          %v764 = vpop.f32.mrf.mxu0
          %v765 = vadd.f32 0.0, %v764
          %v766 = vpop.f32.mrf.mxu0
          %v767 = vadd.f32 0.0, %v766
          %768 = vdwg.mxu0
          %769 = vst [vmem:[#allocation2] sm:$0xff] %v765
          %770 = vst [vmem:[#allocation2 + $0x8] sm:$0xff] %v767
        $region68: #{_lambda_.34} parent=51 // pred_fallthru
          _
        %v771 = vld [vmem:[%s380] sm:$0xf]
        %v772 = vld [vmem:[%s380 + $0x4] sm:$0xf]
        %v773 = vld [vmem:[%s380 + $0x8] sm:$0xf]
        %v774 = vld [vmem:[%s380 + $0xc] sm:$0xf]
        %v775 = vld [vmem:[%s380 + $0x10] sm:$0xf]
        %v776 = vld [vmem:[%s380 + $0x14] sm:$0xf]
        %v777 = vld [vmem:[%s380 + $0x18] sm:$0xf]
        %v778 = vld [vmem:[%s380 + $0x1c] sm:$0xf]
        %v779 = vld [vmem:[%s380 + $0x20] sm:$0xf]
        %v780 = vld [vmem:[%s380 + $0x24] sm:$0xf]
        %v781 = vld [vmem:[%s380 + $0x28] sm:$0xf]
        %v782 = vld [vmem:[%s380 + $0x2c] sm:$0xf]
        %v783 = vld [vmem:[%s380 + $0x30] sm:$0xf]
        %v784 = vld [vmem:[%s380 + $0x34] sm:$0xf]
        %v785 = vld [vmem:[%s380 + $0x38] sm:$0xf]
        %v786 = vld [vmem:[%s380 + $0x3c] sm:$0xf]
        %v789 = vunpack.c.l.b16 %v480
        %v790 = vunpack.c.l.b16 %v481
        %v791 = vpack.c.b16 %v790, %v789
        %v809 = vunpack.c.l.b16 %v771
        %v810 = vunpack.c.l.b16 %v772
        %v811 = vunpack.c.l.b16 %v773
        %v812 = vunpack.c.l.b16 %v774
        %v813 = vunpack.c.l.b16 %v775
        %v814 = vunpack.c.l.b16 %v776
        %v815 = vunpack.c.l.b16 %v777
        %v816 = vunpack.c.l.b16 %v778
        %v817 = vunpack.c.l.b16 %v779
        %v818 = vunpack.c.l.b16 %v780
        %v819 = vunpack.c.l.b16 %v781
        %v820 = vunpack.c.l.b16 %v782
        %v821 = vunpack.c.l.b16 %v783
        %v822 = vunpack.c.l.b16 %v784
        %v823 = vunpack.c.l.b16 %v785
        %v824 = vunpack.c.l.b16 %v786
        %v825 = vpack.c.b16 %v810, %v809
        %v826 = vpack.c.b16 %v812, %v811
        %v827 = vpack.c.b16 %v814, %v813
        %v828 = vpack.c.b16 %v816, %v815
        %v829 = vpack.c.b16 %v818, %v817
        %v830 = vpack.c.b16 %v820, %v819
        %v831 = vpack.c.b16 %v822, %v821
        %v832 = vpack.c.b16 %v824, %v823
        %841 = vmatpush.bf16.msra.mxu0 %v832
        %842 = vmatpush.bf16.msra.mxu0 %v831
        %843 = vmatpush.bf16.msra.mxu0 %v830
        %844 = vmatpush.bf16.msra.mxu0 %v829
        %845 = vmatpush.bf16.msra.mxu0 %v828
        %846 = vmatpush.bf16.msra.mxu0 %v827
        %847 = vmatpush.bf16.msra.mxu0 %v826
        %848 = vmatpush.bf16.msra.mxu0 %v825
        %849 = vmatmul.bf16.gmra.mxu0 %v791
        %v850 = vpop.f32.mrf.mxu0
        %v851 = vadd.f32 0.0, %v850
        %v852 = vpop.f32.mrf.mxu0
        %v853 = vadd.f32 0.0, %v852
        %854 = vdwg.mxu0
        %v855 = vld [vmem:[%s390] sm:$0xf]
        %v856 = vld [vmem:[%s390 + $0x4] sm:$0xf]
        %v857 = vld [vmem:[%s390 + $0x8] sm:$0xf]
        %v858 = vld [vmem:[%s390 + $0xc] sm:$0xf]
        %v859 = vld [vmem:[%s390 + $0x10] sm:$0xf]
        %v860 = vld [vmem:[%s390 + $0x14] sm:$0xf]
        %v861 = vld [vmem:[%s390 + $0x18] sm:$0xf]
        %v862 = vld [vmem:[%s390 + $0x1c] sm:$0xf]
        %v863 = vld [vmem:[%s390 + $0x20] sm:$0xf]
        %v864 = vld [vmem:[%s390 + $0x24] sm:$0xf]
        %v865 = vld [vmem:[%s390 + $0x28] sm:$0xf]
        %v866 = vld [vmem:[%s390 + $0x2c] sm:$0xf]
        %v867 = vld [vmem:[%s390 + $0x30] sm:$0xf]
        %v868 = vld [vmem:[%s390 + $0x34] sm:$0xf]
        %v869 = vld [vmem:[%s390 + $0x38] sm:$0xf]
        %v870 = vld [vmem:[%s390 + $0x3c] sm:$0xf]
        %v887 = vunpack.c.l.b16 %v855
        %v888 = vunpack.c.l.b16 %v856
        %v889 = vunpack.c.l.b16 %v857
        %v890 = vunpack.c.l.b16 %v858
        %v891 = vunpack.c.l.b16 %v859
        %v892 = vunpack.c.l.b16 %v860
        %v893 = vunpack.c.l.b16 %v861
        %v894 = vunpack.c.l.b16 %v862
        %v895 = vunpack.c.l.b16 %v863
        %v896 = vunpack.c.l.b16 %v864
        %v897 = vunpack.c.l.b16 %v865
        %v898 = vunpack.c.l.b16 %v866
        %v899 = vunpack.c.l.b16 %v867
        %v900 = vunpack.c.l.b16 %v868
        %v901 = vunpack.c.l.b16 %v869
        %v902 = vunpack.c.l.b16 %v870
        %v903 = vpack.c.b16 %v888, %v887
        %v904 = vpack.c.b16 %v890, %v889
        %v905 = vpack.c.b16 %v892, %v891
        %v906 = vpack.c.b16 %v894, %v893
        %v907 = vpack.c.b16 %v896, %v895
        %v908 = vpack.c.b16 %v898, %v897
        %v909 = vpack.c.b16 %v900, %v899
        %v910 = vpack.c.b16 %v902, %v901
        %919 = vmatpush.bf16.msra.mxu0 %v910
        %920 = vmatpush.bf16.msra.mxu0 %v909
        %921 = vmatpush.bf16.msra.mxu0 %v908
        %922 = vmatpush.bf16.msra.mxu0 %v907
        %923 = vmatpush.bf16.msra.mxu0 %v906
        %924 = vmatpush.bf16.msra.mxu0 %v905
        %925 = vmatpush.bf16.msra.mxu0 %v904
        %926 = vmatpush.bf16.msra.mxu0 %v903
        %927 = vmatmul.bf16.gmra.mxu0 %v791
        %v928 = vpop.f32.mrf.mxu0
        %v929 = vadd.f32 0.0, %v928
        %v930 = vpop.f32.mrf.mxu0
        %v931 = vadd.f32 0.0, %v930
        %932 = vdwg.mxu0
        %v933 = vxor.u32 %v851, 2147483648
        %v934 = vxor.u32 %v853, 2147483648
        %v935 = vmul.f32 %v933, 1.442695
        %v936 = vpow.pop %v935
        %v937 = vmul.f32 %v934, 1.442695
        %v938 = vpow.pop %v937
        %v939 = vadd.f32 %v936, 1.0
        %v940 = vadd.f32 %v938, 1.0
        %v941 = vrcp.pop %v939
        %v942 = vmul.f32 %v939, %v941
        %v943 = vsub.f32 1.0, %v942
        %v944 = vmul.f32 %v941, %v943
        %v945 = vadd.f32 %v941, %v944
        %vm946 = vweird.f32 %v939
        %vm947 = vweird.f32 %v941
        %vm948 = vmor %vm946, %vm947
        %v949 = vsel %vm948, %v941, %v945
        %v950 = vand.u32 2147483647, %v939
        %vm951 = vcmp.eq.f32.partialorder %v950, 8.507059e+37
        %v952 = vand.u32 %v939, 2147483648
        %v953 = vor.u32 1.1754944e-38, %v952
        %v954 = vsel %vm951, %v953, %v949
        %v955 = vmul.f32 1.0, %v954
        %v956 = vrcp.pop %v940
        %v957 = vmul.f32 %v940, %v956
        %v958 = vsub.f32 1.0, %v957
        %v959 = vmul.f32 %v956, %v958
        %v960 = vadd.f32 %v956, %v959
        %vm961 = vweird.f32 %v940
        %vm962 = vweird.f32 %v956
        %vm963 = vmor %vm961, %vm962
        %v964 = vsel %vm963, %v956, %v960
        %v965 = vand.u32 2147483647, %v940
        %vm966 = vcmp.eq.f32.partialorder %v965, 8.507059e+37
        %v967 = vand.u32 %v940, 2147483648
        %v968 = vor.u32 1.1754944e-38, %v967
        %v969 = vsel %vm966, %v968, %v964
        %v970 = vmul.f32 1.0, %v969
        %v971 = vmul.f32 %v851, %v955
        %v972 = vmul.f32 %v853, %v970
        %v973 = vmul.f32 %v971, %v929
        %v974 = vmul.f32 %v972, %v931
        %v975 = vld [vmem:[%s472] sm:$0xff]
        %v976 = vld [vmem:[%s472 + $0x8] sm:$0xff]
        %978 = vset.pattern.permute.xlu0 0
        %979 = vperm.xlu0 %978, %v975
        %v980 = vpop.permute.xlu0 %979
        %983 = vset.pattern.permute.xlu0 0
        %984 = vperm.xlu0 %983, %v976
        %v985 = vpop.permute.xlu0 %984
        %v987 = vmul.f32 %v973, %v980
        %v988 = vmul.f32 %v974, %v985
        %v989 = vpack.c.bf16 %v988, %v987
        %v990 = vld [vmem:[#allocation2] sm:$0xff]
        %v991 = vld [vmem:[#allocation2 + $0x8] sm:$0xff]
        %v992 = vld [vmem:[%s400] sm:$0xf]
        %v993 = vld [vmem:[%s400 + $0x4] sm:$0xf]
        %v994 = vld [vmem:[%s400 + $0x8] sm:$0xf]
        %v995 = vld [vmem:[%s400 + $0xc] sm:$0xf]
        %v996 = vld [vmem:[%s400 + $0x10] sm:$0xf]
        %v997 = vld [vmem:[%s400 + $0x14] sm:$0xf]
        %v998 = vld [vmem:[%s400 + $0x18] sm:$0xf]
        %v999 = vld [vmem:[%s400 + $0x1c] sm:$0xf]
        %v1000 = vld [vmem:[%s400 + $0x20] sm:$0xf]
        %v1001 = vld [vmem:[%s400 + $0x24] sm:$0xf]
        %v1002 = vld [vmem:[%s400 + $0x28] sm:$0xf]
        %v1003 = vld [vmem:[%s400 + $0x2c] sm:$0xf]
        %v1004 = vld [vmem:[%s400 + $0x30] sm:$0xf]
        %v1005 = vld [vmem:[%s400 + $0x34] sm:$0xf]
        %v1006 = vld [vmem:[%s400 + $0x38] sm:$0xf]
        %v1007 = vld [vmem:[%s400 + $0x3c] sm:$0xf]
        %v1024 = vunpack.c.l.b16 %v992
        %v1025 = vunpack.c.l.b16 %v993
        %v1026 = vunpack.c.l.b16 %v994
        %v1027 = vunpack.c.l.b16 %v995
        %v1028 = vunpack.c.l.b16 %v996
        %v1029 = vunpack.c.l.b16 %v997
        %v1030 = vunpack.c.l.b16 %v998
        %v1031 = vunpack.c.l.b16 %v999
        %v1032 = vunpack.c.l.b16 %v1000
        %v1033 = vunpack.c.l.b16 %v1001
        %v1034 = vunpack.c.l.b16 %v1002
        %v1035 = vunpack.c.l.b16 %v1003
        %v1036 = vunpack.c.l.b16 %v1004
        %v1037 = vunpack.c.l.b16 %v1005
        %v1038 = vunpack.c.l.b16 %v1006
        %v1039 = vunpack.c.l.b16 %v1007
        %v1040 = vpack.c.b16 %v1025, %v1024
        %v1041 = vpack.c.b16 %v1027, %v1026
        %v1042 = vpack.c.b16 %v1029, %v1028
        %v1043 = vpack.c.b16 %v1031, %v1030
        %v1044 = vpack.c.b16 %v1033, %v1032
        %v1045 = vpack.c.b16 %v1035, %v1034
        %v1046 = vpack.c.b16 %v1037, %v1036
        %v1047 = vpack.c.b16 %v1039, %v1038
        %1056 = vmatpush.bf16.msra.mxu0 %v1047
        %1057 = vmatpush.bf16.msra.mxu0 %v1046
        %1058 = vmatpush.bf16.msra.mxu0 %v1045
        %1059 = vmatpush.bf16.msra.mxu0 %v1044
        %1060 = vmatpush.bf16.msra.mxu0 %v1043
        %1061 = vmatpush.bf16.msra.mxu0 %v1042
        %1062 = vmatpush.bf16.msra.mxu0 %v1041
        %1063 = vmatpush.bf16.msra.mxu0 %v1040
        %1064 = vmatmul.bf16.gmra.mxu0 %v989
        %v1065 = vpop.f32.mrf.mxu0
        %v1066 = vadd.f32 0.0, %v1065
        %v1067 = vpop.f32.mrf.mxu0
        %v1068 = vadd.f32 0.0, %v1067
        %1069 = vdwg.mxu0
        %v1070 = vadd.f32 %v990, %v1066
        %v1071 = vadd.f32 %v991, %v1068
        %1072 = vst [vmem:[#allocation2] sm:$0xff] %v1070
        %1073 = vst [vmem:[#allocation2 + $0x8] sm:$0xff] %v1071
        %p1074 = scmp.eq.s32.totalorder %s30, 7
        // Predicated region
        $region69: #{_lambda_.34} parent=51 // pred_check
          %p1075 = pneg %p1074
        $region70: #{_lambda_.34} parent=51 // pred_check_branch
          %1077 = sbr.rel (%p1075) target = $region72
        $region71: #{_lambda_.34} parent=51 // pred_region
          %v1078 = vld [vmem:[#allocation2] sm:$0xff]
          %v1079 = vld [vmem:[#allocation2 + $0x8] sm:$0xff]
          %v1080 = vpack.c.bf16 %v1078, %v1078
          %v1081 = vpack.c.bf16 %v1079, %v1079
          %1082 = vst [vmem:[%s478] sm:$0xf] %v1080
          %1083 = vst [vmem:[%s478 + $0x4] sm:$0xf] %v1081
        $region72: #{_lambda_.34} parent=51 // pred_fallthru
          _
        %s1084 = smul.u32 2, %s29
        %p1085 = scmp.lt.s32.totalorder %s1084, 1
        %s1086 = scalar_select %p1085, %s1084, 1
        %s1087 = smul.addr %s1086, 4
        %s1088 = scalar_lea.vmem %s8, %s1087
        // Predicated region
        $region73: #{_lambda_.34} parent=51 // pred_check
          %p1089 = pneg %p250
        $region74: #{_lambda_.34} parent=51 // pred_check_branch
          %1091 = sbr.rel (%p1089) target = $region76
        $region75: #{_lambda_.34} parent=51 // pred_region
          %s1092 = smul.u32 2, %s29
        $region76: #{_lambda_.34} parent=51 // pred_fallthru
          _
        // Predicated region
        $region77: #{_lambda_.34} parent=51 // pred_check
          %p1093 = pneg %p250
        $region78: #{_lambda_.34} parent=51 // pred_check_branch
          %1095 = sbr.rel (%p1093) target = $region80
        $region79: #{_lambda_.34} parent=51 // pred_region
          %s1096 = smul.u32 2, %s29
          %p1097 = scmp.lt.s32.totalorder %s1096, 1
          %s1098 = scalar_select %p1097, %s1096, 1
          %s1099 = smul.addr %s1098, 4
          %s1100 = scalar_lea.vmem %s8, %s1099
        $region80: #{_lambda_.34} parent=51 // pred_fallthru
          _
      $region52: #{_lambda_.34} parent=5 // pred_fallthru
        _
      %p1101 = scmp.le.s32.totalorder 2, %s20
      // Predicated region
      $region81: #{_lambda_.34} parent=5 // pred_check
        %p1102 = pneg %p1101
      $region82: #{_lambda_.34} parent=5 // pred_check_branch
        %1104 = sbr.rel (%p1102) target = $region84
      $region83: #{_lambda_.34} parent=5 // pred_region
        %s1105 = ssub.s32 %s20, 2
      $region84: #{_lambda_.34} parent=5 // pred_fallthru
        _
    $region6: #{_lambda_.34} parent=1 // loop_footer
      %s24 = sadd.s32 1, %s20
    $region7: #{_lambda_.34} parent=1 // loop_footer_branch
      %19 = sbr.rel target = $region3
    $region8: #{_lambda_.34} parent=1 // loop_exit
      _
    %1106 = vsyncpa [#allocation4], 1
    %s1107 = scalar_lea.sflag [#allocation4], 1
    %1108 = vsyncpa %s1107, 1
    %1109 = vsyncpa [#allocation6], 1
    %s1110 = scalar_lea.sflag [#allocation6], 1
    %1111 = vsyncpa %s1110, 1

// kernel: _lambda_.36
$region0: #{_lambda_.36}
  #allocation0 [shape = 'u32[]', space=smem, size = 0x4, offset = 0x4, fixed_abs, tag = 'smem constant byte address 0x4 - core index']
  #allocation1 [shape = 'u32[72,128]{1,0:T(1,128)}', space=vmem, size = 0x9000, scoped, tag = 'internal scratch']
  %s0 = inlined_call_operand.vmem [shape: bf16[32,128], index: 0, kind: input, shape index: {}]
  %s1 = inlined_call_operand.vmem [shape: bf16[128,128], index: 1, kind: input, shape index: {}]
  %s2 = inlined_call_operand.vmem [shape: f32[1,128], index: 2, kind: input, shape index: {}, may-alias: {2,4,6}]
  %s3 = inlined_call_operand.vmem [shape: bf16[128,128], index: 3, kind: input, shape index: {}]
  %s4 = inlined_call_operand.vmem [shape: f32[1,128], index: 4, kind: input, shape index: {}, may-alias: {2,4,6}]
  %s5 = inlined_call_operand.vmem [shape: bf16[128,128], index: 5, kind: input, shape index: {}]
  %s6 = inlined_call_operand.vmem [shape: f32[1,128], index: 6, kind: input, shape index: {}, may-alias: {2,4,6}]
  %s7 = inlined_call_operand.vmem [shape: bf16[32,128], index: 7, kind: output, shape index: {}]
  %s8 = sld [smem:[#allocation0]]
  $region38: #{_lambda_.36} parent=0
    _
  %s10 = ssub.s32 1, %s8
  %s11 = scalar_select 0, %s10, %s8
  // Predicated region
  $region2: #{_lambda_.36} parent=0 // pred_check
    _
  $region3: #{_lambda_.36} parent=0 // pred_check_branch
    %13 = sbr.rel (0) target = $region5
  $region4: #{_lambda_.36} parent=0 // pred_region
    _
  $region5: #{_lambda_.36} parent=0 // pred_fallthru
    _
  // Predicated region
  $region6: #{_lambda_.36} parent=0 // pred_check
    _
  $region7: #{_lambda_.36} parent=0 // pred_check_branch
    %15 = sbr.rel (0) target = $region9
  $region8: #{_lambda_.36} parent=0 // pred_region
    _
  $region9: #{_lambda_.36} parent=0 // pred_fallthru
    _
  // Predicated region
  $region10: #{_lambda_.36} parent=0 // pred_check
    _
  $region11: #{_lambda_.36} parent=0 // pred_check_branch
    %17 = sbr.rel (0) target = $region13
  $region12: #{_lambda_.36} parent=0 // pred_region
    _
  $region13: #{_lambda_.36} parent=0 // pred_fallthru
    _
  // Predicated region
  $region14: #{_lambda_.36} parent=0 // pred_check
    _
  $region15: #{_lambda_.36} parent=0 // pred_check_branch
    %19 = sbr.rel (0) target = $region17
  $region16: #{_lambda_.36} parent=0 // pred_region
    _
  $region17: #{_lambda_.36} parent=0 // pred_fallthru
    _
  // Predicated region
  $region18: #{_lambda_.36} parent=0 // pred_check
    _
  $region19: #{_lambda_.36} parent=0 // pred_check_branch
    %21 = sbr.rel (0) target = $region21
  $region20: #{_lambda_.36} parent=0 // pred_region
    _
  $region21: #{_lambda_.36} parent=0 // pred_fallthru
    _
  // Predicated region
  $region22: #{_lambda_.36} parent=0 // pred_check
    _
  $region23: #{_lambda_.36} parent=0 // pred_check_branch
    %23 = sbr.rel (0) target = $region25
  $region24: #{_lambda_.36} parent=0 // pred_region
    _
  $region25: #{_lambda_.36} parent=0 // pred_fallthru
    _
  // Predicated region
  $region26: #{_lambda_.36} parent=0 // pred_check
    _
  $region27: #{_lambda_.36} parent=0 // pred_check_branch
    %25 = sbr.rel (0) target = $region29
  $region28: #{_lambda_.36} parent=0 // pred_region
    _
  $region29: #{_lambda_.36} parent=0 // pred_fallthru
    _
  %v26 = vld [vmem:[%s0] sm:$0xf]
  %v27 = vld [vmem:[%s0 + $0x4] sm:$0xf]
  %v28 = vld [vmem:[%s0 + $0x8] sm:$0xf]
  %v29 = vld [vmem:[%s0 + $0xc] sm:$0xf]
  %v30 = vld [vmem:[%s1] sm:$0xf]
  %v31 = vld [vmem:[%s1 + $0x4] sm:$0xf]
  %v32 = vld [vmem:[%s1 + $0x8] sm:$0xf]
  %v33 = vld [vmem:[%s1 + $0xc] sm:$0xf]
  %v34 = vld [vmem:[%s1 + $0x10] sm:$0xf]
  %v35 = vld [vmem:[%s1 + $0x14] sm:$0xf]
  %v36 = vld [vmem:[%s1 + $0x18] sm:$0xf]
  %v37 = vld [vmem:[%s1 + $0x1c] sm:$0xf]
  %v38 = vld [vmem:[%s1 + $0x20] sm:$0xf]
  %v39 = vld [vmem:[%s1 + $0x24] sm:$0xf]
  %v40 = vld [vmem:[%s1 + $0x28] sm:$0xf]
  %v41 = vld [vmem:[%s1 + $0x2c] sm:$0xf]
  %v42 = vld [vmem:[%s1 + $0x30] sm:$0xf]
  %v43 = vld [vmem:[%s1 + $0x34] sm:$0xf]
  %v44 = vld [vmem:[%s1 + $0x38] sm:$0xf]
  %v45 = vld [vmem:[%s1 + $0x3c] sm:$0xf]
  %v46 = vld [vmem:[%s2] sm:$0x1]
  %v48 = vperm.slane %v46, 0
  %v54 = vunpack.c.l.b16 %v26
  %v55 = vunpack.c.l.b16 %v27
  %v56 = vunpack.c.l.b16 %v28
  %v57 = vunpack.c.l.b16 %v29
  %v58 = vpack.c.b16 %v55, %v54
  %v59 = vpack.c.b16 %v57, %v56
  %v78 = vunpack.c.l.b16 %v30
  %v79 = vunpack.c.l.b16 %v31
  %v80 = vunpack.c.l.b16 %v32
  %v81 = vunpack.c.l.b16 %v33
  %v82 = vunpack.c.l.b16 %v34
  %v83 = vunpack.c.l.b16 %v35
  %v84 = vunpack.c.l.b16 %v36
  %v85 = vunpack.c.l.b16 %v37
  %v86 = vunpack.c.l.b16 %v38
  %v87 = vunpack.c.l.b16 %v39
  %v88 = vunpack.c.l.b16 %v40
  %v89 = vunpack.c.l.b16 %v41
  %v90 = vunpack.c.l.b16 %v42
  %v91 = vunpack.c.l.b16 %v43
  %v92 = vunpack.c.l.b16 %v44
  %v93 = vunpack.c.l.b16 %v45
  %v94 = vpack.c.b16 %v79, %v78
  %v95 = vpack.c.b16 %v81, %v80
  %v96 = vpack.c.b16 %v83, %v82
  %v97 = vpack.c.b16 %v85, %v84
  %v98 = vpack.c.b16 %v87, %v86
  %v99 = vpack.c.b16 %v89, %v88
  %v100 = vpack.c.b16 %v91, %v90
  %v101 = vpack.c.b16 %v93, %v92
  %110 = vmatpush.bf16.msra.mxu0 %v101
  %111 = vmatpush.bf16.msra.mxu0 %v100
  %112 = vmatpush.bf16.msra.mxu0 %v99
  %113 = vmatpush.bf16.msra.mxu0 %v98
  %114 = vmatpush.bf16.msra.mxu0 %v97
  %115 = vmatpush.bf16.msra.mxu0 %v96
  %116 = vmatpush.bf16.msra.mxu0 %v95
  %117 = vmatpush.bf16.msra.mxu0 %v94
  %118 = vmatmul.bf16.gmra.mxu0 %v58
  %v119 = vpop.f32.mrf.mxu0
  %v120 = vadd.f32 %v48, %v119
  %v121 = vpop.f32.mrf.mxu0
  %v122 = vadd.f32 %v48, %v121
  %123 = vmatmul.bf16.gmra.mxu0 %v59
  %v124 = vpop.f32.mrf.mxu0
  %v125 = vadd.f32 %v48, %v124
  %v126 = vpop.f32.mrf.mxu0
  %v127 = vadd.f32 %v48, %v126
  %128 = vdwg.mxu0
  %v129 = vpack.c.bf16 %v122, %v120
  %v130 = vpack.c.bf16 %v127, %v125
  %v131 = vld [vmem:[%s3] sm:$0xf]
  %v132 = vld [vmem:[%s3 + $0x4] sm:$0xf]
  %v133 = vld [vmem:[%s3 + $0x8] sm:$0xf]
  %v134 = vld [vmem:[%s3 + $0xc] sm:$0xf]
  %v135 = vld [vmem:[%s3 + $0x10] sm:$0xf]
  %v136 = vld [vmem:[%s3 + $0x14] sm:$0xf]
  %v137 = vld [vmem:[%s3 + $0x18] sm:$0xf]
  %v138 = vld [vmem:[%s3 + $0x1c] sm:$0xf]
  %v139 = vld [vmem:[%s3 + $0x20] sm:$0xf]
  %v140 = vld [vmem:[%s3 + $0x24] sm:$0xf]
  %v141 = vld [vmem:[%s3 + $0x28] sm:$0xf]
  %v142 = vld [vmem:[%s3 + $0x2c] sm:$0xf]
  %v143 = vld [vmem:[%s3 + $0x30] sm:$0xf]
  %v144 = vld [vmem:[%s3 + $0x34] sm:$0xf]
  %v145 = vld [vmem:[%s3 + $0x38] sm:$0xf]
  %v146 = vld [vmem:[%s3 + $0x3c] sm:$0xf]
  %v147 = vld [vmem:[%s4] sm:$0x1]
  %v149 = vperm.slane %v147, 0
  %v167 = vunpack.c.l.b16 %v131
  %v168 = vunpack.c.l.b16 %v132
  %v169 = vunpack.c.l.b16 %v133
  %v170 = vunpack.c.l.b16 %v134
  %v171 = vunpack.c.l.b16 %v135
  %v172 = vunpack.c.l.b16 %v136
  %v173 = vunpack.c.l.b16 %v137
  %v174 = vunpack.c.l.b16 %v138
  %v175 = vunpack.c.l.b16 %v139
  %v176 = vunpack.c.l.b16 %v140
  %v177 = vunpack.c.l.b16 %v141
  %v178 = vunpack.c.l.b16 %v142
  %v179 = vunpack.c.l.b16 %v143
  %v180 = vunpack.c.l.b16 %v144
  %v181 = vunpack.c.l.b16 %v145
  %v182 = vunpack.c.l.b16 %v146
  %v183 = vpack.c.b16 %v168, %v167
  %v184 = vpack.c.b16 %v170, %v169
  %v185 = vpack.c.b16 %v172, %v171
  %v186 = vpack.c.b16 %v174, %v173
  %v187 = vpack.c.b16 %v176, %v175
  %v188 = vpack.c.b16 %v178, %v177
  %v189 = vpack.c.b16 %v180, %v179
  %v190 = vpack.c.b16 %v182, %v181
  %199 = vmatpush.bf16.msra.mxu0 %v190
  %200 = vmatpush.bf16.msra.mxu0 %v189
  %201 = vmatpush.bf16.msra.mxu0 %v188
  %202 = vmatpush.bf16.msra.mxu0 %v187
  %203 = vmatpush.bf16.msra.mxu0 %v186
  %204 = vmatpush.bf16.msra.mxu0 %v185
  %205 = vmatpush.bf16.msra.mxu0 %v184
  %206 = vmatpush.bf16.msra.mxu0 %v183
  %207 = vmatmul.bf16.gmra.mxu0 %v129
  %v208 = vpop.f32.mrf.mxu0
  %v209 = vadd.f32 %v149, %v208
  %v210 = vpop.f32.mrf.mxu0
  %v211 = vadd.f32 %v149, %v210
  %212 = vmatmul.bf16.gmra.mxu0 %v130
  %v213 = vpop.f32.mrf.mxu0
  %v214 = vadd.f32 %v149, %v213
  %v215 = vpop.f32.mrf.mxu0
  %v216 = vadd.f32 %v149, %v215
  %217 = vdwg.mxu0
  %v218 = vld [vmem:[%s5] sm:$0xf]
  %v219 = vld [vmem:[%s5 + $0x4] sm:$0xf]
  %v220 = vld [vmem:[%s5 + $0x8] sm:$0xf]
  %v221 = vld [vmem:[%s5 + $0xc] sm:$0xf]
  %v222 = vld [vmem:[%s5 + $0x10] sm:$0xf]
  %v223 = vld [vmem:[%s5 + $0x14] sm:$0xf]
  %v224 = vld [vmem:[%s5 + $0x18] sm:$0xf]
  %v225 = vld [vmem:[%s5 + $0x1c] sm:$0xf]
  %v226 = vld [vmem:[%s5 + $0x20] sm:$0xf]
  %v227 = vld [vmem:[%s5 + $0x24] sm:$0xf]
  %v228 = vld [vmem:[%s5 + $0x28] sm:$0xf]
  %v229 = vld [vmem:[%s5 + $0x2c] sm:$0xf]
  %v230 = vld [vmem:[%s5 + $0x30] sm:$0xf]
  %v231 = vld [vmem:[%s5 + $0x34] sm:$0xf]
  %v232 = vld [vmem:[%s5 + $0x38] sm:$0xf]
  %v233 = vld [vmem:[%s5 + $0x3c] sm:$0xf]
  %v234 = vld [vmem:[%s6] sm:$0x1]
  %v236 = vperm.slane %v234, 0
  %v254 = vunpack.c.l.b16 %v218
  %v255 = vunpack.c.l.b16 %v219
  %v256 = vunpack.c.l.b16 %v220
  %v257 = vunpack.c.l.b16 %v221
  %v258 = vunpack.c.l.b16 %v222
  %v259 = vunpack.c.l.b16 %v223
  %v260 = vunpack.c.l.b16 %v224
  %v261 = vunpack.c.l.b16 %v225
  %v262 = vunpack.c.l.b16 %v226
  %v263 = vunpack.c.l.b16 %v227
  %v264 = vunpack.c.l.b16 %v228
  %v265 = vunpack.c.l.b16 %v229
  %v266 = vunpack.c.l.b16 %v230
  %v267 = vunpack.c.l.b16 %v231
  %v268 = vunpack.c.l.b16 %v232
  %v269 = vunpack.c.l.b16 %v233
  %v270 = vpack.c.b16 %v255, %v254
  %v271 = vpack.c.b16 %v257, %v256
  %v272 = vpack.c.b16 %v259, %v258
  %v273 = vpack.c.b16 %v261, %v260
  %v274 = vpack.c.b16 %v263, %v262
  %v275 = vpack.c.b16 %v265, %v264
  %v276 = vpack.c.b16 %v267, %v266
  %v277 = vpack.c.b16 %v269, %v268
  %286 = vmatpush.bf16.msra.mxu0 %v277
  %287 = vmatpush.bf16.msra.mxu0 %v276
  %288 = vmatpush.bf16.msra.mxu0 %v275
  %289 = vmatpush.bf16.msra.mxu0 %v274
  %290 = vmatpush.bf16.msra.mxu0 %v273
  %291 = vmatpush.bf16.msra.mxu0 %v272
  %292 = vmatpush.bf16.msra.mxu0 %v271
  %293 = vmatpush.bf16.msra.mxu0 %v270
  %294 = vmatmul.bf16.gmra.mxu0 %v129
  %v295 = vpop.f32.mrf.mxu0
  %v296 = vadd.f32 %v236, %v295
  %v297 = vpop.f32.mrf.mxu0
  %v298 = vadd.f32 %v236, %v297
  %299 = vmatmul.bf16.gmra.mxu0 %v130
  %v300 = vpop.f32.mrf.mxu0
  %v301 = vadd.f32 %v236, %v300
  %v302 = vpop.f32.mrf.mxu0
  %v303 = vadd.f32 %v236, %v302
  %304 = vdwg.mxu0
  %v305 = vxor.u32 %v209, 2147483648
  %v306 = vxor.u32 %v211, 2147483648
  %v307 = vxor.u32 %v214, 2147483648
  %v308 = vxor.u32 %v216, 2147483648
  %v309 = vmul.f32 %v305, 1.442695
  %v310 = vpow.pop %v309
  %v311 = vmul.f32 %v306, 1.442695
  %v312 = vpow.pop %v311
  %v313 = vmul.f32 %v307, 1.442695
  %v314 = vpow.pop %v313
  %v315 = vmul.f32 %v308, 1.442695
  %v316 = vpow.pop %v315
  %v317 = vadd.f32 %v310, 1.0
  %v318 = vadd.f32 %v312, 1.0
  %v319 = vadd.f32 %v314, 1.0
  %v320 = vadd.f32 %v316, 1.0
  %v321 = vrcp.pop %v317
  %v322 = vmul.f32 %v317, %v321
  %v323 = vsub.f32 1.0, %v322
  %v324 = vmul.f32 %v321, %v323
  %v325 = vadd.f32 %v321, %v324
  %vm326 = vweird.f32 %v317
  %vm327 = vweird.f32 %v321
  %vm328 = vmor %vm326, %vm327
  %v329 = vsel %vm328, %v321, %v325
  %v330 = vand.u32 2147483647, %v317
  %vm331 = vcmp.eq.f32.partialorder %v330, 8.507059e+37
  %v332 = vand.u32 %v317, 2147483648
  %v333 = vor.u32 1.1754944e-38, %v332
  %v334 = vsel %vm331, %v333, %v329
  %v335 = vmul.f32 1.0, %v334
  %v336 = vrcp.pop %v318
  %v337 = vmul.f32 %v318, %v336
  %v338 = vsub.f32 1.0, %v337
  %v339 = vmul.f32 %v336, %v338
  %v340 = vadd.f32 %v336, %v339
  %vm341 = vweird.f32 %v318
  %vm342 = vweird.f32 %v336
  %vm343 = vmor %vm341, %vm342
  %v344 = vsel %vm343, %v336, %v340
  %v345 = vand.u32 2147483647, %v318
  %vm346 = vcmp.eq.f32.partialorder %v345, 8.507059e+37
  %v347 = vand.u32 %v318, 2147483648
  %v348 = vor.u32 1.1754944e-38, %v347
  %v349 = vsel %vm346, %v348, %v344
  %v350 = vmul.f32 1.0, %v349
  %v351 = vrcp.pop %v319
  %v352 = vmul.f32 %v319, %v351
  %v353 = vsub.f32 1.0, %v352
  %v354 = vmul.f32 %v351, %v353
  %v355 = vadd.f32 %v351, %v354
  %vm356 = vweird.f32 %v319
  %vm357 = vweird.f32 %v351
  %vm358 = vmor %vm356, %vm357
  %v359 = vsel %vm358, %v351, %v355
  %v360 = vand.u32 2147483647, %v319
  %vm361 = vcmp.eq.f32.partialorder %v360, 8.507059e+37
  %v362 = vand.u32 %v319, 2147483648
  %v363 = vor.u32 1.1754944e-38, %v362
  %v364 = vsel %vm361, %v363, %v359
  %v365 = vmul.f32 1.0, %v364
  %v366 = vrcp.pop %v320
  %v367 = vmul.f32 %v320, %v366
  %v368 = vsub.f32 1.0, %v367
  %v369 = vmul.f32 %v366, %v368
  %v370 = vadd.f32 %v366, %v369
  %vm371 = vweird.f32 %v320
  %vm372 = vweird.f32 %v366
  %vm373 = vmor %vm371, %vm372
  %v374 = vsel %vm373, %v366, %v370
  %v375 = vand.u32 2147483647, %v320
  %vm376 = vcmp.eq.f32.partialorder %v375, 8.507059e+37
  %v377 = vand.u32 %v320, 2147483648
  %v378 = vor.u32 1.1754944e-38, %v377
  %v379 = vsel %vm376, %v378, %v374
  %v380 = vmul.f32 1.0, %v379
  %v381 = vmul.f32 %v209, %v335
  %v382 = vmul.f32 %v211, %v350
  %v383 = vmul.f32 %v214, %v365
  %v384 = vmul.f32 %v216, %v380
  %v385 = vmul.f32 %v381, %v296
  %v386 = vmul.f32 %v382, %v298
  %v387 = vmul.f32 %v383, %v301
  %v388 = vmul.f32 %v384, %v303
  %v389 = vpack.c.bf16 %v385, %v385
  %v390 = vpack.c.bf16 %v386, %v386
  %v391 = vpack.c.bf16 %v387, %v387
  %v392 = vpack.c.bf16 %v388, %v388
  %393 = vst [vmem:[%s7] sm:$0xf] %v389
  %394 = vst [vmem:[%s7 + $0x4] sm:$0xf] %v390
  %395 = vst [vmem:[%s7 + $0x8] sm:$0xf] %v391
  %396 = vst [vmem:[%s7 + $0xc] sm:$0xf] %v392
  // Predicated region
  $region30: #{_lambda_.36} parent=0 // pred_check
    _
  $region31: #{_lambda_.36} parent=0 // pred_check_branch
    %398 = sbr.rel (0) target = $region33
  $region32: #{_lambda_.36} parent=0 // pred_region
    _
  $region33: #{_lambda_.36} parent=0 // pred_fallthru
    _
  // Predicated region
  $region34: #{_lambda_.36} parent=0 // pred_check
    _
  $region35: #{_lambda_.36} parent=0 // pred_check_branch
    %400 = sbr.rel (0) target = $region37
  $region36: #{_lambda_.36} parent=0 // pred_region
    _
  $region37: #{_lambda_.36} parent=0 // pred_fallthru
    _

// kernel: _lambda_.37
$region0: #{_lambda_.37}
  #allocation0 [shape = 'u32[]', space=smem, size = 0x4, offset = 0x4, fixed_abs, tag = 'smem constant byte address 0x4 - core index']
  #allocation1 [shape = 'u32[72,128]{1,0:T(1,128)}', space=vmem, size = 0x9000, scoped, tag = 'internal scratch']
  #allocation2 [shape = 'f32[32,128]{1,0:T(8,128)}', space=vmem, size = 0x4000, scoped, tag = 'scratch operand']
  %s0 = inlined_call_operand.vmem [shape: bf16[32,128], index: 0, kind: input, shape index: {}]
  %s1 = inlined_call_operand.hbm [shape: bf16[8,128,128], index: 1, kind: input, shape index: {}]
  %s2 = inlined_call_operand.hbm [shape: bf16[8,128,128], index: 2, kind: input, shape index: {}]
  %s3 = inlined_call_operand.hbm [shape: bf16[8,128,128], index: 3, kind: input, shape index: {}]
  %s4 = inlined_call_operand.vmem [shape: f32[8,32,1], index: 4, kind: input, shape index: {}]
  %s5 = inlined_call_operand.vmem [shape: bf16[128,128], index: 5, kind: input, shape index: {}]
  %s6 = inlined_call_operand.vmem [shape: bf16[128,128], index: 6, kind: input, shape index: {}]
  %s7 = inlined_call_operand.vmem [shape: bf16[128,128], index: 7, kind: input, shape index: {}]
  %s8 = inlined_call_operand.vmem [shape: bf16[32,128], index: 8, kind: output, shape index: {}]
  %s9 = sld [smem:[#allocation0]]
  $region85: #{_lambda_.37} parent=0
    _
  %s11 = ssub.s32 1, %s9
  %s12 = scalar_select 0, %s11, %s9
  $region1: #{_lambda_.37} parent=0
    #allocation3 [shape = 'u8[65536]{0}', space=vmem, size = 0x10000, scoped, tag = 'input window, operand 1']
    #allocation4 [shape = 's32[2]{0}', space=sflag, size = 0x8, scoped, tag = 'scoped memory for _lambda_.37']
    #allocation5 [shape = 'u8[65536]{0}', space=vmem, size = 0x10000, scoped, tag = 'input window, operand 2']
    #allocation6 [shape = 's32[2]{0}', space=sflag, size = 0x8, scoped, tag = 'scoped memory for _lambda_.37']
    #allocation7 [shape = 'u8[65536]{0}', space=vmem, size = 0x10000, scoped, tag = 'input window, operand 3']
    %13 = vsyncpa [#allocation4], 0
    %s14 = scalar_lea.sflag [#allocation4], 1
    %15 = vsyncpa %s14, 0
    %16 = vsyncpa [#allocation6], 0
    %s17 = scalar_lea.sflag [#allocation6], 1
    %18 = vsyncpa %s17, 0
    loop: start=0, step=1, limit=10
    $region2: #{_lambda_.37} parent=1 // loop_pre_header
      _
    $region3: #{_lambda_.37} parent=1 // loop_header
      %s20 = sphi 0, %s24
      %p21 = scmp.ge.s32.totalorder %s20, 10
      %s27 = sphi 0, %s39
      %s28 = sphi 0, %s35
      %s29 = sphi 0, %s27
      %s30 = sphi 0, %s28
      %s31 = sphi 0, %s29
      %s32 = sphi 0, %s30
      %s42 = sphi 0, %s44
      %s45 = sphi 0, %s42
      %s46 = sphi 0, %s45
      %s62 = sphi 0, %s46
      %s68 = sphi 0, %s70
      %s71 = sphi 0, %s68
      %s72 = sphi 0, %s71
      %s88 = sphi 0, %s72
      %s94 = sphi 0, %s96
      %s97 = sphi 0, %s94
      %s98 = sphi 0, %s97
      %s114 = sphi 0, %s98
      %s120 = sphi 0, %s122
      %s123 = sphi 0, %s120
      %s124 = sphi 0, %s123
      %s140 = sphi 0, %s124
      %s148 = sphi 0, %s150
      %s151 = sphi 0, %s148
      %s152 = sphi 0, %s151
      %s168 = sphi 0, %s152
      %s172 = sphi 0, %s172
      %s174 = sphi 0, %s172
      %s175 = sphi 0, %s174
      %s189 = sphi 0, %s175
      %s193 = sphi 0, %s193
      %s195 = sphi 0, %s193
      %s196 = sphi 0, %s195
      %s210 = sphi 0, %s196
      %s214 = sphi 0, %s214
      %s216 = sphi 0, %s214
      %s217 = sphi 0, %s216
      %s231 = sphi 0, %s217
      %s237 = sphi 0, %s239
      %s240 = sphi 0, %s237
      %s241 = sphi 0, %s240
      %s257 = sphi 0, %s241
    $region4: #{_lambda_.37} parent=1 // loop_header_branch
      %23 = sbr.rel (%p21) target = $region8
    $region5: #{_lambda_.37} parent=1 // loop_body
      %s25 = ssub.s32 %s20, 1
      %s26 = ssub.s32 %s20, 2
      %s33 = sadd.s32 1, %s28
      %p34 = scmp.ge.s32.totalorder %s33, 8
      %s35 = scalar_select %p34, 0, %s33
      %s36 = sadd.s32 1, %s27
      %s37 = scalar_select %p34, %s36, %s27
      %p38 = scmp.ge.s32.totalorder %s37, 1
      %s39 = scalar_select %p38, 0, %s37
      %s40 = ssub.s32 %s27, %s39
      %p41 = scmp.eq.s32.totalorder %s40, 0
      %s43 = sadd.s32 %s42, 1
      %s44 = scalar_select %p41, %s42, %s43
      %p47 = pneg %p41
      %p48 = scmp.eq.s32.totalorder %s20, 7
      %p49 = por %p47, %p48
      %p50 = scmp.ne.s32.totalorder %s42, %s45
      %p51 = scmp.eq.s32.totalorder %s20, 0
      %p52 = por %p50, %p51
      %p53 = scmp.ne.s32.totalorder %s42, %s45
      %p54 = scmp.eq.s32.totalorder %s25, 7
      %p55 = por %p53, %p54
      %p56 = scmp.ne.s32.totalorder %s45, %s46
      %p57 = scmp.eq.s32.totalorder %s25, 0
      %p58 = por %p56, %p57
      %p59 = scmp.ne.s32.totalorder %s45, %s46
      %p60 = scmp.eq.s32.totalorder %s26, 7
      %p61 = por %p59, %p60
      %p63 = scmp.ne.s32.totalorder %s46, %s62
      %p64 = scmp.eq.s32.totalorder %s26, 0
      %p65 = por %p63, %p64
      %s66 = ssub.s32 %s28, %s35
      %p67 = scmp.eq.s32.totalorder %s66, 0
      %s69 = sadd.s32 %s68, 1
      %s70 = scalar_select %p67, %s68, %s69
      %p73 = pneg %p67
      %p74 = scmp.eq.s32.totalorder %s20, 7
      %p75 = por %p73, %p74
      %p76 = scmp.ne.s32.totalorder %s68, %s71
      %p77 = scmp.eq.s32.totalorder %s20, 0
      %p78 = por %p76, %p77
      %p79 = scmp.ne.s32.totalorder %s68, %s71
      %p80 = scmp.eq.s32.totalorder %s25, 7
      %p81 = por %p79, %p80
      %p82 = scmp.ne.s32.totalorder %s71, %s72
      %p83 = scmp.eq.s32.totalorder %s25, 0
      %p84 = por %p82, %p83
      %p85 = scmp.ne.s32.totalorder %s71, %s72
      %p86 = scmp.eq.s32.totalorder %s26, 7
      %p87 = por %p85, %p86
      %p89 = scmp.ne.s32.totalorder %s72, %s88
      %p90 = scmp.eq.s32.totalorder %s26, 0
      %p91 = por %p89, %p90
      %s92 = ssub.s32 %s28, %s35
      %p93 = scmp.eq.s32.totalorder %s92, 0
      %s95 = sadd.s32 %s94, 1
      %s96 = scalar_select %p93, %s94, %s95
      %p99 = pneg %p93
      %p100 = scmp.eq.s32.totalorder %s20, 7
      %p101 = por %p99, %p100
      %p102 = scmp.ne.s32.totalorder %s94, %s97
      %p103 = scmp.eq.s32.totalorder %s20, 0
      %p104 = por %p102, %p103
      %p105 = scmp.ne.s32.totalorder %s94, %s97
      %p106 = scmp.eq.s32.totalorder %s25, 7
      %p107 = por %p105, %p106
      %p108 = scmp.ne.s32.totalorder %s97, %s98
      %p109 = scmp.eq.s32.totalorder %s25, 0
      %p110 = por %p108, %p109
      %p111 = scmp.ne.s32.totalorder %s97, %s98
      %p112 = scmp.eq.s32.totalorder %s26, 7
      %p113 = por %p111, %p112
      %p115 = scmp.ne.s32.totalorder %s98, %s114
      %p116 = scmp.eq.s32.totalorder %s26, 0
      %p117 = por %p115, %p116
      %s118 = ssub.s32 %s28, %s35
      %p119 = scmp.eq.s32.totalorder %s118, 0
      %s121 = sadd.s32 %s120, 1
      %s122 = scalar_select %p119, %s120, %s121
      %p125 = pneg %p119
      %p126 = scmp.eq.s32.totalorder %s20, 7
      %p127 = por %p125, %p126
      %p128 = scmp.ne.s32.totalorder %s120, %s123
      %p129 = scmp.eq.s32.totalorder %s20, 0
      %p130 = por %p128, %p129
      %p131 = scmp.ne.s32.totalorder %s120, %s123
      %p132 = scmp.eq.s32.totalorder %s25, 7
      %p133 = por %p131, %p132
      %p134 = scmp.ne.s32.totalorder %s123, %s124
      %p135 = scmp.eq.s32.totalorder %s25, 0
      %p136 = por %p134, %p135
      %p137 = scmp.ne.s32.totalorder %s123, %s124
      %p138 = scmp.eq.s32.totalorder %s26, 7
      %p139 = por %p137, %p138
      %p141 = scmp.ne.s32.totalorder %s124, %s140
      %p142 = scmp.eq.s32.totalorder %s26, 0
      %p143 = por %p141, %p142
      %s144 = ssub.s32 %s28, %s35
      %s145 = ssub.s32 %s27, %s39
      %s146 = sor.u32 %s144, %s145
      %p147 = scmp.eq.s32.totalorder %s146, 0
      %s149 = sadd.s32 %s148, 1
      %s150 = scalar_select %p147, %s148, %s149
      %p153 = pneg %p147
      %p154 = scmp.eq.s32.totalorder %s20, 7
      %p155 = por %p153, %p154
      %p156 = scmp.ne.s32.totalorder %s148, %s151
      %p157 = scmp.eq.s32.totalorder %s20, 0
      %p158 = por %p156, %p157
      %p159 = scmp.ne.s32.totalorder %s148, %s151
      %p160 = scmp.eq.s32.totalorder %s25, 7
      %p161 = por %p159, %p160
      %p162 = scmp.ne.s32.totalorder %s151, %s152
      %p163 = scmp.eq.s32.totalorder %s25, 0
      %p164 = por %p162, %p163
      %p165 = scmp.ne.s32.totalorder %s151, %s152
      %p166 = scmp.eq.s32.totalorder %s26, 7
      %p167 = por %p165, %p166
      %p169 = scmp.ne.s32.totalorder %s152, %s168
      %p170 = scmp.eq.s32.totalorder %s26, 0
      %p171 = por %p169, %p170
      %s173 = sadd.s32 %s172, 1
      %p176 = scmp.eq.s32.totalorder %s20, 7
      %p177 = scmp.ne.s32.totalorder %s172, %s174
      %p178 = scmp.eq.s32.totalorder %s20, 0
      %p179 = por %p177, %p178
      %p180 = scmp.ne.s32.totalorder %s172, %s174
      %p181 = scmp.eq.s32.totalorder %s25, 7
      %p182 = por %p180, %p181
      %p183 = scmp.ne.s32.totalorder %s174, %s175
      %p184 = scmp.eq.s32.totalorder %s25, 0
      %p185 = por %p183, %p184
      %p186 = scmp.ne.s32.totalorder %s174, %s175
      %p187 = scmp.eq.s32.totalorder %s26, 7
      %p188 = por %p186, %p187
      %p190 = scmp.ne.s32.totalorder %s175, %s189
      %p191 = scmp.eq.s32.totalorder %s26, 0
      %p192 = por %p190, %p191
      %s194 = sadd.s32 %s193, 1
      %p197 = scmp.eq.s32.totalorder %s20, 7
      %p198 = scmp.ne.s32.totalorder %s193, %s195
      %p199 = scmp.eq.s32.totalorder %s20, 0
      %p200 = por %p198, %p199
      %p201 = scmp.ne.s32.totalorder %s193, %s195
      %p202 = scmp.eq.s32.totalorder %s25, 7
      %p203 = por %p201, %p202
      %p204 = scmp.ne.s32.totalorder %s195, %s196
      %p205 = scmp.eq.s32.totalorder %s25, 0
      %p206 = por %p204, %p205
      %p207 = scmp.ne.s32.totalorder %s195, %s196
      %p208 = scmp.eq.s32.totalorder %s26, 7
      %p209 = por %p207, %p208
      %p211 = scmp.ne.s32.totalorder %s196, %s210
      %p212 = scmp.eq.s32.totalorder %s26, 0
      %p213 = por %p211, %p212
      %s215 = sadd.s32 %s214, 1
      %p218 = scmp.eq.s32.totalorder %s20, 7
      %p219 = scmp.ne.s32.totalorder %s214, %s216
      %p220 = scmp.eq.s32.totalorder %s20, 0
      %p221 = por %p219, %p220
      %p222 = scmp.ne.s32.totalorder %s214, %s216
      %p223 = scmp.eq.s32.totalorder %s25, 7
      %p224 = por %p222, %p223
      %p225 = scmp.ne.s32.totalorder %s216, %s217
      %p226 = scmp.eq.s32.totalorder %s25, 0
      %p227 = por %p225, %p226
      %p228 = scmp.ne.s32.totalorder %s216, %s217
      %p229 = scmp.eq.s32.totalorder %s26, 7
      %p230 = por %p228, %p229
      %p232 = scmp.ne.s32.totalorder %s217, %s231
      %p233 = scmp.eq.s32.totalorder %s26, 0
      %p234 = por %p232, %p233
      %s235 = ssub.s32 %s27, %s39
      %p236 = scmp.eq.s32.totalorder %s235, 0
      %s238 = sadd.s32 %s237, 1
      %s239 = scalar_select %p236, %s237, %s238
      %p242 = pneg %p236
      %p243 = scmp.eq.s32.totalorder %s20, 7
      %p244 = por %p242, %p243
      %p245 = scmp.ne.s32.totalorder %s237, %s240
      %p246 = scmp.eq.s32.totalorder %s20, 0
      %p247 = por %p245, %p246
      %p248 = scmp.ne.s32.totalorder %s237, %s240
      %p249 = scmp.eq.s32.totalorder %s25, 7
      %p250 = por %p248, %p249
      %p251 = scmp.ne.s32.totalorder %s240, %s241
      %p252 = scmp.eq.s32.totalorder %s25, 0
      %p253 = por %p251, %p252
      %p254 = scmp.ne.s32.totalorder %s240, %s241
      %p255 = scmp.eq.s32.totalorder %s26, 7
      %p256 = por %p254, %p255
      %p258 = scmp.ne.s32.totalorder %s241, %s257
      %p259 = scmp.eq.s32.totalorder %s26, 0
      %p260 = por %p258, %p259
      %p261 = scmp.le.s32.totalorder 1, %s20
      %p262 = scmp.lt.s32.totalorder %s20, 9
      %p263 = pnand %p261, %p262
      %p264 = pneg %p263
      // Predicated region
      $region9: #{_lambda_.37} parent=5 // pred_check
        _
      $region10: #{_lambda_.37} parent=5 // pred_check_branch
        %266 = sbr.rel (%p263) target = $region12
      $region11: #{_lambda_.37} parent=5 // pred_region
        %s267 = ssub.s32 %s20, 1
        // Predicated region
        $region13: #{_lambda_.37} parent=11 // pred_check
          %p268 = pneg %p58
        $region14: #{_lambda_.37} parent=11 // pred_check_branch
          %270 = sbr.rel (%p268) target = $region16
        $region15: #{_lambda_.37} parent=11 // pred_region
          %s271 = smul.u32 4, %s29
          %p272 = scmp.lt.s32.totalorder %s271, 3
          %s273 = scalar_select %p272, %s271, 3
          %s274 = smul.addr %s273, 4
          %s275 = scalar_lea.vmem %s0, %s274
          %s276 = smul.u32 4, %s29
        $region16: #{_lambda_.37} parent=11 // pred_fallthru
          _
        // Predicated region
        $region17: #{_lambda_.37} parent=11 // pred_check
          %p277 = pneg %p185
        $region18: #{_lambda_.37} parent=11 // pred_check_branch
          %279 = sbr.rel (%p277) target = $region20
        $region19: #{_lambda_.37} parent=11 // pred_region
          _
        $region20: #{_lambda_.37} parent=11 // pred_fallthru
          _
        // Predicated region
        $region21: #{_lambda_.37} parent=11 // pred_check
          %p280 = pneg %p206
        $region22: #{_lambda_.37} parent=11 // pred_check_branch
          %282 = sbr.rel (%p280) target = $region24
        $region23: #{_lambda_.37} parent=11 // pred_region
          _
        $region24: #{_lambda_.37} parent=11 // pred_fallthru
          _
        // Predicated region
        $region25: #{_lambda_.37} parent=11 // pred_check
          %p283 = pneg %p227
        $region26: #{_lambda_.37} parent=11 // pred_check_branch
          %285 = sbr.rel (%p283) target = $region28
        $region27: #{_lambda_.37} parent=11 // pred_region
          _
        $region28: #{_lambda_.37} parent=11 // pred_fallthru
          _
      $region12: #{_lambda_.37} parent=5 // pred_fallthru
        _
      %p286 = scmp.lt.s32.totalorder %s20, 8
      // Predicated region
      $region29: #{_lambda_.37} parent=5 // pred_check
        %p287 = pneg %p286
      $region30: #{_lambda_.37} parent=5 // pred_check_branch
        %289 = sbr.rel (%p287) target = $region32
      $region31: #{_lambda_.37} parent=5 // pred_region
        // Predicated region
        $region33: #{_lambda_.37} parent=31 // pred_check
          %p290 = pneg %p78
        $region34: #{_lambda_.37} parent=31 // pred_check_branch
          %292 = sbr.rel (%p290) target = $region36
        $region35: #{_lambda_.37} parent=31 // pred_region
          %s293 = sand.u32 %s68, 1
          %s294 = scalar_lea.sflag [#allocation4], %s293
          %s295 = sand.u32 %s68, 1
          %s296 = smul.addr %s295, 64
          %s297 = scalar_lea.vmem [#allocation3], %s296
          %299 = vsyncadd %s294, 0
          %s300 = smul.addr %s28, 16
          %s301 = smul.addr %s300, 4
          %s302 = scalar_lea.hbm %s1, %s301
          %s303 = sshll.u32 %s302, 4
          %s304 = int_to_ptr.hbm [resolvable:$true] %s303
          %s305 = sshll.u32 %s297, 4
          %s306 = int_to_ptr.vmem [resolvable:$true] %s305
          %311 = dma.hbm_to_vmem [thread:$0]  %s304, 1024, %s306, %s294, 64, 64, 4
        $region36: #{_lambda_.37} parent=31 // pred_fallthru
          _
        // Predicated region
        $region37: #{_lambda_.37} parent=31 // pred_check
          %p312 = pneg %p104
        $region38: #{_lambda_.37} parent=31 // pred_check_branch
          %314 = sbr.rel (%p312) target = $region40
        $region39: #{_lambda_.37} parent=31 // pred_region
          %s315 = sand.u32 %s20, 1
          %s316 = scalar_lea.sflag [#allocation6], %s315
          %s317 = sand.u32 %s94, 1
          %s318 = smul.addr %s317, 64
          %s319 = scalar_lea.vmem [#allocation5], %s318
          %321 = vsyncadd %s316, 0
          %s322 = smul.addr %s28, 16
          %s323 = smul.addr %s322, 4
          %s324 = scalar_lea.hbm %s2, %s323
          %s325 = sshll.u32 %s324, 4
          %s326 = int_to_ptr.hbm [resolvable:$true] %s325
          %s327 = sshll.u32 %s319, 4
          %s328 = int_to_ptr.vmem [resolvable:$true] %s327
          %333 = dma.hbm_to_vmem [thread:$0]  %s326, 1024, %s328, %s316, 64, 64, 4
        $region40: #{_lambda_.37} parent=31 // pred_fallthru
          _
        // Predicated region
        $region41: #{_lambda_.37} parent=31 // pred_check
          %p334 = pneg %p130
        $region42: #{_lambda_.37} parent=31 // pred_check_branch
          %336 = sbr.rel (%p334) target = $region44
        $region43: #{_lambda_.37} parent=31 // pred_region
          %s337 = sand.u32 %s20, 1
          %s338 = scalar_lea.sflag [#allocation6], %s337
          %s339 = sand.u32 %s120, 1
          %s340 = smul.addr %s339, 64
          %s341 = scalar_lea.vmem [#allocation7], %s340
          %343 = vsyncadd %s338, 0
          %s344 = smul.addr %s28, 16
          %s345 = smul.addr %s344, 4
          %s346 = scalar_lea.hbm %s3, %s345
          %s347 = sshll.u32 %s346, 4
          %s348 = int_to_ptr.hbm [resolvable:$true] %s347
          %s349 = sshll.u32 %s341, 4
          %s350 = int_to_ptr.vmem [resolvable:$true] %s349
          %355 = dma.hbm_to_vmem [thread:$0]  %s348, 1024, %s350, %s338, 64, 64, 4
        $region44: #{_lambda_.37} parent=31 // pred_fallthru
          _
        // Predicated region
        $region45: #{_lambda_.37} parent=31 // pred_check
          %p356 = pneg %p158
        $region46: #{_lambda_.37} parent=31 // pred_check_branch
          %358 = sbr.rel (%p356) target = $region48
        $region47: #{_lambda_.37} parent=31 // pred_region
          %s359 = smul.u32 4, %s27
          %p360 = scmp.lt.s32.totalorder %s28, 7
          %s361 = scalar_select %p360, %s28, 7
          %p362 = scmp.lt.s32.totalorder %s359, 3
          %s363 = scalar_select %p362, %s359, 3
          %s364 = smul.addr %s361, 4
          %s365 = sadd.s32 %s363, %s364
          %s366 = smul.addr %s365, 8
          %s367 = scalar_lea.vmem %s4, %s366
          %s368 = smul.u32 4, %s27
        $region48: #{_lambda_.37} parent=31 // pred_fallthru
          _
      $region32: #{_lambda_.37} parent=5 // pred_fallthru
        _
      %p369 = scmp.le.s32.totalorder 1, %s20
      %p370 = scmp.lt.s32.totalorder %s20, 9
      %p371 = pnand %p369, %p370
      %p372 = pneg %p371
      // Predicated region
      $region49: #{_lambda_.37} parent=5 // pred_check
        _
      $region50: #{_lambda_.37} parent=5 // pred_check_branch
        %374 = sbr.rel (%p371) target = $region52
      $region51: #{_lambda_.37} parent=5 // pred_region
        %s375 = ssub.s32 %s20, 1
        %s376 = sand.u32 %s71, 1
        %s377 = scalar_lea.sflag [#allocation4], %s376
        %s378 = sand.u32 %s71, 1
        %s379 = smul.addr %s378, 64
        %s380 = scalar_lea.vmem [#allocation3], %s379
        // Predicated region
        $region53: #{_lambda_.37} parent=51 // pred_check
          %p381 = pneg %p84
        $region54: #{_lambda_.37} parent=51 // pred_check_branch
          %383 = sbr.rel (%p381) target = $region56
        $region55: #{_lambda_.37} parent=51 // pred_region
          %385 = dma.done %s377, 1024
        $region56: #{_lambda_.37} parent=51 // pred_fallthru
          _
        %s386 = sand.u32 %s25, 1
        %s387 = scalar_lea.sflag [#allocation6], %s386
        %s388 = sand.u32 %s97, 1
        %s389 = smul.addr %s388, 64
        %s390 = scalar_lea.vmem [#allocation5], %s389
        // Predicated region
        $region57: #{_lambda_.37} parent=51 // pred_check
          %p391 = pneg %p110
        $region58: #{_lambda_.37} parent=51 // pred_check_branch
          %393 = sbr.rel (%p391) target = $region60
        $region59: #{_lambda_.37} parent=51 // pred_region
          %395 = dma.done %s387, 1024
        $region60: #{_lambda_.37} parent=51 // pred_fallthru
          _
        %s396 = sand.u32 %s25, 1
        %s397 = scalar_lea.sflag [#allocation6], %s396
        %s398 = sand.u32 %s123, 1
        %s399 = smul.addr %s398, 64
        %s400 = scalar_lea.vmem [#allocation7], %s399
        // Predicated region
        $region61: #{_lambda_.37} parent=51 // pred_check
          %p401 = pneg %p136
        $region62: #{_lambda_.37} parent=51 // pred_check_branch
          %403 = sbr.rel (%p401) target = $region64
        $region63: #{_lambda_.37} parent=51 // pred_region
          %405 = dma.done %s397, 1024
        $region64: #{_lambda_.37} parent=51 // pred_fallthru
          _
        %s406 = smul.u32 4, %s29
        %p407 = scmp.lt.s32.totalorder %s406, 3
        %s408 = scalar_select %p407, %s406, 3
        %s409 = smul.addr %s408, 4
        %s410 = scalar_lea.vmem %s0, %s409
        %p411 = pneg %p58
        %p412 = pneg %p55
        %s413 = sand.u32 %s71, 1
        %s414 = scalar_lea.sflag [#allocation4], %s413
        %s415 = sand.u32 %s71, 1
        %s416 = smul.addr %s415, 64
        %s417 = scalar_lea.vmem [#allocation3], %s416
        %p418 = pneg %p84
        %p419 = pneg %p81
        %s420 = sand.u32 %s25, 1
        %s421 = scalar_lea.sflag [#allocation6], %s420
        %s422 = sand.u32 %s97, 1
        %s423 = smul.addr %s422, 64
        %s424 = scalar_lea.vmem [#allocation5], %s423
        %p425 = pneg %p110
        %p426 = pneg %p107
        %s427 = sand.u32 %s25, 1
        %s428 = scalar_lea.sflag [#allocation6], %s427
        %s429 = sand.u32 %s123, 1
        %s430 = smul.addr %s429, 64
        %s431 = scalar_lea.vmem [#allocation7], %s430
        %p432 = pneg %p136
        %p433 = pneg %p133
        %s434 = smul.u32 4, %s29
        %p435 = scmp.lt.s32.totalorder %s30, 7
        %s436 = scalar_select %p435, %s30, 7
        %p437 = scmp.lt.s32.totalorder %s434, 3
        %s438 = scalar_select %p437, %s434, 3
        %s439 = smul.addr %s436, 4
        %s440 = sadd.s32 %s438, %s439
        %s441 = smul.addr %s440, 8
        %s442 = scalar_lea.vmem %s4, %s441
        %p443 = pneg %p164
        %p444 = pneg %p161
        %p445 = pneg %p185
        %p446 = pneg %p182
        %p447 = pneg %p206
        %p448 = pneg %p203
        %p449 = pneg %p227
        %p450 = pneg %p224
        %p451 = pneg %p253
        %p452 = pneg %p250
        %s453 = smul.u32 4, %s29
        %p454 = scmp.lt.s32.totalorder %s453, 3
        %s455 = scalar_select %p454, %s453, 3
        %s456 = smul.addr %s455, 4
        %s457 = scalar_lea.vmem %s8, %s456
        %s458 = smul.u32 4, %s29
        %p459 = scmp.lt.s32.totalorder %s458, 3
        %s460 = scalar_select %p459, %s458, 3
        %s461 = smul.addr %s460, 4
        %s462 = scalar_lea.vmem %s0, %s461
        %s463 = smul.u32 4, %s29
        %s464 = smul.u32 4, %s29
        %p465 = scmp.lt.s32.totalorder %s30, 7
        %s466 = scalar_select %p465, %s30, 7
        %p467 = scmp.lt.s32.totalorder %s464, 3
        %s468 = scalar_select %p467, %s464, 3
        %s469 = smul.addr %s466, 4
        %s470 = sadd.s32 %s468, %s469
        %s471 = smul.addr %s470, 8
        %s472 = scalar_lea.vmem %s4, %s471
        %s473 = smul.u32 4, %s29
        %s474 = smul.u32 4, %s29
        %p475 = scmp.lt.s32.totalorder %s474, 3
        %s476 = scalar_select %p475, %s474, 3
        %s477 = smul.addr %s476, 4
        %s478 = scalar_lea.vmem %s8, %s477
        %s479 = smul.u32 4, %s29
        %v480 = vld [vmem:[%s462] sm:$0xf]
        %v481 = vld [vmem:[%s462 + $0x4] sm:$0xf]
        %v482 = vld [vmem:[%s462 + $0x8] sm:$0xf]
        %v483 = vld [vmem:[%s462 + $0xc] sm:$0xf]
        %p484 = scmp.eq.s32.totalorder %s30, 0
        // Predicated region
        $region65: #{_lambda_.37} parent=51 // pred_check
          %p485 = pneg %p484
        $region66: #{_lambda_.37} parent=51 // pred_check_branch
          %487 = sbr.rel (%p485) target = $region68
        $region67: #{_lambda_.37} parent=51 // pred_region
          %v488 = vld [vmem:[%s5] sm:$0xf]
          %v489 = vld [vmem:[%s5 + $0x4] sm:$0xf]
          %v490 = vld [vmem:[%s5 + $0x8] sm:$0xf]
          %v491 = vld [vmem:[%s5 + $0xc] sm:$0xf]
          %v492 = vld [vmem:[%s5 + $0x10] sm:$0xf]
          %v493 = vld [vmem:[%s5 + $0x14] sm:$0xf]
          %v494 = vld [vmem:[%s5 + $0x18] sm:$0xf]
          %v495 = vld [vmem:[%s5 + $0x1c] sm:$0xf]
          %v496 = vld [vmem:[%s5 + $0x20] sm:$0xf]
          %v497 = vld [vmem:[%s5 + $0x24] sm:$0xf]
          %v498 = vld [vmem:[%s5 + $0x28] sm:$0xf]
          %v499 = vld [vmem:[%s5 + $0x2c] sm:$0xf]
          %v500 = vld [vmem:[%s5 + $0x30] sm:$0xf]
          %v501 = vld [vmem:[%s5 + $0x34] sm:$0xf]
          %v502 = vld [vmem:[%s5 + $0x38] sm:$0xf]
          %v503 = vld [vmem:[%s5 + $0x3c] sm:$0xf]
          %v508 = vunpack.c.l.b16 %v480
          %v509 = vunpack.c.l.b16 %v481
          %v510 = vunpack.c.l.b16 %v482
          %v511 = vunpack.c.l.b16 %v483
          %v512 = vpack.c.b16 %v509, %v508
          %v513 = vpack.c.b16 %v511, %v510
          %v532 = vunpack.c.l.b16 %v488
          %v533 = vunpack.c.l.b16 %v489
          %v534 = vunpack.c.l.b16 %v490
          %v535 = vunpack.c.l.b16 %v491
          %v536 = vunpack.c.l.b16 %v492
          %v537 = vunpack.c.l.b16 %v493
          %v538 = vunpack.c.l.b16 %v494
          %v539 = vunpack.c.l.b16 %v495
          %v540 = vunpack.c.l.b16 %v496
          %v541 = vunpack.c.l.b16 %v497
          %v542 = vunpack.c.l.b16 %v498
          %v543 = vunpack.c.l.b16 %v499
          %v544 = vunpack.c.l.b16 %v500
          %v545 = vunpack.c.l.b16 %v501
          %v546 = vunpack.c.l.b16 %v502
          %v547 = vunpack.c.l.b16 %v503
          %v548 = vpack.c.b16 %v533, %v532
          %v549 = vpack.c.b16 %v535, %v534
          %v550 = vpack.c.b16 %v537, %v536
          %v551 = vpack.c.b16 %v539, %v538
          %v552 = vpack.c.b16 %v541, %v540
          %v553 = vpack.c.b16 %v543, %v542
          %v554 = vpack.c.b16 %v545, %v544
          %v555 = vpack.c.b16 %v547, %v546
          %564 = vmatpush.bf16.msra.mxu0 %v555
          %565 = vmatpush.bf16.msra.mxu0 %v554
          %566 = vmatpush.bf16.msra.mxu0 %v553
          %567 = vmatpush.bf16.msra.mxu0 %v552
          %568 = vmatpush.bf16.msra.mxu0 %v551
          %569 = vmatpush.bf16.msra.mxu0 %v550
          %570 = vmatpush.bf16.msra.mxu0 %v549
          %571 = vmatpush.bf16.msra.mxu0 %v548
          %572 = vmatmul.bf16.gmra.mxu0 %v512
          %v573 = vpop.f32.mrf.mxu0
          %v574 = vadd.f32 0.0, %v573
          %v575 = vpop.f32.mrf.mxu0
          %v576 = vadd.f32 0.0, %v575
          %577 = vmatmul.bf16.gmra.mxu0 %v513
          %v578 = vpop.f32.mrf.mxu0
          %v579 = vadd.f32 0.0, %v578
          %v580 = vpop.f32.mrf.mxu0
          %v581 = vadd.f32 0.0, %v580
          %582 = vdwg.mxu0
          %v583 = vld [vmem:[%s6] sm:$0xf]
          %v584 = vld [vmem:[%s6 + $0x4] sm:$0xf]
          %v585 = vld [vmem:[%s6 + $0x8] sm:$0xf]
          %v586 = vld [vmem:[%s6 + $0xc] sm:$0xf]
          %v587 = vld [vmem:[%s6 + $0x10] sm:$0xf]
          %v588 = vld [vmem:[%s6 + $0x14] sm:$0xf]
          %v589 = vld [vmem:[%s6 + $0x18] sm:$0xf]
          %v590 = vld [vmem:[%s6 + $0x1c] sm:$0xf]
          %v591 = vld [vmem:[%s6 + $0x20] sm:$0xf]
          %v592 = vld [vmem:[%s6 + $0x24] sm:$0xf]
          %v593 = vld [vmem:[%s6 + $0x28] sm:$0xf]
          %v594 = vld [vmem:[%s6 + $0x2c] sm:$0xf]
          %v595 = vld [vmem:[%s6 + $0x30] sm:$0xf]
          %v596 = vld [vmem:[%s6 + $0x34] sm:$0xf]
          %v597 = vld [vmem:[%s6 + $0x38] sm:$0xf]
          %v598 = vld [vmem:[%s6 + $0x3c] sm:$0xf]
          %v615 = vunpack.c.l.b16 %v583
          %v616 = vunpack.c.l.b16 %v584
          %v617 = vunpack.c.l.b16 %v585
          %v618 = vunpack.c.l.b16 %v586
          %v619 = vunpack.c.l.b16 %v587
          %v620 = vunpack.c.l.b16 %v588
          %v621 = vunpack.c.l.b16 %v589
          %v622 = vunpack.c.l.b16 %v590
          %v623 = vunpack.c.l.b16 %v591
          %v624 = vunpack.c.l.b16 %v592
          %v625 = vunpack.c.l.b16 %v593
          %v626 = vunpack.c.l.b16 %v594
          %v627 = vunpack.c.l.b16 %v595
          %v628 = vunpack.c.l.b16 %v596
          %v629 = vunpack.c.l.b16 %v597
          %v630 = vunpack.c.l.b16 %v598
          %v631 = vpack.c.b16 %v616, %v615
          %v632 = vpack.c.b16 %v618, %v617
          %v633 = vpack.c.b16 %v620, %v619
          %v634 = vpack.c.b16 %v622, %v621
          %v635 = vpack.c.b16 %v624, %v623
          %v636 = vpack.c.b16 %v626, %v625
          %v637 = vpack.c.b16 %v628, %v627
          %v638 = vpack.c.b16 %v630, %v629
          %647 = vmatpush.bf16.msra.mxu0 %v638
          %648 = vmatpush.bf16.msra.mxu0 %v637
          %649 = vmatpush.bf16.msra.mxu0 %v636
          %650 = vmatpush.bf16.msra.mxu0 %v635
          %651 = vmatpush.bf16.msra.mxu0 %v634
          %652 = vmatpush.bf16.msra.mxu0 %v633
          %653 = vmatpush.bf16.msra.mxu0 %v632
          %654 = vmatpush.bf16.msra.mxu0 %v631
          %655 = vmatmul.bf16.gmra.mxu0 %v512
          %v656 = vpop.f32.mrf.mxu0
          %v657 = vadd.f32 0.0, %v656
          %v658 = vpop.f32.mrf.mxu0
          %v659 = vadd.f32 0.0, %v658
          %660 = vmatmul.bf16.gmra.mxu0 %v513
          %v661 = vpop.f32.mrf.mxu0
          %v662 = vadd.f32 0.0, %v661
          %v663 = vpop.f32.mrf.mxu0
          %v664 = vadd.f32 0.0, %v663
          %665 = vdwg.mxu0
          %v666 = vxor.u32 %v574, 2147483648
          %v667 = vxor.u32 %v576, 2147483648
          %v668 = vxor.u32 %v579, 2147483648
          %v669 = vxor.u32 %v581, 2147483648
          %v670 = vmul.f32 %v666, 1.442695
          %v671 = vpow.pop %v670
          %v672 = vmul.f32 %v667, 1.442695
          %v673 = vpow.pop %v672
          %v674 = vmul.f32 %v668, 1.442695
          %v675 = vpow.pop %v674
          %v676 = vmul.f32 %v669, 1.442695
          %v677 = vpow.pop %v676
          %v678 = vadd.f32 %v671, 1.0
          %v679 = vadd.f32 %v673, 1.0
          %v680 = vadd.f32 %v675, 1.0
          %v681 = vadd.f32 %v677, 1.0
          %v682 = vrcp.pop %v678
          %v683 = vmul.f32 %v678, %v682
          %v684 = vsub.f32 1.0, %v683
          %v685 = vmul.f32 %v682, %v684
          %v686 = vadd.f32 %v682, %v685
          %vm687 = vweird.f32 %v678
          %vm688 = vweird.f32 %v682
          %vm689 = vmor %vm687, %vm688
          %v690 = vsel %vm689, %v682, %v686
          %v691 = vand.u32 2147483647, %v678
          %vm692 = vcmp.eq.f32.partialorder %v691, 8.507059e+37
          %v693 = vand.u32 %v678, 2147483648
          %v694 = vor.u32 1.1754944e-38, %v693
          %v695 = vsel %vm692, %v694, %v690
          %v696 = vmul.f32 1.0, %v695
          %v697 = vrcp.pop %v679
          %v698 = vmul.f32 %v679, %v697
          %v699 = vsub.f32 1.0, %v698
          %v700 = vmul.f32 %v697, %v699
          %v701 = vadd.f32 %v697, %v700
          %vm702 = vweird.f32 %v679
          %vm703 = vweird.f32 %v697
          %vm704 = vmor %vm702, %vm703
          %v705 = vsel %vm704, %v697, %v701
          %v706 = vand.u32 2147483647, %v679
          %vm707 = vcmp.eq.f32.partialorder %v706, 8.507059e+37
          %v708 = vand.u32 %v679, 2147483648
          %v709 = vor.u32 1.1754944e-38, %v708
          %v710 = vsel %vm707, %v709, %v705
          %v711 = vmul.f32 1.0, %v710
          %v712 = vrcp.pop %v680
          %v713 = vmul.f32 %v680, %v712
          %v714 = vsub.f32 1.0, %v713
          %v715 = vmul.f32 %v712, %v714
          %v716 = vadd.f32 %v712, %v715
          %vm717 = vweird.f32 %v680
          %vm718 = vweird.f32 %v712
          %vm719 = vmor %vm717, %vm718
          %v720 = vsel %vm719, %v712, %v716
          %v721 = vand.u32 2147483647, %v680
          %vm722 = vcmp.eq.f32.partialorder %v721, 8.507059e+37
          %v723 = vand.u32 %v680, 2147483648
          %v724 = vor.u32 1.1754944e-38, %v723
          %v725 = vsel %vm722, %v724, %v720
          %v726 = vmul.f32 1.0, %v725
          %v727 = vrcp.pop %v681
          %v728 = vmul.f32 %v681, %v727
          %v729 = vsub.f32 1.0, %v728
          %v730 = vmul.f32 %v727, %v729
          %v731 = vadd.f32 %v727, %v730
          %vm732 = vweird.f32 %v681
          %vm733 = vweird.f32 %v727
          %vm734 = vmor %vm732, %vm733
          %v735 = vsel %vm734, %v727, %v731
          %v736 = vand.u32 2147483647, %v681
          %vm737 = vcmp.eq.f32.partialorder %v736, 8.507059e+37
          %v738 = vand.u32 %v681, 2147483648
          %v739 = vor.u32 1.1754944e-38, %v738
          %v740 = vsel %vm737, %v739, %v735
          %v741 = vmul.f32 1.0, %v740
          %v742 = vmul.f32 %v574, %v696
          %v743 = vmul.f32 %v576, %v711
          %v744 = vmul.f32 %v579, %v726
          %v745 = vmul.f32 %v581, %v741
          %v746 = vmul.f32 %v742, %v657
          %v747 = vmul.f32 %v743, %v659
          %v748 = vmul.f32 %v744, %v662
          %v749 = vmul.f32 %v745, %v664
          %v750 = vpack.c.bf16 %v747, %v746
          %v751 = vpack.c.bf16 %v749, %v748
          %v752 = vld [vmem:[%s7] sm:$0xf]
          %v753 = vld [vmem:[%s7 + $0x4] sm:$0xf]
          %v754 = vld [vmem:[%s7 + $0x8] sm:$0xf]
          %v755 = vld [vmem:[%s7 + $0xc] sm:$0xf]
          %v756 = vld [vmem:[%s7 + $0x10] sm:$0xf]
          %v757 = vld [vmem:[%s7 + $0x14] sm:$0xf]
          %v758 = vld [vmem:[%s7 + $0x18] sm:$0xf]
          %v759 = vld [vmem:[%s7 + $0x1c] sm:$0xf]
          %v760 = vld [vmem:[%s7 + $0x20] sm:$0xf]
          %v761 = vld [vmem:[%s7 + $0x24] sm:$0xf]
          %v762 = vld [vmem:[%s7 + $0x28] sm:$0xf]
          %v763 = vld [vmem:[%s7 + $0x2c] sm:$0xf]
          %v764 = vld [vmem:[%s7 + $0x30] sm:$0xf]
          %v765 = vld [vmem:[%s7 + $0x34] sm:$0xf]
          %v766 = vld [vmem:[%s7 + $0x38] sm:$0xf]
          %v767 = vld [vmem:[%s7 + $0x3c] sm:$0xf]
          %v784 = vunpack.c.l.b16 %v752
          %v785 = vunpack.c.l.b16 %v753
          %v786 = vunpack.c.l.b16 %v754
          %v787 = vunpack.c.l.b16 %v755
          %v788 = vunpack.c.l.b16 %v756
          %v789 = vunpack.c.l.b16 %v757
          %v790 = vunpack.c.l.b16 %v758
          %v791 = vunpack.c.l.b16 %v759
          %v792 = vunpack.c.l.b16 %v760
          %v793 = vunpack.c.l.b16 %v761
          %v794 = vunpack.c.l.b16 %v762
          %v795 = vunpack.c.l.b16 %v763
          %v796 = vunpack.c.l.b16 %v764
          %v797 = vunpack.c.l.b16 %v765
          %v798 = vunpack.c.l.b16 %v766
          %v799 = vunpack.c.l.b16 %v767
          %v800 = vpack.c.b16 %v785, %v784
          %v801 = vpack.c.b16 %v787, %v786
          %v802 = vpack.c.b16 %v789, %v788
          %v803 = vpack.c.b16 %v791, %v790
          %v804 = vpack.c.b16 %v793, %v792
          %v805 = vpack.c.b16 %v795, %v794
          %v806 = vpack.c.b16 %v797, %v796
          %v807 = vpack.c.b16 %v799, %v798
          %816 = vmatpush.bf16.msra.mxu0 %v807
          %817 = vmatpush.bf16.msra.mxu0 %v806
          %818 = vmatpush.bf16.msra.mxu0 %v805
          %819 = vmatpush.bf16.msra.mxu0 %v804
          %820 = vmatpush.bf16.msra.mxu0 %v803
          %821 = vmatpush.bf16.msra.mxu0 %v802
          %822 = vmatpush.bf16.msra.mxu0 %v801
          %823 = vmatpush.bf16.msra.mxu0 %v800
          %824 = vmatmul.bf16.gmra.mxu0 %v750
          %v825 = vpop.f32.mrf.mxu0
          %v826 = vadd.f32 0.0, %v825
          %v827 = vpop.f32.mrf.mxu0
          %v828 = vadd.f32 0.0, %v827
          %829 = vmatmul.bf16.gmra.mxu0 %v751
          %v830 = vpop.f32.mrf.mxu0
          %v831 = vadd.f32 0.0, %v830
          %v832 = vpop.f32.mrf.mxu0
          %v833 = vadd.f32 0.0, %v832
          %834 = vdwg.mxu0
          %835 = vst [vmem:[#allocation2] sm:$0xff] %v826
          %836 = vst [vmem:[#allocation2 + $0x8] sm:$0xff] %v828
          %837 = vst [vmem:[#allocation2 + $0x10] sm:$0xff] %v831
          %838 = vst [vmem:[#allocation2 + $0x18] sm:$0xff] %v833
        $region68: #{_lambda_.37} parent=51 // pred_fallthru
          _
        %v839 = vld [vmem:[%s380] sm:$0xf]
        %v840 = vld [vmem:[%s380 + $0x4] sm:$0xf]
        %v841 = vld [vmem:[%s380 + $0x8] sm:$0xf]
        %v842 = vld [vmem:[%s380 + $0xc] sm:$0xf]
        %v843 = vld [vmem:[%s380 + $0x10] sm:$0xf]
        %v844 = vld [vmem:[%s380 + $0x14] sm:$0xf]
        %v845 = vld [vmem:[%s380 + $0x18] sm:$0xf]
        %v846 = vld [vmem:[%s380 + $0x1c] sm:$0xf]
        %v847 = vld [vmem:[%s380 + $0x20] sm:$0xf]
        %v848 = vld [vmem:[%s380 + $0x24] sm:$0xf]
        %v849 = vld [vmem:[%s380 + $0x28] sm:$0xf]
        %v850 = vld [vmem:[%s380 + $0x2c] sm:$0xf]
        %v851 = vld [vmem:[%s380 + $0x30] sm:$0xf]
        %v852 = vld [vmem:[%s380 + $0x34] sm:$0xf]
        %v853 = vld [vmem:[%s380 + $0x38] sm:$0xf]
        %v854 = vld [vmem:[%s380 + $0x3c] sm:$0xf]
        %v859 = vunpack.c.l.b16 %v480
        %v860 = vunpack.c.l.b16 %v481
        %v861 = vunpack.c.l.b16 %v482
        %v862 = vunpack.c.l.b16 %v483
        %v863 = vpack.c.b16 %v860, %v859
        %v864 = vpack.c.b16 %v862, %v861
        %v883 = vunpack.c.l.b16 %v839
        %v884 = vunpack.c.l.b16 %v840
        %v885 = vunpack.c.l.b16 %v841
        %v886 = vunpack.c.l.b16 %v842
        %v887 = vunpack.c.l.b16 %v843
        %v888 = vunpack.c.l.b16 %v844
        %v889 = vunpack.c.l.b16 %v845
        %v890 = vunpack.c.l.b16 %v846
        %v891 = vunpack.c.l.b16 %v847
        %v892 = vunpack.c.l.b16 %v848
        %v893 = vunpack.c.l.b16 %v849
        %v894 = vunpack.c.l.b16 %v850
        %v895 = vunpack.c.l.b16 %v851
        %v896 = vunpack.c.l.b16 %v852
        %v897 = vunpack.c.l.b16 %v853
        %v898 = vunpack.c.l.b16 %v854
        %v899 = vpack.c.b16 %v884, %v883
        %v900 = vpack.c.b16 %v886, %v885
        %v901 = vpack.c.b16 %v888, %v887
        %v902 = vpack.c.b16 %v890, %v889
        %v903 = vpack.c.b16 %v892, %v891
        %v904 = vpack.c.b16 %v894, %v893
        %v905 = vpack.c.b16 %v896, %v895
        %v906 = vpack.c.b16 %v898, %v897
        %915 = vmatpush.bf16.msra.mxu0 %v906
        %916 = vmatpush.bf16.msra.mxu0 %v905
        %917 = vmatpush.bf16.msra.mxu0 %v904
        %918 = vmatpush.bf16.msra.mxu0 %v903
        %919 = vmatpush.bf16.msra.mxu0 %v902
        %920 = vmatpush.bf16.msra.mxu0 %v901
        %921 = vmatpush.bf16.msra.mxu0 %v900
        %922 = vmatpush.bf16.msra.mxu0 %v899
        %923 = vmatmul.bf16.gmra.mxu0 %v863
        %v924 = vpop.f32.mrf.mxu0
        %v925 = vadd.f32 0.0, %v924
        %v926 = vpop.f32.mrf.mxu0
        %v927 = vadd.f32 0.0, %v926
        %928 = vmatmul.bf16.gmra.mxu0 %v864
        %v929 = vpop.f32.mrf.mxu0
        %v930 = vadd.f32 0.0, %v929
        %v931 = vpop.f32.mrf.mxu0
        %v932 = vadd.f32 0.0, %v931
        %933 = vdwg.mxu0
        %v934 = vld [vmem:[%s390] sm:$0xf]
        %v935 = vld [vmem:[%s390 + $0x4] sm:$0xf]
        %v936 = vld [vmem:[%s390 + $0x8] sm:$0xf]
        %v937 = vld [vmem:[%s390 + $0xc] sm:$0xf]
        %v938 = vld [vmem:[%s390 + $0x10] sm:$0xf]
        %v939 = vld [vmem:[%s390 + $0x14] sm:$0xf]
        %v940 = vld [vmem:[%s390 + $0x18] sm:$0xf]
        %v941 = vld [vmem:[%s390 + $0x1c] sm:$0xf]
        %v942 = vld [vmem:[%s390 + $0x20] sm:$0xf]
        %v943 = vld [vmem:[%s390 + $0x24] sm:$0xf]
        %v944 = vld [vmem:[%s390 + $0x28] sm:$0xf]
        %v945 = vld [vmem:[%s390 + $0x2c] sm:$0xf]
        %v946 = vld [vmem:[%s390 + $0x30] sm:$0xf]
        %v947 = vld [vmem:[%s390 + $0x34] sm:$0xf]
        %v948 = vld [vmem:[%s390 + $0x38] sm:$0xf]
        %v949 = vld [vmem:[%s390 + $0x3c] sm:$0xf]
        %v966 = vunpack.c.l.b16 %v934
        %v967 = vunpack.c.l.b16 %v935
        %v968 = vunpack.c.l.b16 %v936
        %v969 = vunpack.c.l.b16 %v937
        %v970 = vunpack.c.l.b16 %v938
        %v971 = vunpack.c.l.b16 %v939
        %v972 = vunpack.c.l.b16 %v940
        %v973 = vunpack.c.l.b16 %v941
        %v974 = vunpack.c.l.b16 %v942
        %v975 = vunpack.c.l.b16 %v943
        %v976 = vunpack.c.l.b16 %v944
        %v977 = vunpack.c.l.b16 %v945
        %v978 = vunpack.c.l.b16 %v946
        %v979 = vunpack.c.l.b16 %v947
        %v980 = vunpack.c.l.b16 %v948
        %v981 = vunpack.c.l.b16 %v949
        %v982 = vpack.c.b16 %v967, %v966
        %v983 = vpack.c.b16 %v969, %v968
        %v984 = vpack.c.b16 %v971, %v970
        %v985 = vpack.c.b16 %v973, %v972
        %v986 = vpack.c.b16 %v975, %v974
        %v987 = vpack.c.b16 %v977, %v976
        %v988 = vpack.c.b16 %v979, %v978
        %v989 = vpack.c.b16 %v981, %v980
        %998 = vmatpush.bf16.msra.mxu0 %v989
        %999 = vmatpush.bf16.msra.mxu0 %v988
        %1000 = vmatpush.bf16.msra.mxu0 %v987
        %1001 = vmatpush.bf16.msra.mxu0 %v986
        %1002 = vmatpush.bf16.msra.mxu0 %v985
        %1003 = vmatpush.bf16.msra.mxu0 %v984
        %1004 = vmatpush.bf16.msra.mxu0 %v983
        %1005 = vmatpush.bf16.msra.mxu0 %v982
        %1006 = vmatmul.bf16.gmra.mxu0 %v863
        %v1007 = vpop.f32.mrf.mxu0
        %v1008 = vadd.f32 0.0, %v1007
        %v1009 = vpop.f32.mrf.mxu0
        %v1010 = vadd.f32 0.0, %v1009
        %1011 = vmatmul.bf16.gmra.mxu0 %v864
        %v1012 = vpop.f32.mrf.mxu0
        %v1013 = vadd.f32 0.0, %v1012
        %v1014 = vpop.f32.mrf.mxu0
        %v1015 = vadd.f32 0.0, %v1014
        %1016 = vdwg.mxu0
        %v1017 = vxor.u32 %v925, 2147483648
        %v1018 = vxor.u32 %v927, 2147483648
        %v1019 = vxor.u32 %v930, 2147483648
        %v1020 = vxor.u32 %v932, 2147483648
        %v1021 = vmul.f32 %v1017, 1.442695
        %v1022 = vpow.pop %v1021
        %v1023 = vmul.f32 %v1018, 1.442695
        %v1024 = vpow.pop %v1023
        %v1025 = vmul.f32 %v1019, 1.442695
        %v1026 = vpow.pop %v1025
        %v1027 = vmul.f32 %v1020, 1.442695
        %v1028 = vpow.pop %v1027
        %v1029 = vadd.f32 %v1022, 1.0
        %v1030 = vadd.f32 %v1024, 1.0
        %v1031 = vadd.f32 %v1026, 1.0
        %v1032 = vadd.f32 %v1028, 1.0
        %v1033 = vrcp.pop %v1029
        %v1034 = vmul.f32 %v1029, %v1033
        %v1035 = vsub.f32 1.0, %v1034
        %v1036 = vmul.f32 %v1033, %v1035
        %v1037 = vadd.f32 %v1033, %v1036
        %vm1038 = vweird.f32 %v1029
        %vm1039 = vweird.f32 %v1033
        %vm1040 = vmor %vm1038, %vm1039
        %v1041 = vsel %vm1040, %v1033, %v1037
        %v1042 = vand.u32 2147483647, %v1029
        %vm1043 = vcmp.eq.f32.partialorder %v1042, 8.507059e+37
        %v1044 = vand.u32 %v1029, 2147483648
        %v1045 = vor.u32 1.1754944e-38, %v1044
        %v1046 = vsel %vm1043, %v1045, %v1041
        %v1047 = vmul.f32 1.0, %v1046
        %v1048 = vrcp.pop %v1030
        %v1049 = vmul.f32 %v1030, %v1048
        %v1050 = vsub.f32 1.0, %v1049
        %v1051 = vmul.f32 %v1048, %v1050
        %v1052 = vadd.f32 %v1048, %v1051
        %vm1053 = vweird.f32 %v1030
        %vm1054 = vweird.f32 %v1048
        %vm1055 = vmor %vm1053, %vm1054
        %v1056 = vsel %vm1055, %v1048, %v1052
        %v1057 = vand.u32 2147483647, %v1030
        %vm1058 = vcmp.eq.f32.partialorder %v1057, 8.507059e+37
        %v1059 = vand.u32 %v1030, 2147483648
        %v1060 = vor.u32 1.1754944e-38, %v1059
        %v1061 = vsel %vm1058, %v1060, %v1056
        %v1062 = vmul.f32 1.0, %v1061
        %v1063 = vrcp.pop %v1031
        %v1064 = vmul.f32 %v1031, %v1063
        %v1065 = vsub.f32 1.0, %v1064
        %v1066 = vmul.f32 %v1063, %v1065
        %v1067 = vadd.f32 %v1063, %v1066
        %vm1068 = vweird.f32 %v1031
        %vm1069 = vweird.f32 %v1063
        %vm1070 = vmor %vm1068, %vm1069
        %v1071 = vsel %vm1070, %v1063, %v1067
        %v1072 = vand.u32 2147483647, %v1031
        %vm1073 = vcmp.eq.f32.partialorder %v1072, 8.507059e+37
        %v1074 = vand.u32 %v1031, 2147483648
        %v1075 = vor.u32 1.1754944e-38, %v1074
        %v1076 = vsel %vm1073, %v1075, %v1071
        %v1077 = vmul.f32 1.0, %v1076
        %v1078 = vrcp.pop %v1032
        %v1079 = vmul.f32 %v1032, %v1078
        %v1080 = vsub.f32 1.0, %v1079
        %v1081 = vmul.f32 %v1078, %v1080
        %v1082 = vadd.f32 %v1078, %v1081
        %vm1083 = vweird.f32 %v1032
        %vm1084 = vweird.f32 %v1078
        %vm1085 = vmor %vm1083, %vm1084
        %v1086 = vsel %vm1085, %v1078, %v1082
        %v1087 = vand.u32 2147483647, %v1032
        %vm1088 = vcmp.eq.f32.partialorder %v1087, 8.507059e+37
        %v1089 = vand.u32 %v1032, 2147483648
        %v1090 = vor.u32 1.1754944e-38, %v1089
        %v1091 = vsel %vm1088, %v1090, %v1086
        %v1092 = vmul.f32 1.0, %v1091
        %v1093 = vmul.f32 %v925, %v1047
        %v1094 = vmul.f32 %v927, %v1062
        %v1095 = vmul.f32 %v930, %v1077
        %v1096 = vmul.f32 %v932, %v1092
        %v1097 = vmul.f32 %v1093, %v1008
        %v1098 = vmul.f32 %v1094, %v1010
        %v1099 = vmul.f32 %v1095, %v1013
        %v1100 = vmul.f32 %v1096, %v1015
        %v1101 = vld [vmem:[%s472] sm:$0xff]
        %v1102 = vld [vmem:[%s472 + $0x8] sm:$0xff]
        %v1103 = vld [vmem:[%s472 + $0x10] sm:$0xff]
        %v1104 = vld [vmem:[%s472 + $0x18] sm:$0xff]
        %1106 = vset.pattern.permute.xlu0 0
        %1107 = vperm.xlu0 %1106, %v1101
        %v1108 = vpop.permute.xlu0 %1107
        %1111 = vset.pattern.permute.xlu0 0
        %1112 = vperm.xlu0 %1111, %v1102
        %v1113 = vpop.permute.xlu0 %1112
        %1116 = vset.pattern.permute.xlu0 0
        %1117 = vperm.xlu0 %1116, %v1103
        %v1118 = vpop.permute.xlu0 %1117
        %1121 = vset.pattern.permute.xlu0 0
        %1122 = vperm.xlu0 %1121, %v1104
        %v1123 = vpop.permute.xlu0 %1122
        %v1125 = vmul.f32 %v1097, %v1108
        %v1126 = vmul.f32 %v1098, %v1113
        %v1127 = vmul.f32 %v1099, %v1118
        %v1128 = vmul.f32 %v1100, %v1123
        %v1129 = vpack.c.bf16 %v1126, %v1125
        %v1130 = vpack.c.bf16 %v1128, %v1127
        %v1131 = vld [vmem:[#allocation2] sm:$0xff]
        %v1132 = vld [vmem:[#allocation2 + $0x8] sm:$0xff]
        %v1133 = vld [vmem:[#allocation2 + $0x10] sm:$0xff]
        %v1134 = vld [vmem:[#allocation2 + $0x18] sm:$0xff]
        %v1135 = vld [vmem:[%s400] sm:$0xf]
        %v1136 = vld [vmem:[%s400 + $0x4] sm:$0xf]
        %v1137 = vld [vmem:[%s400 + $0x8] sm:$0xf]
        %v1138 = vld [vmem:[%s400 + $0xc] sm:$0xf]
        %v1139 = vld [vmem:[%s400 + $0x10] sm:$0xf]
        %v1140 = vld [vmem:[%s400 + $0x14] sm:$0xf]
        %v1141 = vld [vmem:[%s400 + $0x18] sm:$0xf]
        %v1142 = vld [vmem:[%s400 + $0x1c] sm:$0xf]
        %v1143 = vld [vmem:[%s400 + $0x20] sm:$0xf]
        %v1144 = vld [vmem:[%s400 + $0x24] sm:$0xf]
        %v1145 = vld [vmem:[%s400 + $0x28] sm:$0xf]
        %v1146 = vld [vmem:[%s400 + $0x2c] sm:$0xf]
        %v1147 = vld [vmem:[%s400 + $0x30] sm:$0xf]
        %v1148 = vld [vmem:[%s400 + $0x34] sm:$0xf]
        %v1149 = vld [vmem:[%s400 + $0x38] sm:$0xf]
        %v1150 = vld [vmem:[%s400 + $0x3c] sm:$0xf]
        %v1167 = vunpack.c.l.b16 %v1135
        %v1168 = vunpack.c.l.b16 %v1136
        %v1169 = vunpack.c.l.b16 %v1137
        %v1170 = vunpack.c.l.b16 %v1138
        %v1171 = vunpack.c.l.b16 %v1139
        %v1172 = vunpack.c.l.b16 %v1140
        %v1173 = vunpack.c.l.b16 %v1141
        %v1174 = vunpack.c.l.b16 %v1142
        %v1175 = vunpack.c.l.b16 %v1143
        %v1176 = vunpack.c.l.b16 %v1144
        %v1177 = vunpack.c.l.b16 %v1145
        %v1178 = vunpack.c.l.b16 %v1146
        %v1179 = vunpack.c.l.b16 %v1147
        %v1180 = vunpack.c.l.b16 %v1148
        %v1181 = vunpack.c.l.b16 %v1149
        %v1182 = vunpack.c.l.b16 %v1150
        %v1183 = vpack.c.b16 %v1168, %v1167
        %v1184 = vpack.c.b16 %v1170, %v1169
        %v1185 = vpack.c.b16 %v1172, %v1171
        %v1186 = vpack.c.b16 %v1174, %v1173
        %v1187 = vpack.c.b16 %v1176, %v1175
        %v1188 = vpack.c.b16 %v1178, %v1177
        %v1189 = vpack.c.b16 %v1180, %v1179
        %v1190 = vpack.c.b16 %v1182, %v1181
        %1199 = vmatpush.bf16.msra.mxu0 %v1190
        %1200 = vmatpush.bf16.msra.mxu0 %v1189
        %1201 = vmatpush.bf16.msra.mxu0 %v1188
        %1202 = vmatpush.bf16.msra.mxu0 %v1187
        %1203 = vmatpush.bf16.msra.mxu0 %v1186
        %1204 = vmatpush.bf16.msra.mxu0 %v1185
        %1205 = vmatpush.bf16.msra.mxu0 %v1184
        %1206 = vmatpush.bf16.msra.mxu0 %v1183
        %1207 = vmatmul.bf16.gmra.mxu0 %v1129
        %v1208 = vpop.f32.mrf.mxu0
        %v1209 = vadd.f32 0.0, %v1208
        %v1210 = vpop.f32.mrf.mxu0
        %v1211 = vadd.f32 0.0, %v1210
        %1212 = vmatmul.bf16.gmra.mxu0 %v1130
        %v1213 = vpop.f32.mrf.mxu0
        %v1214 = vadd.f32 0.0, %v1213
        %v1215 = vpop.f32.mrf.mxu0
        %v1216 = vadd.f32 0.0, %v1215
        %1217 = vdwg.mxu0
        %v1218 = vadd.f32 %v1131, %v1209
        %v1219 = vadd.f32 %v1132, %v1211
        %v1220 = vadd.f32 %v1133, %v1214
        %v1221 = vadd.f32 %v1134, %v1216
        %1222 = vst [vmem:[#allocation2] sm:$0xff] %v1218
        %1223 = vst [vmem:[#allocation2 + $0x8] sm:$0xff] %v1219
        %1224 = vst [vmem:[#allocation2 + $0x10] sm:$0xff] %v1220
        %1225 = vst [vmem:[#allocation2 + $0x18] sm:$0xff] %v1221
        %p1226 = scmp.eq.s32.totalorder %s30, 7
        // Predicated region
        $region69: #{_lambda_.37} parent=51 // pred_check
          %p1227 = pneg %p1226
        $region70: #{_lambda_.37} parent=51 // pred_check_branch
          %1229 = sbr.rel (%p1227) target = $region72
        $region71: #{_lambda_.37} parent=51 // pred_region
          %v1230 = vld [vmem:[#allocation2] sm:$0xff]
          %v1231 = vld [vmem:[#allocation2 + $0x8] sm:$0xff]
          %v1232 = vld [vmem:[#allocation2 + $0x10] sm:$0xff]
          %v1233 = vld [vmem:[#allocation2 + $0x18] sm:$0xff]
          %v1234 = vpack.c.bf16 %v1230, %v1230
          %v1235 = vpack.c.bf16 %v1231, %v1231
          %v1236 = vpack.c.bf16 %v1232, %v1232
          %v1237 = vpack.c.bf16 %v1233, %v1233
          %1238 = vst [vmem:[%s478] sm:$0xf] %v1234
          %1239 = vst [vmem:[%s478 + $0x4] sm:$0xf] %v1235
          %1240 = vst [vmem:[%s478 + $0x8] sm:$0xf] %v1236
          %1241 = vst [vmem:[%s478 + $0xc] sm:$0xf] %v1237
        $region72: #{_lambda_.37} parent=51 // pred_fallthru
          _
        %s1242 = smul.u32 4, %s29
        %p1243 = scmp.lt.s32.totalorder %s1242, 3
        %s1244 = scalar_select %p1243, %s1242, 3
        %s1245 = smul.addr %s1244, 4
        %s1246 = scalar_lea.vmem %s8, %s1245
        // Predicated region
        $region73: #{_lambda_.37} parent=51 // pred_check
          %p1247 = pneg %p250
        $region74: #{_lambda_.37} parent=51 // pred_check_branch
          %1249 = sbr.rel (%p1247) target = $region76
        $region75: #{_lambda_.37} parent=51 // pred_region
          %s1250 = smul.u32 4, %s29
        $region76: #{_lambda_.37} parent=51 // pred_fallthru
          _
        // Predicated region
        $region77: #{_lambda_.37} parent=51 // pred_check
          %p1251 = pneg %p250
        $region78: #{_lambda_.37} parent=51 // pred_check_branch
          %1253 = sbr.rel (%p1251) target = $region80
        $region79: #{_lambda_.37} parent=51 // pred_region
          %s1254 = smul.u32 4, %s29
          %p1255 = scmp.lt.s32.totalorder %s1254, 3
          %s1256 = scalar_select %p1255, %s1254, 3
          %s1257 = smul.addr %s1256, 4
          %s1258 = scalar_lea.vmem %s8, %s1257
        $region80: #{_lambda_.37} parent=51 // pred_fallthru
          _
      $region52: #{_lambda_.37} parent=5 // pred_fallthru
        _
      %p1259 = scmp.le.s32.totalorder 2, %s20
      // Predicated region
      $region81: #{_lambda_.37} parent=5 // pred_check
        %p1260 = pneg %p1259
      $region82: #{_lambda_.37} parent=5 // pred_check_branch
        %1262 = sbr.rel (%p1260) target = $region84
      $region83: #{_lambda_.37} parent=5 // pred_region
        %s1263 = ssub.s32 %s20, 2
      $region84: #{_lambda_.37} parent=5 // pred_fallthru
        _
    $region6: #{_lambda_.37} parent=1 // loop_footer
      %s24 = sadd.s32 1, %s20
    $region7: #{_lambda_.37} parent=1 // loop_footer_branch
      %19 = sbr.rel target = $region3
    $region8: #{_lambda_.37} parent=1 // loop_exit
      _
    %1264 = vsyncpa [#allocation4], 1
    %s1265 = scalar_lea.sflag [#allocation4], 1
    %1266 = vsyncpa %s1265, 1
    %1267 = vsyncpa [#allocation6], 1
    %s1268 = scalar_lea.sflag [#allocation6], 1
    %1269 = vsyncpa %s1268, 1

// kernel: _lambda_.40
$region0: #{_lambda_.40}
  #allocation0 [shape = 'u32[]', space=smem, size = 0x4, offset = 0x4, fixed_abs, tag = 'smem constant byte address 0x4 - core index']
  #allocation1 [shape = 'u32[72,128]{1,0:T(1,128)}', space=vmem, size = 0x9000, scoped, tag = 'internal scratch']
  #allocation2 [shape = 'f32[32,128]{1,0:T(8,128)}', space=vmem, size = 0x4000, scoped, tag = 'scratch operand']
  %s0 = inlined_call_operand.vmem [shape: bf16[32,128], index: 0, kind: input, shape index: {}]
  %s1 = inlined_call_operand.vmem [shape: bf16[8,128,128], index: 1, kind: input, shape index: {}]
  %s2 = inlined_call_operand.vmem [shape: bf16[8,128,128], index: 2, kind: input, shape index: {}]
  %s3 = inlined_call_operand.hbm [shape: bf16[8,128,128], index: 3, kind: input, shape index: {}]
  %s4 = inlined_call_operand.vmem [shape: f32[8,32,1], index: 4, kind: input, shape index: {}]
  %s5 = inlined_call_operand.vmem [shape: bf16[128,128], index: 5, kind: input, shape index: {}]
  %s6 = inlined_call_operand.vmem [shape: bf16[128,128], index: 6, kind: input, shape index: {}]
  %s7 = inlined_call_operand.vmem [shape: bf16[128,128], index: 7, kind: input, shape index: {}]
  %s8 = inlined_call_operand.vmem [shape: bf16[32,128], index: 8, kind: output, shape index: {}]
  %s9 = sld [smem:[#allocation0]]
  $region77: #{_lambda_.40} parent=0
    _
  %s11 = ssub.s32 1, %s9
  %s12 = scalar_select 0, %s11, %s9
  $region1: #{_lambda_.40} parent=0
    #allocation3 [shape = 'u8[65536]{0}', space=vmem, size = 0x10000, scoped, tag = 'input window, operand 3']
    #allocation4 [shape = 's32[2]{0}', space=sflag, size = 0x8, scoped, tag = 'scoped memory for _lambda_.40']
    %13 = vsyncpa [#allocation4], 0
    %s14 = scalar_lea.sflag [#allocation4], 1
    %15 = vsyncpa %s14, 0
    loop: start=0, step=1, limit=10
    $region2: #{_lambda_.40} parent=1 // loop_pre_header
      _
    $region3: #{_lambda_.40} parent=1 // loop_header
      %s17 = sphi 0, %s21
      %p18 = scmp.ge.s32.totalorder %s17, 10
      %s24 = sphi 0, %s36
      %s25 = sphi 0, %s32
      %s26 = sphi 0, %s24
      %s27 = sphi 0, %s25
      %s28 = sphi 0, %s26
      %s29 = sphi 0, %s27
      %s39 = sphi 0, %s41
      %s42 = sphi 0, %s39
      %s43 = sphi 0, %s42
      %s59 = sphi 0, %s43
      %s65 = sphi 0, %s67
      %s68 = sphi 0, %s65
      %s69 = sphi 0, %s68
      %s85 = sphi 0, %s69
      %s91 = sphi 0, %s93
      %s94 = sphi 0, %s91
      %s95 = sphi 0, %s94
      %s111 = sphi 0, %s95
      %s117 = sphi 0, %s119
      %s120 = sphi 0, %s117
      %s121 = sphi 0, %s120
      %s137 = sphi 0, %s121
      %s145 = sphi 0, %s147
      %s148 = sphi 0, %s145
      %s149 = sphi 0, %s148
      %s165 = sphi 0, %s149
      %s169 = sphi 0, %s169
      %s171 = sphi 0, %s169
      %s172 = sphi 0, %s171
      %s186 = sphi 0, %s172
      %s190 = sphi 0, %s190
      %s192 = sphi 0, %s190
      %s193 = sphi 0, %s192
      %s207 = sphi 0, %s193
      %s211 = sphi 0, %s211
      %s213 = sphi 0, %s211
      %s214 = sphi 0, %s213
      %s228 = sphi 0, %s214
      %s234 = sphi 0, %s236
      %s237 = sphi 0, %s234
      %s238 = sphi 0, %s237
      %s254 = sphi 0, %s238
    $region4: #{_lambda_.40} parent=1 // loop_header_branch
      %20 = sbr.rel (%p18) target = $region8
    $region5: #{_lambda_.40} parent=1 // loop_body
      %s22 = ssub.s32 %s17, 1
      %s23 = ssub.s32 %s17, 2
      %s30 = sadd.s32 1, %s25
      %p31 = scmp.ge.s32.totalorder %s30, 8
      %s32 = scalar_select %p31, 0, %s30
      %s33 = sadd.s32 1, %s24
      %s34 = scalar_select %p31, %s33, %s24
      %p35 = scmp.ge.s32.totalorder %s34, 1
      %s36 = scalar_select %p35, 0, %s34
      %s37 = ssub.s32 %s24, %s36
      %p38 = scmp.eq.s32.totalorder %s37, 0
      %s40 = sadd.s32 %s39, 1
      %s41 = scalar_select %p38, %s39, %s40
      %p44 = pneg %p38
      %p45 = scmp.eq.s32.totalorder %s17, 7
      %p46 = por %p44, %p45
      %p47 = scmp.ne.s32.totalorder %s39, %s42
      %p48 = scmp.eq.s32.totalorder %s17, 0
      %p49 = por %p47, %p48
      %p50 = scmp.ne.s32.totalorder %s39, %s42
      %p51 = scmp.eq.s32.totalorder %s22, 7
      %p52 = por %p50, %p51
      %p53 = scmp.ne.s32.totalorder %s42, %s43
      %p54 = scmp.eq.s32.totalorder %s22, 0
      %p55 = por %p53, %p54
      %p56 = scmp.ne.s32.totalorder %s42, %s43
      %p57 = scmp.eq.s32.totalorder %s23, 7
      %p58 = por %p56, %p57
      %p60 = scmp.ne.s32.totalorder %s43, %s59
      %p61 = scmp.eq.s32.totalorder %s23, 0
      %p62 = por %p60, %p61
      %s63 = ssub.s32 %s25, %s32
      %p64 = scmp.eq.s32.totalorder %s63, 0
      %s66 = sadd.s32 %s65, 1
      %s67 = scalar_select %p64, %s65, %s66
      %p70 = pneg %p64
      %p71 = scmp.eq.s32.totalorder %s17, 7
      %p72 = por %p70, %p71
      %p73 = scmp.ne.s32.totalorder %s65, %s68
      %p74 = scmp.eq.s32.totalorder %s17, 0
      %p75 = por %p73, %p74
      %p76 = scmp.ne.s32.totalorder %s65, %s68
      %p77 = scmp.eq.s32.totalorder %s22, 7
      %p78 = por %p76, %p77
      %p79 = scmp.ne.s32.totalorder %s68, %s69
      %p80 = scmp.eq.s32.totalorder %s22, 0
      %p81 = por %p79, %p80
      %p82 = scmp.ne.s32.totalorder %s68, %s69
      %p83 = scmp.eq.s32.totalorder %s23, 7
      %p84 = por %p82, %p83
      %p86 = scmp.ne.s32.totalorder %s69, %s85
      %p87 = scmp.eq.s32.totalorder %s23, 0
      %p88 = por %p86, %p87
      %s89 = ssub.s32 %s25, %s32
      %p90 = scmp.eq.s32.totalorder %s89, 0
      %s92 = sadd.s32 %s91, 1
      %s93 = scalar_select %p90, %s91, %s92
      %p96 = pneg %p90
      %p97 = scmp.eq.s32.totalorder %s17, 7
      %p98 = por %p96, %p97
      %p99 = scmp.ne.s32.totalorder %s91, %s94
      %p100 = scmp.eq.s32.totalorder %s17, 0
      %p101 = por %p99, %p100
      %p102 = scmp.ne.s32.totalorder %s91, %s94
      %p103 = scmp.eq.s32.totalorder %s22, 7
      %p104 = por %p102, %p103
      %p105 = scmp.ne.s32.totalorder %s94, %s95
      %p106 = scmp.eq.s32.totalorder %s22, 0
      %p107 = por %p105, %p106
      %p108 = scmp.ne.s32.totalorder %s94, %s95
      %p109 = scmp.eq.s32.totalorder %s23, 7
      %p110 = por %p108, %p109
      %p112 = scmp.ne.s32.totalorder %s95, %s111
      %p113 = scmp.eq.s32.totalorder %s23, 0
      %p114 = por %p112, %p113
      %s115 = ssub.s32 %s25, %s32
      %p116 = scmp.eq.s32.totalorder %s115, 0
      %s118 = sadd.s32 %s117, 1
      %s119 = scalar_select %p116, %s117, %s118
      %p122 = pneg %p116
      %p123 = scmp.eq.s32.totalorder %s17, 7
      %p124 = por %p122, %p123
      %p125 = scmp.ne.s32.totalorder %s117, %s120
      %p126 = scmp.eq.s32.totalorder %s17, 0
      %p127 = por %p125, %p126
      %p128 = scmp.ne.s32.totalorder %s117, %s120
      %p129 = scmp.eq.s32.totalorder %s22, 7
      %p130 = por %p128, %p129
      %p131 = scmp.ne.s32.totalorder %s120, %s121
      %p132 = scmp.eq.s32.totalorder %s22, 0
      %p133 = por %p131, %p132
      %p134 = scmp.ne.s32.totalorder %s120, %s121
      %p135 = scmp.eq.s32.totalorder %s23, 7
      %p136 = por %p134, %p135
      %p138 = scmp.ne.s32.totalorder %s121, %s137
      %p139 = scmp.eq.s32.totalorder %s23, 0
      %p140 = por %p138, %p139
      %s141 = ssub.s32 %s25, %s32
      %s142 = ssub.s32 %s24, %s36
      %s143 = sor.u32 %s141, %s142
      %p144 = scmp.eq.s32.totalorder %s143, 0
      %s146 = sadd.s32 %s145, 1
      %s147 = scalar_select %p144, %s145, %s146
      %p150 = pneg %p144
      %p151 = scmp.eq.s32.totalorder %s17, 7
      %p152 = por %p150, %p151
      %p153 = scmp.ne.s32.totalorder %s145, %s148
      %p154 = scmp.eq.s32.totalorder %s17, 0
      %p155 = por %p153, %p154
      %p156 = scmp.ne.s32.totalorder %s145, %s148
      %p157 = scmp.eq.s32.totalorder %s22, 7
      %p158 = por %p156, %p157
      %p159 = scmp.ne.s32.totalorder %s148, %s149
      %p160 = scmp.eq.s32.totalorder %s22, 0
      %p161 = por %p159, %p160
      %p162 = scmp.ne.s32.totalorder %s148, %s149
      %p163 = scmp.eq.s32.totalorder %s23, 7
      %p164 = por %p162, %p163
      %p166 = scmp.ne.s32.totalorder %s149, %s165
      %p167 = scmp.eq.s32.totalorder %s23, 0
      %p168 = por %p166, %p167
      %s170 = sadd.s32 %s169, 1
      %p173 = scmp.eq.s32.totalorder %s17, 7
      %p174 = scmp.ne.s32.totalorder %s169, %s171
      %p175 = scmp.eq.s32.totalorder %s17, 0
      %p176 = por %p174, %p175
      %p177 = scmp.ne.s32.totalorder %s169, %s171
      %p178 = scmp.eq.s32.totalorder %s22, 7
      %p179 = por %p177, %p178
      %p180 = scmp.ne.s32.totalorder %s171, %s172
      %p181 = scmp.eq.s32.totalorder %s22, 0
      %p182 = por %p180, %p181
      %p183 = scmp.ne.s32.totalorder %s171, %s172
      %p184 = scmp.eq.s32.totalorder %s23, 7
      %p185 = por %p183, %p184
      %p187 = scmp.ne.s32.totalorder %s172, %s186
      %p188 = scmp.eq.s32.totalorder %s23, 0
      %p189 = por %p187, %p188
      %s191 = sadd.s32 %s190, 1
      %p194 = scmp.eq.s32.totalorder %s17, 7
      %p195 = scmp.ne.s32.totalorder %s190, %s192
      %p196 = scmp.eq.s32.totalorder %s17, 0
      %p197 = por %p195, %p196
      %p198 = scmp.ne.s32.totalorder %s190, %s192
      %p199 = scmp.eq.s32.totalorder %s22, 7
      %p200 = por %p198, %p199
      %p201 = scmp.ne.s32.totalorder %s192, %s193
      %p202 = scmp.eq.s32.totalorder %s22, 0
      %p203 = por %p201, %p202
      %p204 = scmp.ne.s32.totalorder %s192, %s193
      %p205 = scmp.eq.s32.totalorder %s23, 7
      %p206 = por %p204, %p205
      %p208 = scmp.ne.s32.totalorder %s193, %s207
      %p209 = scmp.eq.s32.totalorder %s23, 0
      %p210 = por %p208, %p209
      %s212 = sadd.s32 %s211, 1
      %p215 = scmp.eq.s32.totalorder %s17, 7
      %p216 = scmp.ne.s32.totalorder %s211, %s213
      %p217 = scmp.eq.s32.totalorder %s17, 0
      %p218 = por %p216, %p217
      %p219 = scmp.ne.s32.totalorder %s211, %s213
      %p220 = scmp.eq.s32.totalorder %s22, 7
      %p221 = por %p219, %p220
      %p222 = scmp.ne.s32.totalorder %s213, %s214
      %p223 = scmp.eq.s32.totalorder %s22, 0
      %p224 = por %p222, %p223
      %p225 = scmp.ne.s32.totalorder %s213, %s214
      %p226 = scmp.eq.s32.totalorder %s23, 7
      %p227 = por %p225, %p226
      %p229 = scmp.ne.s32.totalorder %s214, %s228
      %p230 = scmp.eq.s32.totalorder %s23, 0
      %p231 = por %p229, %p230
      %s232 = ssub.s32 %s24, %s36
      %p233 = scmp.eq.s32.totalorder %s232, 0
      %s235 = sadd.s32 %s234, 1
      %s236 = scalar_select %p233, %s234, %s235
      %p239 = pneg %p233
      %p240 = scmp.eq.s32.totalorder %s17, 7
      %p241 = por %p239, %p240
      %p242 = scmp.ne.s32.totalorder %s234, %s237
      %p243 = scmp.eq.s32.totalorder %s17, 0
      %p244 = por %p242, %p243
      %p245 = scmp.ne.s32.totalorder %s234, %s237
      %p246 = scmp.eq.s32.totalorder %s22, 7
      %p247 = por %p245, %p246
      %p248 = scmp.ne.s32.totalorder %s237, %s238
      %p249 = scmp.eq.s32.totalorder %s22, 0
      %p250 = por %p248, %p249
      %p251 = scmp.ne.s32.totalorder %s237, %s238
      %p252 = scmp.eq.s32.totalorder %s23, 7
      %p253 = por %p251, %p252
      %p255 = scmp.ne.s32.totalorder %s238, %s254
      %p256 = scmp.eq.s32.totalorder %s23, 0
      %p257 = por %p255, %p256
      %p258 = scmp.le.s32.totalorder 1, %s17
      %p259 = scmp.lt.s32.totalorder %s17, 9
      %p260 = pnand %p258, %p259
      %p261 = pneg %p260
      // Predicated region
      $region9: #{_lambda_.40} parent=5 // pred_check
        _
      $region10: #{_lambda_.40} parent=5 // pred_check_branch
        %263 = sbr.rel (%p260) target = $region12
      $region11: #{_lambda_.40} parent=5 // pred_region
        %s264 = ssub.s32 %s17, 1
        // Predicated region
        $region13: #{_lambda_.40} parent=11 // pred_check
          %p265 = pneg %p55
        $region14: #{_lambda_.40} parent=11 // pred_check_branch
          %267 = sbr.rel (%p265) target = $region16
        $region15: #{_lambda_.40} parent=11 // pred_region
          %s268 = smul.u32 4, %s26
          %p269 = scmp.lt.s32.totalorder %s268, 3
          %s270 = scalar_select %p269, %s268, 3
          %s271 = smul.addr %s270, 4
          %s272 = scalar_lea.vmem %s0, %s271
          %s273 = smul.u32 4, %s26
        $region16: #{_lambda_.40} parent=11 // pred_fallthru
          _
        // Predicated region
        $region17: #{_lambda_.40} parent=11 // pred_check
          %p274 = pneg %p182
        $region18: #{_lambda_.40} parent=11 // pred_check_branch
          %276 = sbr.rel (%p274) target = $region20
        $region19: #{_lambda_.40} parent=11 // pred_region
          _
        $region20: #{_lambda_.40} parent=11 // pred_fallthru
          _
        // Predicated region
        $region21: #{_lambda_.40} parent=11 // pred_check
          %p277 = pneg %p203
        $region22: #{_lambda_.40} parent=11 // pred_check_branch
          %279 = sbr.rel (%p277) target = $region24
        $region23: #{_lambda_.40} parent=11 // pred_region
          _
        $region24: #{_lambda_.40} parent=11 // pred_fallthru
          _
        // Predicated region
        $region25: #{_lambda_.40} parent=11 // pred_check
          %p280 = pneg %p224
        $region26: #{_lambda_.40} parent=11 // pred_check_branch
          %282 = sbr.rel (%p280) target = $region28
        $region27: #{_lambda_.40} parent=11 // pred_region
          _
        $region28: #{_lambda_.40} parent=11 // pred_fallthru
          _
      $region12: #{_lambda_.40} parent=5 // pred_fallthru
        _
      %p283 = scmp.lt.s32.totalorder %s17, 8
      // Predicated region
      $region29: #{_lambda_.40} parent=5 // pred_check
        %p284 = pneg %p283
      $region30: #{_lambda_.40} parent=5 // pred_check_branch
        %286 = sbr.rel (%p284) target = $region32
      $region31: #{_lambda_.40} parent=5 // pred_region
        // Predicated region
        $region33: #{_lambda_.40} parent=31 // pred_check
          %p287 = pneg %p75
        $region34: #{_lambda_.40} parent=31 // pred_check_branch
          %289 = sbr.rel (%p287) target = $region36
        $region35: #{_lambda_.40} parent=31 // pred_region
          %p290 = scmp.lt.s32.totalorder %s25, 7
          %s291 = scalar_select %p290, %s25, 7
          %s292 = smul.addr %s291, 16
          %s293 = smul.addr %s292, 4
          %s294 = scalar_lea.vmem %s1, %s293
        $region36: #{_lambda_.40} parent=31 // pred_fallthru
          _
        // Predicated region
        $region37: #{_lambda_.40} parent=31 // pred_check
          %p295 = pneg %p101
        $region38: #{_lambda_.40} parent=31 // pred_check_branch
          %297 = sbr.rel (%p295) target = $region40
        $region39: #{_lambda_.40} parent=31 // pred_region
          %p298 = scmp.lt.s32.totalorder %s25, 7
          %s299 = scalar_select %p298, %s25, 7
          %s300 = smul.addr %s299, 16
          %s301 = smul.addr %s300, 4
          %s302 = scalar_lea.vmem %s2, %s301
        $region40: #{_lambda_.40} parent=31 // pred_fallthru
          _
        // Predicated region
        $region41: #{_lambda_.40} parent=31 // pred_check
          %p303 = pneg %p127
        $region42: #{_lambda_.40} parent=31 // pred_check_branch
          %305 = sbr.rel (%p303) target = $region44
        $region43: #{_lambda_.40} parent=31 // pred_region
          %s306 = sand.u32 %s117, 1
          %s307 = scalar_lea.sflag [#allocation4], %s306
          %s308 = sand.u32 %s117, 1
          %s309 = smul.addr %s308, 64
          %s310 = scalar_lea.vmem [#allocation3], %s309
          %312 = vsyncadd %s307, 0
          %s313 = smul.addr %s25, 16
          %s314 = smul.addr %s313, 4
          %s315 = scalar_lea.hbm %s3, %s314
          %s316 = sshll.u32 %s315, 4
          %s317 = int_to_ptr.hbm [resolvable:$true] %s316
          %s318 = sshll.u32 %s310, 4
          %s319 = int_to_ptr.vmem [resolvable:$true] %s318
          %324 = dma.hbm_to_vmem [thread:$0]  %s317, 1024, %s319, %s307, 64, 64, 4
        $region44: #{_lambda_.40} parent=31 // pred_fallthru
          _
        // Predicated region
        $region45: #{_lambda_.40} parent=31 // pred_check
          %p325 = pneg %p155
        $region46: #{_lambda_.40} parent=31 // pred_check_branch
          %327 = sbr.rel (%p325) target = $region48
        $region47: #{_lambda_.40} parent=31 // pred_region
          %s328 = smul.u32 4, %s24
          %p329 = scmp.lt.s32.totalorder %s25, 7
          %s330 = scalar_select %p329, %s25, 7
          %p331 = scmp.lt.s32.totalorder %s328, 3
          %s332 = scalar_select %p331, %s328, 3
          %s333 = smul.addr %s330, 4
          %s334 = sadd.s32 %s332, %s333
          %s335 = smul.addr %s334, 8
          %s336 = scalar_lea.vmem %s4, %s335
          %s337 = smul.u32 4, %s24
        $region48: #{_lambda_.40} parent=31 // pred_fallthru
          _
      $region32: #{_lambda_.40} parent=5 // pred_fallthru
        _
      %p338 = scmp.le.s32.totalorder 1, %s17
      %p339 = scmp.lt.s32.totalorder %s17, 9
      %p340 = pnand %p338, %p339
      %p341 = pneg %p340
      // Predicated region
      $region49: #{_lambda_.40} parent=5 // pred_check
        _
      $region50: #{_lambda_.40} parent=5 // pred_check_branch
        %343 = sbr.rel (%p340) target = $region52
      $region51: #{_lambda_.40} parent=5 // pred_region
        %s344 = ssub.s32 %s17, 1
        %s345 = sand.u32 %s120, 1
        %s346 = scalar_lea.sflag [#allocation4], %s345
        %s347 = sand.u32 %s120, 1
        %s348 = smul.addr %s347, 64
        %s349 = scalar_lea.vmem [#allocation3], %s348
        // Predicated region
        $region53: #{_lambda_.40} parent=51 // pred_check
          %p350 = pneg %p133
        $region54: #{_lambda_.40} parent=51 // pred_check_branch
          %352 = sbr.rel (%p350) target = $region56
        $region55: #{_lambda_.40} parent=51 // pred_region
          %354 = dma.done %s346, 1024
        $region56: #{_lambda_.40} parent=51 // pred_fallthru
          _
        %s355 = smul.u32 4, %s26
        %p356 = scmp.lt.s32.totalorder %s355, 3
        %s357 = scalar_select %p356, %s355, 3
        %s358 = smul.addr %s357, 4
        %s359 = scalar_lea.vmem %s0, %s358
        %p360 = pneg %p55
        %p361 = pneg %p52
        %p362 = scmp.lt.s32.totalorder %s27, 7
        %s363 = scalar_select %p362, %s27, 7
        %s364 = smul.addr %s363, 16
        %s365 = smul.addr %s364, 4
        %s366 = scalar_lea.vmem %s1, %s365
        %p367 = pneg %p81
        %p368 = pneg %p78
        %p369 = scmp.lt.s32.totalorder %s27, 7
        %s370 = scalar_select %p369, %s27, 7
        %s371 = smul.addr %s370, 16
        %s372 = smul.addr %s371, 4
        %s373 = scalar_lea.vmem %s2, %s372
        %p374 = pneg %p107
        %p375 = pneg %p104
        %s376 = sand.u32 %s120, 1
        %s377 = scalar_lea.sflag [#allocation4], %s376
        %s378 = sand.u32 %s120, 1
        %s379 = smul.addr %s378, 64
        %s380 = scalar_lea.vmem [#allocation3], %s379
        %p381 = pneg %p133
        %p382 = pneg %p130
        %s383 = smul.u32 4, %s26
        %p384 = scmp.lt.s32.totalorder %s27, 7
        %s385 = scalar_select %p384, %s27, 7
        %p386 = scmp.lt.s32.totalorder %s383, 3
        %s387 = scalar_select %p386, %s383, 3
        %s388 = smul.addr %s385, 4
        %s389 = sadd.s32 %s387, %s388
        %s390 = smul.addr %s389, 8
        %s391 = scalar_lea.vmem %s4, %s390
        %p392 = pneg %p161
        %p393 = pneg %p158
        %p394 = pneg %p182
        %p395 = pneg %p179
        %p396 = pneg %p203
        %p397 = pneg %p200
        %p398 = pneg %p224
        %p399 = pneg %p221
        %p400 = pneg %p250
        %p401 = pneg %p247
        %s402 = smul.u32 4, %s26
        %p403 = scmp.lt.s32.totalorder %s402, 3
        %s404 = scalar_select %p403, %s402, 3
        %s405 = smul.addr %s404, 4
        %s406 = scalar_lea.vmem %s8, %s405
        %s407 = smul.u32 4, %s26
        %p408 = scmp.lt.s32.totalorder %s407, 3
        %s409 = scalar_select %p408, %s407, 3
        %s410 = smul.addr %s409, 4
        %s411 = scalar_lea.vmem %s0, %s410
        %s412 = smul.u32 4, %s26
        %p413 = scmp.lt.s32.totalorder %s27, 7
        %s414 = scalar_select %p413, %s27, 7
        %s415 = smul.addr %s414, 16
        %s416 = smul.addr %s415, 4
        %s417 = scalar_lea.vmem %s1, %s416
        %p418 = scmp.lt.s32.totalorder %s27, 7
        %s419 = scalar_select %p418, %s27, 7
        %s420 = smul.addr %s419, 16
        %s421 = smul.addr %s420, 4
        %s422 = scalar_lea.vmem %s2, %s421
        %s423 = smul.u32 4, %s26
        %p424 = scmp.lt.s32.totalorder %s27, 7
        %s425 = scalar_select %p424, %s27, 7
        %p426 = scmp.lt.s32.totalorder %s423, 3
        %s427 = scalar_select %p426, %s423, 3
        %s428 = smul.addr %s425, 4
        %s429 = sadd.s32 %s427, %s428
        %s430 = smul.addr %s429, 8
        %s431 = scalar_lea.vmem %s4, %s430
        %s432 = smul.u32 4, %s26
        %s433 = smul.u32 4, %s26
        %p434 = scmp.lt.s32.totalorder %s433, 3
        %s435 = scalar_select %p434, %s433, 3
        %s436 = smul.addr %s435, 4
        %s437 = scalar_lea.vmem %s8, %s436
        %s438 = smul.u32 4, %s26
        %v439 = vld [vmem:[%s411] sm:$0xf]
        %v440 = vld [vmem:[%s411 + $0x4] sm:$0xf]
        %v441 = vld [vmem:[%s411 + $0x8] sm:$0xf]
        %v442 = vld [vmem:[%s411 + $0xc] sm:$0xf]
        %p443 = scmp.eq.s32.totalorder %s27, 0
        // Predicated region
        $region57: #{_lambda_.40} parent=51 // pred_check
          %p444 = pneg %p443
        $region58: #{_lambda_.40} parent=51 // pred_check_branch
          %446 = sbr.rel (%p444) target = $region60
        $region59: #{_lambda_.40} parent=51 // pred_region
          %v447 = vld [vmem:[%s5] sm:$0xf]
          %v448 = vld [vmem:[%s5 + $0x4] sm:$0xf]
          %v449 = vld [vmem:[%s5 + $0x8] sm:$0xf]
          %v450 = vld [vmem:[%s5 + $0xc] sm:$0xf]
          %v451 = vld [vmem:[%s5 + $0x10] sm:$0xf]
          %v452 = vld [vmem:[%s5 + $0x14] sm:$0xf]
          %v453 = vld [vmem:[%s5 + $0x18] sm:$0xf]
          %v454 = vld [vmem:[%s5 + $0x1c] sm:$0xf]
          %v455 = vld [vmem:[%s5 + $0x20] sm:$0xf]
          %v456 = vld [vmem:[%s5 + $0x24] sm:$0xf]
          %v457 = vld [vmem:[%s5 + $0x28] sm:$0xf]
          %v458 = vld [vmem:[%s5 + $0x2c] sm:$0xf]
          %v459 = vld [vmem:[%s5 + $0x30] sm:$0xf]
          %v460 = vld [vmem:[%s5 + $0x34] sm:$0xf]
          %v461 = vld [vmem:[%s5 + $0x38] sm:$0xf]
          %v462 = vld [vmem:[%s5 + $0x3c] sm:$0xf]
          %v467 = vunpack.c.l.b16 %v439
          %v468 = vunpack.c.l.b16 %v440
          %v469 = vunpack.c.l.b16 %v441
          %v470 = vunpack.c.l.b16 %v442
          %v471 = vpack.c.b16 %v468, %v467
          %v472 = vpack.c.b16 %v470, %v469
          %v491 = vunpack.c.l.b16 %v447
          %v492 = vunpack.c.l.b16 %v448
          %v493 = vunpack.c.l.b16 %v449
          %v494 = vunpack.c.l.b16 %v450
          %v495 = vunpack.c.l.b16 %v451
          %v496 = vunpack.c.l.b16 %v452
          %v497 = vunpack.c.l.b16 %v453
          %v498 = vunpack.c.l.b16 %v454
          %v499 = vunpack.c.l.b16 %v455
          %v500 = vunpack.c.l.b16 %v456
          %v501 = vunpack.c.l.b16 %v457
          %v502 = vunpack.c.l.b16 %v458
          %v503 = vunpack.c.l.b16 %v459
          %v504 = vunpack.c.l.b16 %v460
          %v505 = vunpack.c.l.b16 %v461
          %v506 = vunpack.c.l.b16 %v462
          %v507 = vpack.c.b16 %v492, %v491
          %v508 = vpack.c.b16 %v494, %v493
          %v509 = vpack.c.b16 %v496, %v495
          %v510 = vpack.c.b16 %v498, %v497
          %v511 = vpack.c.b16 %v500, %v499
          %v512 = vpack.c.b16 %v502, %v501
          %v513 = vpack.c.b16 %v504, %v503
          %v514 = vpack.c.b16 %v506, %v505
          %523 = vmatpush.bf16.msra.mxu0 %v514
          %524 = vmatpush.bf16.msra.mxu0 %v513
          %525 = vmatpush.bf16.msra.mxu0 %v512
          %526 = vmatpush.bf16.msra.mxu0 %v511
          %527 = vmatpush.bf16.msra.mxu0 %v510
          %528 = vmatpush.bf16.msra.mxu0 %v509
          %529 = vmatpush.bf16.msra.mxu0 %v508
          %530 = vmatpush.bf16.msra.mxu0 %v507
          %531 = vmatmul.bf16.gmra.mxu0 %v471
          %v532 = vpop.f32.mrf.mxu0
          %v533 = vadd.f32 0.0, %v532
          %v534 = vpop.f32.mrf.mxu0
          %v535 = vadd.f32 0.0, %v534
          %536 = vmatmul.bf16.gmra.mxu0 %v472
          %v537 = vpop.f32.mrf.mxu0
          %v538 = vadd.f32 0.0, %v537
          %v539 = vpop.f32.mrf.mxu0
          %v540 = vadd.f32 0.0, %v539
          %541 = vdwg.mxu0
          %v542 = vld [vmem:[%s6] sm:$0xf]
          %v543 = vld [vmem:[%s6 + $0x4] sm:$0xf]
          %v544 = vld [vmem:[%s6 + $0x8] sm:$0xf]
          %v545 = vld [vmem:[%s6 + $0xc] sm:$0xf]
          %v546 = vld [vmem:[%s6 + $0x10] sm:$0xf]
          %v547 = vld [vmem:[%s6 + $0x14] sm:$0xf]
          %v548 = vld [vmem:[%s6 + $0x18] sm:$0xf]
          %v549 = vld [vmem:[%s6 + $0x1c] sm:$0xf]
          %v550 = vld [vmem:[%s6 + $0x20] sm:$0xf]
          %v551 = vld [vmem:[%s6 + $0x24] sm:$0xf]
          %v552 = vld [vmem:[%s6 + $0x28] sm:$0xf]
          %v553 = vld [vmem:[%s6 + $0x2c] sm:$0xf]
          %v554 = vld [vmem:[%s6 + $0x30] sm:$0xf]
          %v555 = vld [vmem:[%s6 + $0x34] sm:$0xf]
          %v556 = vld [vmem:[%s6 + $0x38] sm:$0xf]
          %v557 = vld [vmem:[%s6 + $0x3c] sm:$0xf]
          %v574 = vunpack.c.l.b16 %v542
          %v575 = vunpack.c.l.b16 %v543
          %v576 = vunpack.c.l.b16 %v544
          %v577 = vunpack.c.l.b16 %v545
          %v578 = vunpack.c.l.b16 %v546
          %v579 = vunpack.c.l.b16 %v547
          %v580 = vunpack.c.l.b16 %v548
          %v581 = vunpack.c.l.b16 %v549
          %v582 = vunpack.c.l.b16 %v550
          %v583 = vunpack.c.l.b16 %v551
          %v584 = vunpack.c.l.b16 %v552
          %v585 = vunpack.c.l.b16 %v553
          %v586 = vunpack.c.l.b16 %v554
          %v587 = vunpack.c.l.b16 %v555
          %v588 = vunpack.c.l.b16 %v556
          %v589 = vunpack.c.l.b16 %v557
          %v590 = vpack.c.b16 %v575, %v574
          %v591 = vpack.c.b16 %v577, %v576
          %v592 = vpack.c.b16 %v579, %v578
          %v593 = vpack.c.b16 %v581, %v580
          %v594 = vpack.c.b16 %v583, %v582
          %v595 = vpack.c.b16 %v585, %v584
          %v596 = vpack.c.b16 %v587, %v586
          %v597 = vpack.c.b16 %v589, %v588
          %606 = vmatpush.bf16.msra.mxu0 %v597
          %607 = vmatpush.bf16.msra.mxu0 %v596
          %608 = vmatpush.bf16.msra.mxu0 %v595
          %609 = vmatpush.bf16.msra.mxu0 %v594
          %610 = vmatpush.bf16.msra.mxu0 %v593
          %611 = vmatpush.bf16.msra.mxu0 %v592
          %612 = vmatpush.bf16.msra.mxu0 %v591
          %613 = vmatpush.bf16.msra.mxu0 %v590
          %614 = vmatmul.bf16.gmra.mxu0 %v471
          %v615 = vpop.f32.mrf.mxu0
          %v616 = vadd.f32 0.0, %v615
          %v617 = vpop.f32.mrf.mxu0
          %v618 = vadd.f32 0.0, %v617
          %619 = vmatmul.bf16.gmra.mxu0 %v472
          %v620 = vpop.f32.mrf.mxu0
          %v621 = vadd.f32 0.0, %v620
          %v622 = vpop.f32.mrf.mxu0
          %v623 = vadd.f32 0.0, %v622
          %624 = vdwg.mxu0
          %v625 = vxor.u32 %v533, 2147483648
          %v626 = vxor.u32 %v535, 2147483648
          %v627 = vxor.u32 %v538, 2147483648
          %v628 = vxor.u32 %v540, 2147483648
          %v629 = vmul.f32 %v625, 1.442695
          %v630 = vpow.pop %v629
          %v631 = vmul.f32 %v626, 1.442695
          %v632 = vpow.pop %v631
          %v633 = vmul.f32 %v627, 1.442695
          %v634 = vpow.pop %v633
          %v635 = vmul.f32 %v628, 1.442695
          %v636 = vpow.pop %v635
          %v637 = vadd.f32 %v630, 1.0
          %v638 = vadd.f32 %v632, 1.0
          %v639 = vadd.f32 %v634, 1.0
          %v640 = vadd.f32 %v636, 1.0
          %v641 = vrcp.pop %v637
          %v642 = vmul.f32 %v637, %v641
          %v643 = vsub.f32 1.0, %v642
          %v644 = vmul.f32 %v641, %v643
          %v645 = vadd.f32 %v641, %v644
          %vm646 = vweird.f32 %v637
          %vm647 = vweird.f32 %v641
          %vm648 = vmor %vm646, %vm647
          %v649 = vsel %vm648, %v641, %v645
          %v650 = vand.u32 2147483647, %v637
          %vm651 = vcmp.eq.f32.partialorder %v650, 8.507059e+37
          %v652 = vand.u32 %v637, 2147483648
          %v653 = vor.u32 1.1754944e-38, %v652
          %v654 = vsel %vm651, %v653, %v649
          %v655 = vmul.f32 1.0, %v654
          %v656 = vrcp.pop %v638
          %v657 = vmul.f32 %v638, %v656
          %v658 = vsub.f32 1.0, %v657
          %v659 = vmul.f32 %v656, %v658
          %v660 = vadd.f32 %v656, %v659
          %vm661 = vweird.f32 %v638
          %vm662 = vweird.f32 %v656
          %vm663 = vmor %vm661, %vm662
          %v664 = vsel %vm663, %v656, %v660
          %v665 = vand.u32 2147483647, %v638
          %vm666 = vcmp.eq.f32.partialorder %v665, 8.507059e+37
          %v667 = vand.u32 %v638, 2147483648
          %v668 = vor.u32 1.1754944e-38, %v667
          %v669 = vsel %vm666, %v668, %v664
          %v670 = vmul.f32 1.0, %v669
          %v671 = vrcp.pop %v639
          %v672 = vmul.f32 %v639, %v671
          %v673 = vsub.f32 1.0, %v672
          %v674 = vmul.f32 %v671, %v673
          %v675 = vadd.f32 %v671, %v674
          %vm676 = vweird.f32 %v639
          %vm677 = vweird.f32 %v671
          %vm678 = vmor %vm676, %vm677
          %v679 = vsel %vm678, %v671, %v675
          %v680 = vand.u32 2147483647, %v639
          %vm681 = vcmp.eq.f32.partialorder %v680, 8.507059e+37
          %v682 = vand.u32 %v639, 2147483648
          %v683 = vor.u32 1.1754944e-38, %v682
          %v684 = vsel %vm681, %v683, %v679
          %v685 = vmul.f32 1.0, %v684
          %v686 = vrcp.pop %v640
          %v687 = vmul.f32 %v640, %v686
          %v688 = vsub.f32 1.0, %v687
          %v689 = vmul.f32 %v686, %v688
          %v690 = vadd.f32 %v686, %v689
          %vm691 = vweird.f32 %v640
          %vm692 = vweird.f32 %v686
          %vm693 = vmor %vm691, %vm692
          %v694 = vsel %vm693, %v686, %v690
          %v695 = vand.u32 2147483647, %v640
          %vm696 = vcmp.eq.f32.partialorder %v695, 8.507059e+37
          %v697 = vand.u32 %v640, 2147483648
          %v698 = vor.u32 1.1754944e-38, %v697
          %v699 = vsel %vm696, %v698, %v694
          %v700 = vmul.f32 1.0, %v699
          %v701 = vmul.f32 %v533, %v655
          %v702 = vmul.f32 %v535, %v670
          %v703 = vmul.f32 %v538, %v685
          %v704 = vmul.f32 %v540, %v700
          %v705 = vmul.f32 %v701, %v616
          %v706 = vmul.f32 %v702, %v618
          %v707 = vmul.f32 %v703, %v621
          %v708 = vmul.f32 %v704, %v623
          %v709 = vpack.c.bf16 %v706, %v705
          %v710 = vpack.c.bf16 %v708, %v707
          %v711 = vld [vmem:[%s7] sm:$0xf]
          %v712 = vld [vmem:[%s7 + $0x4] sm:$0xf]
          %v713 = vld [vmem:[%s7 + $0x8] sm:$0xf]
          %v714 = vld [vmem:[%s7 + $0xc] sm:$0xf]
          %v715 = vld [vmem:[%s7 + $0x10] sm:$0xf]
          %v716 = vld [vmem:[%s7 + $0x14] sm:$0xf]
          %v717 = vld [vmem:[%s7 + $0x18] sm:$0xf]
          %v718 = vld [vmem:[%s7 + $0x1c] sm:$0xf]
          %v719 = vld [vmem:[%s7 + $0x20] sm:$0xf]
          %v720 = vld [vmem:[%s7 + $0x24] sm:$0xf]
          %v721 = vld [vmem:[%s7 + $0x28] sm:$0xf]
          %v722 = vld [vmem:[%s7 + $0x2c] sm:$0xf]
          %v723 = vld [vmem:[%s7 + $0x30] sm:$0xf]
          %v724 = vld [vmem:[%s7 + $0x34] sm:$0xf]
          %v725 = vld [vmem:[%s7 + $0x38] sm:$0xf]
          %v726 = vld [vmem:[%s7 + $0x3c] sm:$0xf]
          %v743 = vunpack.c.l.b16 %v711
          %v744 = vunpack.c.l.b16 %v712
          %v745 = vunpack.c.l.b16 %v713
          %v746 = vunpack.c.l.b16 %v714
          %v747 = vunpack.c.l.b16 %v715
          %v748 = vunpack.c.l.b16 %v716
          %v749 = vunpack.c.l.b16 %v717
          %v750 = vunpack.c.l.b16 %v718
          %v751 = vunpack.c.l.b16 %v719
          %v752 = vunpack.c.l.b16 %v720
          %v753 = vunpack.c.l.b16 %v721
          %v754 = vunpack.c.l.b16 %v722
          %v755 = vunpack.c.l.b16 %v723
          %v756 = vunpack.c.l.b16 %v724
          %v757 = vunpack.c.l.b16 %v725
          %v758 = vunpack.c.l.b16 %v726
          %v759 = vpack.c.b16 %v744, %v743
          %v760 = vpack.c.b16 %v746, %v745
          %v761 = vpack.c.b16 %v748, %v747
          %v762 = vpack.c.b16 %v750, %v749
          %v763 = vpack.c.b16 %v752, %v751
          %v764 = vpack.c.b16 %v754, %v753
          %v765 = vpack.c.b16 %v756, %v755
          %v766 = vpack.c.b16 %v758, %v757
          %775 = vmatpush.bf16.msra.mxu0 %v766
          %776 = vmatpush.bf16.msra.mxu0 %v765
          %777 = vmatpush.bf16.msra.mxu0 %v764
          %778 = vmatpush.bf16.msra.mxu0 %v763
          %779 = vmatpush.bf16.msra.mxu0 %v762
          %780 = vmatpush.bf16.msra.mxu0 %v761
          %781 = vmatpush.bf16.msra.mxu0 %v760
          %782 = vmatpush.bf16.msra.mxu0 %v759
          %783 = vmatmul.bf16.gmra.mxu0 %v709
          %v784 = vpop.f32.mrf.mxu0
          %v785 = vadd.f32 0.0, %v784
          %v786 = vpop.f32.mrf.mxu0
          %v787 = vadd.f32 0.0, %v786
          %788 = vmatmul.bf16.gmra.mxu0 %v710
          %v789 = vpop.f32.mrf.mxu0
          %v790 = vadd.f32 0.0, %v789
          %v791 = vpop.f32.mrf.mxu0
          %v792 = vadd.f32 0.0, %v791
          %793 = vdwg.mxu0
          %794 = vst [vmem:[#allocation2] sm:$0xff] %v785
          %795 = vst [vmem:[#allocation2 + $0x8] sm:$0xff] %v787
          %796 = vst [vmem:[#allocation2 + $0x10] sm:$0xff] %v790
          %797 = vst [vmem:[#allocation2 + $0x18] sm:$0xff] %v792
        $region60: #{_lambda_.40} parent=51 // pred_fallthru
          _
        %v798 = vld [vmem:[%s417] sm:$0xf]
        %v799 = vld [vmem:[%s417 + $0x4] sm:$0xf]
        %v800 = vld [vmem:[%s417 + $0x8] sm:$0xf]
        %v801 = vld [vmem:[%s417 + $0xc] sm:$0xf]
        %v802 = vld [vmem:[%s417 + $0x10] sm:$0xf]
        %v803 = vld [vmem:[%s417 + $0x14] sm:$0xf]
        %v804 = vld [vmem:[%s417 + $0x18] sm:$0xf]
        %v805 = vld [vmem:[%s417 + $0x1c] sm:$0xf]
        %v806 = vld [vmem:[%s417 + $0x20] sm:$0xf]
        %v807 = vld [vmem:[%s417 + $0x24] sm:$0xf]
        %v808 = vld [vmem:[%s417 + $0x28] sm:$0xf]
        %v809 = vld [vmem:[%s417 + $0x2c] sm:$0xf]
        %v810 = vld [vmem:[%s417 + $0x30] sm:$0xf]
        %v811 = vld [vmem:[%s417 + $0x34] sm:$0xf]
        %v812 = vld [vmem:[%s417 + $0x38] sm:$0xf]
        %v813 = vld [vmem:[%s417 + $0x3c] sm:$0xf]
        %v818 = vunpack.c.l.b16 %v439
        %v819 = vunpack.c.l.b16 %v440
        %v820 = vunpack.c.l.b16 %v441
        %v821 = vunpack.c.l.b16 %v442
        %v822 = vpack.c.b16 %v819, %v818
        %v823 = vpack.c.b16 %v821, %v820
        %v842 = vunpack.c.l.b16 %v798
        %v843 = vunpack.c.l.b16 %v799
        %v844 = vunpack.c.l.b16 %v800
        %v845 = vunpack.c.l.b16 %v801
        %v846 = vunpack.c.l.b16 %v802
        %v847 = vunpack.c.l.b16 %v803
        %v848 = vunpack.c.l.b16 %v804
        %v849 = vunpack.c.l.b16 %v805
        %v850 = vunpack.c.l.b16 %v806
        %v851 = vunpack.c.l.b16 %v807
        %v852 = vunpack.c.l.b16 %v808
        %v853 = vunpack.c.l.b16 %v809
        %v854 = vunpack.c.l.b16 %v810
        %v855 = vunpack.c.l.b16 %v811
        %v856 = vunpack.c.l.b16 %v812
        %v857 = vunpack.c.l.b16 %v813
        %v858 = vpack.c.b16 %v843, %v842
        %v859 = vpack.c.b16 %v845, %v844
        %v860 = vpack.c.b16 %v847, %v846
        %v861 = vpack.c.b16 %v849, %v848
        %v862 = vpack.c.b16 %v851, %v850
        %v863 = vpack.c.b16 %v853, %v852
        %v864 = vpack.c.b16 %v855, %v854
        %v865 = vpack.c.b16 %v857, %v856
        %874 = vmatpush.bf16.msra.mxu0 %v865
        %875 = vmatpush.bf16.msra.mxu0 %v864
        %876 = vmatpush.bf16.msra.mxu0 %v863
        %877 = vmatpush.bf16.msra.mxu0 %v862
        %878 = vmatpush.bf16.msra.mxu0 %v861
        %879 = vmatpush.bf16.msra.mxu0 %v860
        %880 = vmatpush.bf16.msra.mxu0 %v859
        %881 = vmatpush.bf16.msra.mxu0 %v858
        %882 = vmatmul.bf16.gmra.mxu0 %v822
        %v883 = vpop.f32.mrf.mxu0
        %v884 = vadd.f32 0.0, %v883
        %v885 = vpop.f32.mrf.mxu0
        %v886 = vadd.f32 0.0, %v885
        %887 = vmatmul.bf16.gmra.mxu0 %v823
        %v888 = vpop.f32.mrf.mxu0
        %v889 = vadd.f32 0.0, %v888
        %v890 = vpop.f32.mrf.mxu0
        %v891 = vadd.f32 0.0, %v890
        %892 = vdwg.mxu0
        %v893 = vld [vmem:[%s422] sm:$0xf]
        %v894 = vld [vmem:[%s422 + $0x4] sm:$0xf]
        %v895 = vld [vmem:[%s422 + $0x8] sm:$0xf]
        %v896 = vld [vmem:[%s422 + $0xc] sm:$0xf]
        %v897 = vld [vmem:[%s422 + $0x10] sm:$0xf]
        %v898 = vld [vmem:[%s422 + $0x14] sm:$0xf]
        %v899 = vld [vmem:[%s422 + $0x18] sm:$0xf]
        %v900 = vld [vmem:[%s422 + $0x1c] sm:$0xf]
        %v901 = vld [vmem:[%s422 + $0x20] sm:$0xf]
        %v902 = vld [vmem:[%s422 + $0x24] sm:$0xf]
        %v903 = vld [vmem:[%s422 + $0x28] sm:$0xf]
        %v904 = vld [vmem:[%s422 + $0x2c] sm:$0xf]
        %v905 = vld [vmem:[%s422 + $0x30] sm:$0xf]
        %v906 = vld [vmem:[%s422 + $0x34] sm:$0xf]
        %v907 = vld [vmem:[%s422 + $0x38] sm:$0xf]
        %v908 = vld [vmem:[%s422 + $0x3c] sm:$0xf]
        %v925 = vunpack.c.l.b16 %v893
        %v926 = vunpack.c.l.b16 %v894
        %v927 = vunpack.c.l.b16 %v895
        %v928 = vunpack.c.l.b16 %v896
        %v929 = vunpack.c.l.b16 %v897
        %v930 = vunpack.c.l.b16 %v898
        %v931 = vunpack.c.l.b16 %v899
        %v932 = vunpack.c.l.b16 %v900
        %v933 = vunpack.c.l.b16 %v901
        %v934 = vunpack.c.l.b16 %v902
        %v935 = vunpack.c.l.b16 %v903
        %v936 = vunpack.c.l.b16 %v904
        %v937 = vunpack.c.l.b16 %v905
        %v938 = vunpack.c.l.b16 %v906
        %v939 = vunpack.c.l.b16 %v907
        %v940 = vunpack.c.l.b16 %v908
        %v941 = vpack.c.b16 %v926, %v925
        %v942 = vpack.c.b16 %v928, %v927
        %v943 = vpack.c.b16 %v930, %v929
        %v944 = vpack.c.b16 %v932, %v931
        %v945 = vpack.c.b16 %v934, %v933
        %v946 = vpack.c.b16 %v936, %v935
        %v947 = vpack.c.b16 %v938, %v937
        %v948 = vpack.c.b16 %v940, %v939
        %957 = vmatpush.bf16.msra.mxu0 %v948
        %958 = vmatpush.bf16.msra.mxu0 %v947
        %959 = vmatpush.bf16.msra.mxu0 %v946
        %960 = vmatpush.bf16.msra.mxu0 %v945
        %961 = vmatpush.bf16.msra.mxu0 %v944
        %962 = vmatpush.bf16.msra.mxu0 %v943
        %963 = vmatpush.bf16.msra.mxu0 %v942
        %964 = vmatpush.bf16.msra.mxu0 %v941
        %965 = vmatmul.bf16.gmra.mxu0 %v822
        %v966 = vpop.f32.mrf.mxu0
        %v967 = vadd.f32 0.0, %v966
        %v968 = vpop.f32.mrf.mxu0
        %v969 = vadd.f32 0.0, %v968
        %970 = vmatmul.bf16.gmra.mxu0 %v823
        %v971 = vpop.f32.mrf.mxu0
        %v972 = vadd.f32 0.0, %v971
        %v973 = vpop.f32.mrf.mxu0
        %v974 = vadd.f32 0.0, %v973
        %975 = vdwg.mxu0
        %v976 = vxor.u32 %v884, 2147483648
        %v977 = vxor.u32 %v886, 2147483648
        %v978 = vxor.u32 %v889, 2147483648
        %v979 = vxor.u32 %v891, 2147483648
        %v980 = vmul.f32 %v976, 1.442695
        %v981 = vpow.pop %v980
        %v982 = vmul.f32 %v977, 1.442695
        %v983 = vpow.pop %v982
        %v984 = vmul.f32 %v978, 1.442695
        %v985 = vpow.pop %v984
        %v986 = vmul.f32 %v979, 1.442695
        %v987 = vpow.pop %v986
        %v988 = vadd.f32 %v981, 1.0
        %v989 = vadd.f32 %v983, 1.0
        %v990 = vadd.f32 %v985, 1.0
        %v991 = vadd.f32 %v987, 1.0
        %v992 = vrcp.pop %v988
        %v993 = vmul.f32 %v988, %v992
        %v994 = vsub.f32 1.0, %v993
        %v995 = vmul.f32 %v992, %v994
        %v996 = vadd.f32 %v992, %v995
        %vm997 = vweird.f32 %v988
        %vm998 = vweird.f32 %v992
        %vm999 = vmor %vm997, %vm998
        %v1000 = vsel %vm999, %v992, %v996
        %v1001 = vand.u32 2147483647, %v988
        %vm1002 = vcmp.eq.f32.partialorder %v1001, 8.507059e+37
        %v1003 = vand.u32 %v988, 2147483648
        %v1004 = vor.u32 1.1754944e-38, %v1003
        %v1005 = vsel %vm1002, %v1004, %v1000
        %v1006 = vmul.f32 1.0, %v1005
        %v1007 = vrcp.pop %v989
        %v1008 = vmul.f32 %v989, %v1007
        %v1009 = vsub.f32 1.0, %v1008
        %v1010 = vmul.f32 %v1007, %v1009
        %v1011 = vadd.f32 %v1007, %v1010
        %vm1012 = vweird.f32 %v989
        %vm1013 = vweird.f32 %v1007
        %vm1014 = vmor %vm1012, %vm1013
        %v1015 = vsel %vm1014, %v1007, %v1011
        %v1016 = vand.u32 2147483647, %v989
        %vm1017 = vcmp.eq.f32.partialorder %v1016, 8.507059e+37
        %v1018 = vand.u32 %v989, 2147483648
        %v1019 = vor.u32 1.1754944e-38, %v1018
        %v1020 = vsel %vm1017, %v1019, %v1015
        %v1021 = vmul.f32 1.0, %v1020
        %v1022 = vrcp.pop %v990
        %v1023 = vmul.f32 %v990, %v1022
        %v1024 = vsub.f32 1.0, %v1023
        %v1025 = vmul.f32 %v1022, %v1024
        %v1026 = vadd.f32 %v1022, %v1025
        %vm1027 = vweird.f32 %v990
        %vm1028 = vweird.f32 %v1022
        %vm1029 = vmor %vm1027, %vm1028
        %v1030 = vsel %vm1029, %v1022, %v1026
        %v1031 = vand.u32 2147483647, %v990
        %vm1032 = vcmp.eq.f32.partialorder %v1031, 8.507059e+37
        %v1033 = vand.u32 %v990, 2147483648
        %v1034 = vor.u32 1.1754944e-38, %v1033
        %v1035 = vsel %vm1032, %v1034, %v1030
        %v1036 = vmul.f32 1.0, %v1035
        %v1037 = vrcp.pop %v991
        %v1038 = vmul.f32 %v991, %v1037
        %v1039 = vsub.f32 1.0, %v1038
        %v1040 = vmul.f32 %v1037, %v1039
        %v1041 = vadd.f32 %v1037, %v1040
        %vm1042 = vweird.f32 %v991
        %vm1043 = vweird.f32 %v1037
        %vm1044 = vmor %vm1042, %vm1043
        %v1045 = vsel %vm1044, %v1037, %v1041
        %v1046 = vand.u32 2147483647, %v991
        %vm1047 = vcmp.eq.f32.partialorder %v1046, 8.507059e+37
        %v1048 = vand.u32 %v991, 2147483648
        %v1049 = vor.u32 1.1754944e-38, %v1048
        %v1050 = vsel %vm1047, %v1049, %v1045
        %v1051 = vmul.f32 1.0, %v1050
        %v1052 = vmul.f32 %v884, %v1006
        %v1053 = vmul.f32 %v886, %v1021
        %v1054 = vmul.f32 %v889, %v1036
        %v1055 = vmul.f32 %v891, %v1051
        %v1056 = vmul.f32 %v1052, %v967
        %v1057 = vmul.f32 %v1053, %v969
        %v1058 = vmul.f32 %v1054, %v972
        %v1059 = vmul.f32 %v1055, %v974
        %v1060 = vld [vmem:[%s431] sm:$0xff]
        %v1061 = vld [vmem:[%s431 + $0x8] sm:$0xff]
        %v1062 = vld [vmem:[%s431 + $0x10] sm:$0xff]
        %v1063 = vld [vmem:[%s431 + $0x18] sm:$0xff]
        %1065 = vset.pattern.permute.xlu0 0
        %1066 = vperm.xlu0 %1065, %v1060
        %v1067 = vpop.permute.xlu0 %1066
        %1070 = vset.pattern.permute.xlu0 0
        %1071 = vperm.xlu0 %1070, %v1061
        %v1072 = vpop.permute.xlu0 %1071
        %1075 = vset.pattern.permute.xlu0 0
        %1076 = vperm.xlu0 %1075, %v1062
        %v1077 = vpop.permute.xlu0 %1076
        %1080 = vset.pattern.permute.xlu0 0
        %1081 = vperm.xlu0 %1080, %v1063
        %v1082 = vpop.permute.xlu0 %1081
        %v1084 = vmul.f32 %v1056, %v1067
        %v1085 = vmul.f32 %v1057, %v1072
        %v1086 = vmul.f32 %v1058, %v1077
        %v1087 = vmul.f32 %v1059, %v1082
        %v1088 = vpack.c.bf16 %v1085, %v1084
        %v1089 = vpack.c.bf16 %v1087, %v1086
        %v1090 = vld [vmem:[#allocation2] sm:$0xff]
        %v1091 = vld [vmem:[#allocation2 + $0x8] sm:$0xff]
        %v1092 = vld [vmem:[#allocation2 + $0x10] sm:$0xff]
        %v1093 = vld [vmem:[#allocation2 + $0x18] sm:$0xff]
        %v1094 = vld [vmem:[%s349] sm:$0xf]
        %v1095 = vld [vmem:[%s349 + $0x4] sm:$0xf]
        %v1096 = vld [vmem:[%s349 + $0x8] sm:$0xf]
        %v1097 = vld [vmem:[%s349 + $0xc] sm:$0xf]
        %v1098 = vld [vmem:[%s349 + $0x10] sm:$0xf]
        %v1099 = vld [vmem:[%s349 + $0x14] sm:$0xf]
        %v1100 = vld [vmem:[%s349 + $0x18] sm:$0xf]
        %v1101 = vld [vmem:[%s349 + $0x1c] sm:$0xf]
        %v1102 = vld [vmem:[%s349 + $0x20] sm:$0xf]
        %v1103 = vld [vmem:[%s349 + $0x24] sm:$0xf]
        %v1104 = vld [vmem:[%s349 + $0x28] sm:$0xf]
        %v1105 = vld [vmem:[%s349 + $0x2c] sm:$0xf]
        %v1106 = vld [vmem:[%s349 + $0x30] sm:$0xf]
        %v1107 = vld [vmem:[%s349 + $0x34] sm:$0xf]
        %v1108 = vld [vmem:[%s349 + $0x38] sm:$0xf]
        %v1109 = vld [vmem:[%s349 + $0x3c] sm:$0xf]
        %v1126 = vunpack.c.l.b16 %v1094
        %v1127 = vunpack.c.l.b16 %v1095
        %v1128 = vunpack.c.l.b16 %v1096
        %v1129 = vunpack.c.l.b16 %v1097
        %v1130 = vunpack.c.l.b16 %v1098
        %v1131 = vunpack.c.l.b16 %v1099
        %v1132 = vunpack.c.l.b16 %v1100
        %v1133 = vunpack.c.l.b16 %v1101
        %v1134 = vunpack.c.l.b16 %v1102
        %v1135 = vunpack.c.l.b16 %v1103
        %v1136 = vunpack.c.l.b16 %v1104
        %v1137 = vunpack.c.l.b16 %v1105
        %v1138 = vunpack.c.l.b16 %v1106
        %v1139 = vunpack.c.l.b16 %v1107
        %v1140 = vunpack.c.l.b16 %v1108
        %v1141 = vunpack.c.l.b16 %v1109
        %v1142 = vpack.c.b16 %v1127, %v1126
        %v1143 = vpack.c.b16 %v1129, %v1128
        %v1144 = vpack.c.b16 %v1131, %v1130
        %v1145 = vpack.c.b16 %v1133, %v1132
        %v1146 = vpack.c.b16 %v1135, %v1134
        %v1147 = vpack.c.b16 %v1137, %v1136
        %v1148 = vpack.c.b16 %v1139, %v1138
        %v1149 = vpack.c.b16 %v1141, %v1140
        %1158 = vmatpush.bf16.msra.mxu0 %v1149
        %1159 = vmatpush.bf16.msra.mxu0 %v1148
        %1160 = vmatpush.bf16.msra.mxu0 %v1147
        %1161 = vmatpush.bf16.msra.mxu0 %v1146
        %1162 = vmatpush.bf16.msra.mxu0 %v1145
        %1163 = vmatpush.bf16.msra.mxu0 %v1144
        %1164 = vmatpush.bf16.msra.mxu0 %v1143
        %1165 = vmatpush.bf16.msra.mxu0 %v1142
        %1166 = vmatmul.bf16.gmra.mxu0 %v1088
        %v1167 = vpop.f32.mrf.mxu0
        %v1168 = vadd.f32 0.0, %v1167
        %v1169 = vpop.f32.mrf.mxu0
        %v1170 = vadd.f32 0.0, %v1169
        %1171 = vmatmul.bf16.gmra.mxu0 %v1089
        %v1172 = vpop.f32.mrf.mxu0
        %v1173 = vadd.f32 0.0, %v1172
        %v1174 = vpop.f32.mrf.mxu0
        %v1175 = vadd.f32 0.0, %v1174
        %1176 = vdwg.mxu0
        %v1177 = vadd.f32 %v1090, %v1168
        %v1178 = vadd.f32 %v1091, %v1170
        %v1179 = vadd.f32 %v1092, %v1173
        %v1180 = vadd.f32 %v1093, %v1175
        %1181 = vst [vmem:[#allocation2] sm:$0xff] %v1177
        %1182 = vst [vmem:[#allocation2 + $0x8] sm:$0xff] %v1178
        %1183 = vst [vmem:[#allocation2 + $0x10] sm:$0xff] %v1179
        %1184 = vst [vmem:[#allocation2 + $0x18] sm:$0xff] %v1180
        %p1185 = scmp.eq.s32.totalorder %s27, 7
        // Predicated region
        $region61: #{_lambda_.40} parent=51 // pred_check
          %p1186 = pneg %p1185
        $region62: #{_lambda_.40} parent=51 // pred_check_branch
          %1188 = sbr.rel (%p1186) target = $region64
        $region63: #{_lambda_.40} parent=51 // pred_region
          %v1189 = vld [vmem:[#allocation2] sm:$0xff]
          %v1190 = vld [vmem:[#allocation2 + $0x8] sm:$0xff]
          %v1191 = vld [vmem:[#allocation2 + $0x10] sm:$0xff]
          %v1192 = vld [vmem:[#allocation2 + $0x18] sm:$0xff]
          %v1193 = vpack.c.bf16 %v1189, %v1189
          %v1194 = vpack.c.bf16 %v1190, %v1190
          %v1195 = vpack.c.bf16 %v1191, %v1191
          %v1196 = vpack.c.bf16 %v1192, %v1192
          %1197 = vst [vmem:[%s437] sm:$0xf] %v1193
          %1198 = vst [vmem:[%s437 + $0x4] sm:$0xf] %v1194
          %1199 = vst [vmem:[%s437 + $0x8] sm:$0xf] %v1195
          %1200 = vst [vmem:[%s437 + $0xc] sm:$0xf] %v1196
        $region64: #{_lambda_.40} parent=51 // pred_fallthru
          _
        %s1201 = smul.u32 4, %s26
        %p1202 = scmp.lt.s32.totalorder %s1201, 3
        %s1203 = scalar_select %p1202, %s1201, 3
        %s1204 = smul.addr %s1203, 4
        %s1205 = scalar_lea.vmem %s8, %s1204
        // Predicated region
        $region65: #{_lambda_.40} parent=51 // pred_check
          %p1206 = pneg %p247
        $region66: #{_lambda_.40} parent=51 // pred_check_branch
          %1208 = sbr.rel (%p1206) target = $region68
        $region67: #{_lambda_.40} parent=51 // pred_region
          %s1209 = smul.u32 4, %s26
        $region68: #{_lambda_.40} parent=51 // pred_fallthru
          _
        // Predicated region
        $region69: #{_lambda_.40} parent=51 // pred_check
          %p1210 = pneg %p247
        $region70: #{_lambda_.40} parent=51 // pred_check_branch
          %1212 = sbr.rel (%p1210) target = $region72
        $region71: #{_lambda_.40} parent=51 // pred_region
          %s1213 = smul.u32 4, %s26
          %p1214 = scmp.lt.s32.totalorder %s1213, 3
          %s1215 = scalar_select %p1214, %s1213, 3
          %s1216 = smul.addr %s1215, 4
          %s1217 = scalar_lea.vmem %s8, %s1216
        $region72: #{_lambda_.40} parent=51 // pred_fallthru
          _
      $region52: #{_lambda_.40} parent=5 // pred_fallthru
        _
      %p1218 = scmp.le.s32.totalorder 2, %s17
      // Predicated region
      $region73: #{_lambda_.40} parent=5 // pred_check
        %p1219 = pneg %p1218
      $region74: #{_lambda_.40} parent=5 // pred_check_branch
        %1221 = sbr.rel (%p1219) target = $region76
      $region75: #{_lambda_.40} parent=5 // pred_region
        %s1222 = ssub.s32 %s17, 2
      $region76: #{_lambda_.40} parent=5 // pred_fallthru
        _
    $region6: #{_lambda_.40} parent=1 // loop_footer
      %s21 = sadd.s32 1, %s17
    $region7: #{_lambda_.40} parent=1 // loop_footer_branch
      %16 = sbr.rel target = $region3
    $region8: #{_lambda_.40} parent=1 // loop_exit
      _
    %1223 = vsyncpa [#allocation4], 1
    %s1224 = scalar_lea.sflag [#allocation4], 1
    %1225 = vsyncpa %s1224, 1

</llo_original>
